<compile_context>
chip_gen: v5e
topology: v5e:2x2
jax: 0.10.0
libtpu: 0.0.40
codegen_flags: <defaults>
</compile_context>

<pallas_src>
import jax
import jax.numpy as jnp
from jax.experimental import pallas as pl
from jax.experimental.pallas import tpu as pltpu

EPS = 1e-5


def _pick_row_chunk(c, target):
    """Largest divisor of c that is a multiple of 8 and <= target (fallback: c)."""
    for d in range(min(target, c), 7, -1):
        if c % d == 0 and d % 8 == 0:
            return d
    return c


def _make_kernel(c, m, rc):
    n_chunks = c // rc
    inv_m = 1.0 / float(m)

    def kernel(x_hbm, w_hbm, p_hbm, o_hbm,
               y_vmem, z_vmem, w_vmem, p_vmem,
               in_sems, out_sems, misc_sems):
        # ---- Phase 0: queue all input DMAs (params first: needed by chunk 0;
        # conv weight last: only needed at the matmul). Each x chunk is a fully
        # contiguous (rc, M) slab in HBM. ----
        p_copy = pltpu.make_async_copy(p_hbm, p_vmem, misc_sems.at[0])
        p_copy.start()
        in_copies = []
        for i in range(n_chunks):
            r0 = i * rc
            cp = pltpu.make_async_copy(
                x_hbm.at[pl.ds(r0, rc), :],
                y_vmem.at[pl.ds(r0, rc), :],
                in_sems.at[i])
            cp.start()
            in_copies.append(cp)
        w_copy = pltpu.make_async_copy(w_hbm, w_vmem, misc_sems.at[1])
        w_copy.start()

        p_copy.wait()

        # ---- Phase A: per channel chunk, BN1 stats (single pass, chunked so the
        # squared temp is only rc x M), fused scale/shift apply + ReLU, written
        # in place; later chunks' DMAs stay in flight under this compute. ----
        for i in range(n_chunks):
            r0 = i * rc
            in_copies[i].wait()
            xc = y_vmem[pl.ds(r0, rc), :]                       # (rc, M)
            s = jnp.sum(xc, axis=1, keepdims=True)
            sq = jnp.sum(xc * xc, axis=1, keepdims=True)
            mean = s * inv_m
            var = jnp.maximum(sq * inv_m - mean * mean, 0.0)    # clamp: single-pass var
            g1 = p_vmem[pl.ds(r0, rc), 0:1]
            b1 = p_vmem[pl.ds(r0, rc), 1:2]
            scale = g1 * jax.lax.rsqrt(var + EPS)
            shift = b1 - mean * scale
            y_vmem[pl.ds(r0, rc), :] = jnp.maximum(xc * scale + shift, 0.0)

        # ---- Conv2d 1x1 (no bias): one f32 MXU matmul, RHS (y) tiles loaded once.
        w_copy.wait()
        z_vmem[...] = jnp.dot(w_vmem[...], y_vmem[...],
                              preferred_element_type=jnp.float32)

        # ---- Phase B: per output-channel chunk, BN2 stats + fused apply in place,
        # then start the contiguous HBM writeback so it overlaps the next chunk. ----
        out_copies = []
        for j in range(n_chunks):
            r0 = j * rc
            zc = z_vmem[pl.ds(r0, rc), :]
            s = jnp.sum(zc, axis=1, keepdims=True)
            sq = jnp.sum(zc * zc, axis=1, keepdims=True)
            mean = s * inv_m
            var = jnp.maximum(sq * inv_m - mean * mean, 0.0)
            g2 = p_vmem[pl.ds(r0, rc), 2:3]
            b2 = p_vmem[pl.ds(r0, rc), 3:4]
            scale = g2 * jax.lax.rsqrt(var + EPS)
            shift = b2 - mean * scale
            z_vmem[pl.ds(r0, rc), :] = zc * scale + shift
            cp = pltpu.make_async_copy(
                z_vmem.at[pl.ds(r0, rc), :],
                o_hbm.at[pl.ds(r0, rc), :],
                out_sems.at[j])
            cp.start()
            out_copies.append(cp)

        for cp in out_copies:
            cp.wait()

    return kernel, n_chunks


def bn_relu_conv_bn(x_nchw, conv_w, gamma1, beta1, gamma2, beta2):
    """x_nchw: (N, C, H, W) f32; conv_w: (C_out, C_in) f32 (1x1 kernel squeezed)."""
    n, c, h, w = x_nchw.shape
    m = n * h * w

    # (N, C, H, W) -> (C, N*H*W); free reshape for N == 1.
    if n == 1:
        x_cm = x_nchw.reshape(c, m).astype(jnp.float32)
    else:
        x_cm = jnp.transpose(x_nchw, (1, 0, 2, 3)).reshape(c, m).astype(jnp.float32)

    w2d = conv_w.reshape(c, c).astype(jnp.float32)
    # Pack the four per-channel parameter vectors into one (C, 4) array -> one DMA.
    params = jnp.stack([gamma1, beta1, gamma2, beta2], axis=1).astype(jnp.float32)

    rc = _pick_row_chunk(c, 24)
    kernel, n_chunks = _make_kernel(c, m, rc)

    cost = pl.CostEstimate(
        flops=2 * c * c * m + 10 * c * m,
        transcendentals=2 * c,
        bytes_accessed=(2 * m * c + c * c + 4 * c) * 4,
    )

    out_cm = pl.pallas_call(
        kernel,
        out_shape=jax.ShapeDtypeStruct((c, m), jnp.float32),
        in_specs=[
            pl.BlockSpec(memory_space=pl.ANY),   # x (C, M): stays in HBM, streamed manually
            pl.BlockSpec(memory_space=pl.ANY),   # conv weight (C, C)
            pl.BlockSpec(memory_space=pl.ANY),   # packed BN params (C, 4)
        ],
        out_specs=pl.BlockSpec(memory_space=pl.ANY),   # output streamed back manually
        scratch_shapes=[
            pltpu.VMEM((c, m), jnp.float32),     # y_vmem: x, then relu(bn1(x))
            pltpu.VMEM((c, m), jnp.float32),     # z_vmem: conv out, then bn2 out
            pltpu.VMEM((c, c), jnp.float32),     # conv weight
            pltpu.VMEM((c, 4), jnp.float32),     # packed BN params
            pltpu.SemaphoreType.DMA((n_chunks,)),   # input chunk sems
            pltpu.SemaphoreType.DMA((n_chunks,)),   # output chunk sems
            pltpu.SemaphoreType.DMA((2,)),          # params / weight sems
        ],
        cost_estimate=cost,
    )(x_cm, w2d, params)

    # (C, M) -> (N, C, H, W); free reshape for N == 1.
    if n == 1:
        return out_cm.reshape(1, c, h, w)
    return jnp.transpose(out_cm.reshape(c, n, h, w), (1, 0, 2, 3))


def _reference(x_nchw, conv_w, gamma1, beta1, gamma2, beta2):
    """Pure-JAX reference with the same training-mode BN semantics as the module."""
    def bn(x, g, b):
        mean = jnp.mean(x, axis=(0, 2, 3), keepdims=True)
        var = jnp.mean((x - mean) ** 2, axis=(0, 2, 3), keepdims=True)
        return (x - mean) / jnp.sqrt(var + EPS) * g.reshape(1, -1, 1, 1) + b.reshape(1, -1, 1, 1)

    y = jnp.maximum(bn(x_nchw, gamma1, beta1), 0.0)
    z = jnp.einsum("nchw,oc->nohw", y, conv_w)      # 1x1 conv, no bias
    return bn(z, gamma2, beta2)


if __name__ == "__main__":
    key = jax.random.PRNGKey(0)
    k_x, k_w, k_g1, k_b1, k_g2, k_b2 = jax.random.split(key, 6)

    N, C, H, W = 1, 168, 28, 28                      # shapes the module implies
    x = jax.random.normal(k_x, (N, C, H, W), dtype=jnp.float32)

    conv_w = jax.random.normal(k_w, (C, C), dtype=jnp.float32) * 0.05   # (C_out, C_in)
    gamma1 = 1.0 + 0.1 * jax.random.normal(k_g1, (C,), dtype=jnp.float32)
    beta1 = 0.1 * jax.random.normal(k_b1, (C,), dtype=jnp.float32)
    gamma2 = 1.0 + 0.1 * jax.random.normal(k_g2, (C,), dtype=jnp.float32)
    beta2 = 0.1 * jax.random.normal(k_b2, (C,), dtype=jnp.float32)

    out = jax.block_until_ready(bn_relu_conv_bn(x, conv_w, gamma1, beta1, gamma2, beta2))
    ref = jax.block_until_ready(_reference(x, conv_w, gamma1, beta1, gamma2, beta2))

    assert out.shape == (N, C, H, W)
    assert float(jnp.max(jnp.abs(out - ref))) < 1e-3, "mismatch vs reference"

    print("KERNEL_OK")
</pallas_src>

<mosaic_0001>
module attributes {stable_mosaic.version = 11 : i64} {
  func.func @kernel(%arg0: memref<168x784xf32, #tpu.memory_space<any>>, %arg1: memref<168x168xf32, #tpu.memory_space<any>>, %arg2: memref<168x4xf32, #tpu.memory_space<any>>, %arg3: memref<168x784xf32, #tpu.memory_space<any>>, %arg4: memref<168x784xf32, #tpu.memory_space<vmem>>, %arg5: memref<168x784xf32, #tpu.memory_space<vmem>>, %arg6: memref<168x168xf32, #tpu.memory_space<vmem>>, %arg7: memref<168x4xf32, #tpu.memory_space<vmem>>, %arg8: memref<7x!tpu.dma_semaphore, #tpu.memory_space<semaphore_mem>>, %arg9: memref<7x!tpu.dma_semaphore, #tpu.memory_space<semaphore_mem>>, %arg10: memref<2x!tpu.dma_semaphore, #tpu.memory_space<semaphore_mem>>) attributes {dimension_semantics = [], scalar_prefetch = 0 : i64, scratch_operands = 7 : i64, tpu.core_type = #tpu.core_type<tc>} {
    %c0_i32 = arith.constant 0 : i32
    %0 = tpu.memref_slice %arg10[%c0_i32] : memref<2x!tpu.dma_semaphore, #tpu.memory_space<semaphore_mem>> -> memref<1x!tpu.dma_semaphore, #tpu.memory_space<semaphore_mem>>
    %1 = tpu.memref_squeeze %0 : memref<1x!tpu.dma_semaphore, #tpu.memory_space<semaphore_mem>> -> memref<!tpu.dma_semaphore, #tpu.memory_space<semaphore_mem>>
    tpu.enqueue_dma source(%arg2 : memref<168x4xf32, #tpu.memory_space<any>>) target(%arg7 : memref<168x4xf32, #tpu.memory_space<vmem>>) target_semaphore(%1 : memref<!tpu.dma_semaphore, #tpu.memory_space<semaphore_mem>>)
    %c0_i32_0 = arith.constant 0 : i32
    %c0_i32_1 = arith.constant 0 : i32
    %c0_i32_2 = arith.constant 0 : i32
    %2 = tpu.memref_slice %arg0[%c0_i32_1, %c0_i32_2] : memref<168x784xf32, #tpu.memory_space<any>> -> memref<24x784xf32, #tpu.memory_space<any>>
    %c0_i32_3 = arith.constant 0 : i32
    %c0_i32_4 = arith.constant 0 : i32
    %3 = tpu.memref_slice %arg4[%c0_i32_3, %c0_i32_4] : memref<168x784xf32, #tpu.memory_space<vmem>> -> memref<24x784xf32, #tpu.memory_space<vmem>>
    %4 = tpu.memref_slice %arg8[%c0_i32_0] : memref<7x!tpu.dma_semaphore, #tpu.memory_space<semaphore_mem>> -> memref<1x!tpu.dma_semaphore, #tpu.memory_space<semaphore_mem>>
    %5 = tpu.memref_squeeze %4 : memref<1x!tpu.dma_semaphore, #tpu.memory_space<semaphore_mem>> -> memref<!tpu.dma_semaphore, #tpu.memory_space<semaphore_mem>>
    tpu.enqueue_dma source(%2 : memref<24x784xf32, #tpu.memory_space<any>>) target(%3 : memref<24x784xf32, #tpu.memory_space<vmem>>) target_semaphore(%5 : memref<!tpu.dma_semaphore, #tpu.memory_space<semaphore_mem>>)
    %c1_i32 = arith.constant 1 : i32
    %c24_i32 = arith.constant 24 : i32
    %c0_i32_5 = arith.constant 0 : i32
    %6 = tpu.memref_slice %arg0[%c24_i32, %c0_i32_5] : memref<168x784xf32, #tpu.memory_space<any>> -> memref<24x784xf32, #tpu.memory_space<any>>
    %c24_i32_6 = arith.constant 24 : i32
    %c0_i32_7 = arith.constant 0 : i32
    %7 = tpu.memref_slice %arg4[%c24_i32_6, %c0_i32_7] : memref<168x784xf32, #tpu.memory_space<vmem>> -> memref<24x784xf32, #tpu.memory_space<vmem>>
    %8 = tpu.memref_slice %arg8[%c1_i32] : memref<7x!tpu.dma_semaphore, #tpu.memory_space<semaphore_mem>> -> memref<1x!tpu.dma_semaphore, #tpu.memory_space<semaphore_mem>>
    %9 = tpu.memref_squeeze %8 : memref<1x!tpu.dma_semaphore, #tpu.memory_space<semaphore_mem>> -> memref<!tpu.dma_semaphore, #tpu.memory_space<semaphore_mem>>
    tpu.enqueue_dma source(%6 : memref<24x784xf32, #tpu.memory_space<any>>) target(%7 : memref<24x784xf32, #tpu.memory_space<vmem>>) target_semaphore(%9 : memref<!tpu.dma_semaphore, #tpu.memory_space<semaphore_mem>>)
    %c2_i32 = arith.constant 2 : i32
    %c48_i32 = arith.constant 48 : i32
    %c0_i32_8 = arith.constant 0 : i32
    %10 = tpu.memref_slice %arg0[%c48_i32, %c0_i32_8] : memref<168x784xf32, #tpu.memory_space<any>> -> memref<24x784xf32, #tpu.memory_space<any>>
    %c48_i32_9 = arith.constant 48 : i32
    %c0_i32_10 = arith.constant 0 : i32
    %11 = tpu.memref_slice %arg4[%c48_i32_9, %c0_i32_10] : memref<168x784xf32, #tpu.memory_space<vmem>> -> memref<24x784xf32, #tpu.memory_space<vmem>>
    %12 = tpu.memref_slice %arg8[%c2_i32] : memref<7x!tpu.dma_semaphore, #tpu.memory_space<semaphore_mem>> -> memref<1x!tpu.dma_semaphore, #tpu.memory_space<semaphore_mem>>
    %13 = tpu.memref_squeeze %12 : memref<1x!tpu.dma_semaphore, #tpu.memory_space<semaphore_mem>> -> memref<!tpu.dma_semaphore, #tpu.memory_space<semaphore_mem>>
    tpu.enqueue_dma source(%10 : memref<24x784xf32, #tpu.memory_space<any>>) target(%11 : memref<24x784xf32, #tpu.memory_space<vmem>>) target_semaphore(%13 : memref<!tpu.dma_semaphore, #tpu.memory_space<semaphore_mem>>)
    %c3_i32 = arith.constant 3 : i32
    %c72_i32 = arith.constant 72 : i32
    %c0_i32_11 = arith.constant 0 : i32
    %14 = tpu.memref_slice %arg0[%c72_i32, %c0_i32_11] : memref<168x784xf32, #tpu.memory_space<any>> -> memref<24x784xf32, #tpu.memory_space<any>>
    %c72_i32_12 = arith.constant 72 : i32
    %c0_i32_13 = arith.constant 0 : i32
    %15 = tpu.memref_slice %arg4[%c72_i32_12, %c0_i32_13] : memref<168x784xf32, #tpu.memory_space<vmem>> -> memref<24x784xf32, #tpu.memory_space<vmem>>
    %16 = tpu.memref_slice %arg8[%c3_i32] : memref<7x!tpu.dma_semaphore, #tpu.memory_space<semaphore_mem>> -> memref<1x!tpu.dma_semaphore, #tpu.memory_space<semaphore_mem>>
    %17 = tpu.memref_squeeze %16 : memref<1x!tpu.dma_semaphore, #tpu.memory_space<semaphore_mem>> -> memref<!tpu.dma_semaphore, #tpu.memory_space<semaphore_mem>>
    tpu.enqueue_dma source(%14 : memref<24x784xf32, #tpu.memory_space<any>>) target(%15 : memref<24x784xf32, #tpu.memory_space<vmem>>) target_semaphore(%17 : memref<!tpu.dma_semaphore, #tpu.memory_space<semaphore_mem>>)
    %c4_i32 = arith.constant 4 : i32
    %c96_i32 = arith.constant 96 : i32
    %c0_i32_14 = arith.constant 0 : i32
    %18 = tpu.memref_slice %arg0[%c96_i32, %c0_i32_14] : memref<168x784xf32, #tpu.memory_space<any>> -> memref<24x784xf32, #tpu.memory_space<any>>
    %c96_i32_15 = arith.constant 96 : i32
    %c0_i32_16 = arith.constant 0 : i32
    %19 = tpu.memref_slice %arg4[%c96_i32_15, %c0_i32_16] : memref<168x784xf32, #tpu.memory_space<vmem>> -> memref<24x784xf32, #tpu.memory_space<vmem>>
    %20 = tpu.memref_slice %arg8[%c4_i32] : memref<7x!tpu.dma_semaphore, #tpu.memory_space<semaphore_mem>> -> memref<1x!tpu.dma_semaphore, #tpu.memory_space<semaphore_mem>>
    %21 = tpu.memref_squeeze %20 : memref<1x!tpu.dma_semaphore, #tpu.memory_space<semaphore_mem>> -> memref<!tpu.dma_semaphore, #tpu.memory_space<semaphore_mem>>
    tpu.enqueue_dma source(%18 : memref<24x784xf32, #tpu.memory_space<any>>) target(%19 : memref<24x784xf32, #tpu.memory_space<vmem>>) target_semaphore(%21 : memref<!tpu.dma_semaphore, #tpu.memory_space<semaphore_mem>>)
    %c5_i32 = arith.constant 5 : i32
    %c120_i32 = arith.constant 120 : i32
    %c0_i32_17 = arith.constant 0 : i32
    %22 = tpu.memref_slice %arg0[%c120_i32, %c0_i32_17] : memref<168x784xf32, #tpu.memory_space<any>> -> memref<24x784xf32, #tpu.memory_space<any>>
    %c120_i32_18 = arith.constant 120 : i32
    %c0_i32_19 = arith.constant 0 : i32
    %23 = tpu.memref_slice %arg4[%c120_i32_18, %c0_i32_19] : memref<168x784xf32, #tpu.memory_space<vmem>> -> memref<24x784xf32, #tpu.memory_space<vmem>>
    %24 = tpu.memref_slice %arg8[%c5_i32] : memref<7x!tpu.dma_semaphore, #tpu.memory_space<semaphore_mem>> -> memref<1x!tpu.dma_semaphore, #tpu.memory_space<semaphore_mem>>
    %25 = tpu.memref_squeeze %24 : memref<1x!tpu.dma_semaphore, #tpu.memory_space<semaphore_mem>> -> memref<!tpu.dma_semaphore, #tpu.memory_space<semaphore_mem>>
    tpu.enqueue_dma source(%22 : memref<24x784xf32, #tpu.memory_space<any>>) target(%23 : memref<24x784xf32, #tpu.memory_space<vmem>>) target_semaphore(%25 : memref<!tpu.dma_semaphore, #tpu.memory_space<semaphore_mem>>)
    %c6_i32 = arith.constant 6 : i32
    %c144_i32 = arith.constant 144 : i32
    %c0_i32_20 = arith.constant 0 : i32
    %26 = tpu.memref_slice %arg0[%c144_i32, %c0_i32_20] : memref<168x784xf32, #tpu.memory_space<any>> -> memref<24x784xf32, #tpu.memory_space<any>>
    %c144_i32_21 = arith.constant 144 : i32
    %c0_i32_22 = arith.constant 0 : i32
    %27 = tpu.memref_slice %arg4[%c144_i32_21, %c0_i32_22] : memref<168x784xf32, #tpu.memory_space<vmem>> -> memref<24x784xf32, #tpu.memory_space<vmem>>
    %28 = tpu.memref_slice %arg8[%c6_i32] : memref<7x!tpu.dma_semaphore, #tpu.memory_space<semaphore_mem>> -> memref<1x!tpu.dma_semaphore, #tpu.memory_space<semaphore_mem>>
    %29 = tpu.memref_squeeze %28 : memref<1x!tpu.dma_semaphore, #tpu.memory_space<semaphore_mem>> -> memref<!tpu.dma_semaphore, #tpu.memory_space<semaphore_mem>>
    tpu.enqueue_dma source(%26 : memref<24x784xf32, #tpu.memory_space<any>>) target(%27 : memref<24x784xf32, #tpu.memory_space<vmem>>) target_semaphore(%29 : memref<!tpu.dma_semaphore, #tpu.memory_space<semaphore_mem>>)
    %c1_i32_23 = arith.constant 1 : i32
    %30 = tpu.memref_slice %arg10[%c1_i32_23] : memref<2x!tpu.dma_semaphore, #tpu.memory_space<semaphore_mem>> -> memref<1x!tpu.dma_semaphore, #tpu.memory_space<semaphore_mem>>
    %31 = tpu.memref_squeeze %30 : memref<1x!tpu.dma_semaphore, #tpu.memory_space<semaphore_mem>> -> memref<!tpu.dma_semaphore, #tpu.memory_space<semaphore_mem>>
    tpu.enqueue_dma source(%arg1 : memref<168x168xf32, #tpu.memory_space<any>>) target(%arg6 : memref<168x168xf32, #tpu.memory_space<vmem>>) target_semaphore(%31 : memref<!tpu.dma_semaphore, #tpu.memory_space<semaphore_mem>>)
    %c0_i32_24 = arith.constant 0 : i32
    %32 = tpu.memref_slice %arg10[%c0_i32_24] : memref<2x!tpu.dma_semaphore, #tpu.memory_space<semaphore_mem>> -> memref<1x!tpu.dma_semaphore, #tpu.memory_space<semaphore_mem>>
    %33 = tpu.memref_squeeze %32 : memref<1x!tpu.dma_semaphore, #tpu.memory_space<semaphore_mem>> -> memref<!tpu.dma_semaphore, #tpu.memory_space<semaphore_mem>>
    tpu.wait_dma2 semaphore(%33 : memref<!tpu.dma_semaphore, #tpu.memory_space<semaphore_mem>>) src(%arg2 : memref<168x4xf32, #tpu.memory_space<any>>) dst(%arg7 : memref<168x4xf32, #tpu.memory_space<vmem>>)
    %c0_i32_25 = arith.constant 0 : i32
    %c0_i32_26 = arith.constant 0 : i32
    %c0_i32_27 = arith.constant 0 : i32
    %34 = tpu.memref_slice %arg0[%c0_i32_26, %c0_i32_27] : memref<168x784xf32, #tpu.memory_space<any>> -> memref<24x784xf32, #tpu.memory_space<any>>
    %c0_i32_28 = arith.constant 0 : i32
    %c0_i32_29 = arith.constant 0 : i32
    %35 = tpu.memref_slice %arg4[%c0_i32_28, %c0_i32_29] : memref<168x784xf32, #tpu.memory_space<vmem>> -> memref<24x784xf32, #tpu.memory_space<vmem>>
    %36 = tpu.memref_slice %arg8[%c0_i32_25] : memref<7x!tpu.dma_semaphore, #tpu.memory_space<semaphore_mem>> -> memref<1x!tpu.dma_semaphore, #tpu.memory_space<semaphore_mem>>
    %37 = tpu.memref_squeeze %36 : memref<1x!tpu.dma_semaphore, #tpu.memory_space<semaphore_mem>> -> memref<!tpu.dma_semaphore, #tpu.memory_space<semaphore_mem>>
    tpu.wait_dma2 semaphore(%37 : memref<!tpu.dma_semaphore, #tpu.memory_space<semaphore_mem>>) src(%34 : memref<24x784xf32, #tpu.memory_space<any>>) dst(%35 : memref<24x784xf32, #tpu.memory_space<vmem>>)
    %c0 = arith.constant 0 : index
    %c0_30 = arith.constant 0 : index
    %38 = vector.load %arg4[%c0, %c0_30] : memref<168x784xf32, #tpu.memory_space<vmem>>, vector<24x784xf32>
    %cst = arith.constant dense<0.000000e+00> : vector<24xf32>
    %39 = vector.multi_reduction <add>, %38, %cst [1] : vector<24x784xf32> to vector<24xf32>
    %40 = vector.shape_cast %39 : vector<24xf32> to vector<24x1xf32>
    %41 = arith.mulf %38, %38 : vector<24x784xf32>
    %cst_31 = arith.constant dense<0.000000e+00> : vector<24xf32>
    %42 = vector.multi_reduction <add>, %41, %cst_31 [1] : vector<24x784xf32> to vector<24xf32>
    %43 = vector.shape_cast %42 : vector<24xf32> to vector<24x1xf32>
    %cst_32 = arith.constant 0.00127551018 : f32
    %44 = vector.broadcast %cst_32 : f32 to vector<24x1xf32>
    %45 = arith.mulf %40, %44 : vector<24x1xf32>
    %cst_33 = arith.constant 0.00127551018 : f32
    %46 = vector.broadcast %cst_33 : f32 to vector<24x1xf32>
    %47 = arith.mulf %43, %46 : vector<24x1xf32>
    %48 = arith.mulf %45, %45 : vector<24x1xf32>
    %49 = arith.subf %47, %48 : vector<24x1xf32>
    %cst_34 = arith.constant 0.000000e+00 : f32
    %50 = vector.broadcast %cst_34 : f32 to vector<24x1xf32>
    %51 = arith.maximumf %49, %50 : vector<24x1xf32>
    %c0_35 = arith.constant 0 : index
    %c0_36 = arith.constant 0 : index
    %52 = vector.load %arg7[%c0_35, %c0_36] : memref<168x4xf32, #tpu.memory_space<vmem>>, vector<24x1xf32>
    %c0_37 = arith.constant 0 : index
    %c1 = arith.constant 1 : index
    %53 = vector.load %arg7[%c0_37, %c1] : memref<168x4xf32, #tpu.memory_space<vmem>>, vector<24x1xf32>
    %cst_38 = arith.constant 9.99999974E-6 : f32
    %54 = vector.broadcast %cst_38 : f32 to vector<24x1xf32>
    %55 = arith.addf %51, %54 : vector<24x1xf32>
    %56 = math.rsqrt %55 : vector<24x1xf32>
    %57 = arith.mulf %52, %56 : vector<24x1xf32>
    %58 = arith.mulf %45, %57 : vector<24x1xf32>
    %59 = arith.subf %53, %58 : vector<24x1xf32>
    %60 = vector.broadcast %57 : vector<24x1xf32> to vector<24x784xf32>
    %61 = arith.mulf %38, %60 : vector<24x784xf32>
    %62 = vector.broadcast %59 : vector<24x1xf32> to vector<24x784xf32>
    %63 = arith.addf %61, %62 : vector<24x784xf32>
    %cst_39 = arith.constant 0.000000e+00 : f32
    %64 = vector.broadcast %cst_39 : f32 to vector<24x784xf32>
    %65 = arith.maximumf %63, %64 : vector<24x784xf32>
    %c0_40 = arith.constant 0 : index
    %c0_41 = arith.constant 0 : index
    %66 = vector.load %arg4[%c0_40, %c0_41] : memref<168x784xf32, #tpu.memory_space<vmem>>, vector<24x784xf32>
    tpu.vector_store %arg4[%c0_40, %c0_41], %65 {strides = array<i32>} : memref<168x784xf32, #tpu.memory_space<vmem>>, vector<24x784xf32>,
    %c1_i32_42 = arith.constant 1 : i32
    %c24_i32_43 = arith.constant 24 : i32
    %c0_i32_44 = arith.constant 0 : i32
    %67 = tpu.memref_slice %arg0[%c24_i32_43, %c0_i32_44] : memref<168x784xf32, #tpu.memory_space<any>> -> memref<24x784xf32, #tpu.memory_space<any>>
    %c24_i32_45 = arith.constant 24 : i32
    %c0_i32_46 = arith.constant 0 : i32
    %68 = tpu.memref_slice %arg4[%c24_i32_45, %c0_i32_46] : memref<168x784xf32, #tpu.memory_space<vmem>> -> memref<24x784xf32, #tpu.memory_space<vmem>>
    %69 = tpu.memref_slice %arg8[%c1_i32_42] : memref<7x!tpu.dma_semaphore, #tpu.memory_space<semaphore_mem>> -> memref<1x!tpu.dma_semaphore, #tpu.memory_space<semaphore_mem>>
    %70 = tpu.memref_squeeze %69 : memref<1x!tpu.dma_semaphore, #tpu.memory_space<semaphore_mem>> -> memref<!tpu.dma_semaphore, #tpu.memory_space<semaphore_mem>>
    tpu.wait_dma2 semaphore(%70 : memref<!tpu.dma_semaphore, #tpu.memory_space<semaphore_mem>>) src(%67 : memref<24x784xf32, #tpu.memory_space<any>>) dst(%68 : memref<24x784xf32, #tpu.memory_space<vmem>>)
    %c24 = arith.constant 24 : index
    %c0_47 = arith.constant 0 : index
    %71 = vector.load %arg4[%c24, %c0_47] : memref<168x784xf32, #tpu.memory_space<vmem>>, vector<24x784xf32>
    %cst_48 = arith.constant dense<0.000000e+00> : vector<24xf32>
    %72 = vector.multi_reduction <add>, %71, %cst_48 [1] : vector<24x784xf32> to vector<24xf32>
    %73 = vector.shape_cast %72 : vector<24xf32> to vector<24x1xf32>
    %74 = arith.mulf %71, %71 : vector<24x784xf32>
    %cst_49 = arith.constant dense<0.000000e+00> : vector<24xf32>
    %75 = vector.multi_reduction <add>, %74, %cst_49 [1] : vector<24x784xf32> to vector<24xf32>
    %76 = vector.shape_cast %75 : vector<24xf32> to vector<24x1xf32>
    %cst_50 = arith.constant 0.00127551018 : f32
    %77 = vector.broadcast %cst_50 : f32 to vector<24x1xf32>
    %78 = arith.mulf %73, %77 : vector<24x1xf32>
    %cst_51 = arith.constant 0.00127551018 : f32
    %79 = vector.broadcast %cst_51 : f32 to vector<24x1xf32>
    %80 = arith.mulf %76, %79 : vector<24x1xf32>
    %81 = arith.mulf %78, %78 : vector<24x1xf32>
    %82 = arith.subf %80, %81 : vector<24x1xf32>
    %cst_52 = arith.constant 0.000000e+00 : f32
    %83 = vector.broadcast %cst_52 : f32 to vector<24x1xf32>
    %84 = arith.maximumf %82, %83 : vector<24x1xf32>
    %c24_53 = arith.constant 24 : index
    %c0_54 = arith.constant 0 : index
    %85 = vector.load %arg7[%c24_53, %c0_54] : memref<168x4xf32, #tpu.memory_space<vmem>>, vector<24x1xf32>
    %c24_55 = arith.constant 24 : index
    %c1_56 = arith.constant 1 : index
    %86 = vector.load %arg7[%c24_55, %c1_56] : memref<168x4xf32, #tpu.memory_space<vmem>>, vector<24x1xf32>
    %cst_57 = arith.constant 9.99999974E-6 : f32
    %87 = vector.broadcast %cst_57 : f32 to vector<24x1xf32>
    %88 = arith.addf %84, %87 : vector<24x1xf32>
    %89 = math.rsqrt %88 : vector<24x1xf32>
    %90 = arith.mulf %85, %89 : vector<24x1xf32>
    %91 = arith.mulf %78, %90 : vector<24x1xf32>
    %92 = arith.subf %86, %91 : vector<24x1xf32>
    %93 = vector.broadcast %90 : vector<24x1xf32> to vector<24x784xf32>
    %94 = arith.mulf %71, %93 : vector<24x784xf32>
    %95 = vector.broadcast %92 : vector<24x1xf32> to vector<24x784xf32>
    %96 = arith.addf %94, %95 : vector<24x784xf32>
    %cst_58 = arith.constant 0.000000e+00 : f32
    %97 = vector.broadcast %cst_58 : f32 to vector<24x784xf32>
    %98 = arith.maximumf %96, %97 : vector<24x784xf32>
    %c24_59 = arith.constant 24 : index
    %c0_60 = arith.constant 0 : index
    %99 = vector.load %arg4[%c24_59, %c0_60] : memref<168x784xf32, #tpu.memory_space<vmem>>, vector<24x784xf32>
    tpu.vector_store %arg4[%c24_59, %c0_60], %98 {strides = array<i32>} : memref<168x784xf32, #tpu.memory_space<vmem>>, vector<24x784xf32>,
    %c2_i32_61 = arith.constant 2 : i32
    %c48_i32_62 = arith.constant 48 : i32
    %c0_i32_63 = arith.constant 0 : i32
    %100 = tpu.memref_slice %arg0[%c48_i32_62, %c0_i32_63] : memref<168x784xf32, #tpu.memory_space<any>> -> memref<24x784xf32, #tpu.memory_space<any>>
    %c48_i32_64 = arith.constant 48 : i32
    %c0_i32_65 = arith.constant 0 : i32
    %101 = tpu.memref_slice %arg4[%c48_i32_64, %c0_i32_65] : memref<168x784xf32, #tpu.memory_space<vmem>> -> memref<24x784xf32, #tpu.memory_space<vmem>>
    %102 = tpu.memref_slice %arg8[%c2_i32_61] : memref<7x!tpu.dma_semaphore, #tpu.memory_space<semaphore_mem>> -> memref<1x!tpu.dma_semaphore, #tpu.memory_space<semaphore_mem>>
    %103 = tpu.memref_squeeze %102 : memref<1x!tpu.dma_semaphore, #tpu.memory_space<semaphore_mem>> -> memref<!tpu.dma_semaphore, #tpu.memory_space<semaphore_mem>>
    tpu.wait_dma2 semaphore(%103 : memref<!tpu.dma_semaphore, #tpu.memory_space<semaphore_mem>>) src(%100 : memref<24x784xf32, #tpu.memory_space<any>>) dst(%101 : memref<24x784xf32, #tpu.memory_space<vmem>>)
    %c48 = arith.constant 48 : index
    %c0_66 = arith.constant 0 : index
    %104 = vector.load %arg4[%c48, %c0_66] : memref<168x784xf32, #tpu.memory_space<vmem>>, vector<24x784xf32>
    %cst_67 = arith.constant dense<0.000000e+00> : vector<24xf32>
    %105 = vector.multi_reduction <add>, %104, %cst_67 [1] : vector<24x784xf32> to vector<24xf32>
    %106 = vector.shape_cast %105 : vector<24xf32> to vector<24x1xf32>
    %107 = arith.mulf %104, %104 : vector<24x784xf32>
    %cst_68 = arith.constant dense<0.000000e+00> : vector<24xf32>
    %108 = vector.multi_reduction <add>, %107, %cst_68 [1] : vector<24x784xf32> to vector<24xf32>
    %109 = vector.shape_cast %108 : vector<24xf32> to vector<24x1xf32>
    %cst_69 = arith.constant 0.00127551018 : f32
    %110 = vector.broadcast %cst_69 : f32 to vector<24x1xf32>
    %111 = arith.mulf %106, %110 : vector<24x1xf32>
    %cst_70 = arith.constant 0.00127551018 : f32
    %112 = vector.broadcast %cst_70 : f32 to vector<24x1xf32>
    %113 = arith.mulf %109, %112 : vector<24x1xf32>
    %114 = arith.mulf %111, %111 : vector<24x1xf32>
    %115 = arith.subf %113, %114 : vector<24x1xf32>
    %cst_71 = arith.constant 0.000000e+00 : f32
    %116 = vector.broadcast %cst_71 : f32 to vector<24x1xf32>
    %117 = arith.maximumf %115, %116 : vector<24x1xf32>
    %c48_72 = arith.constant 48 : index
    %c0_73 = arith.constant 0 : index
    %118 = vector.load %arg7[%c48_72, %c0_73] : memref<168x4xf32, #tpu.memory_space<vmem>>, vector<24x1xf32>
    %c48_74 = arith.constant 48 : index
    %c1_75 = arith.constant 1 : index
    %119 = vector.load %arg7[%c48_74, %c1_75] : memref<168x4xf32, #tpu.memory_space<vmem>>, vector<24x1xf32>
    %cst_76 = arith.constant 9.99999974E-6 : f32
    %120 = vector.broadcast %cst_76 : f32 to vector<24x1xf32>
    %121 = arith.addf %117, %120 : vector<24x1xf32>
    %122 = math.rsqrt %121 : vector<24x1xf32>
    %123 = arith.mulf %118, %122 : vector<24x1xf32>
    %124 = arith.mulf %111, %123 : vector<24x1xf32>
    %125 = arith.subf %119, %124 : vector<24x1xf32>
    %126 = vector.broadcast %123 : vector<24x1xf32> to vector<24x784xf32>
    %127 = arith.mulf %104, %126 : vector<24x784xf32>
    %128 = vector.broadcast %125 : vector<24x1xf32> to vector<24x784xf32>
    %129 = arith.addf %127, %128 : vector<24x784xf32>
    %cst_77 = arith.constant 0.000000e+00 : f32
    %130 = vector.broadcast %cst_77 : f32 to vector<24x784xf32>
    %131 = arith.maximumf %129, %130 : vector<24x784xf32>
    %c48_78 = arith.constant 48 : index
    %c0_79 = arith.constant 0 : index
    %132 = vector.load %arg4[%c48_78, %c0_79] : memref<168x784xf32, #tpu.memory_space<vmem>>, vector<24x784xf32>
    tpu.vector_store %arg4[%c48_78, %c0_79], %131 {strides = array<i32>} : memref<168x784xf32, #tpu.memory_space<vmem>>, vector<24x784xf32>,
    %c3_i32_80 = arith.constant 3 : i32
    %c72_i32_81 = arith.constant 72 : i32
    %c0_i32_82 = arith.constant 0 : i32
    %133 = tpu.memref_slice %arg0[%c72_i32_81, %c0_i32_82] : memref<168x784xf32, #tpu.memory_space<any>> -> memref<24x784xf32, #tpu.memory_space<any>>
    %c72_i32_83 = arith.constant 72 : i32
    %c0_i32_84 = arith.constant 0 : i32
    %134 = tpu.memref_slice %arg4[%c72_i32_83, %c0_i32_84] : memref<168x784xf32, #tpu.memory_space<vmem>> -> memref<24x784xf32, #tpu.memory_space<vmem>>
    %135 = tpu.memref_slice %arg8[%c3_i32_80] : memref<7x!tpu.dma_semaphore, #tpu.memory_space<semaphore_mem>> -> memref<1x!tpu.dma_semaphore, #tpu.memory_space<semaphore_mem>>
    %136 = tpu.memref_squeeze %135 : memref<1x!tpu.dma_semaphore, #tpu.memory_space<semaphore_mem>> -> memref<!tpu.dma_semaphore, #tpu.memory_space<semaphore_mem>>
    tpu.wait_dma2 semaphore(%136 : memref<!tpu.dma_semaphore, #tpu.memory_space<semaphore_mem>>) src(%133 : memref<24x784xf32, #tpu.memory_space<any>>) dst(%134 : memref<24x784xf32, #tpu.memory_space<vmem>>)
    %c72 = arith.constant 72 : index
    %c0_85 = arith.constant 0 : index
    %137 = vector.load %arg4[%c72, %c0_85] : memref<168x784xf32, #tpu.memory_space<vmem>>, vector<24x784xf32>
    %cst_86 = arith.constant dense<0.000000e+00> : vector<24xf32>
    %138 = vector.multi_reduction <add>, %137, %cst_86 [1] : vector<24x784xf32> to vector<24xf32>
    %139 = vector.shape_cast %138 : vector<24xf32> to vector<24x1xf32>
    %140 = arith.mulf %137, %137 : vector<24x784xf32>
    %cst_87 = arith.constant dense<0.000000e+00> : vector<24xf32>
    %141 = vector.multi_reduction <add>, %140, %cst_87 [1] : vector<24x784xf32> to vector<24xf32>
    %142 = vector.shape_cast %141 : vector<24xf32> to vector<24x1xf32>
    %cst_88 = arith.constant 0.00127551018 : f32
    %143 = vector.broadcast %cst_88 : f32 to vector<24x1xf32>
    %144 = arith.mulf %139, %143 : vector<24x1xf32>
    %cst_89 = arith.constant 0.00127551018 : f32
    %145 = vector.broadcast %cst_89 : f32 to vector<24x1xf32>
    %146 = arith.mulf %142, %145 : vector<24x1xf32>
    %147 = arith.mulf %144, %144 : vector<24x1xf32>
    %148 = arith.subf %146, %147 : vector<24x1xf32>
    %cst_90 = arith.constant 0.000000e+00 : f32
    %149 = vector.broadcast %cst_90 : f32 to vector<24x1xf32>
    %150 = arith.maximumf %148, %149 : vector<24x1xf32>
    %c72_91 = arith.constant 72 : index
    %c0_92 = arith.constant 0 : index
    %151 = vector.load %arg7[%c72_91, %c0_92] : memref<168x4xf32, #tpu.memory_space<vmem>>, vector<24x1xf32>
    %c72_93 = arith.constant 72 : index
    %c1_94 = arith.constant 1 : index
    %152 = vector.load %arg7[%c72_93, %c1_94] : memref<168x4xf32, #tpu.memory_space<vmem>>, vector<24x1xf32>
    %cst_95 = arith.constant 9.99999974E-6 : f32
    %153 = vector.broadcast %cst_95 : f32 to vector<24x1xf32>
    %154 = arith.addf %150, %153 : vector<24x1xf32>
    %155 = math.rsqrt %154 : vector<24x1xf32>
    %156 = arith.mulf %151, %155 : vector<24x1xf32>
    %157 = arith.mulf %144, %156 : vector<24x1xf32>
    %158 = arith.subf %152, %157 : vector<24x1xf32>
    %159 = vector.broadcast %156 : vector<24x1xf32> to vector<24x784xf32>
    %160 = arith.mulf %137, %159 : vector<24x784xf32>
    %161 = vector.broadcast %158 : vector<24x1xf32> to vector<24x784xf32>
    %162 = arith.addf %160, %161 : vector<24x784xf32>
    %cst_96 = arith.constant 0.000000e+00 : f32
    %163 = vector.broadcast %cst_96 : f32 to vector<24x784xf32>
    %164 = arith.maximumf %162, %163 : vector<24x784xf32>
    %c72_97 = arith.constant 72 : index
    %c0_98 = arith.constant 0 : index
    %165 = vector.load %arg4[%c72_97, %c0_98] : memref<168x784xf32, #tpu.memory_space<vmem>>, vector<24x784xf32>
    tpu.vector_store %arg4[%c72_97, %c0_98], %164 {strides = array<i32>} : memref<168x784xf32, #tpu.memory_space<vmem>>, vector<24x784xf32>,
    %c4_i32_99 = arith.constant 4 : i32
    %c96_i32_100 = arith.constant 96 : i32
    %c0_i32_101 = arith.constant 0 : i32
    %166 = tpu.memref_slice %arg0[%c96_i32_100, %c0_i32_101] : memref<168x784xf32, #tpu.memory_space<any>> -> memref<24x784xf32, #tpu.memory_space<any>>
    %c96_i32_102 = arith.constant 96 : i32
    %c0_i32_103 = arith.constant 0 : i32
    %167 = tpu.memref_slice %arg4[%c96_i32_102, %c0_i32_103] : memref<168x784xf32, #tpu.memory_space<vmem>> -> memref<24x784xf32, #tpu.memory_space<vmem>>
    %168 = tpu.memref_slice %arg8[%c4_i32_99] : memref<7x!tpu.dma_semaphore, #tpu.memory_space<semaphore_mem>> -> memref<1x!tpu.dma_semaphore, #tpu.memory_space<semaphore_mem>>
    %169 = tpu.memref_squeeze %168 : memref<1x!tpu.dma_semaphore, #tpu.memory_space<semaphore_mem>> -> memref<!tpu.dma_semaphore, #tpu.memory_space<semaphore_mem>>
    tpu.wait_dma2 semaphore(%169 : memref<!tpu.dma_semaphore, #tpu.memory_space<semaphore_mem>>) src(%166 : memref<24x784xf32, #tpu.memory_space<any>>) dst(%167 : memref<24x784xf32, #tpu.memory_space<vmem>>)
    %c96 = arith.constant 96 : index
    %c0_104 = arith.constant 0 : index
    %170 = vector.load %arg4[%c96, %c0_104] : memref<168x784xf32, #tpu.memory_space<vmem>>, vector<24x784xf32>
    %cst_105 = arith.constant dense<0.000000e+00> : vector<24xf32>
    %171 = vector.multi_reduction <add>, %170, %cst_105 [1] : vector<24x784xf32> to vector<24xf32>
    %172 = vector.shape_cast %171 : vector<24xf32> to vector<24x1xf32>
    %173 = arith.mulf %170, %170 : vector<24x784xf32>
    %cst_106 = arith.constant dense<0.000000e+00> : vector<24xf32>
    %174 = vector.multi_reduction <add>, %173, %cst_106 [1] : vector<24x784xf32> to vector<24xf32>
    %175 = vector.shape_cast %174 : vector<24xf32> to vector<24x1xf32>
    %cst_107 = arith.constant 0.00127551018 : f32
    %176 = vector.broadcast %cst_107 : f32 to vector<24x1xf32>
    %177 = arith.mulf %172, %176 : vector<24x1xf32>
    %cst_108 = arith.constant 0.00127551018 : f32
    %178 = vector.broadcast %cst_108 : f32 to vector<24x1xf32>
    %179 = arith.mulf %175, %178 : vector<24x1xf32>
    %180 = arith.mulf %177, %177 : vector<24x1xf32>
    %181 = arith.subf %179, %180 : vector<24x1xf32>
    %cst_109 = arith.constant 0.000000e+00 : f32
    %182 = vector.broadcast %cst_109 : f32 to vector<24x1xf32>
    %183 = arith.maximumf %181, %182 : vector<24x1xf32>
    %c96_110 = arith.constant 96 : index
    %c0_111 = arith.constant 0 : index
    %184 = vector.load %arg7[%c96_110, %c0_111] : memref<168x4xf32, #tpu.memory_space<vmem>>, vector<24x1xf32>
    %c96_112 = arith.constant 96 : index
    %c1_113 = arith.constant 1 : index
    %185 = vector.load %arg7[%c96_112, %c1_113] : memref<168x4xf32, #tpu.memory_space<vmem>>, vector<24x1xf32>
    %cst_114 = arith.constant 9.99999974E-6 : f32
    %186 = vector.broadcast %cst_114 : f32 to vector<24x1xf32>
    %187 = arith.addf %183, %186 : vector<24x1xf32>
    %188 = math.rsqrt %187 : vector<24x1xf32>
    %189 = arith.mulf %184, %188 : vector<24x1xf32>
    %190 = arith.mulf %177, %189 : vector<24x1xf32>
    %191 = arith.subf %185, %190 : vector<24x1xf32>
    %192 = vector.broadcast %189 : vector<24x1xf32> to vector<24x784xf32>
    %193 = arith.mulf %170, %192 : vector<24x784xf32>
    %194 = vector.broadcast %191 : vector<24x1xf32> to vector<24x784xf32>
    %195 = arith.addf %193, %194 : vector<24x784xf32>
    %cst_115 = arith.constant 0.000000e+00 : f32
    %196 = vector.broadcast %cst_115 : f32 to vector<24x784xf32>
    %197 = arith.maximumf %195, %196 : vector<24x784xf32>
    %c96_116 = arith.constant 96 : index
    %c0_117 = arith.constant 0 : index
    %198 = vector.load %arg4[%c96_116, %c0_117] : memref<168x784xf32, #tpu.memory_space<vmem>>, vector<24x784xf32>
    tpu.vector_store %arg4[%c96_116, %c0_117], %197 {strides = array<i32>} : memref<168x784xf32, #tpu.memory_space<vmem>>, vector<24x784xf32>,
    %c5_i32_118 = arith.constant 5 : i32
    %c120_i32_119 = arith.constant 120 : i32
    %c0_i32_120 = arith.constant 0 : i32
    %199 = tpu.memref_slice %arg0[%c120_i32_119, %c0_i32_120] : memref<168x784xf32, #tpu.memory_space<any>> -> memref<24x784xf32, #tpu.memory_space<any>>
    %c120_i32_121 = arith.constant 120 : i32
    %c0_i32_122 = arith.constant 0 : i32
    %200 = tpu.memref_slice %arg4[%c120_i32_121, %c0_i32_122] : memref<168x784xf32, #tpu.memory_space<vmem>> -> memref<24x784xf32, #tpu.memory_space<vmem>>
    %201 = tpu.memref_slice %arg8[%c5_i32_118] : memref<7x!tpu.dma_semaphore, #tpu.memory_space<semaphore_mem>> -> memref<1x!tpu.dma_semaphore, #tpu.memory_space<semaphore_mem>>
    %202 = tpu.memref_squeeze %201 : memref<1x!tpu.dma_semaphore, #tpu.memory_space<semaphore_mem>> -> memref<!tpu.dma_semaphore, #tpu.memory_space<semaphore_mem>>
    tpu.wait_dma2 semaphore(%202 : memref<!tpu.dma_semaphore, #tpu.memory_space<semaphore_mem>>) src(%199 : memref<24x784xf32, #tpu.memory_space<any>>) dst(%200 : memref<24x784xf32, #tpu.memory_space<vmem>>)
    %c120 = arith.constant 120 : index
    %c0_123 = arith.constant 0 : index
    %203 = vector.load %arg4[%c120, %c0_123] : memref<168x784xf32, #tpu.memory_space<vmem>>, vector<24x784xf32>
    %cst_124 = arith.constant dense<0.000000e+00> : vector<24xf32>
    %204 = vector.multi_reduction <add>, %203, %cst_124 [1] : vector<24x784xf32> to vector<24xf32>
    %205 = vector.shape_cast %204 : vector<24xf32> to vector<24x1xf32>
    %206 = arith.mulf %203, %203 : vector<24x784xf32>
    %cst_125 = arith.constant dense<0.000000e+00> : vector<24xf32>
    %207 = vector.multi_reduction <add>, %206, %cst_125 [1] : vector<24x784xf32> to vector<24xf32>
    %208 = vector.shape_cast %207 : vector<24xf32> to vector<24x1xf32>
    %cst_126 = arith.constant 0.00127551018 : f32
    %209 = vector.broadcast %cst_126 : f32 to vector<24x1xf32>
    %210 = arith.mulf %205, %209 : vector<24x1xf32>
    %cst_127 = arith.constant 0.00127551018 : f32
    %211 = vector.broadcast %cst_127 : f32 to vector<24x1xf32>
    %212 = arith.mulf %208, %211 : vector<24x1xf32>
    %213 = arith.mulf %210, %210 : vector<24x1xf32>
    %214 = arith.subf %212, %213 : vector<24x1xf32>
    %cst_128 = arith.constant 0.000000e+00 : f32
    %215 = vector.broadcast %cst_128 : f32 to vector<24x1xf32>
    %216 = arith.maximumf %214, %215 : vector<24x1xf32>
    %c120_129 = arith.constant 120 : index
    %c0_130 = arith.constant 0 : index
    %217 = vector.load %arg7[%c120_129, %c0_130] : memref<168x4xf32, #tpu.memory_space<vmem>>, vector<24x1xf32>
    %c120_131 = arith.constant 120 : index
    %c1_132 = arith.constant 1 : index
    %218 = vector.load %arg7[%c120_131, %c1_132] : memref<168x4xf32, #tpu.memory_space<vmem>>, vector<24x1xf32>
    %cst_133 = arith.constant 9.99999974E-6 : f32
    %219 = vector.broadcast %cst_133 : f32 to vector<24x1xf32>
    %220 = arith.addf %216, %219 : vector<24x1xf32>
    %221 = math.rsqrt %220 : vector<24x1xf32>
    %222 = arith.mulf %217, %221 : vector<24x1xf32>
    %223 = arith.mulf %210, %222 : vector<24x1xf32>
    %224 = arith.subf %218, %223 : vector<24x1xf32>
    %225 = vector.broadcast %222 : vector<24x1xf32> to vector<24x784xf32>
    %226 = arith.mulf %203, %225 : vector<24x784xf32>
    %227 = vector.broadcast %224 : vector<24x1xf32> to vector<24x784xf32>
    %228 = arith.addf %226, %227 : vector<24x784xf32>
    %cst_134 = arith.constant 0.000000e+00 : f32
    %229 = vector.broadcast %cst_134 : f32 to vector<24x784xf32>
    %230 = arith.maximumf %228, %229 : vector<24x784xf32>
    %c120_135 = arith.constant 120 : index
    %c0_136 = arith.constant 0 : index
    %231 = vector.load %arg4[%c120_135, %c0_136] : memref<168x784xf32, #tpu.memory_space<vmem>>, vector<24x784xf32>
    tpu.vector_store %arg4[%c120_135, %c0_136], %230 {strides = array<i32>} : memref<168x784xf32, #tpu.memory_space<vmem>>, vector<24x784xf32>,
    %c6_i32_137 = arith.constant 6 : i32
    %c144_i32_138 = arith.constant 144 : i32
    %c0_i32_139 = arith.constant 0 : i32
    %232 = tpu.memref_slice %arg0[%c144_i32_138, %c0_i32_139] : memref<168x784xf32, #tpu.memory_space<any>> -> memref<24x784xf32, #tpu.memory_space<any>>
    %c144_i32_140 = arith.constant 144 : i32
    %c0_i32_141 = arith.constant 0 : i32
    %233 = tpu.memref_slice %arg4[%c144_i32_140, %c0_i32_141] : memref<168x784xf32, #tpu.memory_space<vmem>> -> memref<24x784xf32, #tpu.memory_space<vmem>>
    %234 = tpu.memref_slice %arg8[%c6_i32_137] : memref<7x!tpu.dma_semaphore, #tpu.memory_space<semaphore_mem>> -> memref<1x!tpu.dma_semaphore, #tpu.memory_space<semaphore_mem>>
    %235 = tpu.memref_squeeze %234 : memref<1x!tpu.dma_semaphore, #tpu.memory_space<semaphore_mem>> -> memref<!tpu.dma_semaphore, #tpu.memory_space<semaphore_mem>>
    tpu.wait_dma2 semaphore(%235 : memref<!tpu.dma_semaphore, #tpu.memory_space<semaphore_mem>>) src(%232 : memref<24x784xf32, #tpu.memory_space<any>>) dst(%233 : memref<24x784xf32, #tpu.memory_space<vmem>>)
    %c144 = arith.constant 144 : index
    %c0_142 = arith.constant 0 : index
    %236 = vector.load %arg4[%c144, %c0_142] : memref<168x784xf32, #tpu.memory_space<vmem>>, vector<24x784xf32>
    %cst_143 = arith.constant dense<0.000000e+00> : vector<24xf32>
    %237 = vector.multi_reduction <add>, %236, %cst_143 [1] : vector<24x784xf32> to vector<24xf32>
    %238 = vector.shape_cast %237 : vector<24xf32> to vector<24x1xf32>
    %239 = arith.mulf %236, %236 : vector<24x784xf32>
    %cst_144 = arith.constant dense<0.000000e+00> : vector<24xf32>
    %240 = vector.multi_reduction <add>, %239, %cst_144 [1] : vector<24x784xf32> to vector<24xf32>
    %241 = vector.shape_cast %240 : vector<24xf32> to vector<24x1xf32>
    %cst_145 = arith.constant 0.00127551018 : f32
    %242 = vector.broadcast %cst_145 : f32 to vector<24x1xf32>
    %243 = arith.mulf %238, %242 : vector<24x1xf32>
    %cst_146 = arith.constant 0.00127551018 : f32
    %244 = vector.broadcast %cst_146 : f32 to vector<24x1xf32>
    %245 = arith.mulf %241, %244 : vector<24x1xf32>
    %246 = arith.mulf %243, %243 : vector<24x1xf32>
    %247 = arith.subf %245, %246 : vector<24x1xf32>
    %cst_147 = arith.constant 0.000000e+00 : f32
    %248 = vector.broadcast %cst_147 : f32 to vector<24x1xf32>
    %249 = arith.maximumf %247, %248 : vector<24x1xf32>
    %c144_148 = arith.constant 144 : index
    %c0_149 = arith.constant 0 : index
    %250 = vector.load %arg7[%c144_148, %c0_149] : memref<168x4xf32, #tpu.memory_space<vmem>>, vector<24x1xf32>
    %c144_150 = arith.constant 144 : index
    %c1_151 = arith.constant 1 : index
    %251 = vector.load %arg7[%c144_150, %c1_151] : memref<168x4xf32, #tpu.memory_space<vmem>>, vector<24x1xf32>
    %cst_152 = arith.constant 9.99999974E-6 : f32
    %252 = vector.broadcast %cst_152 : f32 to vector<24x1xf32>
    %253 = arith.addf %249, %252 : vector<24x1xf32>
    %254 = math.rsqrt %253 : vector<24x1xf32>
    %255 = arith.mulf %250, %254 : vector<24x1xf32>
    %256 = arith.mulf %243, %255 : vector<24x1xf32>
    %257 = arith.subf %251, %256 : vector<24x1xf32>
    %258 = vector.broadcast %255 : vector<24x1xf32> to vector<24x784xf32>
    %259 = arith.mulf %236, %258 : vector<24x784xf32>
    %260 = vector.broadcast %257 : vector<24x1xf32> to vector<24x784xf32>
    %261 = arith.addf %259, %260 : vector<24x784xf32>
    %cst_153 = arith.constant 0.000000e+00 : f32
    %262 = vector.broadcast %cst_153 : f32 to vector<24x784xf32>
    %263 = arith.maximumf %261, %262 : vector<24x784xf32>
    %c144_154 = arith.constant 144 : index
    %c0_155 = arith.constant 0 : index
    %264 = vector.load %arg4[%c144_154, %c0_155] : memref<168x784xf32, #tpu.memory_space<vmem>>, vector<24x784xf32>
    tpu.vector_store %arg4[%c144_154, %c0_155], %263 {strides = array<i32>} : memref<168x784xf32, #tpu.memory_space<vmem>>, vector<24x784xf32>,
    %c1_i32_156 = arith.constant 1 : i32
    %265 = tpu.memref_slice %arg10[%c1_i32_156] : memref<2x!tpu.dma_semaphore, #tpu.memory_space<semaphore_mem>> -> memref<1x!tpu.dma_semaphore, #tpu.memory_space<semaphore_mem>>
    %266 = tpu.memref_squeeze %265 : memref<1x!tpu.dma_semaphore, #tpu.memory_space<semaphore_mem>> -> memref<!tpu.dma_semaphore, #tpu.memory_space<semaphore_mem>>
    tpu.wait_dma2 semaphore(%266 : memref<!tpu.dma_semaphore, #tpu.memory_space<semaphore_mem>>) src(%arg1 : memref<168x168xf32, #tpu.memory_space<any>>) dst(%arg6 : memref<168x168xf32, #tpu.memory_space<vmem>>)
    %c0_157 = arith.constant 0 : index
    %c0_158 = arith.constant 0 : index
    %267 = vector.load %arg6[%c0_157, %c0_158] : memref<168x168xf32, #tpu.memory_space<vmem>>, vector<168x168xf32>
    %c0_159 = arith.constant 0 : index
    %c0_160 = arith.constant 0 : index
    %268 = vector.load %arg4[%c0_159, %c0_160] : memref<168x784xf32, #tpu.memory_space<vmem>>, vector<168x784xf32>
    %cst_161 = arith.constant dense<0.000000e+00> : vector<168x784xf32>
    %269 = tpu.matmul %267, %268, %cst_161 {dimension_numbers = #tpu.dot_dimension_numbers<[1], [0], [0], [1], [0, 0, 1, 1], [], []>} : vector<168x168xf32>, vector<168x784xf32>, vector<168x784xf32> -> vector<168x784xf32>
    %c0_162 = arith.constant 0 : index
    %c0_163 = arith.constant 0 : index
    %270 = vector.load %arg5[%c0_162, %c0_163] : memref<168x784xf32, #tpu.memory_space<vmem>>, vector<168x784xf32>
    tpu.vector_store %arg5[%c0_162, %c0_163], %269 {strides = array<i32>} : memref<168x784xf32, #tpu.memory_space<vmem>>, vector<168x784xf32>,
    %c0_164 = arith.constant 0 : index
    %c0_165 = arith.constant 0 : index
    %271 = vector.load %arg5[%c0_164, %c0_165] : memref<168x784xf32, #tpu.memory_space<vmem>>, vector<24x784xf32>
    %cst_166 = arith.constant dense<0.000000e+00> : vector<24xf32>
    %272 = vector.multi_reduction <add>, %271, %cst_166 [1] : vector<24x784xf32> to vector<24xf32>
    %273 = vector.shape_cast %272 : vector<24xf32> to vector<24x1xf32>
    %274 = arith.mulf %271, %271 : vector<24x784xf32>
    %cst_167 = arith.constant dense<0.000000e+00> : vector<24xf32>
    %275 = vector.multi_reduction <add>, %274, %cst_167 [1] : vector<24x784xf32> to vector<24xf32>
    %276 = vector.shape_cast %275 : vector<24xf32> to vector<24x1xf32>
    %cst_168 = arith.constant 0.00127551018 : f32
    %277 = vector.broadcast %cst_168 : f32 to vector<24x1xf32>
    %278 = arith.mulf %273, %277 : vector<24x1xf32>
    %cst_169 = arith.constant 0.00127551018 : f32
    %279 = vector.broadcast %cst_169 : f32 to vector<24x1xf32>
    %280 = arith.mulf %276, %279 : vector<24x1xf32>
    %281 = arith.mulf %278, %278 : vector<24x1xf32>
    %282 = arith.subf %280, %281 : vector<24x1xf32>
    %cst_170 = arith.constant 0.000000e+00 : f32
    %283 = vector.broadcast %cst_170 : f32 to vector<24x1xf32>
    %284 = arith.maximumf %282, %283 : vector<24x1xf32>
    %c0_171 = arith.constant 0 : index
    %c2 = arith.constant 2 : index
    %285 = vector.load %arg7[%c0_171, %c2] : memref<168x4xf32, #tpu.memory_space<vmem>>, vector<24x1xf32>
    %c0_172 = arith.constant 0 : index
    %c3 = arith.constant 3 : index
    %286 = vector.load %arg7[%c0_172, %c3] : memref<168x4xf32, #tpu.memory_space<vmem>>, vector<24x1xf32>
    %cst_173 = arith.constant 9.99999974E-6 : f32
    %287 = vector.broadcast %cst_173 : f32 to vector<24x1xf32>
    %288 = arith.addf %284, %287 : vector<24x1xf32>
    %289 = math.rsqrt %288 : vector<24x1xf32>
    %290 = arith.mulf %285, %289 : vector<24x1xf32>
    %291 = arith.mulf %278, %290 : vector<24x1xf32>
    %292 = arith.subf %286, %291 : vector<24x1xf32>
    %293 = vector.broadcast %290 : vector<24x1xf32> to vector<24x784xf32>
    %294 = arith.mulf %271, %293 : vector<24x784xf32>
    %295 = vector.broadcast %292 : vector<24x1xf32> to vector<24x784xf32>
    %296 = arith.addf %294, %295 : vector<24x784xf32>
    %c0_174 = arith.constant 0 : index
    %c0_175 = arith.constant 0 : index
    %297 = vector.load %arg5[%c0_174, %c0_175] : memref<168x784xf32, #tpu.memory_space<vmem>>, vector<24x784xf32>
    tpu.vector_store %arg5[%c0_174, %c0_175], %296 {strides = array<i32>} : memref<168x784xf32, #tpu.memory_space<vmem>>, vector<24x784xf32>,
    %c0_i32_176 = arith.constant 0 : i32
    %c0_i32_177 = arith.constant 0 : i32
    %c0_i32_178 = arith.constant 0 : i32
    %298 = tpu.memref_slice %arg5[%c0_i32_177, %c0_i32_178] : memref<168x784xf32, #tpu.memory_space<vmem>> -> memref<24x784xf32, #tpu.memory_space<vmem>>
    %c0_i32_179 = arith.constant 0 : i32
    %c0_i32_180 = arith.constant 0 : i32
    %299 = tpu.memref_slice %arg3[%c0_i32_179, %c0_i32_180] : memref<168x784xf32, #tpu.memory_space<any>> -> memref<24x784xf32, #tpu.memory_space<any>>
    %300 = tpu.memref_slice %arg9[%c0_i32_176] : memref<7x!tpu.dma_semaphore, #tpu.memory_space<semaphore_mem>> -> memref<1x!tpu.dma_semaphore, #tpu.memory_space<semaphore_mem>>
    %301 = tpu.memref_squeeze %300 : memref<1x!tpu.dma_semaphore, #tpu.memory_space<semaphore_mem>> -> memref<!tpu.dma_semaphore, #tpu.memory_space<semaphore_mem>>
    tpu.enqueue_dma source(%298 : memref<24x784xf32, #tpu.memory_space<vmem>>) target(%299 : memref<24x784xf32, #tpu.memory_space<any>>) target_semaphore(%301 : memref<!tpu.dma_semaphore, #tpu.memory_space<semaphore_mem>>)
    %c24_181 = arith.constant 24 : index
    %c0_182 = arith.constant 0 : index
    %302 = vector.load %arg5[%c24_181, %c0_182] : memref<168x784xf32, #tpu.memory_space<vmem>>, vector<24x784xf32>
    %cst_183 = arith.constant dense<0.000000e+00> : vector<24xf32>
    %303 = vector.multi_reduction <add>, %302, %cst_183 [1] : vector<24x784xf32> to vector<24xf32>
    %304 = vector.shape_cast %303 : vector<24xf32> to vector<24x1xf32>
    %305 = arith.mulf %302, %302 : vector<24x784xf32>
    %cst_184 = arith.constant dense<0.000000e+00> : vector<24xf32>
    %306 = vector.multi_reduction <add>, %305, %cst_184 [1] : vector<24x784xf32> to vector<24xf32>
    %307 = vector.shape_cast %306 : vector<24xf32> to vector<24x1xf32>
    %cst_185 = arith.constant 0.00127551018 : f32
    %308 = vector.broadcast %cst_185 : f32 to vector<24x1xf32>
    %309 = arith.mulf %304, %308 : vector<24x1xf32>
    %cst_186 = arith.constant 0.00127551018 : f32
    %310 = vector.broadcast %cst_186 : f32 to vector<24x1xf32>
    %311 = arith.mulf %307, %310 : vector<24x1xf32>
    %312 = arith.mulf %309, %309 : vector<24x1xf32>
    %313 = arith.subf %311, %312 : vector<24x1xf32>
    %cst_187 = arith.constant 0.000000e+00 : f32
    %314 = vector.broadcast %cst_187 : f32 to vector<24x1xf32>
    %315 = arith.maximumf %313, %314 : vector<24x1xf32>
    %c24_188 = arith.constant 24 : index
    %c2_189 = arith.constant 2 : index
    %316 = vector.load %arg7[%c24_188, %c2_189] : memref<168x4xf32, #tpu.memory_space<vmem>>, vector<24x1xf32>
    %c24_190 = arith.constant 24 : index
    %c3_191 = arith.constant 3 : index
    %317 = vector.load %arg7[%c24_190, %c3_191] : memref<168x4xf32, #tpu.memory_space<vmem>>, vector<24x1xf32>
    %cst_192 = arith.constant 9.99999974E-6 : f32
    %318 = vector.broadcast %cst_192 : f32 to vector<24x1xf32>
    %319 = arith.addf %315, %318 : vector<24x1xf32>
    %320 = math.rsqrt %319 : vector<24x1xf32>
    %321 = arith.mulf %316, %320 : vector<24x1xf32>
    %322 = arith.mulf %309, %321 : vector<24x1xf32>
    %323 = arith.subf %317, %322 : vector<24x1xf32>
    %324 = vector.broadcast %321 : vector<24x1xf32> to vector<24x784xf32>
    %325 = arith.mulf %302, %324 : vector<24x784xf32>
    %326 = vector.broadcast %323 : vector<24x1xf32> to vector<24x784xf32>
    %327 = arith.addf %325, %326 : vector<24x784xf32>
    %c24_193 = arith.constant 24 : index
    %c0_194 = arith.constant 0 : index
    %328 = vector.load %arg5[%c24_193, %c0_194] : memref<168x784xf32, #tpu.memory_space<vmem>>, vector<24x784xf32>
    tpu.vector_store %arg5[%c24_193, %c0_194], %327 {strides = array<i32>} : memref<168x784xf32, #tpu.memory_space<vmem>>, vector<24x784xf32>,
    %c1_i32_195 = arith.constant 1 : i32
    %c24_i32_196 = arith.constant 24 : i32
    %c0_i32_197 = arith.constant 0 : i32
    %329 = tpu.memref_slice %arg5[%c24_i32_196, %c0_i32_197] : memref<168x784xf32, #tpu.memory_space<vmem>> -> memref<24x784xf32, #tpu.memory_space<vmem>>
    %c24_i32_198 = arith.constant 24 : i32
    %c0_i32_199 = arith.constant 0 : i32
    %330 = tpu.memref_slice %arg3[%c24_i32_198, %c0_i32_199] : memref<168x784xf32, #tpu.memory_space<any>> -> memref<24x784xf32, #tpu.memory_space<any>>
    %331 = tpu.memref_slice %arg9[%c1_i32_195] : memref<7x!tpu.dma_semaphore, #tpu.memory_space<semaphore_mem>> -> memref<1x!tpu.dma_semaphore, #tpu.memory_space<semaphore_mem>>
    %332 = tpu.memref_squeeze %331 : memref<1x!tpu.dma_semaphore, #tpu.memory_space<semaphore_mem>> -> memref<!tpu.dma_semaphore, #tpu.memory_space<semaphore_mem>>
    tpu.enqueue_dma source(%329 : memref<24x784xf32, #tpu.memory_space<vmem>>) target(%330 : memref<24x784xf32, #tpu.memory_space<any>>) target_semaphore(%332 : memref<!tpu.dma_semaphore, #tpu.memory_space<semaphore_mem>>)
    %c48_200 = arith.constant 48 : index
    %c0_201 = arith.constant 0 : index
    %333 = vector.load %arg5[%c48_200, %c0_201] : memref<168x784xf32, #tpu.memory_space<vmem>>, vector<24x784xf32>
    %cst_202 = arith.constant dense<0.000000e+00> : vector<24xf32>
    %334 = vector.multi_reduction <add>, %333, %cst_202 [1] : vector<24x784xf32> to vector<24xf32>
    %335 = vector.shape_cast %334 : vector<24xf32> to vector<24x1xf32>
    %336 = arith.mulf %333, %333 : vector<24x784xf32>
    %cst_203 = arith.constant dense<0.000000e+00> : vector<24xf32>
    %337 = vector.multi_reduction <add>, %336, %cst_203 [1] : vector<24x784xf32> to vector<24xf32>
    %338 = vector.shape_cast %337 : vector<24xf32> to vector<24x1xf32>
    %cst_204 = arith.constant 0.00127551018 : f32
    %339 = vector.broadcast %cst_204 : f32 to vector<24x1xf32>
    %340 = arith.mulf %335, %339 : vector<24x1xf32>
    %cst_205 = arith.constant 0.00127551018 : f32
    %341 = vector.broadcast %cst_205 : f32 to vector<24x1xf32>
    %342 = arith.mulf %338, %341 : vector<24x1xf32>
    %343 = arith.mulf %340, %340 : vector<24x1xf32>
    %344 = arith.subf %342, %343 : vector<24x1xf32>
    %cst_206 = arith.constant 0.000000e+00 : f32
    %345 = vector.broadcast %cst_206 : f32 to vector<24x1xf32>
    %346 = arith.maximumf %344, %345 : vector<24x1xf32>
    %c48_207 = arith.constant 48 : index
    %c2_208 = arith.constant 2 : index
    %347 = vector.load %arg7[%c48_207, %c2_208] : memref<168x4xf32, #tpu.memory_space<vmem>>, vector<24x1xf32>
    %c48_209 = arith.constant 48 : index
    %c3_210 = arith.constant 3 : index
    %348 = vector.load %arg7[%c48_209, %c3_210] : memref<168x4xf32, #tpu.memory_space<vmem>>, vector<24x1xf32>
    %cst_211 = arith.constant 9.99999974E-6 : f32
    %349 = vector.broadcast %cst_211 : f32 to vector<24x1xf32>
    %350 = arith.addf %346, %349 : vector<24x1xf32>
    %351 = math.rsqrt %350 : vector<24x1xf32>
    %352 = arith.mulf %347, %351 : vector<24x1xf32>
    %353 = arith.mulf %340, %352 : vector<24x1xf32>
    %354 = arith.subf %348, %353 : vector<24x1xf32>
    %355 = vector.broadcast %352 : vector<24x1xf32> to vector<24x784xf32>
    %356 = arith.mulf %333, %355 : vector<24x784xf32>
    %357 = vector.broadcast %354 : vector<24x1xf32> to vector<24x784xf32>
    %358 = arith.addf %356, %357 : vector<24x784xf32>
    %c48_212 = arith.constant 48 : index
    %c0_213 = arith.constant 0 : index
    %359 = vector.load %arg5[%c48_212, %c0_213] : memref<168x784xf32, #tpu.memory_space<vmem>>, vector<24x784xf32>
    tpu.vector_store %arg5[%c48_212, %c0_213], %358 {strides = array<i32>} : memref<168x784xf32, #tpu.memory_space<vmem>>, vector<24x784xf32>,
    %c2_i32_214 = arith.constant 2 : i32
    %c48_i32_215 = arith.constant 48 : i32
    %c0_i32_216 = arith.constant 0 : i32
    %360 = tpu.memref_slice %arg5[%c48_i32_215, %c0_i32_216] : memref<168x784xf32, #tpu.memory_space<vmem>> -> memref<24x784xf32, #tpu.memory_space<vmem>>
    %c48_i32_217 = arith.constant 48 : i32
    %c0_i32_218 = arith.constant 0 : i32
    %361 = tpu.memref_slice %arg3[%c48_i32_217, %c0_i32_218] : memref<168x784xf32, #tpu.memory_space<any>> -> memref<24x784xf32, #tpu.memory_space<any>>
    %362 = tpu.memref_slice %arg9[%c2_i32_214] : memref<7x!tpu.dma_semaphore, #tpu.memory_space<semaphore_mem>> -> memref<1x!tpu.dma_semaphore, #tpu.memory_space<semaphore_mem>>
    %363 = tpu.memref_squeeze %362 : memref<1x!tpu.dma_semaphore, #tpu.memory_space<semaphore_mem>> -> memref<!tpu.dma_semaphore, #tpu.memory_space<semaphore_mem>>
    tpu.enqueue_dma source(%360 : memref<24x784xf32, #tpu.memory_space<vmem>>) target(%361 : memref<24x784xf32, #tpu.memory_space<any>>) target_semaphore(%363 : memref<!tpu.dma_semaphore, #tpu.memory_space<semaphore_mem>>)
    %c72_219 = arith.constant 72 : index
    %c0_220 = arith.constant 0 : index
    %364 = vector.load %arg5[%c72_219, %c0_220] : memref<168x784xf32, #tpu.memory_space<vmem>>, vector<24x784xf32>
    %cst_221 = arith.constant dense<0.000000e+00> : vector<24xf32>
    %365 = vector.multi_reduction <add>, %364, %cst_221 [1] : vector<24x784xf32> to vector<24xf32>
    %366 = vector.shape_cast %365 : vector<24xf32> to vector<24x1xf32>
    %367 = arith.mulf %364, %364 : vector<24x784xf32>
    %cst_222 = arith.constant dense<0.000000e+00> : vector<24xf32>
    %368 = vector.multi_reduction <add>, %367, %cst_222 [1] : vector<24x784xf32> to vector<24xf32>
    %369 = vector.shape_cast %368 : vector<24xf32> to vector<24x1xf32>
    %cst_223 = arith.constant 0.00127551018 : f32
    %370 = vector.broadcast %cst_223 : f32 to vector<24x1xf32>
    %371 = arith.mulf %366, %370 : vector<24x1xf32>
    %cst_224 = arith.constant 0.00127551018 : f32
    %372 = vector.broadcast %cst_224 : f32 to vector<24x1xf32>
    %373 = arith.mulf %369, %372 : vector<24x1xf32>
    %374 = arith.mulf %371, %371 : vector<24x1xf32>
    %375 = arith.subf %373, %374 : vector<24x1xf32>
    %cst_225 = arith.constant 0.000000e+00 : f32
    %376 = vector.broadcast %cst_225 : f32 to vector<24x1xf32>
    %377 = arith.maximumf %375, %376 : vector<24x1xf32>
    %c72_226 = arith.constant 72 : index
    %c2_227 = arith.constant 2 : index
    %378 = vector.load %arg7[%c72_226, %c2_227] : memref<168x4xf32, #tpu.memory_space<vmem>>, vector<24x1xf32>
    %c72_228 = arith.constant 72 : index
    %c3_229 = arith.constant 3 : index
    %379 = vector.load %arg7[%c72_228, %c3_229] : memref<168x4xf32, #tpu.memory_space<vmem>>, vector<24x1xf32>
    %cst_230 = arith.constant 9.99999974E-6 : f32
    %380 = vector.broadcast %cst_230 : f32 to vector<24x1xf32>
    %381 = arith.addf %377, %380 : vector<24x1xf32>
    %382 = math.rsqrt %381 : vector<24x1xf32>
    %383 = arith.mulf %378, %382 : vector<24x1xf32>
    %384 = arith.mulf %371, %383 : vector<24x1xf32>
    %385 = arith.subf %379, %384 : vector<24x1xf32>
    %386 = vector.broadcast %383 : vector<24x1xf32> to vector<24x784xf32>
    %387 = arith.mulf %364, %386 : vector<24x784xf32>
    %388 = vector.broadcast %385 : vector<24x1xf32> to vector<24x784xf32>
    %389 = arith.addf %387, %388 : vector<24x784xf32>
    %c72_231 = arith.constant 72 : index
    %c0_232 = arith.constant 0 : index
    %390 = vector.load %arg5[%c72_231, %c0_232] : memref<168x784xf32, #tpu.memory_space<vmem>>, vector<24x784xf32>
    tpu.vector_store %arg5[%c72_231, %c0_232], %389 {strides = array<i32>} : memref<168x784xf32, #tpu.memory_space<vmem>>, vector<24x784xf32>,
    %c3_i32_233 = arith.constant 3 : i32
    %c72_i32_234 = arith.constant 72 : i32
    %c0_i32_235 = arith.constant 0 : i32
    %391 = tpu.memref_slice %arg5[%c72_i32_234, %c0_i32_235] : memref<168x784xf32, #tpu.memory_space<vmem>> -> memref<24x784xf32, #tpu.memory_space<vmem>>
    %c72_i32_236 = arith.constant 72 : i32
    %c0_i32_237 = arith.constant 0 : i32
    %392 = tpu.memref_slice %arg3[%c72_i32_236, %c0_i32_237] : memref<168x784xf32, #tpu.memory_space<any>> -> memref<24x784xf32, #tpu.memory_space<any>>
    %393 = tpu.memref_slice %arg9[%c3_i32_233] : memref<7x!tpu.dma_semaphore, #tpu.memory_space<semaphore_mem>> -> memref<1x!tpu.dma_semaphore, #tpu.memory_space<semaphore_mem>>
    %394 = tpu.memref_squeeze %393 : memref<1x!tpu.dma_semaphore, #tpu.memory_space<semaphore_mem>> -> memref<!tpu.dma_semaphore, #tpu.memory_space<semaphore_mem>>
    tpu.enqueue_dma source(%391 : memref<24x784xf32, #tpu.memory_space<vmem>>) target(%392 : memref<24x784xf32, #tpu.memory_space<any>>) target_semaphore(%394 : memref<!tpu.dma_semaphore, #tpu.memory_space<semaphore_mem>>)
    %c96_238 = arith.constant 96 : index
    %c0_239 = arith.constant 0 : index
    %395 = vector.load %arg5[%c96_238, %c0_239] : memref<168x784xf32, #tpu.memory_space<vmem>>, vector<24x784xf32>
    %cst_240 = arith.constant dense<0.000000e+00> : vector<24xf32>
    %396 = vector.multi_reduction <add>, %395, %cst_240 [1] : vector<24x784xf32> to vector<24xf32>
    %397 = vector.shape_cast %396 : vector<24xf32> to vector<24x1xf32>
    %398 = arith.mulf %395, %395 : vector<24x784xf32>
    %cst_241 = arith.constant dense<0.000000e+00> : vector<24xf32>
    %399 = vector.multi_reduction <add>, %398, %cst_241 [1] : vector<24x784xf32> to vector<24xf32>
    %400 = vector.shape_cast %399 : vector<24xf32> to vector<24x1xf32>
    %cst_242 = arith.constant 0.00127551018 : f32
    %401 = vector.broadcast %cst_242 : f32 to vector<24x1xf32>
    %402 = arith.mulf %397, %401 : vector<24x1xf32>
    %cst_243 = arith.constant 0.00127551018 : f32
    %403 = vector.broadcast %cst_243 : f32 to vector<24x1xf32>
    %404 = arith.mulf %400, %403 : vector<24x1xf32>
    %405 = arith.mulf %402, %402 : vector<24x1xf32>
    %406 = arith.subf %404, %405 : vector<24x1xf32>
    %cst_244 = arith.constant 0.000000e+00 : f32
    %407 = vector.broadcast %cst_244 : f32 to vector<24x1xf32>
    %408 = arith.maximumf %406, %407 : vector<24x1xf32>
    %c96_245 = arith.constant 96 : index
    %c2_246 = arith.constant 2 : index
    %409 = vector.load %arg7[%c96_245, %c2_246] : memref<168x4xf32, #tpu.memory_space<vmem>>, vector<24x1xf32>
    %c96_247 = arith.constant 96 : index
    %c3_248 = arith.constant 3 : index
    %410 = vector.load %arg7[%c96_247, %c3_248] : memref<168x4xf32, #tpu.memory_space<vmem>>, vector<24x1xf32>
    %cst_249 = arith.constant 9.99999974E-6 : f32
    %411 = vector.broadcast %cst_249 : f32 to vector<24x1xf32>
    %412 = arith.addf %408, %411 : vector<24x1xf32>
    %413 = math.rsqrt %412 : vector<24x1xf32>
    %414 = arith.mulf %409, %413 : vector<24x1xf32>
    %415 = arith.mulf %402, %414 : vector<24x1xf32>
    %416 = arith.subf %410, %415 : vector<24x1xf32>
    %417 = vector.broadcast %414 : vector<24x1xf32> to vector<24x784xf32>
    %418 = arith.mulf %395, %417 : vector<24x784xf32>
    %419 = vector.broadcast %416 : vector<24x1xf32> to vector<24x784xf32>
    %420 = arith.addf %418, %419 : vector<24x784xf32>
    %c96_250 = arith.constant 96 : index
    %c0_251 = arith.constant 0 : index
    %421 = vector.load %arg5[%c96_250, %c0_251] : memref<168x784xf32, #tpu.memory_space<vmem>>, vector<24x784xf32>
    tpu.vector_store %arg5[%c96_250, %c0_251], %420 {strides = array<i32>} : memref<168x784xf32, #tpu.memory_space<vmem>>, vector<24x784xf32>,
    %c4_i32_252 = arith.constant 4 : i32
    %c96_i32_253 = arith.constant 96 : i32
    %c0_i32_254 = arith.constant 0 : i32
    %422 = tpu.memref_slice %arg5[%c96_i32_253, %c0_i32_254] : memref<168x784xf32, #tpu.memory_space<vmem>> -> memref<24x784xf32, #tpu.memory_space<vmem>>
    %c96_i32_255 = arith.constant 96 : i32
    %c0_i32_256 = arith.constant 0 : i32
    %423 = tpu.memref_slice %arg3[%c96_i32_255, %c0_i32_256] : memref<168x784xf32, #tpu.memory_space<any>> -> memref<24x784xf32, #tpu.memory_space<any>>
    %424 = tpu.memref_slice %arg9[%c4_i32_252] : memref<7x!tpu.dma_semaphore, #tpu.memory_space<semaphore_mem>> -> memref<1x!tpu.dma_semaphore, #tpu.memory_space<semaphore_mem>>
    %425 = tpu.memref_squeeze %424 : memref<1x!tpu.dma_semaphore, #tpu.memory_space<semaphore_mem>> -> memref<!tpu.dma_semaphore, #tpu.memory_space<semaphore_mem>>
    tpu.enqueue_dma source(%422 : memref<24x784xf32, #tpu.memory_space<vmem>>) target(%423 : memref<24x784xf32, #tpu.memory_space<any>>) target_semaphore(%425 : memref<!tpu.dma_semaphore, #tpu.memory_space<semaphore_mem>>)
    %c120_257 = arith.constant 120 : index
    %c0_258 = arith.constant 0 : index
    %426 = vector.load %arg5[%c120_257, %c0_258] : memref<168x784xf32, #tpu.memory_space<vmem>>, vector<24x784xf32>
    %cst_259 = arith.constant dense<0.000000e+00> : vector<24xf32>
    %427 = vector.multi_reduction <add>, %426, %cst_259 [1] : vector<24x784xf32> to vector<24xf32>
    %428 = vector.shape_cast %427 : vector<24xf32> to vector<24x1xf32>
    %429 = arith.mulf %426, %426 : vector<24x784xf32>
    %cst_260 = arith.constant dense<0.000000e+00> : vector<24xf32>
    %430 = vector.multi_reduction <add>, %429, %cst_260 [1] : vector<24x784xf32> to vector<24xf32>
    %431 = vector.shape_cast %430 : vector<24xf32> to vector<24x1xf32>
    %cst_261 = arith.constant 0.00127551018 : f32
    %432 = vector.broadcast %cst_261 : f32 to vector<24x1xf32>
    %433 = arith.mulf %428, %432 : vector<24x1xf32>
    %cst_262 = arith.constant 0.00127551018 : f32
    %434 = vector.broadcast %cst_262 : f32 to vector<24x1xf32>
    %435 = arith.mulf %431, %434 : vector<24x1xf32>
    %436 = arith.mulf %433, %433 : vector<24x1xf32>
    %437 = arith.subf %435, %436 : vector<24x1xf32>
    %cst_263 = arith.constant 0.000000e+00 : f32
    %438 = vector.broadcast %cst_263 : f32 to vector<24x1xf32>
    %439 = arith.maximumf %437, %438 : vector<24x1xf32>
    %c120_264 = arith.constant 120 : index
    %c2_265 = arith.constant 2 : index
    %440 = vector.load %arg7[%c120_264, %c2_265] : memref<168x4xf32, #tpu.memory_space<vmem>>, vector<24x1xf32>
    %c120_266 = arith.constant 120 : index
    %c3_267 = arith.constant 3 : index
    %441 = vector.load %arg7[%c120_266, %c3_267] : memref<168x4xf32, #tpu.memory_space<vmem>>, vector<24x1xf32>
    %cst_268 = arith.constant 9.99999974E-6 : f32
    %442 = vector.broadcast %cst_268 : f32 to vector<24x1xf32>
    %443 = arith.addf %439, %442 : vector<24x1xf32>
    %444 = math.rsqrt %443 : vector<24x1xf32>
    %445 = arith.mulf %440, %444 : vector<24x1xf32>
    %446 = arith.mulf %433, %445 : vector<24x1xf32>
    %447 = arith.subf %441, %446 : vector<24x1xf32>
    %448 = vector.broadcast %445 : vector<24x1xf32> to vector<24x784xf32>
    %449 = arith.mulf %426, %448 : vector<24x784xf32>
    %450 = vector.broadcast %447 : vector<24x1xf32> to vector<24x784xf32>
    %451 = arith.addf %449, %450 : vector<24x784xf32>
    %c120_269 = arith.constant 120 : index
    %c0_270 = arith.constant 0 : index
    %452 = vector.load %arg5[%c120_269, %c0_270] : memref<168x784xf32, #tpu.memory_space<vmem>>, vector<24x784xf32>
    tpu.vector_store %arg5[%c120_269, %c0_270], %451 {strides = array<i32>} : memref<168x784xf32, #tpu.memory_space<vmem>>, vector<24x784xf32>,
    %c5_i32_271 = arith.constant 5 : i32
    %c120_i32_272 = arith.constant 120 : i32
    %c0_i32_273 = arith.constant 0 : i32
    %453 = tpu.memref_slice %arg5[%c120_i32_272, %c0_i32_273] : memref<168x784xf32, #tpu.memory_space<vmem>> -> memref<24x784xf32, #tpu.memory_space<vmem>>
    %c120_i32_274 = arith.constant 120 : i32
    %c0_i32_275 = arith.constant 0 : i32
    %454 = tpu.memref_slice %arg3[%c120_i32_274, %c0_i32_275] : memref<168x784xf32, #tpu.memory_space<any>> -> memref<24x784xf32, #tpu.memory_space<any>>
    %455 = tpu.memref_slice %arg9[%c5_i32_271] : memref<7x!tpu.dma_semaphore, #tpu.memory_space<semaphore_mem>> -> memref<1x!tpu.dma_semaphore, #tpu.memory_space<semaphore_mem>>
    %456 = tpu.memref_squeeze %455 : memref<1x!tpu.dma_semaphore, #tpu.memory_space<semaphore_mem>> -> memref<!tpu.dma_semaphore, #tpu.memory_space<semaphore_mem>>
    tpu.enqueue_dma source(%453 : memref<24x784xf32, #tpu.memory_space<vmem>>) target(%454 : memref<24x784xf32, #tpu.memory_space<any>>) target_semaphore(%456 : memref<!tpu.dma_semaphore, #tpu.memory_space<semaphore_mem>>)
    %c144_276 = arith.constant 144 : index
    %c0_277 = arith.constant 0 : index
    %457 = vector.load %arg5[%c144_276, %c0_277] : memref<168x784xf32, #tpu.memory_space<vmem>>, vector<24x784xf32>
    %cst_278 = arith.constant dense<0.000000e+00> : vector<24xf32>
    %458 = vector.multi_reduction <add>, %457, %cst_278 [1] : vector<24x784xf32> to vector<24xf32>
    %459 = vector.shape_cast %458 : vector<24xf32> to vector<24x1xf32>
    %460 = arith.mulf %457, %457 : vector<24x784xf32>
    %cst_279 = arith.constant dense<0.000000e+00> : vector<24xf32>
    %461 = vector.multi_reduction <add>, %460, %cst_279 [1] : vector<24x784xf32> to vector<24xf32>
    %462 = vector.shape_cast %461 : vector<24xf32> to vector<24x1xf32>
    %cst_280 = arith.constant 0.00127551018 : f32
    %463 = vector.broadcast %cst_280 : f32 to vector<24x1xf32>
    %464 = arith.mulf %459, %463 : vector<24x1xf32>
    %cst_281 = arith.constant 0.00127551018 : f32
    %465 = vector.broadcast %cst_281 : f32 to vector<24x1xf32>
    %466 = arith.mulf %462, %465 : vector<24x1xf32>
    %467 = arith.mulf %464, %464 : vector<24x1xf32>
    %468 = arith.subf %466, %467 : vector<24x1xf32>
    %cst_282 = arith.constant 0.000000e+00 : f32
    %469 = vector.broadcast %cst_282 : f32 to vector<24x1xf32>
    %470 = arith.maximumf %468, %469 : vector<24x1xf32>
    %c144_283 = arith.constant 144 : index
    %c2_284 = arith.constant 2 : index
    %471 = vector.load %arg7[%c144_283, %c2_284] : memref<168x4xf32, #tpu.memory_space<vmem>>, vector<24x1xf32>
    %c144_285 = arith.constant 144 : index
    %c3_286 = arith.constant 3 : index
    %472 = vector.load %arg7[%c144_285, %c3_286] : memref<168x4xf32, #tpu.memory_space<vmem>>, vector<24x1xf32>
    %cst_287 = arith.constant 9.99999974E-6 : f32
    %473 = vector.broadcast %cst_287 : f32 to vector<24x1xf32>
    %474 = arith.addf %470, %473 : vector<24x1xf32>
    %475 = math.rsqrt %474 : vector<24x1xf32>
    %476 = arith.mulf %471, %475 : vector<24x1xf32>
    %477 = arith.mulf %464, %476 : vector<24x1xf32>
    %478 = arith.subf %472, %477 : vector<24x1xf32>
    %479 = vector.broadcast %476 : vector<24x1xf32> to vector<24x784xf32>
    %480 = arith.mulf %457, %479 : vector<24x784xf32>
    %481 = vector.broadcast %478 : vector<24x1xf32> to vector<24x784xf32>
    %482 = arith.addf %480, %481 : vector<24x784xf32>
    %c144_288 = arith.constant 144 : index
    %c0_289 = arith.constant 0 : index
    %483 = vector.load %arg5[%c144_288, %c0_289] : memref<168x784xf32, #tpu.memory_space<vmem>>, vector<24x784xf32>
    tpu.vector_store %arg5[%c144_288, %c0_289], %482 {strides = array<i32>} : memref<168x784xf32, #tpu.memory_space<vmem>>, vector<24x784xf32>,
    %c6_i32_290 = arith.constant 6 : i32
    %c144_i32_291 = arith.constant 144 : i32
    %c0_i32_292 = arith.constant 0 : i32
    %484 = tpu.memref_slice %arg5[%c144_i32_291, %c0_i32_292] : memref<168x784xf32, #tpu.memory_space<vmem>> -> memref<24x784xf32, #tpu.memory_space<vmem>>
    %c144_i32_293 = arith.constant 144 : i32
    %c0_i32_294 = arith.constant 0 : i32
    %485 = tpu.memref_slice %arg3[%c144_i32_293, %c0_i32_294] : memref<168x784xf32, #tpu.memory_space<any>> -> memref<24x784xf32, #tpu.memory_space<any>>
    %486 = tpu.memref_slice %arg9[%c6_i32_290] : memref<7x!tpu.dma_semaphore, #tpu.memory_space<semaphore_mem>> -> memref<1x!tpu.dma_semaphore, #tpu.memory_space<semaphore_mem>>
    %487 = tpu.memref_squeeze %486 : memref<1x!tpu.dma_semaphore, #tpu.memory_space<semaphore_mem>> -> memref<!tpu.dma_semaphore, #tpu.memory_space<semaphore_mem>>
    tpu.enqueue_dma source(%484 : memref<24x784xf32, #tpu.memory_space<vmem>>) target(%485 : memref<24x784xf32, #tpu.memory_space<any>>) target_semaphore(%487 : memref<!tpu.dma_semaphore, #tpu.memory_space<semaphore_mem>>)
    %c0_i32_295 = arith.constant 0 : i32
    %c0_i32_296 = arith.constant 0 : i32
    %c0_i32_297 = arith.constant 0 : i32
    %488 = tpu.memref_slice %arg5[%c0_i32_296, %c0_i32_297] : memref<168x784xf32, #tpu.memory_space<vmem>> -> memref<24x784xf32, #tpu.memory_space<vmem>>
    %c0_i32_298 = arith.constant 0 : i32
    %c0_i32_299 = arith.constant 0 : i32
    %489 = tpu.memref_slice %arg3[%c0_i32_298, %c0_i32_299] : memref<168x784xf32, #tpu.memory_space<any>> -> memref<24x784xf32, #tpu.memory_space<any>>
    %490 = tpu.memref_slice %arg9[%c0_i32_295] : memref<7x!tpu.dma_semaphore, #tpu.memory_space<semaphore_mem>> -> memref<1x!tpu.dma_semaphore, #tpu.memory_space<semaphore_mem>>
    %491 = tpu.memref_squeeze %490 : memref<1x!tpu.dma_semaphore, #tpu.memory_space<semaphore_mem>> -> memref<!tpu.dma_semaphore, #tpu.memory_space<semaphore_mem>>
    tpu.wait_dma2 semaphore(%491 : memref<!tpu.dma_semaphore, #tpu.memory_space<semaphore_mem>>) src(%488 : memref<24x784xf32, #tpu.memory_space<vmem>>) dst(%489 : memref<24x784xf32, #tpu.memory_space<any>>)
    %c1_i32_300 = arith.constant 1 : i32
    %c24_i32_301 = arith.constant 24 : i32
    %c0_i32_302 = arith.constant 0 : i32
    %492 = tpu.memref_slice %arg5[%c24_i32_301, %c0_i32_302] : memref<168x784xf32, #tpu.memory_space<vmem>> -> memref<24x784xf32, #tpu.memory_space<vmem>>
    %c24_i32_303 = arith.constant 24 : i32
    %c0_i32_304 = arith.constant 0 : i32
    %493 = tpu.memref_slice %arg3[%c24_i32_303, %c0_i32_304] : memref<168x784xf32, #tpu.memory_space<any>> -> memref<24x784xf32, #tpu.memory_space<any>>
    %494 = tpu.memref_slice %arg9[%c1_i32_300] : memref<7x!tpu.dma_semaphore, #tpu.memory_space<semaphore_mem>> -> memref<1x!tpu.dma_semaphore, #tpu.memory_space<semaphore_mem>>
    %495 = tpu.memref_squeeze %494 : memref<1x!tpu.dma_semaphore, #tpu.memory_space<semaphore_mem>> -> memref<!tpu.dma_semaphore, #tpu.memory_space<semaphore_mem>>
    tpu.wait_dma2 semaphore(%495 : memref<!tpu.dma_semaphore, #tpu.memory_space<semaphore_mem>>) src(%492 : memref<24x784xf32, #tpu.memory_space<vmem>>) dst(%493 : memref<24x784xf32, #tpu.memory_space<any>>)
    %c2_i32_305 = arith.constant 2 : i32
    %c48_i32_306 = arith.constant 48 : i32
    %c0_i32_307 = arith.constant 0 : i32
    %496 = tpu.memref_slice %arg5[%c48_i32_306, %c0_i32_307] : memref<168x784xf32, #tpu.memory_space<vmem>> -> memref<24x784xf32, #tpu.memory_space<vmem>>
    %c48_i32_308 = arith.constant 48 : i32
    %c0_i32_309 = arith.constant 0 : i32
    %497 = tpu.memref_slice %arg3[%c48_i32_308, %c0_i32_309] : memref<168x784xf32, #tpu.memory_space<any>> -> memref<24x784xf32, #tpu.memory_space<any>>
    %498 = tpu.memref_slice %arg9[%c2_i32_305] : memref<7x!tpu.dma_semaphore, #tpu.memory_space<semaphore_mem>> -> memref<1x!tpu.dma_semaphore, #tpu.memory_space<semaphore_mem>>
    %499 = tpu.memref_squeeze %498 : memref<1x!tpu.dma_semaphore, #tpu.memory_space<semaphore_mem>> -> memref<!tpu.dma_semaphore, #tpu.memory_space<semaphore_mem>>
    tpu.wait_dma2 semaphore(%499 : memref<!tpu.dma_semaphore, #tpu.memory_space<semaphore_mem>>) src(%496 : memref<24x784xf32, #tpu.memory_space<vmem>>) dst(%497 : memref<24x784xf32, #tpu.memory_space<any>>)
    %c3_i32_310 = arith.constant 3 : i32
    %c72_i32_311 = arith.constant 72 : i32
    %c0_i32_312 = arith.constant 0 : i32
    %500 = tpu.memref_slice %arg5[%c72_i32_311, %c0_i32_312] : memref<168x784xf32, #tpu.memory_space<vmem>> -> memref<24x784xf32, #tpu.memory_space<vmem>>
    %c72_i32_313 = arith.constant 72 : i32
    %c0_i32_314 = arith.constant 0 : i32
    %501 = tpu.memref_slice %arg3[%c72_i32_313, %c0_i32_314] : memref<168x784xf32, #tpu.memory_space<any>> -> memref<24x784xf32, #tpu.memory_space<any>>
    %502 = tpu.memref_slice %arg9[%c3_i32_310] : memref<7x!tpu.dma_semaphore, #tpu.memory_space<semaphore_mem>> -> memref<1x!tpu.dma_semaphore, #tpu.memory_space<semaphore_mem>>
    %503 = tpu.memref_squeeze %502 : memref<1x!tpu.dma_semaphore, #tpu.memory_space<semaphore_mem>> -> memref<!tpu.dma_semaphore, #tpu.memory_space<semaphore_mem>>
    tpu.wait_dma2 semaphore(%503 : memref<!tpu.dma_semaphore, #tpu.memory_space<semaphore_mem>>) src(%500 : memref<24x784xf32, #tpu.memory_space<vmem>>) dst(%501 : memref<24x784xf32, #tpu.memory_space<any>>)
    %c4_i32_315 = arith.constant 4 : i32
    %c96_i32_316 = arith.constant 96 : i32
    %c0_i32_317 = arith.constant 0 : i32
    %504 = tpu.memref_slice %arg5[%c96_i32_316, %c0_i32_317] : memref<168x784xf32, #tpu.memory_space<vmem>> -> memref<24x784xf32, #tpu.memory_space<vmem>>
    %c96_i32_318 = arith.constant 96 : i32
    %c0_i32_319 = arith.constant 0 : i32
    %505 = tpu.memref_slice %arg3[%c96_i32_318, %c0_i32_319] : memref<168x784xf32, #tpu.memory_space<any>> -> memref<24x784xf32, #tpu.memory_space<any>>
    %506 = tpu.memref_slice %arg9[%c4_i32_315] : memref<7x!tpu.dma_semaphore, #tpu.memory_space<semaphore_mem>> -> memref<1x!tpu.dma_semaphore, #tpu.memory_space<semaphore_mem>>
    %507 = tpu.memref_squeeze %506 : memref<1x!tpu.dma_semaphore, #tpu.memory_space<semaphore_mem>> -> memref<!tpu.dma_semaphore, #tpu.memory_space<semaphore_mem>>
    tpu.wait_dma2 semaphore(%507 : memref<!tpu.dma_semaphore, #tpu.memory_space<semaphore_mem>>) src(%504 : memref<24x784xf32, #tpu.memory_space<vmem>>) dst(%505 : memref<24x784xf32, #tpu.memory_space<any>>)
    %c5_i32_320 = arith.constant 5 : i32
    %c120_i32_321 = arith.constant 120 : i32
    %c0_i32_322 = arith.constant 0 : i32
    %508 = tpu.memref_slice %arg5[%c120_i32_321, %c0_i32_322] : memref<168x784xf32, #tpu.memory_space<vmem>> -> memref<24x784xf32, #tpu.memory_space<vmem>>
    %c120_i32_323 = arith.constant 120 : i32
    %c0_i32_324 = arith.constant 0 : i32
    %509 = tpu.memref_slice %arg3[%c120_i32_323, %c0_i32_324] : memref<168x784xf32, #tpu.memory_space<any>> -> memref<24x784xf32, #tpu.memory_space<any>>
    %510 = tpu.memref_slice %arg9[%c5_i32_320] : memref<7x!tpu.dma_semaphore, #tpu.memory_space<semaphore_mem>> -> memref<1x!tpu.dma_semaphore, #tpu.memory_space<semaphore_mem>>
    %511 = tpu.memref_squeeze %510 : memref<1x!tpu.dma_semaphore, #tpu.memory_space<semaphore_mem>> -> memref<!tpu.dma_semaphore, #tpu.memory_space<semaphore_mem>>
    tpu.wait_dma2 semaphore(%511 : memref<!tpu.dma_semaphore, #tpu.memory_space<semaphore_mem>>) src(%508 : memref<24x784xf32, #tpu.memory_space<vmem>>) dst(%509 : memref<24x784xf32, #tpu.memory_space<any>>)
    %c6_i32_325 = arith.constant 6 : i32
    %c144_i32_326 = arith.constant 144 : i32
    %c0_i32_327 = arith.constant 0 : i32
    %512 = tpu.memref_slice %arg5[%c144_i32_326, %c0_i32_327] : memref<168x784xf32, #tpu.memory_space<vmem>> -> memref<24x784xf32, #tpu.memory_space<vmem>>
    %c144_i32_328 = arith.constant 144 : i32
    %c0_i32_329 = arith.constant 0 : i32
    %513 = tpu.memref_slice %arg3[%c144_i32_328, %c0_i32_329] : memref<168x784xf32, #tpu.memory_space<any>> -> memref<24x784xf32, #tpu.memory_space<any>>
    %514 = tpu.memref_slice %arg9[%c6_i32_325] : memref<7x!tpu.dma_semaphore, #tpu.memory_space<semaphore_mem>> -> memref<1x!tpu.dma_semaphore, #tpu.memory_space<semaphore_mem>>
    %515 = tpu.memref_squeeze %514 : memref<1x!tpu.dma_semaphore, #tpu.memory_space<semaphore_mem>> -> memref<!tpu.dma_semaphore, #tpu.memory_space<semaphore_mem>>
    tpu.wait_dma2 semaphore(%515 : memref<!tpu.dma_semaphore, #tpu.memory_space<semaphore_mem>>) src(%512 : memref<24x784xf32, #tpu.memory_space<vmem>>) dst(%513 : memref<24x784xf32, #tpu.memory_space<any>>)
    return
  }
}

</mosaic_0001>

<llo_original>
// kernel: tpu_custom_call.1
$region0: #{tpu_custom_call.1}
  #allocation0 [shape = 'u32[]', space=smem, size = 0x4, offset = 0x4, fixed_abs, tag = 'smem constant byte address 0x4 - core index']
  #allocation1 [shape = 'u32[72,128]{1,0:T(1,128)}', space=vmem, size = 0x9000, scoped, tag = 'internal scratch']
  #allocation2 [shape = 'f32[168,784]{1,0:T(8,128)}', space=vmem, size = 0x93000, scoped, tag = 'scratch operand']
  #allocation3 [shape = 'f32[168,784]{1,0:T(8,128)}', space=vmem, size = 0x93000, scoped, tag = 'scratch operand']
  #allocation4 [shape = 'f32[168,168]{1,0:T(8,128)}', space=vmem, size = 0x2a000, scoped, tag = 'scratch operand']
  #allocation5 [shape = 'f32[168,4]{1,0:T(8,128)}', space=vmem, size = 0x15000, scoped, tag = 'scratch operand']
  #allocation6 [shape = 's32[7]{0}', space=sflag, size = 0x1c, scoped, tag = 'scratch operand']
  #allocation7 [shape = 's32[7]{0}', space=sflag, size = 0x1c, scoped, tag = 'scratch operand']
  #allocation8 [shape = 's32[2]{0}', space=sflag, size = 0x8, scoped, tag = 'scratch operand']
  #allocation9 [shape = 's32[]', space=sflag, size = 0x4, offset = 0, fixed_abs, tag = 'sflag constant byte address 0x0 - dummy sync flag']
  #allocation10 [shape = 's32[]', space=sflag, size = 0x4, offset = 0, fixed_abs, tag = 'sflag constant byte address 0x0 - dummy sync flag']
  #allocation11 [shape = 's32[]', space=sflag, size = 0x4, offset = 0, fixed_abs, tag = 'sflag constant byte address 0x0 - dummy sync flag']
  #allocation12 [shape = 'u32[]', space=smem, size = 0x4, offset = 0x44, fixed_abs, tag = 'smem constant byte address 0x44 - assertion arg 0']
  #allocation13 [shape = 'u32[]', space=smem, size = 0x4, offset = 0x48, fixed_abs, tag = 'smem constant byte address 0x48 - assertion arg 1']
  #allocation14 [shape = 's32[]', space=sflag, size = 0x4, offset = 0, fixed_abs, tag = 'sflag constant byte address 0x0 - dummy sync flag']
  #allocation15 [shape = 's32[]', space=sflag, size = 0x4, offset = 0, fixed_abs, tag = 'sflag constant byte address 0x0 - dummy sync flag']
  #allocation16 [shape = 's32[]', space=sflag, size = 0x4, offset = 0, fixed_abs, tag = 'sflag constant byte address 0x0 - dummy sync flag']
  #allocation17 [shape = 's32[]', space=sflag, size = 0x4, offset = 0, fixed_abs, tag = 'sflag constant byte address 0x0 - dummy sync flag']
  #allocation18 [shape = 's32[]', space=sflag, size = 0x4, offset = 0, fixed_abs, tag = 'sflag constant byte address 0x0 - dummy sync flag']
  #allocation19 [shape = 's32[]', space=sflag, size = 0x4, offset = 0, fixed_abs, tag = 'sflag constant byte address 0x0 - dummy sync flag']
  #allocation20 [shape = 's32[]', space=sflag, size = 0x4, offset = 0, fixed_abs, tag = 'sflag constant byte address 0x0 - dummy sync flag']
  #allocation21 [shape = 's32[]', space=sflag, size = 0x4, offset = 0, fixed_abs, tag = 'sflag constant byte address 0x0 - dummy sync flag']
  #allocation22 [shape = 's32[]', space=sflag, size = 0x4, offset = 0, fixed_abs, tag = 'sflag constant byte address 0x0 - dummy sync flag']
  #allocation23 [shape = 's32[]', space=sflag, size = 0x4, offset = 0, fixed_abs, tag = 'sflag constant byte address 0x0 - dummy sync flag']
  #allocation24 [shape = 's32[]', space=sflag, size = 0x4, offset = 0, fixed_abs, tag = 'sflag constant byte address 0x0 - dummy sync flag']
  #allocation25 [shape = 's32[]', space=sflag, size = 0x4, offset = 0, fixed_abs, tag = 'sflag constant byte address 0x0 - dummy sync flag']
  #allocation26 [shape = 's32[]', space=sflag, size = 0x4, offset = 0, fixed_abs, tag = 'sflag constant byte address 0x0 - dummy sync flag']
  #allocation27 [shape = 's32[]', space=sflag, size = 0x4, offset = 0, fixed_abs, tag = 'sflag constant byte address 0x0 - dummy sync flag']
  #allocation28 [shape = 's32[]', space=sflag, size = 0x4, offset = 0, fixed_abs, tag = 'sflag constant byte address 0x0 - dummy sync flag']
  #allocation29 [shape = 's32[]', space=sflag, size = 0x4, offset = 0, fixed_abs, tag = 'sflag constant byte address 0x0 - dummy sync flag']
  #allocation30 [shape = 's32[]', space=sflag, size = 0x4, offset = 0, fixed_abs, tag = 'sflag constant byte address 0x0 - dummy sync flag']
  #allocation31 [shape = 's32[]', space=sflag, size = 0x4, offset = 0, fixed_abs, tag = 'sflag constant byte address 0x0 - dummy sync flag']
  #allocation32 [shape = 's32[]', space=sflag, size = 0x4, offset = 0, fixed_abs, tag = 'sflag constant byte address 0x0 - dummy sync flag']
  #allocation33 [shape = 's32[]', space=sflag, size = 0x4, offset = 0, fixed_abs, tag = 'sflag constant byte address 0x0 - dummy sync flag']
  #allocation34 [shape = 's32[]', space=sflag, size = 0x4, offset = 0, fixed_abs, tag = 'sflag constant byte address 0x0 - dummy sync flag']
  #allocation35 [shape = 's32[]', space=sflag, size = 0x4, offset = 0, fixed_abs, tag = 'sflag constant byte address 0x0 - dummy sync flag']
  #allocation36 [shape = 's32[]', space=sflag, size = 0x4, offset = 0, fixed_abs, tag = 'sflag constant byte address 0x0 - dummy sync flag']
  #allocation37 [shape = 's32[]', space=sflag, size = 0x4, offset = 0, fixed_abs, tag = 'sflag constant byte address 0x0 - dummy sync flag']
  #allocation38 [shape = 's32[]', space=sflag, size = 0x4, offset = 0, fixed_abs, tag = 'sflag constant byte address 0x0 - dummy sync flag']
  #allocation39 [shape = 's32[]', space=sflag, size = 0x4, offset = 0, fixed_abs, tag = 'sflag constant byte address 0x0 - dummy sync flag']
  #allocation40 [shape = 's32[]', space=sflag, size = 0x4, offset = 0, fixed_abs, tag = 'sflag constant byte address 0x0 - dummy sync flag']
  #allocation41 [shape = 's32[]', space=sflag, size = 0x4, offset = 0, fixed_abs, tag = 'sflag constant byte address 0x0 - dummy sync flag']
  %s0 = inlined_call_operand.hbm [shape: f32[168,784], index: 0, kind: input, shape index: {}]
  %s1 = inlined_call_operand.hbm [shape: f32[168,168], index: 1, kind: input, shape index: {}]
  %s2 = inlined_call_operand.vmem [shape: f32[168,4], index: 2, kind: input, shape index: {}]
  %s3 = inlined_call_operand.hbm [shape: f32[168,784], index: 3, kind: output, shape index: {}]
  %s4 = sld [smem:[#allocation0]]
  $region81: #{tpu_custom_call.1} parent=0
    _
  %s6 = ssub.s32 1, %s4
  %s7 = scalar_select 0, %s6, %s4
  // Predicated region
  $region2: #{tpu_custom_call.1} parent=0 // pred_check
    _
  $region3: #{tpu_custom_call.1} parent=0 // pred_check_branch
    %9 = sbr.rel (0) target = $region5
  $region4: #{tpu_custom_call.1} parent=0 // pred_region
    loop: start=0, step=1, limit=1
    $region6: #{tpu_custom_call.1} parent=4 // loop_pre_header
      _
    $region7: #{tpu_custom_call.1} parent=4 // loop_header
      %s11 = sphi 0, %s15
      %p12 = scmp.ge.s32.totalorder %s11, 1
      %s16 = sphi %s2, %s2
      %s17 = sphi [#allocation5], [#allocation5]
    $region8: #{tpu_custom_call.1} parent=4 // loop_header_branch
      %14 = sbr.rel (%p12) target = $region12
    $region9: #{tpu_custom_call.1} parent=4 // loop_body
      %v18 = vld [vmem:[%s16] sm:$0xff]
      %19 = vst [vmem:[%s17] sm:$0xff] %v18
      %v20 = vld [vmem:[%s16 + $0x8] sm:$0xff]
      %21 = vst [vmem:[%s17 + $0x8] sm:$0xff] %v20
      %v22 = vld [vmem:[%s16 + $0x10] sm:$0xff]
      %23 = vst [vmem:[%s17 + $0x10] sm:$0xff] %v22
      %v24 = vld [vmem:[%s16 + $0x18] sm:$0xff]
      %25 = vst [vmem:[%s17 + $0x18] sm:$0xff] %v24
      %v26 = vld [vmem:[%s16 + $0x20] sm:$0xff]
      %27 = vst [vmem:[%s17 + $0x20] sm:$0xff] %v26
      %v28 = vld [vmem:[%s16 + $0x28] sm:$0xff]
      %29 = vst [vmem:[%s17 + $0x28] sm:$0xff] %v28
      %v30 = vld [vmem:[%s16 + $0x30] sm:$0xff]
      %31 = vst [vmem:[%s17 + $0x30] sm:$0xff] %v30
      %v32 = vld [vmem:[%s16 + $0x38] sm:$0xff]
      %33 = vst [vmem:[%s17 + $0x38] sm:$0xff] %v32
      %v34 = vld [vmem:[%s16 + $0x40] sm:$0xff]
      %35 = vst [vmem:[%s17 + $0x40] sm:$0xff] %v34
      %v36 = vld [vmem:[%s16 + $0x48] sm:$0xff]
      %37 = vst [vmem:[%s17 + $0x48] sm:$0xff] %v36
      %v38 = vld [vmem:[%s16 + $0x50] sm:$0xff]
      %39 = vst [vmem:[%s17 + $0x50] sm:$0xff] %v38
      %v40 = vld [vmem:[%s16 + $0x58] sm:$0xff]
      %41 = vst [vmem:[%s17 + $0x58] sm:$0xff] %v40
      %v42 = vld [vmem:[%s16 + $0x60] sm:$0xff]
      %43 = vst [vmem:[%s17 + $0x60] sm:$0xff] %v42
      %v44 = vld [vmem:[%s16 + $0x68] sm:$0xff]
      %45 = vst [vmem:[%s17 + $0x68] sm:$0xff] %v44
      %v46 = vld [vmem:[%s16 + $0x70] sm:$0xff]
      %47 = vst [vmem:[%s17 + $0x70] sm:$0xff] %v46
      %v48 = vld [vmem:[%s16 + $0x78] sm:$0xff]
      %49 = vst [vmem:[%s17 + $0x78] sm:$0xff] %v48
      %v50 = vld [vmem:[%s16 + $0x80] sm:$0xff]
      %51 = vst [vmem:[%s17 + $0x80] sm:$0xff] %v50
      %v52 = vld [vmem:[%s16 + $0x88] sm:$0xff]
      %53 = vst [vmem:[%s17 + $0x88] sm:$0xff] %v52
      %v54 = vld [vmem:[%s16 + $0x90] sm:$0xff]
      %55 = vst [vmem:[%s17 + $0x90] sm:$0xff] %v54
      %v56 = vld [vmem:[%s16 + $0x98] sm:$0xff]
      %57 = vst [vmem:[%s17 + $0x98] sm:$0xff] %v56
      %v58 = vld [vmem:[%s16 + $0xa0] sm:$0xff]
      %59 = vst [vmem:[%s17 + $0xa0] sm:$0xff] %v58
    $region10: #{tpu_custom_call.1} parent=4 // loop_footer
      %s15 = sadd.s32 1, %s11
    $region11: #{tpu_custom_call.1} parent=4 // loop_footer_branch
      %10 = sbr.rel target = $region7
    $region12: #{tpu_custom_call.1} parent=4 // loop_exit
      _
  $region5: #{tpu_custom_call.1} parent=0 // pred_fallthru
    _
  // Predicated region
  $region13: #{tpu_custom_call.1} parent=0 // pred_check
    _
  $region14: #{tpu_custom_call.1} parent=0 // pred_check_branch
    %61 = sbr.rel target = $region16
  $region15: #{tpu_custom_call.1} parent=0 // pred_region
    _
  $region16: #{tpu_custom_call.1} parent=0 // pred_fallthru
    _
  // Predicated region
  $region17: #{tpu_custom_call.1} parent=0 // pred_check
    _
  $region18: #{tpu_custom_call.1} parent=0 // pred_check_branch
    %64 = sbr.rel (0) target = $region20
  $region19: #{tpu_custom_call.1} parent=0 // pred_region
    %65 = vsyncadd [#allocation8], 2688
  $region20: #{tpu_custom_call.1} parent=0 // pred_fallthru
    _
  // Predicated region
  $region21: #{tpu_custom_call.1} parent=0 // pred_check
    _
  $region22: #{tpu_custom_call.1} parent=0 // pred_check_branch
    %67 = sbr.rel target = $region24
  $region23: #{tpu_custom_call.1} parent=0 // pred_region
    %68 = sst [smem:[#allocation12]] [#allocation11]
    %69 = sst [smem:[#allocation13]] [#allocation10]
  $region24: #{tpu_custom_call.1} parent=0 // pred_fallthru
    _
  %71 = shalt.err (0)
  %s73 = sshll.u32 %s0, 4
  %s74 = int_to_ptr.hbm [resolvable:$true] %s73
  %s75 = sshll.u32 [#allocation2], 4
  %s76 = int_to_ptr.vmem [resolvable:$true] %s75
  %78 = dma.hbm_to_vmem [thread:$0]  %s74, 2688, %s76, [#allocation6]
  %s79 = scalar_lea.hbm %s0, 168
  %s80 = scalar_lea.vmem [#allocation2], 168
  %s81 = scalar_lea.sflag [#allocation6], 1
  // Predicated region
  $region25: #{tpu_custom_call.1} parent=0 // pred_check
    _
  $region26: #{tpu_custom_call.1} parent=0 // pred_check_branch
    %83 = sbr.rel target = $region28
  $region27: #{tpu_custom_call.1} parent=0 // pred_region
    %84 = sst [smem:[#allocation12]] [#allocation15]
    %85 = sst [smem:[#allocation13]] [#allocation14]
  $region28: #{tpu_custom_call.1} parent=0 // pred_fallthru
    _
  %87 = shalt.err (0)
  %s89 = sshll.u32 %s79, 4
  %s90 = int_to_ptr.hbm [resolvable:$true] %s89
  %s91 = sshll.u32 %s80, 4
  %s92 = int_to_ptr.vmem [resolvable:$true] %s91
  %94 = dma.hbm_to_vmem [thread:$0]  %s90, 2688, %s92, %s81
  %s95 = scalar_lea.hbm %s0, 336
  %s96 = scalar_lea.vmem [#allocation2], 336
  %s97 = scalar_lea.sflag [#allocation6], 2
  // Predicated region
  $region29: #{tpu_custom_call.1} parent=0 // pred_check
    _
  $region30: #{tpu_custom_call.1} parent=0 // pred_check_branch
    %99 = sbr.rel target = $region32
  $region31: #{tpu_custom_call.1} parent=0 // pred_region
    %100 = sst [smem:[#allocation12]] [#allocation17]
    %101 = sst [smem:[#allocation13]] [#allocation16]
  $region32: #{tpu_custom_call.1} parent=0 // pred_fallthru
    _
  %103 = shalt.err (0)
  %s105 = sshll.u32 %s95, 4
  %s106 = int_to_ptr.hbm [resolvable:$true] %s105
  %s107 = sshll.u32 %s96, 4
  %s108 = int_to_ptr.vmem [resolvable:$true] %s107
  %110 = dma.hbm_to_vmem [thread:$0]  %s106, 2688, %s108, %s97
  %s111 = scalar_lea.hbm %s0, 504
  %s112 = scalar_lea.vmem [#allocation2], 504
  %s113 = scalar_lea.sflag [#allocation6], 3
  // Predicated region
  $region33: #{tpu_custom_call.1} parent=0 // pred_check
    _
  $region34: #{tpu_custom_call.1} parent=0 // pred_check_branch
    %115 = sbr.rel target = $region36
  $region35: #{tpu_custom_call.1} parent=0 // pred_region
    %116 = sst [smem:[#allocation12]] [#allocation19]
    %117 = sst [smem:[#allocation13]] [#allocation18]
  $region36: #{tpu_custom_call.1} parent=0 // pred_fallthru
    _
  %119 = shalt.err (0)
  %s121 = sshll.u32 %s111, 4
  %s122 = int_to_ptr.hbm [resolvable:$true] %s121
  %s123 = sshll.u32 %s112, 4
  %s124 = int_to_ptr.vmem [resolvable:$true] %s123
  %126 = dma.hbm_to_vmem [thread:$0]  %s122, 2688, %s124, %s113
  %s127 = scalar_lea.hbm %s0, 672
  %s128 = scalar_lea.vmem [#allocation2], 672
  %s129 = scalar_lea.sflag [#allocation6], 4
  // Predicated region
  $region37: #{tpu_custom_call.1} parent=0 // pred_check
    _
  $region38: #{tpu_custom_call.1} parent=0 // pred_check_branch
    %131 = sbr.rel target = $region40
  $region39: #{tpu_custom_call.1} parent=0 // pred_region
    %132 = sst [smem:[#allocation12]] [#allocation21]
    %133 = sst [smem:[#allocation13]] [#allocation20]
  $region40: #{tpu_custom_call.1} parent=0 // pred_fallthru
    _
  %135 = shalt.err (0)
  %s137 = sshll.u32 %s127, 4
  %s138 = int_to_ptr.hbm [resolvable:$true] %s137
  %s139 = sshll.u32 %s128, 4
  %s140 = int_to_ptr.vmem [resolvable:$true] %s139
  %142 = dma.hbm_to_vmem [thread:$0]  %s138, 2688, %s140, %s129
  %s143 = scalar_lea.hbm %s0, 840
  %s144 = scalar_lea.vmem [#allocation2], 840
  %s145 = scalar_lea.sflag [#allocation6], 5
  // Predicated region
  $region41: #{tpu_custom_call.1} parent=0 // pred_check
    _
  $region42: #{tpu_custom_call.1} parent=0 // pred_check_branch
    %147 = sbr.rel target = $region44
  $region43: #{tpu_custom_call.1} parent=0 // pred_region
    %148 = sst [smem:[#allocation12]] [#allocation23]
    %149 = sst [smem:[#allocation13]] [#allocation22]
  $region44: #{tpu_custom_call.1} parent=0 // pred_fallthru
    _
  %151 = shalt.err (0)
  %s153 = sshll.u32 %s143, 4
  %s154 = int_to_ptr.hbm [resolvable:$true] %s153
  %s155 = sshll.u32 %s144, 4
  %s156 = int_to_ptr.vmem [resolvable:$true] %s155
  %158 = dma.hbm_to_vmem [thread:$0]  %s154, 2688, %s156, %s145
  %s159 = scalar_lea.hbm %s0, 1008
  %s160 = scalar_lea.vmem [#allocation2], 1008
  %s161 = scalar_lea.sflag [#allocation6], 6
  // Predicated region
  $region45: #{tpu_custom_call.1} parent=0 // pred_check
    _
  $region46: #{tpu_custom_call.1} parent=0 // pred_check_branch
    %163 = sbr.rel target = $region48
  $region47: #{tpu_custom_call.1} parent=0 // pred_region
    %164 = sst [smem:[#allocation12]] [#allocation25]
    %165 = sst [smem:[#allocation13]] [#allocation24]
  $region48: #{tpu_custom_call.1} parent=0 // pred_fallthru
    _
  %167 = shalt.err (0)
  %s169 = sshll.u32 %s159, 4
  %s170 = int_to_ptr.hbm [resolvable:$true] %s169
  %s171 = sshll.u32 %s160, 4
  %s172 = int_to_ptr.vmem [resolvable:$true] %s171
  %174 = dma.hbm_to_vmem [thread:$0]  %s170, 2688, %s172, %s161
  %s175 = scalar_lea.sflag [#allocation8], 1
  // Predicated region
  $region49: #{tpu_custom_call.1} parent=0 // pred_check
    _
  $region50: #{tpu_custom_call.1} parent=0 // pred_check_branch
    %177 = sbr.rel target = $region52
  $region51: #{tpu_custom_call.1} parent=0 // pred_region
    %178 = sst [smem:[#allocation12]] [#allocation27]
    %179 = sst [smem:[#allocation13]] [#allocation26]
  $region52: #{tpu_custom_call.1} parent=0 // pred_fallthru
    _
  %181 = shalt.err (0)
  %s183 = sshll.u32 %s1, 4
  %s184 = int_to_ptr.hbm [resolvable:$true] %s183
  %s185 = sshll.u32 [#allocation4], 4
  %s186 = int_to_ptr.vmem [resolvable:$true] %s185
  %188 = dma.hbm_to_vmem [thread:$0]  %s184, 5376, %s186, %s175
  %s189 = smul.u32 168, 1
  %s190 = sshll.u32 %s189, 4
  %191 = dma.done [#allocation8], %s190
  %s192 = smul.u32 8, 3
  %s193 = smul.u32 %s192, 7
  %s194 = sshll.u32 %s193, 4
  %195 = dma.done [#allocation6], %s194
  %v196 = vld [vmem:[#allocation2] sm:$0xff]
  %v197 = vld [vmem:[#allocation2 + $0x8] sm:$0xff]
  %v198 = vld [vmem:[#allocation2 + $0x10] sm:$0xff]
  %v199 = vld [vmem:[#allocation2 + $0x18] sm:$0xff]
  %v200 = vld [vmem:[#allocation2 + $0x20] sm:$0xff]
  %v201 = vld [vmem:[#allocation2 + $0x28] sm:$0xff]
  %v202 = vld [vmem:[#allocation2 + $0x30] sm:$0xff]
  %v203 = vld [vmem:[#allocation2 + $0x38] sm:$0xff]
  %v204 = vld [vmem:[#allocation2 + $0x40] sm:$0xff]
  %v205 = vld [vmem:[#allocation2 + $0x48] sm:$0xff]
  %v206 = vld [vmem:[#allocation2 + $0x50] sm:$0xff]
  %v207 = vld [vmem:[#allocation2 + $0x58] sm:$0xff]
  %v208 = vld [vmem:[#allocation2 + $0x60] sm:$0xff]
  %v209 = vld [vmem:[#allocation2 + $0x68] sm:$0xff]
  %v210 = vld [vmem:[#allocation2 + $0x70] sm:$0xff]
  %v211 = vld [vmem:[#allocation2 + $0x78] sm:$0xff]
  %v212 = vld [vmem:[#allocation2 + $0x80] sm:$0xff]
  %v213 = vld [vmem:[#allocation2 + $0x88] sm:$0xff]
  %v214 = vld [vmem:[#allocation2 + $0x90] sm:$0xff]
  %v215 = vld [vmem:[#allocation2 + $0x98] sm:$0xff]
  %v216 = vld [vmem:[#allocation2 + $0xa0] sm:$0xff]
  %v217 = vadd.f32 %v196, %v197
  %v218 = vadd.f32 %v217, %v198
  %v219 = vadd.f32 %v218, %v199
  %v220 = vadd.f32 %v219, %v200
  %v221 = vadd.f32 %v220, %v201
  %vm222 = vcmask 130048
  %v223 = vsel %vm222, %v202, 0.0
  %v224 = vadd.f32 %v221, %v223
  %225 = vadd.xlane.f32.xlu0 %v224
  %v226 = vpop.xlane.xlu0 %225
  %v227 = vadd.f32 %v203, %v204
  %v228 = vadd.f32 %v227, %v205
  %v229 = vadd.f32 %v228, %v206
  %v230 = vadd.f32 %v229, %v207
  %v231 = vadd.f32 %v230, %v208
  %v232 = vsel %vm222, %v209, 0.0
  %v233 = vadd.f32 %v231, %v232
  %234 = vadd.xlane.f32.xlu0 %v233
  %v235 = vpop.xlane.xlu0 %234
  %v236 = vadd.f32 %v210, %v211
  %v237 = vadd.f32 %v236, %v212
  %v238 = vadd.f32 %v237, %v213
  %v239 = vadd.f32 %v238, %v214
  %v240 = vadd.f32 %v239, %v215
  %v241 = vsel %vm222, %v216, 0.0
  %v242 = vadd.f32 %v240, %v241
  %243 = vadd.xlane.f32.xlu0 %v242
  %v244 = vpop.xlane.xlu0 %243
  %v245 = vmul.f32 %v196, %v196
  %v246 = vmul.f32 %v197, %v197
  %v247 = vmul.f32 %v198, %v198
  %v248 = vmul.f32 %v199, %v199
  %v249 = vmul.f32 %v200, %v200
  %v250 = vmul.f32 %v201, %v201
  %v251 = vmul.f32 %v202, %v202
  %v252 = vmul.f32 %v203, %v203
  %v253 = vmul.f32 %v204, %v204
  %v254 = vmul.f32 %v205, %v205
  %v255 = vmul.f32 %v206, %v206
  %v256 = vmul.f32 %v207, %v207
  %v257 = vmul.f32 %v208, %v208
  %v258 = vmul.f32 %v209, %v209
  %v259 = vmul.f32 %v210, %v210
  %v260 = vmul.f32 %v211, %v211
  %v261 = vmul.f32 %v212, %v212
  %v262 = vmul.f32 %v213, %v213
  %v263 = vmul.f32 %v214, %v214
  %v264 = vmul.f32 %v215, %v215
  %v265 = vmul.f32 %v216, %v216
  %v266 = vadd.f32 %v245, %v246
  %v267 = vadd.f32 %v266, %v247
  %v268 = vadd.f32 %v267, %v248
  %v269 = vadd.f32 %v268, %v249
  %v270 = vadd.f32 %v269, %v250
  %v271 = vsel %vm222, %v251, 0.0
  %v272 = vadd.f32 %v270, %v271
  %273 = vadd.xlane.f32.xlu0 %v272
  %v274 = vpop.xlane.xlu0 %273
  %v275 = vadd.f32 %v252, %v253
  %v276 = vadd.f32 %v275, %v254
  %v277 = vadd.f32 %v276, %v255
  %v278 = vadd.f32 %v277, %v256
  %v279 = vadd.f32 %v278, %v257
  %v280 = vsel %vm222, %v258, 0.0
  %v281 = vadd.f32 %v279, %v280
  %282 = vadd.xlane.f32.xlu0 %v281
  %v283 = vpop.xlane.xlu0 %282
  %v284 = vadd.f32 %v259, %v260
  %v285 = vadd.f32 %v284, %v261
  %v286 = vadd.f32 %v285, %v262
  %v287 = vadd.f32 %v286, %v263
  %v288 = vadd.f32 %v287, %v264
  %v289 = vsel %vm222, %v265, 0.0
  %v290 = vadd.f32 %v288, %v289
  %291 = vadd.xlane.f32.xlu0 %v290
  %v292 = vpop.xlane.xlu0 %291
  %v293 = vmul.f32 %v226, 0.0012755102
  %v294 = vmul.f32 %v235, 0.0012755102
  %v295 = vmul.f32 %v244, 0.0012755102
  %v296 = vmul.f32 %v274, 0.0012755102
  %v297 = vmul.f32 %v283, 0.0012755102
  %v298 = vmul.f32 %v292, 0.0012755102
  %v299 = vmul.f32 %v293, %v293
  %v300 = vmul.f32 %v294, %v294
  %v301 = vmul.f32 %v295, %v295
  %v302 = vsub.f32 %v296, %v299
  %v303 = vsub.f32 %v297, %v300
  %v304 = vsub.f32 %v298, %v301
  %v305 = vmax.f32 %v302, 0.0
  %v306 = vmax.f32 %v303, 0.0
  %v307 = vmax.f32 %v304, 0.0
  %v308 = vld [vmem:[#allocation5] sm:$0xff]
  %v309 = vld [vmem:[#allocation5 + $0x8] sm:$0xff]
  %v310 = vld [vmem:[#allocation5 + $0x10] sm:$0xff]
  %v311 = vadd.f32 %v305, 1e-05
  %v312 = vadd.f32 %v306, 1e-05
  %v313 = vadd.f32 %v307, 1e-05
  %v314 = vrsqrt.pop %v311
  %v315 = vmul.f32 %v314, %v311
  %v316 = vmul.f32 %v315, %v314
  %v317 = vmul.f32 0.5, %v316
  %v318 = vsub.f32 1.5, %v317
  %v319 = vmul.f32 %v314, %v318
  %vm320 = vweird.f32 %v311
  %vm321 = vweird.f32 %v314
  %vm322 = vmor %vm320, %vm321
  %v323 = vsel %vm322, %v314, %v319
  %v324 = vrsqrt.pop %v312
  %v325 = vmul.f32 %v324, %v312
  %v326 = vmul.f32 %v325, %v324
  %v327 = vmul.f32 0.5, %v326
  %v328 = vsub.f32 1.5, %v327
  %v329 = vmul.f32 %v324, %v328
  %vm330 = vweird.f32 %v312
  %vm331 = vweird.f32 %v324
  %vm332 = vmor %vm330, %vm331
  %v333 = vsel %vm332, %v324, %v329
  %v334 = vrsqrt.pop %v313
  %v335 = vmul.f32 %v334, %v313
  %v336 = vmul.f32 %v335, %v334
  %v337 = vmul.f32 0.5, %v336
  %v338 = vsub.f32 1.5, %v337
  %v339 = vmul.f32 %v334, %v338
  %vm340 = vweird.f32 %v313
  %vm341 = vweird.f32 %v334
  %vm342 = vmor %vm340, %vm341
  %v343 = vsel %vm342, %v334, %v339
  %v344 = vmul.f32 %v308, %v323
  %v345 = vmul.f32 %v309, %v333
  %v346 = vmul.f32 %v310, %v343
  %v347 = vmul.f32 %v293, %v344
  %v348 = vmul.f32 %v294, %v345
  %v349 = vmul.f32 %v295, %v346
  %353 = vrot.lane.b32.xlu0 %v347, 1
  %v354 = vpop.permute.xlu0 %353
  %355 = vrot.lane.b32.xlu0 %v348, 1
  %v356 = vpop.permute.xlu0 %355
  %357 = vrot.lane.b32.xlu0 %v349, 1
  %v358 = vpop.permute.xlu0 %357
  %v362 = vsub.f32 %v308, %v354
  %v363 = vsub.f32 %v309, %v356
  %v364 = vsub.f32 %v310, %v358
  %366 = vset.pattern.permute.xlu0 0
  %367 = vperm.xlu0 %366, %v344
  %v368 = vpop.permute.xlu0 %367
  %371 = vset.pattern.permute.xlu0 0
  %372 = vperm.xlu0 %371, %v345
  %v373 = vpop.permute.xlu0 %372
  %376 = vset.pattern.permute.xlu0 0
  %377 = vperm.xlu0 %376, %v346
  %v378 = vpop.permute.xlu0 %377
  %v380 = vmul.f32 %v196, %v368
  %v381 = vmul.f32 %v197, %v368
  %v382 = vmul.f32 %v198, %v368
  %v383 = vmul.f32 %v199, %v368
  %v384 = vmul.f32 %v200, %v368
  %v385 = vmul.f32 %v201, %v368
  %v386 = vmul.f32 %v202, %v368
  %v387 = vmul.f32 %v203, %v373
  %v388 = vmul.f32 %v204, %v373
  %v389 = vmul.f32 %v205, %v373
  %v390 = vmul.f32 %v206, %v373
  %v391 = vmul.f32 %v207, %v373
  %v392 = vmul.f32 %v208, %v373
  %v393 = vmul.f32 %v209, %v373
  %v394 = vmul.f32 %v210, %v378
  %v395 = vmul.f32 %v211, %v378
  %v396 = vmul.f32 %v212, %v378
  %v397 = vmul.f32 %v213, %v378
  %v398 = vmul.f32 %v214, %v378
  %v399 = vmul.f32 %v215, %v378
  %v400 = vmul.f32 %v216, %v378
  %402 = vset.pattern.permute.xlu0 1
  %403 = vperm.xlu0 %402, %v362
  %v404 = vpop.permute.xlu0 %403
  %407 = vset.pattern.permute.xlu0 1
  %408 = vperm.xlu0 %407, %v363
  %v409 = vpop.permute.xlu0 %408
  %412 = vset.pattern.permute.xlu0 1
  %413 = vperm.xlu0 %412, %v364
  %v414 = vpop.permute.xlu0 %413
  %v416 = vadd.f32 %v380, %v404
  %v417 = vadd.f32 %v381, %v404
  %v418 = vadd.f32 %v382, %v404
  %v419 = vadd.f32 %v383, %v404
  %v420 = vadd.f32 %v384, %v404
  %v421 = vadd.f32 %v385, %v404
  %v422 = vadd.f32 %v386, %v404
  %v423 = vadd.f32 %v387, %v409
  %v424 = vadd.f32 %v388, %v409
  %v425 = vadd.f32 %v389, %v409
  %v426 = vadd.f32 %v390, %v409
  %v427 = vadd.f32 %v391, %v409
  %v428 = vadd.f32 %v392, %v409
  %v429 = vadd.f32 %v393, %v409
  %v430 = vadd.f32 %v394, %v414
  %v431 = vadd.f32 %v395, %v414
  %v432 = vadd.f32 %v396, %v414
  %v433 = vadd.f32 %v397, %v414
  %v434 = vadd.f32 %v398, %v414
  %v435 = vadd.f32 %v399, %v414
  %v436 = vadd.f32 %v400, %v414
  %v437 = vmax.f32 %v416, 0.0
  %v438 = vmax.f32 %v417, 0.0
  %v439 = vmax.f32 %v418, 0.0
  %v440 = vmax.f32 %v419, 0.0
  %v441 = vmax.f32 %v420, 0.0
  %v442 = vmax.f32 %v421, 0.0
  %v443 = vmax.f32 %v422, 0.0
  %v444 = vmax.f32 %v423, 0.0
  %v445 = vmax.f32 %v424, 0.0
  %v446 = vmax.f32 %v425, 0.0
  %v447 = vmax.f32 %v426, 0.0
  %v448 = vmax.f32 %v427, 0.0
  %v449 = vmax.f32 %v428, 0.0
  %v450 = vmax.f32 %v429, 0.0
  %v451 = vmax.f32 %v430, 0.0
  %v452 = vmax.f32 %v431, 0.0
  %v453 = vmax.f32 %v432, 0.0
  %v454 = vmax.f32 %v433, 0.0
  %v455 = vmax.f32 %v434, 0.0
  %v456 = vmax.f32 %v435, 0.0
  %v457 = vmax.f32 %v436, 0.0
  %458 = vst [vmem:[#allocation2] sm:$0xff] %v437
  %459 = vst [vmem:[#allocation2 + $0x8] sm:$0xff] %v438
  %460 = vst [vmem:[#allocation2 + $0x10] sm:$0xff] %v439
  %461 = vst [vmem:[#allocation2 + $0x18] sm:$0xff] %v440
  %462 = vst [vmem:[#allocation2 + $0x20] sm:$0xff] %v441
  %463 = vst [vmem:[#allocation2 + $0x28] sm:$0xff] %v442
  %464 = vst.msk [vmem:[#allocation2 + $0x30] sm:$0xff] %vm222, %v443
  %465 = vst [vmem:[#allocation2 + $0x38] sm:$0xff] %v444
  %466 = vst [vmem:[#allocation2 + $0x40] sm:$0xff] %v445
  %467 = vst [vmem:[#allocation2 + $0x48] sm:$0xff] %v446
  %468 = vst [vmem:[#allocation2 + $0x50] sm:$0xff] %v447
  %469 = vst [vmem:[#allocation2 + $0x58] sm:$0xff] %v448
  %470 = vst [vmem:[#allocation2 + $0x60] sm:$0xff] %v449
  %471 = vst.msk [vmem:[#allocation2 + $0x68] sm:$0xff] %vm222, %v450
  %472 = vst [vmem:[#allocation2 + $0x70] sm:$0xff] %v451
  %473 = vst [vmem:[#allocation2 + $0x78] sm:$0xff] %v452
  %474 = vst [vmem:[#allocation2 + $0x80] sm:$0xff] %v453
  %475 = vst [vmem:[#allocation2 + $0x88] sm:$0xff] %v454
  %476 = vst [vmem:[#allocation2 + $0x90] sm:$0xff] %v455
  %477 = vst [vmem:[#allocation2 + $0x98] sm:$0xff] %v456
  %478 = vst.msk [vmem:[#allocation2 + $0xa0] sm:$0xff] %vm222, %v457
  %s479 = sshll.u32 %s193, 4
  %480 = dma.done %s81, %s479
  %v481 = vld [vmem:[#allocation2 + $0xa8] sm:$0xff]
  %v482 = vld [vmem:[#allocation2 + $0xb0] sm:$0xff]
  %v483 = vld [vmem:[#allocation2 + $0xb8] sm:$0xff]
  %v484 = vld [vmem:[#allocation2 + $0xc0] sm:$0xff]
  %v485 = vld [vmem:[#allocation2 + $0xc8] sm:$0xff]
  %v486 = vld [vmem:[#allocation2 + $0xd0] sm:$0xff]
  %v487 = vld [vmem:[#allocation2 + $0xd8] sm:$0xff]
  %v488 = vld [vmem:[#allocation2 + $0xe0] sm:$0xff]
  %v489 = vld [vmem:[#allocation2 + $0xe8] sm:$0xff]
  %v490 = vld [vmem:[#allocation2 + $0xf0] sm:$0xff]
  %v491 = vld [vmem:[#allocation2 + $0xf8] sm:$0xff]
  %v492 = vld [vmem:[#allocation2 + $0x100] sm:$0xff]
  %v493 = vld [vmem:[#allocation2 + $0x108] sm:$0xff]
  %v494 = vld [vmem:[#allocation2 + $0x110] sm:$0xff]
  %v495 = vld [vmem:[#allocation2 + $0x118] sm:$0xff]
  %v496 = vld [vmem:[#allocation2 + $0x120] sm:$0xff]
  %v497 = vld [vmem:[#allocation2 + $0x128] sm:$0xff]
  %v498 = vld [vmem:[#allocation2 + $0x130] sm:$0xff]
  %v499 = vld [vmem:[#allocation2 + $0x138] sm:$0xff]
  %v500 = vld [vmem:[#allocation2 + $0x140] sm:$0xff]
  %v501 = vld [vmem:[#allocation2 + $0x148] sm:$0xff]
  %v502 = vadd.f32 %v481, %v482
  %v503 = vadd.f32 %v502, %v483
  %v504 = vadd.f32 %v503, %v484
  %v505 = vadd.f32 %v504, %v485
  %v506 = vadd.f32 %v505, %v486
  %v507 = vsel %vm222, %v487, 0.0
  %v508 = vadd.f32 %v506, %v507
  %509 = vadd.xlane.f32.xlu0 %v508
  %v510 = vpop.xlane.xlu0 %509
  %v511 = vadd.f32 %v488, %v489
  %v512 = vadd.f32 %v511, %v490
  %v513 = vadd.f32 %v512, %v491
  %v514 = vadd.f32 %v513, %v492
  %v515 = vadd.f32 %v514, %v493
  %v516 = vsel %vm222, %v494, 0.0
  %v517 = vadd.f32 %v515, %v516
  %518 = vadd.xlane.f32.xlu0 %v517
  %v519 = vpop.xlane.xlu0 %518
  %v520 = vadd.f32 %v495, %v496
  %v521 = vadd.f32 %v520, %v497
  %v522 = vadd.f32 %v521, %v498
  %v523 = vadd.f32 %v522, %v499
  %v524 = vadd.f32 %v523, %v500
  %v525 = vsel %vm222, %v501, 0.0
  %v526 = vadd.f32 %v524, %v525
  %527 = vadd.xlane.f32.xlu0 %v526
  %v528 = vpop.xlane.xlu0 %527
  %v529 = vmul.f32 %v481, %v481
  %v530 = vmul.f32 %v482, %v482
  %v531 = vmul.f32 %v483, %v483
  %v532 = vmul.f32 %v484, %v484
  %v533 = vmul.f32 %v485, %v485
  %v534 = vmul.f32 %v486, %v486
  %v535 = vmul.f32 %v487, %v487
  %v536 = vmul.f32 %v488, %v488
  %v537 = vmul.f32 %v489, %v489
  %v538 = vmul.f32 %v490, %v490
  %v539 = vmul.f32 %v491, %v491
  %v540 = vmul.f32 %v492, %v492
  %v541 = vmul.f32 %v493, %v493
  %v542 = vmul.f32 %v494, %v494
  %v543 = vmul.f32 %v495, %v495
  %v544 = vmul.f32 %v496, %v496
  %v545 = vmul.f32 %v497, %v497
  %v546 = vmul.f32 %v498, %v498
  %v547 = vmul.f32 %v499, %v499
  %v548 = vmul.f32 %v500, %v500
  %v549 = vmul.f32 %v501, %v501
  %v550 = vadd.f32 %v529, %v530
  %v551 = vadd.f32 %v550, %v531
  %v552 = vadd.f32 %v551, %v532
  %v553 = vadd.f32 %v552, %v533
  %v554 = vadd.f32 %v553, %v534
  %v555 = vsel %vm222, %v535, 0.0
  %v556 = vadd.f32 %v554, %v555
  %557 = vadd.xlane.f32.xlu0 %v556
  %v558 = vpop.xlane.xlu0 %557
  %v559 = vadd.f32 %v536, %v537
  %v560 = vadd.f32 %v559, %v538
  %v561 = vadd.f32 %v560, %v539
  %v562 = vadd.f32 %v561, %v540
  %v563 = vadd.f32 %v562, %v541
  %v564 = vsel %vm222, %v542, 0.0
  %v565 = vadd.f32 %v563, %v564
  %566 = vadd.xlane.f32.xlu0 %v565
  %v567 = vpop.xlane.xlu0 %566
  %v568 = vadd.f32 %v543, %v544
  %v569 = vadd.f32 %v568, %v545
  %v570 = vadd.f32 %v569, %v546
  %v571 = vadd.f32 %v570, %v547
  %v572 = vadd.f32 %v571, %v548
  %v573 = vsel %vm222, %v549, 0.0
  %v574 = vadd.f32 %v572, %v573
  %575 = vadd.xlane.f32.xlu0 %v574
  %v576 = vpop.xlane.xlu0 %575
  %v577 = vmul.f32 %v510, 0.0012755102
  %v578 = vmul.f32 %v519, 0.0012755102
  %v579 = vmul.f32 %v528, 0.0012755102
  %v580 = vmul.f32 %v558, 0.0012755102
  %v581 = vmul.f32 %v567, 0.0012755102
  %v582 = vmul.f32 %v576, 0.0012755102
  %v583 = vmul.f32 %v577, %v577
  %v584 = vmul.f32 %v578, %v578
  %v585 = vmul.f32 %v579, %v579
  %v586 = vsub.f32 %v580, %v583
  %v587 = vsub.f32 %v581, %v584
  %v588 = vsub.f32 %v582, %v585
  %v589 = vmax.f32 %v586, 0.0
  %v590 = vmax.f32 %v587, 0.0
  %v591 = vmax.f32 %v588, 0.0
  %v592 = vld [vmem:[#allocation5 + $0x18] sm:$0xff]
  %v593 = vld [vmem:[#allocation5 + $0x20] sm:$0xff]
  %v594 = vld [vmem:[#allocation5 + $0x28] sm:$0xff]
  %v595 = vadd.f32 %v589, 1e-05
  %v596 = vadd.f32 %v590, 1e-05
  %v597 = vadd.f32 %v591, 1e-05
  %v598 = vrsqrt.pop %v595
  %v599 = vmul.f32 %v598, %v595
  %v600 = vmul.f32 %v599, %v598
  %v601 = vmul.f32 0.5, %v600
  %v602 = vsub.f32 1.5, %v601
  %v603 = vmul.f32 %v598, %v602
  %vm604 = vweird.f32 %v595
  %vm605 = vweird.f32 %v598
  %vm606 = vmor %vm604, %vm605
  %v607 = vsel %vm606, %v598, %v603
  %v608 = vrsqrt.pop %v596
  %v609 = vmul.f32 %v608, %v596
  %v610 = vmul.f32 %v609, %v608
  %v611 = vmul.f32 0.5, %v610
  %v612 = vsub.f32 1.5, %v611
  %v613 = vmul.f32 %v608, %v612
  %vm614 = vweird.f32 %v596
  %vm615 = vweird.f32 %v608
  %vm616 = vmor %vm614, %vm615
  %v617 = vsel %vm616, %v608, %v613
  %v618 = vrsqrt.pop %v597
  %v619 = vmul.f32 %v618, %v597
  %v620 = vmul.f32 %v619, %v618
  %v621 = vmul.f32 0.5, %v620
  %v622 = vsub.f32 1.5, %v621
  %v623 = vmul.f32 %v618, %v622
  %vm624 = vweird.f32 %v597
  %vm625 = vweird.f32 %v618
  %vm626 = vmor %vm624, %vm625
  %v627 = vsel %vm626, %v618, %v623
  %v628 = vmul.f32 %v592, %v607
  %v629 = vmul.f32 %v593, %v617
  %v630 = vmul.f32 %v594, %v627
  %v631 = vmul.f32 %v577, %v628
  %v632 = vmul.f32 %v578, %v629
  %v633 = vmul.f32 %v579, %v630
  %637 = vrot.lane.b32.xlu0 %v631, 1
  %v638 = vpop.permute.xlu0 %637
  %639 = vrot.lane.b32.xlu0 %v632, 1
  %v640 = vpop.permute.xlu0 %639
  %641 = vrot.lane.b32.xlu0 %v633, 1
  %v642 = vpop.permute.xlu0 %641
  %v646 = vsub.f32 %v592, %v638
  %v647 = vsub.f32 %v593, %v640
  %v648 = vsub.f32 %v594, %v642
  %650 = vset.pattern.permute.xlu0 0
  %651 = vperm.xlu0 %650, %v628
  %v652 = vpop.permute.xlu0 %651
  %655 = vset.pattern.permute.xlu0 0
  %656 = vperm.xlu0 %655, %v629
  %v657 = vpop.permute.xlu0 %656
  %660 = vset.pattern.permute.xlu0 0
  %661 = vperm.xlu0 %660, %v630
  %v662 = vpop.permute.xlu0 %661
  %v664 = vmul.f32 %v481, %v652
  %v665 = vmul.f32 %v482, %v652
  %v666 = vmul.f32 %v483, %v652
  %v667 = vmul.f32 %v484, %v652
  %v668 = vmul.f32 %v485, %v652
  %v669 = vmul.f32 %v486, %v652
  %v670 = vmul.f32 %v487, %v652
  %v671 = vmul.f32 %v488, %v657
  %v672 = vmul.f32 %v489, %v657
  %v673 = vmul.f32 %v490, %v657
  %v674 = vmul.f32 %v491, %v657
  %v675 = vmul.f32 %v492, %v657
  %v676 = vmul.f32 %v493, %v657
  %v677 = vmul.f32 %v494, %v657
  %v678 = vmul.f32 %v495, %v662
  %v679 = vmul.f32 %v496, %v662
  %v680 = vmul.f32 %v497, %v662
  %v681 = vmul.f32 %v498, %v662
  %v682 = vmul.f32 %v499, %v662
  %v683 = vmul.f32 %v500, %v662
  %v684 = vmul.f32 %v501, %v662
  %686 = vset.pattern.permute.xlu0 1
  %687 = vperm.xlu0 %686, %v646
  %v688 = vpop.permute.xlu0 %687
  %691 = vset.pattern.permute.xlu0 1
  %692 = vperm.xlu0 %691, %v647
  %v693 = vpop.permute.xlu0 %692
  %696 = vset.pattern.permute.xlu0 1
  %697 = vperm.xlu0 %696, %v648
  %v698 = vpop.permute.xlu0 %697
  %v700 = vadd.f32 %v664, %v688
  %v701 = vadd.f32 %v665, %v688
  %v702 = vadd.f32 %v666, %v688
  %v703 = vadd.f32 %v667, %v688
  %v704 = vadd.f32 %v668, %v688
  %v705 = vadd.f32 %v669, %v688
  %v706 = vadd.f32 %v670, %v688
  %v707 = vadd.f32 %v671, %v693
  %v708 = vadd.f32 %v672, %v693
  %v709 = vadd.f32 %v673, %v693
  %v710 = vadd.f32 %v674, %v693
  %v711 = vadd.f32 %v675, %v693
  %v712 = vadd.f32 %v676, %v693
  %v713 = vadd.f32 %v677, %v693
  %v714 = vadd.f32 %v678, %v698
  %v715 = vadd.f32 %v679, %v698
  %v716 = vadd.f32 %v680, %v698
  %v717 = vadd.f32 %v681, %v698
  %v718 = vadd.f32 %v682, %v698
  %v719 = vadd.f32 %v683, %v698
  %v720 = vadd.f32 %v684, %v698
  %v721 = vmax.f32 %v700, 0.0
  %v722 = vmax.f32 %v701, 0.0
  %v723 = vmax.f32 %v702, 0.0
  %v724 = vmax.f32 %v703, 0.0
  %v725 = vmax.f32 %v704, 0.0
  %v726 = vmax.f32 %v705, 0.0
  %v727 = vmax.f32 %v706, 0.0
  %v728 = vmax.f32 %v707, 0.0
  %v729 = vmax.f32 %v708, 0.0
  %v730 = vmax.f32 %v709, 0.0
  %v731 = vmax.f32 %v710, 0.0
  %v732 = vmax.f32 %v711, 0.0
  %v733 = vmax.f32 %v712, 0.0
  %v734 = vmax.f32 %v713, 0.0
  %v735 = vmax.f32 %v714, 0.0
  %v736 = vmax.f32 %v715, 0.0
  %v737 = vmax.f32 %v716, 0.0
  %v738 = vmax.f32 %v717, 0.0
  %v739 = vmax.f32 %v718, 0.0
  %v740 = vmax.f32 %v719, 0.0
  %v741 = vmax.f32 %v720, 0.0
  %742 = vst [vmem:[#allocation2 + $0xa8] sm:$0xff] %v721
  %743 = vst [vmem:[#allocation2 + $0xb0] sm:$0xff] %v722
  %744 = vst [vmem:[#allocation2 + $0xb8] sm:$0xff] %v723
  %745 = vst [vmem:[#allocation2 + $0xc0] sm:$0xff] %v724
  %746 = vst [vmem:[#allocation2 + $0xc8] sm:$0xff] %v725
  %747 = vst [vmem:[#allocation2 + $0xd0] sm:$0xff] %v726
  %748 = vst.msk [vmem:[#allocation2 + $0xd8] sm:$0xff] %vm222, %v727
  %749 = vst [vmem:[#allocation2 + $0xe0] sm:$0xff] %v728
  %750 = vst [vmem:[#allocation2 + $0xe8] sm:$0xff] %v729
  %751 = vst [vmem:[#allocation2 + $0xf0] sm:$0xff] %v730
  %752 = vst [vmem:[#allocation2 + $0xf8] sm:$0xff] %v731
  %753 = vst [vmem:[#allocation2 + $0x100] sm:$0xff] %v732
  %754 = vst [vmem:[#allocation2 + $0x108] sm:$0xff] %v733
  %755 = vst.msk [vmem:[#allocation2 + $0x110] sm:$0xff] %vm222, %v734
  %756 = vst [vmem:[#allocation2 + $0x118] sm:$0xff] %v735
  %757 = vst [vmem:[#allocation2 + $0x120] sm:$0xff] %v736
  %758 = vst [vmem:[#allocation2 + $0x128] sm:$0xff] %v737
  %759 = vst [vmem:[#allocation2 + $0x130] sm:$0xff] %v738
  %760 = vst [vmem:[#allocation2 + $0x138] sm:$0xff] %v739
  %761 = vst [vmem:[#allocation2 + $0x140] sm:$0xff] %v740
  %762 = vst.msk [vmem:[#allocation2 + $0x148] sm:$0xff] %vm222, %v741
  %s763 = sshll.u32 %s193, 4
  %764 = dma.done %s97, %s763
  %v765 = vld [vmem:[#allocation2 + $0x150] sm:$0xff]
  %v766 = vld [vmem:[#allocation2 + $0x158] sm:$0xff]
  %v767 = vld [vmem:[#allocation2 + $0x160] sm:$0xff]
  %v768 = vld [vmem:[#allocation2 + $0x168] sm:$0xff]
  %v769 = vld [vmem:[#allocation2 + $0x170] sm:$0xff]
  %v770 = vld [vmem:[#allocation2 + $0x178] sm:$0xff]
  %v771 = vld [vmem:[#allocation2 + $0x180] sm:$0xff]
  %v772 = vld [vmem:[#allocation2 + $0x188] sm:$0xff]
  %v773 = vld [vmem:[#allocation2 + $0x190] sm:$0xff]
  %v774 = vld [vmem:[#allocation2 + $0x198] sm:$0xff]
  %v775 = vld [vmem:[#allocation2 + $0x1a0] sm:$0xff]
  %v776 = vld [vmem:[#allocation2 + $0x1a8] sm:$0xff]
  %v777 = vld [vmem:[#allocation2 + $0x1b0] sm:$0xff]
  %v778 = vld [vmem:[#allocation2 + $0x1b8] sm:$0xff]
  %v779 = vld [vmem:[#allocation2 + $0x1c0] sm:$0xff]
  %v780 = vld [vmem:[#allocation2 + $0x1c8] sm:$0xff]
  %v781 = vld [vmem:[#allocation2 + $0x1d0] sm:$0xff]
  %v782 = vld [vmem:[#allocation2 + $0x1d8] sm:$0xff]
  %v783 = vld [vmem:[#allocation2 + $0x1e0] sm:$0xff]
  %v784 = vld [vmem:[#allocation2 + $0x1e8] sm:$0xff]
  %v785 = vld [vmem:[#allocation2 + $0x1f0] sm:$0xff]
  %v786 = vadd.f32 %v765, %v766
  %v787 = vadd.f32 %v786, %v767
  %v788 = vadd.f32 %v787, %v768
  %v789 = vadd.f32 %v788, %v769
  %v790 = vadd.f32 %v789, %v770
  %v791 = vsel %vm222, %v771, 0.0
  %v792 = vadd.f32 %v790, %v791
  %793 = vadd.xlane.f32.xlu0 %v792
  %v794 = vpop.xlane.xlu0 %793
  %v795 = vadd.f32 %v772, %v773
  %v796 = vadd.f32 %v795, %v774
  %v797 = vadd.f32 %v796, %v775
  %v798 = vadd.f32 %v797, %v776
  %v799 = vadd.f32 %v798, %v777
  %v800 = vsel %vm222, %v778, 0.0
  %v801 = vadd.f32 %v799, %v800
  %802 = vadd.xlane.f32.xlu0 %v801
  %v803 = vpop.xlane.xlu0 %802
  %v804 = vadd.f32 %v779, %v780
  %v805 = vadd.f32 %v804, %v781
  %v806 = vadd.f32 %v805, %v782
  %v807 = vadd.f32 %v806, %v783
  %v808 = vadd.f32 %v807, %v784
  %v809 = vsel %vm222, %v785, 0.0
  %v810 = vadd.f32 %v808, %v809
  %811 = vadd.xlane.f32.xlu0 %v810
  %v812 = vpop.xlane.xlu0 %811
  %v813 = vmul.f32 %v765, %v765
  %v814 = vmul.f32 %v766, %v766
  %v815 = vmul.f32 %v767, %v767
  %v816 = vmul.f32 %v768, %v768
  %v817 = vmul.f32 %v769, %v769
  %v818 = vmul.f32 %v770, %v770
  %v819 = vmul.f32 %v771, %v771
  %v820 = vmul.f32 %v772, %v772
  %v821 = vmul.f32 %v773, %v773
  %v822 = vmul.f32 %v774, %v774
  %v823 = vmul.f32 %v775, %v775
  %v824 = vmul.f32 %v776, %v776
  %v825 = vmul.f32 %v777, %v777
  %v826 = vmul.f32 %v778, %v778
  %v827 = vmul.f32 %v779, %v779
  %v828 = vmul.f32 %v780, %v780
  %v829 = vmul.f32 %v781, %v781
  %v830 = vmul.f32 %v782, %v782
  %v831 = vmul.f32 %v783, %v783
  %v832 = vmul.f32 %v784, %v784
  %v833 = vmul.f32 %v785, %v785
  %v834 = vadd.f32 %v813, %v814
  %v835 = vadd.f32 %v834, %v815
  %v836 = vadd.f32 %v835, %v816
  %v837 = vadd.f32 %v836, %v817
  %v838 = vadd.f32 %v837, %v818
  %v839 = vsel %vm222, %v819, 0.0
  %v840 = vadd.f32 %v838, %v839
  %841 = vadd.xlane.f32.xlu0 %v840
  %v842 = vpop.xlane.xlu0 %841
  %v843 = vadd.f32 %v820, %v821
  %v844 = vadd.f32 %v843, %v822
  %v845 = vadd.f32 %v844, %v823
  %v846 = vadd.f32 %v845, %v824
  %v847 = vadd.f32 %v846, %v825
  %v848 = vsel %vm222, %v826, 0.0
  %v849 = vadd.f32 %v847, %v848
  %850 = vadd.xlane.f32.xlu0 %v849
  %v851 = vpop.xlane.xlu0 %850
  %v852 = vadd.f32 %v827, %v828
  %v853 = vadd.f32 %v852, %v829
  %v854 = vadd.f32 %v853, %v830
  %v855 = vadd.f32 %v854, %v831
  %v856 = vadd.f32 %v855, %v832
  %v857 = vsel %vm222, %v833, 0.0
  %v858 = vadd.f32 %v856, %v857
  %859 = vadd.xlane.f32.xlu0 %v858
  %v860 = vpop.xlane.xlu0 %859
  %v861 = vmul.f32 %v794, 0.0012755102
  %v862 = vmul.f32 %v803, 0.0012755102
  %v863 = vmul.f32 %v812, 0.0012755102
  %v864 = vmul.f32 %v842, 0.0012755102
  %v865 = vmul.f32 %v851, 0.0012755102
  %v866 = vmul.f32 %v860, 0.0012755102
  %v867 = vmul.f32 %v861, %v861
  %v868 = vmul.f32 %v862, %v862
  %v869 = vmul.f32 %v863, %v863
  %v870 = vsub.f32 %v864, %v867
  %v871 = vsub.f32 %v865, %v868
  %v872 = vsub.f32 %v866, %v869
  %v873 = vmax.f32 %v870, 0.0
  %v874 = vmax.f32 %v871, 0.0
  %v875 = vmax.f32 %v872, 0.0
  %v876 = vld [vmem:[#allocation5 + $0x30] sm:$0xff]
  %v877 = vld [vmem:[#allocation5 + $0x38] sm:$0xff]
  %v878 = vld [vmem:[#allocation5 + $0x40] sm:$0xff]
  %v879 = vadd.f32 %v873, 1e-05
  %v880 = vadd.f32 %v874, 1e-05
  %v881 = vadd.f32 %v875, 1e-05
  %v882 = vrsqrt.pop %v879
  %v883 = vmul.f32 %v882, %v879
  %v884 = vmul.f32 %v883, %v882
  %v885 = vmul.f32 0.5, %v884
  %v886 = vsub.f32 1.5, %v885
  %v887 = vmul.f32 %v882, %v886
  %vm888 = vweird.f32 %v879
  %vm889 = vweird.f32 %v882
  %vm890 = vmor %vm888, %vm889
  %v891 = vsel %vm890, %v882, %v887
  %v892 = vrsqrt.pop %v880
  %v893 = vmul.f32 %v892, %v880
  %v894 = vmul.f32 %v893, %v892
  %v895 = vmul.f32 0.5, %v894
  %v896 = vsub.f32 1.5, %v895
  %v897 = vmul.f32 %v892, %v896
  %vm898 = vweird.f32 %v880
  %vm899 = vweird.f32 %v892
  %vm900 = vmor %vm898, %vm899
  %v901 = vsel %vm900, %v892, %v897
  %v902 = vrsqrt.pop %v881
  %v903 = vmul.f32 %v902, %v881
  %v904 = vmul.f32 %v903, %v902
  %v905 = vmul.f32 0.5, %v904
  %v906 = vsub.f32 1.5, %v905
  %v907 = vmul.f32 %v902, %v906
  %vm908 = vweird.f32 %v881
  %vm909 = vweird.f32 %v902
  %vm910 = vmor %vm908, %vm909
  %v911 = vsel %vm910, %v902, %v907
  %v912 = vmul.f32 %v876, %v891
  %v913 = vmul.f32 %v877, %v901
  %v914 = vmul.f32 %v878, %v911
  %v915 = vmul.f32 %v861, %v912
  %v916 = vmul.f32 %v862, %v913
  %v917 = vmul.f32 %v863, %v914
  %921 = vrot.lane.b32.xlu0 %v915, 1
  %v922 = vpop.permute.xlu0 %921
  %923 = vrot.lane.b32.xlu0 %v916, 1
  %v924 = vpop.permute.xlu0 %923
  %925 = vrot.lane.b32.xlu0 %v917, 1
  %v926 = vpop.permute.xlu0 %925
  %v930 = vsub.f32 %v876, %v922
  %v931 = vsub.f32 %v877, %v924
  %v932 = vsub.f32 %v878, %v926
  %934 = vset.pattern.permute.xlu0 0
  %935 = vperm.xlu0 %934, %v912
  %v936 = vpop.permute.xlu0 %935
  %939 = vset.pattern.permute.xlu0 0
  %940 = vperm.xlu0 %939, %v913
  %v941 = vpop.permute.xlu0 %940
  %944 = vset.pattern.permute.xlu0 0
  %945 = vperm.xlu0 %944, %v914
  %v946 = vpop.permute.xlu0 %945
  %v948 = vmul.f32 %v765, %v936
  %v949 = vmul.f32 %v766, %v936
  %v950 = vmul.f32 %v767, %v936
  %v951 = vmul.f32 %v768, %v936
  %v952 = vmul.f32 %v769, %v936
  %v953 = vmul.f32 %v770, %v936
  %v954 = vmul.f32 %v771, %v936
  %v955 = vmul.f32 %v772, %v941
  %v956 = vmul.f32 %v773, %v941
  %v957 = vmul.f32 %v774, %v941
  %v958 = vmul.f32 %v775, %v941
  %v959 = vmul.f32 %v776, %v941
  %v960 = vmul.f32 %v777, %v941
  %v961 = vmul.f32 %v778, %v941
  %v962 = vmul.f32 %v779, %v946
  %v963 = vmul.f32 %v780, %v946
  %v964 = vmul.f32 %v781, %v946
  %v965 = vmul.f32 %v782, %v946
  %v966 = vmul.f32 %v783, %v946
  %v967 = vmul.f32 %v784, %v946
  %v968 = vmul.f32 %v785, %v946
  %970 = vset.pattern.permute.xlu0 1
  %971 = vperm.xlu0 %970, %v930
  %v972 = vpop.permute.xlu0 %971
  %975 = vset.pattern.permute.xlu0 1
  %976 = vperm.xlu0 %975, %v931
  %v977 = vpop.permute.xlu0 %976
  %980 = vset.pattern.permute.xlu0 1
  %981 = vperm.xlu0 %980, %v932
  %v982 = vpop.permute.xlu0 %981
  %v984 = vadd.f32 %v948, %v972
  %v985 = vadd.f32 %v949, %v972
  %v986 = vadd.f32 %v950, %v972
  %v987 = vadd.f32 %v951, %v972
  %v988 = vadd.f32 %v952, %v972
  %v989 = vadd.f32 %v953, %v972
  %v990 = vadd.f32 %v954, %v972
  %v991 = vadd.f32 %v955, %v977
  %v992 = vadd.f32 %v956, %v977
  %v993 = vadd.f32 %v957, %v977
  %v994 = vadd.f32 %v958, %v977
  %v995 = vadd.f32 %v959, %v977
  %v996 = vadd.f32 %v960, %v977
  %v997 = vadd.f32 %v961, %v977
  %v998 = vadd.f32 %v962, %v982
  %v999 = vadd.f32 %v963, %v982
  %v1000 = vadd.f32 %v964, %v982
  %v1001 = vadd.f32 %v965, %v982
  %v1002 = vadd.f32 %v966, %v982
  %v1003 = vadd.f32 %v967, %v982
  %v1004 = vadd.f32 %v968, %v982
  %v1005 = vmax.f32 %v984, 0.0
  %v1006 = vmax.f32 %v985, 0.0
  %v1007 = vmax.f32 %v986, 0.0
  %v1008 = vmax.f32 %v987, 0.0
  %v1009 = vmax.f32 %v988, 0.0
  %v1010 = vmax.f32 %v989, 0.0
  %v1011 = vmax.f32 %v990, 0.0
  %v1012 = vmax.f32 %v991, 0.0
  %v1013 = vmax.f32 %v992, 0.0
  %v1014 = vmax.f32 %v993, 0.0
  %v1015 = vmax.f32 %v994, 0.0
  %v1016 = vmax.f32 %v995, 0.0
  %v1017 = vmax.f32 %v996, 0.0
  %v1018 = vmax.f32 %v997, 0.0
  %v1019 = vmax.f32 %v998, 0.0
  %v1020 = vmax.f32 %v999, 0.0
  %v1021 = vmax.f32 %v1000, 0.0
  %v1022 = vmax.f32 %v1001, 0.0
  %v1023 = vmax.f32 %v1002, 0.0
  %v1024 = vmax.f32 %v1003, 0.0
  %v1025 = vmax.f32 %v1004, 0.0
  %1026 = vst [vmem:[#allocation2 + $0x150] sm:$0xff] %v1005
  %1027 = vst [vmem:[#allocation2 + $0x158] sm:$0xff] %v1006
  %1028 = vst [vmem:[#allocation2 + $0x160] sm:$0xff] %v1007
  %1029 = vst [vmem:[#allocation2 + $0x168] sm:$0xff] %v1008
  %1030 = vst [vmem:[#allocation2 + $0x170] sm:$0xff] %v1009
  %1031 = vst [vmem:[#allocation2 + $0x178] sm:$0xff] %v1010
  %1032 = vst.msk [vmem:[#allocation2 + $0x180] sm:$0xff] %vm222, %v1011
  %1033 = vst [vmem:[#allocation2 + $0x188] sm:$0xff] %v1012
  %1034 = vst [vmem:[#allocation2 + $0x190] sm:$0xff] %v1013
  %1035 = vst [vmem:[#allocation2 + $0x198] sm:$0xff] %v1014
  %1036 = vst [vmem:[#allocation2 + $0x1a0] sm:$0xff] %v1015
  %1037 = vst [vmem:[#allocation2 + $0x1a8] sm:$0xff] %v1016
  %1038 = vst [vmem:[#allocation2 + $0x1b0] sm:$0xff] %v1017
  %1039 = vst.msk [vmem:[#allocation2 + $0x1b8] sm:$0xff] %vm222, %v1018
  %1040 = vst [vmem:[#allocation2 + $0x1c0] sm:$0xff] %v1019
  %1041 = vst [vmem:[#allocation2 + $0x1c8] sm:$0xff] %v1020
  %1042 = vst [vmem:[#allocation2 + $0x1d0] sm:$0xff] %v1021
  %1043 = vst [vmem:[#allocation2 + $0x1d8] sm:$0xff] %v1022
  %1044 = vst [vmem:[#allocation2 + $0x1e0] sm:$0xff] %v1023
  %1045 = vst [vmem:[#allocation2 + $0x1e8] sm:$0xff] %v1024
  %1046 = vst.msk [vmem:[#allocation2 + $0x1f0] sm:$0xff] %vm222, %v1025
  %s1047 = sshll.u32 %s193, 4
  %1048 = dma.done %s113, %s1047
  %v1049 = vld [vmem:[#allocation2 + $0x1f8] sm:$0xff]
  %v1050 = vld [vmem:[#allocation2 + $0x200] sm:$0xff]
  %v1051 = vld [vmem:[#allocation2 + $0x208] sm:$0xff]
  %v1052 = vld [vmem:[#allocation2 + $0x210] sm:$0xff]
  %v1053 = vld [vmem:[#allocation2 + $0x218] sm:$0xff]
  %v1054 = vld [vmem:[#allocation2 + $0x220] sm:$0xff]
  %v1055 = vld [vmem:[#allocation2 + $0x228] sm:$0xff]
  %v1056 = vld [vmem:[#allocation2 + $0x230] sm:$0xff]
  %v1057 = vld [vmem:[#allocation2 + $0x238] sm:$0xff]
  %v1058 = vld [vmem:[#allocation2 + $0x240] sm:$0xff]
  %v1059 = vld [vmem:[#allocation2 + $0x248] sm:$0xff]
  %v1060 = vld [vmem:[#allocation2 + $0x250] sm:$0xff]
  %v1061 = vld [vmem:[#allocation2 + $0x258] sm:$0xff]
  %v1062 = vld [vmem:[#allocation2 + $0x260] sm:$0xff]
  %v1063 = vld [vmem:[#allocation2 + $0x268] sm:$0xff]
  %v1064 = vld [vmem:[#allocation2 + $0x270] sm:$0xff]
  %v1065 = vld [vmem:[#allocation2 + $0x278] sm:$0xff]
  %v1066 = vld [vmem:[#allocation2 + $0x280] sm:$0xff]
  %v1067 = vld [vmem:[#allocation2 + $0x288] sm:$0xff]
  %v1068 = vld [vmem:[#allocation2 + $0x290] sm:$0xff]
  %v1069 = vld [vmem:[#allocation2 + $0x298] sm:$0xff]
  %v1070 = vadd.f32 %v1049, %v1050
  %v1071 = vadd.f32 %v1070, %v1051
  %v1072 = vadd.f32 %v1071, %v1052
  %v1073 = vadd.f32 %v1072, %v1053
  %v1074 = vadd.f32 %v1073, %v1054
  %v1075 = vsel %vm222, %v1055, 0.0
  %v1076 = vadd.f32 %v1074, %v1075
  %1077 = vadd.xlane.f32.xlu0 %v1076
  %v1078 = vpop.xlane.xlu0 %1077
  %v1079 = vadd.f32 %v1056, %v1057
  %v1080 = vadd.f32 %v1079, %v1058
  %v1081 = vadd.f32 %v1080, %v1059
  %v1082 = vadd.f32 %v1081, %v1060
  %v1083 = vadd.f32 %v1082, %v1061
  %v1084 = vsel %vm222, %v1062, 0.0
  %v1085 = vadd.f32 %v1083, %v1084
  %1086 = vadd.xlane.f32.xlu0 %v1085
  %v1087 = vpop.xlane.xlu0 %1086
  %v1088 = vadd.f32 %v1063, %v1064
  %v1089 = vadd.f32 %v1088, %v1065
  %v1090 = vadd.f32 %v1089, %v1066
  %v1091 = vadd.f32 %v1090, %v1067
  %v1092 = vadd.f32 %v1091, %v1068
  %v1093 = vsel %vm222, %v1069, 0.0
  %v1094 = vadd.f32 %v1092, %v1093
  %1095 = vadd.xlane.f32.xlu0 %v1094
  %v1096 = vpop.xlane.xlu0 %1095
  %v1097 = vmul.f32 %v1049, %v1049
  %v1098 = vmul.f32 %v1050, %v1050
  %v1099 = vmul.f32 %v1051, %v1051
  %v1100 = vmul.f32 %v1052, %v1052
  %v1101 = vmul.f32 %v1053, %v1053
  %v1102 = vmul.f32 %v1054, %v1054
  %v1103 = vmul.f32 %v1055, %v1055
  %v1104 = vmul.f32 %v1056, %v1056
  %v1105 = vmul.f32 %v1057, %v1057
  %v1106 = vmul.f32 %v1058, %v1058
  %v1107 = vmul.f32 %v1059, %v1059
  %v1108 = vmul.f32 %v1060, %v1060
  %v1109 = vmul.f32 %v1061, %v1061
  %v1110 = vmul.f32 %v1062, %v1062
  %v1111 = vmul.f32 %v1063, %v1063
  %v1112 = vmul.f32 %v1064, %v1064
  %v1113 = vmul.f32 %v1065, %v1065
  %v1114 = vmul.f32 %v1066, %v1066
  %v1115 = vmul.f32 %v1067, %v1067
  %v1116 = vmul.f32 %v1068, %v1068
  %v1117 = vmul.f32 %v1069, %v1069
  %v1118 = vadd.f32 %v1097, %v1098
  %v1119 = vadd.f32 %v1118, %v1099
  %v1120 = vadd.f32 %v1119, %v1100
  %v1121 = vadd.f32 %v1120, %v1101
  %v1122 = vadd.f32 %v1121, %v1102
  %v1123 = vsel %vm222, %v1103, 0.0
  %v1124 = vadd.f32 %v1122, %v1123
  %1125 = vadd.xlane.f32.xlu0 %v1124
  %v1126 = vpop.xlane.xlu0 %1125
  %v1127 = vadd.f32 %v1104, %v1105
  %v1128 = vadd.f32 %v1127, %v1106
  %v1129 = vadd.f32 %v1128, %v1107
  %v1130 = vadd.f32 %v1129, %v1108
  %v1131 = vadd.f32 %v1130, %v1109
  %v1132 = vsel %vm222, %v1110, 0.0
  %v1133 = vadd.f32 %v1131, %v1132
  %1134 = vadd.xlane.f32.xlu0 %v1133
  %v1135 = vpop.xlane.xlu0 %1134
  %v1136 = vadd.f32 %v1111, %v1112
  %v1137 = vadd.f32 %v1136, %v1113
  %v1138 = vadd.f32 %v1137, %v1114
  %v1139 = vadd.f32 %v1138, %v1115
  %v1140 = vadd.f32 %v1139, %v1116
  %v1141 = vsel %vm222, %v1117, 0.0
  %v1142 = vadd.f32 %v1140, %v1141
  %1143 = vadd.xlane.f32.xlu0 %v1142
  %v1144 = vpop.xlane.xlu0 %1143
  %v1145 = vmul.f32 %v1078, 0.0012755102
  %v1146 = vmul.f32 %v1087, 0.0012755102
  %v1147 = vmul.f32 %v1096, 0.0012755102
  %v1148 = vmul.f32 %v1126, 0.0012755102
  %v1149 = vmul.f32 %v1135, 0.0012755102
  %v1150 = vmul.f32 %v1144, 0.0012755102
  %v1151 = vmul.f32 %v1145, %v1145
  %v1152 = vmul.f32 %v1146, %v1146
  %v1153 = vmul.f32 %v1147, %v1147
  %v1154 = vsub.f32 %v1148, %v1151
  %v1155 = vsub.f32 %v1149, %v1152
  %v1156 = vsub.f32 %v1150, %v1153
  %v1157 = vmax.f32 %v1154, 0.0
  %v1158 = vmax.f32 %v1155, 0.0
  %v1159 = vmax.f32 %v1156, 0.0
  %v1160 = vld [vmem:[#allocation5 + $0x48] sm:$0xff]
  %v1161 = vld [vmem:[#allocation5 + $0x50] sm:$0xff]
  %v1162 = vld [vmem:[#allocation5 + $0x58] sm:$0xff]
  %v1163 = vadd.f32 %v1157, 1e-05
  %v1164 = vadd.f32 %v1158, 1e-05
  %v1165 = vadd.f32 %v1159, 1e-05
  %v1166 = vrsqrt.pop %v1163
  %v1167 = vmul.f32 %v1166, %v1163
  %v1168 = vmul.f32 %v1167, %v1166
  %v1169 = vmul.f32 0.5, %v1168
  %v1170 = vsub.f32 1.5, %v1169
  %v1171 = vmul.f32 %v1166, %v1170
  %vm1172 = vweird.f32 %v1163
  %vm1173 = vweird.f32 %v1166
  %vm1174 = vmor %vm1172, %vm1173
  %v1175 = vsel %vm1174, %v1166, %v1171
  %v1176 = vrsqrt.pop %v1164
  %v1177 = vmul.f32 %v1176, %v1164
  %v1178 = vmul.f32 %v1177, %v1176
  %v1179 = vmul.f32 0.5, %v1178
  %v1180 = vsub.f32 1.5, %v1179
  %v1181 = vmul.f32 %v1176, %v1180
  %vm1182 = vweird.f32 %v1164
  %vm1183 = vweird.f32 %v1176
  %vm1184 = vmor %vm1182, %vm1183
  %v1185 = vsel %vm1184, %v1176, %v1181
  %v1186 = vrsqrt.pop %v1165
  %v1187 = vmul.f32 %v1186, %v1165
  %v1188 = vmul.f32 %v1187, %v1186
  %v1189 = vmul.f32 0.5, %v1188
  %v1190 = vsub.f32 1.5, %v1189
  %v1191 = vmul.f32 %v1186, %v1190
  %vm1192 = vweird.f32 %v1165
  %vm1193 = vweird.f32 %v1186
  %vm1194 = vmor %vm1192, %vm1193
  %v1195 = vsel %vm1194, %v1186, %v1191
  %v1196 = vmul.f32 %v1160, %v1175
  %v1197 = vmul.f32 %v1161, %v1185
  %v1198 = vmul.f32 %v1162, %v1195
  %v1199 = vmul.f32 %v1145, %v1196
  %v1200 = vmul.f32 %v1146, %v1197
  %v1201 = vmul.f32 %v1147, %v1198
  %1205 = vrot.lane.b32.xlu0 %v1199, 1
  %v1206 = vpop.permute.xlu0 %1205
  %1207 = vrot.lane.b32.xlu0 %v1200, 1
  %v1208 = vpop.permute.xlu0 %1207
  %1209 = vrot.lane.b32.xlu0 %v1201, 1
  %v1210 = vpop.permute.xlu0 %1209
  %v1214 = vsub.f32 %v1160, %v1206
  %v1215 = vsub.f32 %v1161, %v1208
  %v1216 = vsub.f32 %v1162, %v1210
  %1218 = vset.pattern.permute.xlu0 0
  %1219 = vperm.xlu0 %1218, %v1196
  %v1220 = vpop.permute.xlu0 %1219
  %1223 = vset.pattern.permute.xlu0 0
  %1224 = vperm.xlu0 %1223, %v1197
  %v1225 = vpop.permute.xlu0 %1224
  %1228 = vset.pattern.permute.xlu0 0
  %1229 = vperm.xlu0 %1228, %v1198
  %v1230 = vpop.permute.xlu0 %1229
  %v1232 = vmul.f32 %v1049, %v1220
  %v1233 = vmul.f32 %v1050, %v1220
  %v1234 = vmul.f32 %v1051, %v1220
  %v1235 = vmul.f32 %v1052, %v1220
  %v1236 = vmul.f32 %v1053, %v1220
  %v1237 = vmul.f32 %v1054, %v1220
  %v1238 = vmul.f32 %v1055, %v1220
  %v1239 = vmul.f32 %v1056, %v1225
  %v1240 = vmul.f32 %v1057, %v1225
  %v1241 = vmul.f32 %v1058, %v1225
  %v1242 = vmul.f32 %v1059, %v1225
  %v1243 = vmul.f32 %v1060, %v1225
  %v1244 = vmul.f32 %v1061, %v1225
  %v1245 = vmul.f32 %v1062, %v1225
  %v1246 = vmul.f32 %v1063, %v1230
  %v1247 = vmul.f32 %v1064, %v1230
  %v1248 = vmul.f32 %v1065, %v1230
  %v1249 = vmul.f32 %v1066, %v1230
  %v1250 = vmul.f32 %v1067, %v1230
  %v1251 = vmul.f32 %v1068, %v1230
  %v1252 = vmul.f32 %v1069, %v1230
  %1254 = vset.pattern.permute.xlu0 1
  %1255 = vperm.xlu0 %1254, %v1214
  %v1256 = vpop.permute.xlu0 %1255
  %1259 = vset.pattern.permute.xlu0 1
  %1260 = vperm.xlu0 %1259, %v1215
  %v1261 = vpop.permute.xlu0 %1260
  %1264 = vset.pattern.permute.xlu0 1
  %1265 = vperm.xlu0 %1264, %v1216
  %v1266 = vpop.permute.xlu0 %1265
  %v1268 = vadd.f32 %v1232, %v1256
  %v1269 = vadd.f32 %v1233, %v1256
  %v1270 = vadd.f32 %v1234, %v1256
  %v1271 = vadd.f32 %v1235, %v1256
  %v1272 = vadd.f32 %v1236, %v1256
  %v1273 = vadd.f32 %v1237, %v1256
  %v1274 = vadd.f32 %v1238, %v1256
  %v1275 = vadd.f32 %v1239, %v1261
  %v1276 = vadd.f32 %v1240, %v1261
  %v1277 = vadd.f32 %v1241, %v1261
  %v1278 = vadd.f32 %v1242, %v1261
  %v1279 = vadd.f32 %v1243, %v1261
  %v1280 = vadd.f32 %v1244, %v1261
  %v1281 = vadd.f32 %v1245, %v1261
  %v1282 = vadd.f32 %v1246, %v1266
  %v1283 = vadd.f32 %v1247, %v1266
  %v1284 = vadd.f32 %v1248, %v1266
  %v1285 = vadd.f32 %v1249, %v1266
  %v1286 = vadd.f32 %v1250, %v1266
  %v1287 = vadd.f32 %v1251, %v1266
  %v1288 = vadd.f32 %v1252, %v1266
  %v1289 = vmax.f32 %v1268, 0.0
  %v1290 = vmax.f32 %v1269, 0.0
  %v1291 = vmax.f32 %v1270, 0.0
  %v1292 = vmax.f32 %v1271, 0.0
  %v1293 = vmax.f32 %v1272, 0.0
  %v1294 = vmax.f32 %v1273, 0.0
  %v1295 = vmax.f32 %v1274, 0.0
  %v1296 = vmax.f32 %v1275, 0.0
  %v1297 = vmax.f32 %v1276, 0.0
  %v1298 = vmax.f32 %v1277, 0.0
  %v1299 = vmax.f32 %v1278, 0.0
  %v1300 = vmax.f32 %v1279, 0.0
  %v1301 = vmax.f32 %v1280, 0.0
  %v1302 = vmax.f32 %v1281, 0.0
  %v1303 = vmax.f32 %v1282, 0.0
  %v1304 = vmax.f32 %v1283, 0.0
  %v1305 = vmax.f32 %v1284, 0.0
  %v1306 = vmax.f32 %v1285, 0.0
  %v1307 = vmax.f32 %v1286, 0.0
  %v1308 = vmax.f32 %v1287, 0.0
  %v1309 = vmax.f32 %v1288, 0.0
  %1310 = vst [vmem:[#allocation2 + $0x1f8] sm:$0xff] %v1289
  %1311 = vst [vmem:[#allocation2 + $0x200] sm:$0xff] %v1290
  %1312 = vst [vmem:[#allocation2 + $0x208] sm:$0xff] %v1291
  %1313 = vst [vmem:[#allocation2 + $0x210] sm:$0xff] %v1292
  %1314 = vst [vmem:[#allocation2 + $0x218] sm:$0xff] %v1293
  %1315 = vst [vmem:[#allocation2 + $0x220] sm:$0xff] %v1294
  %1316 = vst.msk [vmem:[#allocation2 + $0x228] sm:$0xff] %vm222, %v1295
  %1317 = vst [vmem:[#allocation2 + $0x230] sm:$0xff] %v1296
  %1318 = vst [vmem:[#allocation2 + $0x238] sm:$0xff] %v1297
  %1319 = vst [vmem:[#allocation2 + $0x240] sm:$0xff] %v1298
  %1320 = vst [vmem:[#allocation2 + $0x248] sm:$0xff] %v1299
  %1321 = vst [vmem:[#allocation2 + $0x250] sm:$0xff] %v1300
  %1322 = vst [vmem:[#allocation2 + $0x258] sm:$0xff] %v1301
  %1323 = vst.msk [vmem:[#allocation2 + $0x260] sm:$0xff] %vm222, %v1302
  %1324 = vst [vmem:[#allocation2 + $0x268] sm:$0xff] %v1303
  %1325 = vst [vmem:[#allocation2 + $0x270] sm:$0xff] %v1304
  %1326 = vst [vmem:[#allocation2 + $0x278] sm:$0xff] %v1305
  %1327 = vst [vmem:[#allocation2 + $0x280] sm:$0xff] %v1306
  %1328 = vst [vmem:[#allocation2 + $0x288] sm:$0xff] %v1307
  %1329 = vst [vmem:[#allocation2 + $0x290] sm:$0xff] %v1308
  %1330 = vst.msk [vmem:[#allocation2 + $0x298] sm:$0xff] %vm222, %v1309
  %s1331 = sshll.u32 %s193, 4
  %1332 = dma.done %s129, %s1331
  %v1333 = vld [vmem:[#allocation2 + $0x2a0] sm:$0xff]
  %v1334 = vld [vmem:[#allocation2 + $0x2a8] sm:$0xff]
  %v1335 = vld [vmem:[#allocation2 + $0x2b0] sm:$0xff]
  %v1336 = vld [vmem:[#allocation2 + $0x2b8] sm:$0xff]
  %v1337 = vld [vmem:[#allocation2 + $0x2c0] sm:$0xff]
  %v1338 = vld [vmem:[#allocation2 + $0x2c8] sm:$0xff]
  %v1339 = vld [vmem:[#allocation2 + $0x2d0] sm:$0xff]
  %v1340 = vld [vmem:[#allocation2 + $0x2d8] sm:$0xff]
  %v1341 = vld [vmem:[#allocation2 + $0x2e0] sm:$0xff]
  %v1342 = vld [vmem:[#allocation2 + $0x2e8] sm:$0xff]
  %v1343 = vld [vmem:[#allocation2 + $0x2f0] sm:$0xff]
  %v1344 = vld [vmem:[#allocation2 + $0x2f8] sm:$0xff]
  %v1345 = vld [vmem:[#allocation2 + $0x300] sm:$0xff]
  %v1346 = vld [vmem:[#allocation2 + $0x308] sm:$0xff]
  %v1347 = vld [vmem:[#allocation2 + $0x310] sm:$0xff]
  %v1348 = vld [vmem:[#allocation2 + $0x318] sm:$0xff]
  %v1349 = vld [vmem:[#allocation2 + $0x320] sm:$0xff]
  %v1350 = vld [vmem:[#allocation2 + $0x328] sm:$0xff]
  %v1351 = vld [vmem:[#allocation2 + $0x330] sm:$0xff]
  %v1352 = vld [vmem:[#allocation2 + $0x338] sm:$0xff]
  %v1353 = vld [vmem:[#allocation2 + $0x340] sm:$0xff]
  %v1354 = vadd.f32 %v1333, %v1334
  %v1355 = vadd.f32 %v1354, %v1335
  %v1356 = vadd.f32 %v1355, %v1336
  %v1357 = vadd.f32 %v1356, %v1337
  %v1358 = vadd.f32 %v1357, %v1338
  %v1359 = vsel %vm222, %v1339, 0.0
  %v1360 = vadd.f32 %v1358, %v1359
  %1361 = vadd.xlane.f32.xlu0 %v1360
  %v1362 = vpop.xlane.xlu0 %1361
  %v1363 = vadd.f32 %v1340, %v1341
  %v1364 = vadd.f32 %v1363, %v1342
  %v1365 = vadd.f32 %v1364, %v1343
  %v1366 = vadd.f32 %v1365, %v1344
  %v1367 = vadd.f32 %v1366, %v1345
  %v1368 = vsel %vm222, %v1346, 0.0
  %v1369 = vadd.f32 %v1367, %v1368
  %1370 = vadd.xlane.f32.xlu0 %v1369
  %v1371 = vpop.xlane.xlu0 %1370
  %v1372 = vadd.f32 %v1347, %v1348
  %v1373 = vadd.f32 %v1372, %v1349
  %v1374 = vadd.f32 %v1373, %v1350
  %v1375 = vadd.f32 %v1374, %v1351
  %v1376 = vadd.f32 %v1375, %v1352
  %v1377 = vsel %vm222, %v1353, 0.0
  %v1378 = vadd.f32 %v1376, %v1377
  %1379 = vadd.xlane.f32.xlu0 %v1378
  %v1380 = vpop.xlane.xlu0 %1379
  %v1381 = vmul.f32 %v1333, %v1333
  %v1382 = vmul.f32 %v1334, %v1334
  %v1383 = vmul.f32 %v1335, %v1335
  %v1384 = vmul.f32 %v1336, %v1336
  %v1385 = vmul.f32 %v1337, %v1337
  %v1386 = vmul.f32 %v1338, %v1338
  %v1387 = vmul.f32 %v1339, %v1339
  %v1388 = vmul.f32 %v1340, %v1340
  %v1389 = vmul.f32 %v1341, %v1341
  %v1390 = vmul.f32 %v1342, %v1342
  %v1391 = vmul.f32 %v1343, %v1343
  %v1392 = vmul.f32 %v1344, %v1344
  %v1393 = vmul.f32 %v1345, %v1345
  %v1394 = vmul.f32 %v1346, %v1346
  %v1395 = vmul.f32 %v1347, %v1347
  %v1396 = vmul.f32 %v1348, %v1348
  %v1397 = vmul.f32 %v1349, %v1349
  %v1398 = vmul.f32 %v1350, %v1350
  %v1399 = vmul.f32 %v1351, %v1351
  %v1400 = vmul.f32 %v1352, %v1352
  %v1401 = vmul.f32 %v1353, %v1353
  %v1402 = vadd.f32 %v1381, %v1382
  %v1403 = vadd.f32 %v1402, %v1383
  %v1404 = vadd.f32 %v1403, %v1384
  %v1405 = vadd.f32 %v1404, %v1385
  %v1406 = vadd.f32 %v1405, %v1386
  %v1407 = vsel %vm222, %v1387, 0.0
  %v1408 = vadd.f32 %v1406, %v1407
  %1409 = vadd.xlane.f32.xlu0 %v1408
  %v1410 = vpop.xlane.xlu0 %1409
  %v1411 = vadd.f32 %v1388, %v1389
  %v1412 = vadd.f32 %v1411, %v1390
  %v1413 = vadd.f32 %v1412, %v1391
  %v1414 = vadd.f32 %v1413, %v1392
  %v1415 = vadd.f32 %v1414, %v1393
  %v1416 = vsel %vm222, %v1394, 0.0
  %v1417 = vadd.f32 %v1415, %v1416
  %1418 = vadd.xlane.f32.xlu0 %v1417
  %v1419 = vpop.xlane.xlu0 %1418
  %v1420 = vadd.f32 %v1395, %v1396
  %v1421 = vadd.f32 %v1420, %v1397
  %v1422 = vadd.f32 %v1421, %v1398
  %v1423 = vadd.f32 %v1422, %v1399
  %v1424 = vadd.f32 %v1423, %v1400
  %v1425 = vsel %vm222, %v1401, 0.0
  %v1426 = vadd.f32 %v1424, %v1425
  %1427 = vadd.xlane.f32.xlu0 %v1426
  %v1428 = vpop.xlane.xlu0 %1427
  %v1429 = vmul.f32 %v1362, 0.0012755102
  %v1430 = vmul.f32 %v1371, 0.0012755102
  %v1431 = vmul.f32 %v1380, 0.0012755102
  %v1432 = vmul.f32 %v1410, 0.0012755102
  %v1433 = vmul.f32 %v1419, 0.0012755102
  %v1434 = vmul.f32 %v1428, 0.0012755102
  %v1435 = vmul.f32 %v1429, %v1429
  %v1436 = vmul.f32 %v1430, %v1430
  %v1437 = vmul.f32 %v1431, %v1431
  %v1438 = vsub.f32 %v1432, %v1435
  %v1439 = vsub.f32 %v1433, %v1436
  %v1440 = vsub.f32 %v1434, %v1437
  %v1441 = vmax.f32 %v1438, 0.0
  %v1442 = vmax.f32 %v1439, 0.0
  %v1443 = vmax.f32 %v1440, 0.0
  %v1444 = vld [vmem:[#allocation5 + $0x60] sm:$0xff]
  %v1445 = vld [vmem:[#allocation5 + $0x68] sm:$0xff]
  %v1446 = vld [vmem:[#allocation5 + $0x70] sm:$0xff]
  %v1447 = vadd.f32 %v1441, 1e-05
  %v1448 = vadd.f32 %v1442, 1e-05
  %v1449 = vadd.f32 %v1443, 1e-05
  %v1450 = vrsqrt.pop %v1447
  %v1451 = vmul.f32 %v1450, %v1447
  %v1452 = vmul.f32 %v1451, %v1450
  %v1453 = vmul.f32 0.5, %v1452
  %v1454 = vsub.f32 1.5, %v1453
  %v1455 = vmul.f32 %v1450, %v1454
  %vm1456 = vweird.f32 %v1447
  %vm1457 = vweird.f32 %v1450
  %vm1458 = vmor %vm1456, %vm1457
  %v1459 = vsel %vm1458, %v1450, %v1455
  %v1460 = vrsqrt.pop %v1448
  %v1461 = vmul.f32 %v1460, %v1448
  %v1462 = vmul.f32 %v1461, %v1460
  %v1463 = vmul.f32 0.5, %v1462
  %v1464 = vsub.f32 1.5, %v1463
  %v1465 = vmul.f32 %v1460, %v1464
  %vm1466 = vweird.f32 %v1448
  %vm1467 = vweird.f32 %v1460
  %vm1468 = vmor %vm1466, %vm1467
  %v1469 = vsel %vm1468, %v1460, %v1465
  %v1470 = vrsqrt.pop %v1449
  %v1471 = vmul.f32 %v1470, %v1449
  %v1472 = vmul.f32 %v1471, %v1470
  %v1473 = vmul.f32 0.5, %v1472
  %v1474 = vsub.f32 1.5, %v1473
  %v1475 = vmul.f32 %v1470, %v1474
  %vm1476 = vweird.f32 %v1449
  %vm1477 = vweird.f32 %v1470
  %vm1478 = vmor %vm1476, %vm1477
  %v1479 = vsel %vm1478, %v1470, %v1475
  %v1480 = vmul.f32 %v1444, %v1459
  %v1481 = vmul.f32 %v1445, %v1469
  %v1482 = vmul.f32 %v1446, %v1479
  %v1483 = vmul.f32 %v1429, %v1480
  %v1484 = vmul.f32 %v1430, %v1481
  %v1485 = vmul.f32 %v1431, %v1482
  %1489 = vrot.lane.b32.xlu0 %v1483, 1
  %v1490 = vpop.permute.xlu0 %1489
  %1491 = vrot.lane.b32.xlu0 %v1484, 1
  %v1492 = vpop.permute.xlu0 %1491
  %1493 = vrot.lane.b32.xlu0 %v1485, 1
  %v1494 = vpop.permute.xlu0 %1493
  %v1498 = vsub.f32 %v1444, %v1490
  %v1499 = vsub.f32 %v1445, %v1492
  %v1500 = vsub.f32 %v1446, %v1494
  %1502 = vset.pattern.permute.xlu0 0
  %1503 = vperm.xlu0 %1502, %v1480
  %v1504 = vpop.permute.xlu0 %1503
  %1507 = vset.pattern.permute.xlu0 0
  %1508 = vperm.xlu0 %1507, %v1481
  %v1509 = vpop.permute.xlu0 %1508
  %1512 = vset.pattern.permute.xlu0 0
  %1513 = vperm.xlu0 %1512, %v1482
  %v1514 = vpop.permute.xlu0 %1513
  %v1516 = vmul.f32 %v1333, %v1504
  %v1517 = vmul.f32 %v1334, %v1504
  %v1518 = vmul.f32 %v1335, %v1504
  %v1519 = vmul.f32 %v1336, %v1504
  %v1520 = vmul.f32 %v1337, %v1504
  %v1521 = vmul.f32 %v1338, %v1504
  %v1522 = vmul.f32 %v1339, %v1504
  %v1523 = vmul.f32 %v1340, %v1509
  %v1524 = vmul.f32 %v1341, %v1509
  %v1525 = vmul.f32 %v1342, %v1509
  %v1526 = vmul.f32 %v1343, %v1509
  %v1527 = vmul.f32 %v1344, %v1509
  %v1528 = vmul.f32 %v1345, %v1509
  %v1529 = vmul.f32 %v1346, %v1509
  %v1530 = vmul.f32 %v1347, %v1514
  %v1531 = vmul.f32 %v1348, %v1514
  %v1532 = vmul.f32 %v1349, %v1514
  %v1533 = vmul.f32 %v1350, %v1514
  %v1534 = vmul.f32 %v1351, %v1514
  %v1535 = vmul.f32 %v1352, %v1514
  %v1536 = vmul.f32 %v1353, %v1514
  %1538 = vset.pattern.permute.xlu0 1
  %1539 = vperm.xlu0 %1538, %v1498
  %v1540 = vpop.permute.xlu0 %1539
  %1543 = vset.pattern.permute.xlu0 1
  %1544 = vperm.xlu0 %1543, %v1499
  %v1545 = vpop.permute.xlu0 %1544
  %1548 = vset.pattern.permute.xlu0 1
  %1549 = vperm.xlu0 %1548, %v1500
  %v1550 = vpop.permute.xlu0 %1549
  %v1552 = vadd.f32 %v1516, %v1540
  %v1553 = vadd.f32 %v1517, %v1540
  %v1554 = vadd.f32 %v1518, %v1540
  %v1555 = vadd.f32 %v1519, %v1540
  %v1556 = vadd.f32 %v1520, %v1540
  %v1557 = vadd.f32 %v1521, %v1540
  %v1558 = vadd.f32 %v1522, %v1540
  %v1559 = vadd.f32 %v1523, %v1545
  %v1560 = vadd.f32 %v1524, %v1545
  %v1561 = vadd.f32 %v1525, %v1545
  %v1562 = vadd.f32 %v1526, %v1545
  %v1563 = vadd.f32 %v1527, %v1545
  %v1564 = vadd.f32 %v1528, %v1545
  %v1565 = vadd.f32 %v1529, %v1545
  %v1566 = vadd.f32 %v1530, %v1550
  %v1567 = vadd.f32 %v1531, %v1550
  %v1568 = vadd.f32 %v1532, %v1550
  %v1569 = vadd.f32 %v1533, %v1550
  %v1570 = vadd.f32 %v1534, %v1550
  %v1571 = vadd.f32 %v1535, %v1550
  %v1572 = vadd.f32 %v1536, %v1550
  %v1573 = vmax.f32 %v1552, 0.0
  %v1574 = vmax.f32 %v1553, 0.0
  %v1575 = vmax.f32 %v1554, 0.0
  %v1576 = vmax.f32 %v1555, 0.0
  %v1577 = vmax.f32 %v1556, 0.0
  %v1578 = vmax.f32 %v1557, 0.0
  %v1579 = vmax.f32 %v1558, 0.0
  %v1580 = vmax.f32 %v1559, 0.0
  %v1581 = vmax.f32 %v1560, 0.0
  %v1582 = vmax.f32 %v1561, 0.0
  %v1583 = vmax.f32 %v1562, 0.0
  %v1584 = vmax.f32 %v1563, 0.0
  %v1585 = vmax.f32 %v1564, 0.0
  %v1586 = vmax.f32 %v1565, 0.0
  %v1587 = vmax.f32 %v1566, 0.0
  %v1588 = vmax.f32 %v1567, 0.0
  %v1589 = vmax.f32 %v1568, 0.0
  %v1590 = vmax.f32 %v1569, 0.0
  %v1591 = vmax.f32 %v1570, 0.0
  %v1592 = vmax.f32 %v1571, 0.0
  %v1593 = vmax.f32 %v1572, 0.0
  %1594 = vst [vmem:[#allocation2 + $0x2a0] sm:$0xff] %v1573
  %1595 = vst [vmem:[#allocation2 + $0x2a8] sm:$0xff] %v1574
  %1596 = vst [vmem:[#allocation2 + $0x2b0] sm:$0xff] %v1575
  %1597 = vst [vmem:[#allocation2 + $0x2b8] sm:$0xff] %v1576
  %1598 = vst [vmem:[#allocation2 + $0x2c0] sm:$0xff] %v1577
  %1599 = vst [vmem:[#allocation2 + $0x2c8] sm:$0xff] %v1578
  %1600 = vst.msk [vmem:[#allocation2 + $0x2d0] sm:$0xff] %vm222, %v1579
  %1601 = vst [vmem:[#allocation2 + $0x2d8] sm:$0xff] %v1580
  %1602 = vst [vmem:[#allocation2 + $0x2e0] sm:$0xff] %v1581
  %1603 = vst [vmem:[#allocation2 + $0x2e8] sm:$0xff] %v1582
  %1604 = vst [vmem:[#allocation2 + $0x2f0] sm:$0xff] %v1583
  %1605 = vst [vmem:[#allocation2 + $0x2f8] sm:$0xff] %v1584
  %1606 = vst [vmem:[#allocation2 + $0x300] sm:$0xff] %v1585
  %1607 = vst.msk [vmem:[#allocation2 + $0x308] sm:$0xff] %vm222, %v1586
  %1608 = vst [vmem:[#allocation2 + $0x310] sm:$0xff] %v1587
  %1609 = vst [vmem:[#allocation2 + $0x318] sm:$0xff] %v1588
  %1610 = vst [vmem:[#allocation2 + $0x320] sm:$0xff] %v1589
  %1611 = vst [vmem:[#allocation2 + $0x328] sm:$0xff] %v1590
  %1612 = vst [vmem:[#allocation2 + $0x330] sm:$0xff] %v1591
  %1613 = vst [vmem:[#allocation2 + $0x338] sm:$0xff] %v1592
  %1614 = vst.msk [vmem:[#allocation2 + $0x340] sm:$0xff] %vm222, %v1593
  %s1615 = sshll.u32 %s193, 4
  %1616 = dma.done %s145, %s1615
  %v1617 = vld [vmem:[#allocation2 + $0x348] sm:$0xff]
  %v1618 = vld [vmem:[#allocation2 + $0x350] sm:$0xff]
  %v1619 = vld [vmem:[#allocation2 + $0x358] sm:$0xff]
  %v1620 = vld [vmem:[#allocation2 + $0x360] sm:$0xff]
  %v1621 = vld [vmem:[#allocation2 + $0x368] sm:$0xff]
  %v1622 = vld [vmem:[#allocation2 + $0x370] sm:$0xff]
  %v1623 = vld [vmem:[#allocation2 + $0x378] sm:$0xff]
  %v1624 = vld [vmem:[#allocation2 + $0x380] sm:$0xff]
  %v1625 = vld [vmem:[#allocation2 + $0x388] sm:$0xff]
  %v1626 = vld [vmem:[#allocation2 + $0x390] sm:$0xff]
  %v1627 = vld [vmem:[#allocation2 + $0x398] sm:$0xff]
  %v1628 = vld [vmem:[#allocation2 + $0x3a0] sm:$0xff]
  %v1629 = vld [vmem:[#allocation2 + $0x3a8] sm:$0xff]
  %v1630 = vld [vmem:[#allocation2 + $0x3b0] sm:$0xff]
  %v1631 = vld [vmem:[#allocation2 + $0x3b8] sm:$0xff]
  %v1632 = vld [vmem:[#allocation2 + $0x3c0] sm:$0xff]
  %v1633 = vld [vmem:[#allocation2 + $0x3c8] sm:$0xff]
  %v1634 = vld [vmem:[#allocation2 + $0x3d0] sm:$0xff]
  %v1635 = vld [vmem:[#allocation2 + $0x3d8] sm:$0xff]
  %v1636 = vld [vmem:[#allocation2 + $0x3e0] sm:$0xff]
  %v1637 = vld [vmem:[#allocation2 + $0x3e8] sm:$0xff]
  %v1638 = vadd.f32 %v1617, %v1618
  %v1639 = vadd.f32 %v1638, %v1619
  %v1640 = vadd.f32 %v1639, %v1620
  %v1641 = vadd.f32 %v1640, %v1621
  %v1642 = vadd.f32 %v1641, %v1622
  %v1643 = vsel %vm222, %v1623, 0.0
  %v1644 = vadd.f32 %v1642, %v1643
  %1645 = vadd.xlane.f32.xlu0 %v1644
  %v1646 = vpop.xlane.xlu0 %1645
  %v1647 = vadd.f32 %v1624, %v1625
  %v1648 = vadd.f32 %v1647, %v1626
  %v1649 = vadd.f32 %v1648, %v1627
  %v1650 = vadd.f32 %v1649, %v1628
  %v1651 = vadd.f32 %v1650, %v1629
  %v1652 = vsel %vm222, %v1630, 0.0
  %v1653 = vadd.f32 %v1651, %v1652
  %1654 = vadd.xlane.f32.xlu0 %v1653
  %v1655 = vpop.xlane.xlu0 %1654
  %v1656 = vadd.f32 %v1631, %v1632
  %v1657 = vadd.f32 %v1656, %v1633
  %v1658 = vadd.f32 %v1657, %v1634
  %v1659 = vadd.f32 %v1658, %v1635
  %v1660 = vadd.f32 %v1659, %v1636
  %v1661 = vsel %vm222, %v1637, 0.0
  %v1662 = vadd.f32 %v1660, %v1661
  %1663 = vadd.xlane.f32.xlu0 %v1662
  %v1664 = vpop.xlane.xlu0 %1663
  %v1665 = vmul.f32 %v1617, %v1617
  %v1666 = vmul.f32 %v1618, %v1618
  %v1667 = vmul.f32 %v1619, %v1619
  %v1668 = vmul.f32 %v1620, %v1620
  %v1669 = vmul.f32 %v1621, %v1621
  %v1670 = vmul.f32 %v1622, %v1622
  %v1671 = vmul.f32 %v1623, %v1623
  %v1672 = vmul.f32 %v1624, %v1624
  %v1673 = vmul.f32 %v1625, %v1625
  %v1674 = vmul.f32 %v1626, %v1626
  %v1675 = vmul.f32 %v1627, %v1627
  %v1676 = vmul.f32 %v1628, %v1628
  %v1677 = vmul.f32 %v1629, %v1629
  %v1678 = vmul.f32 %v1630, %v1630
  %v1679 = vmul.f32 %v1631, %v1631
  %v1680 = vmul.f32 %v1632, %v1632
  %v1681 = vmul.f32 %v1633, %v1633
  %v1682 = vmul.f32 %v1634, %v1634
  %v1683 = vmul.f32 %v1635, %v1635
  %v1684 = vmul.f32 %v1636, %v1636
  %v1685 = vmul.f32 %v1637, %v1637
  %v1686 = vadd.f32 %v1665, %v1666
  %v1687 = vadd.f32 %v1686, %v1667
  %v1688 = vadd.f32 %v1687, %v1668
  %v1689 = vadd.f32 %v1688, %v1669
  %v1690 = vadd.f32 %v1689, %v1670
  %v1691 = vsel %vm222, %v1671, 0.0
  %v1692 = vadd.f32 %v1690, %v1691
  %1693 = vadd.xlane.f32.xlu0 %v1692
  %v1694 = vpop.xlane.xlu0 %1693
  %v1695 = vadd.f32 %v1672, %v1673
  %v1696 = vadd.f32 %v1695, %v1674
  %v1697 = vadd.f32 %v1696, %v1675
  %v1698 = vadd.f32 %v1697, %v1676
  %v1699 = vadd.f32 %v1698, %v1677
  %v1700 = vsel %vm222, %v1678, 0.0
  %v1701 = vadd.f32 %v1699, %v1700
  %1702 = vadd.xlane.f32.xlu0 %v1701
  %v1703 = vpop.xlane.xlu0 %1702
  %v1704 = vadd.f32 %v1679, %v1680
  %v1705 = vadd.f32 %v1704, %v1681
  %v1706 = vadd.f32 %v1705, %v1682
  %v1707 = vadd.f32 %v1706, %v1683
  %v1708 = vadd.f32 %v1707, %v1684
  %v1709 = vsel %vm222, %v1685, 0.0
  %v1710 = vadd.f32 %v1708, %v1709
  %1711 = vadd.xlane.f32.xlu0 %v1710
  %v1712 = vpop.xlane.xlu0 %1711
  %v1713 = vmul.f32 %v1646, 0.0012755102
  %v1714 = vmul.f32 %v1655, 0.0012755102
  %v1715 = vmul.f32 %v1664, 0.0012755102
  %v1716 = vmul.f32 %v1694, 0.0012755102
  %v1717 = vmul.f32 %v1703, 0.0012755102
  %v1718 = vmul.f32 %v1712, 0.0012755102
  %v1719 = vmul.f32 %v1713, %v1713
  %v1720 = vmul.f32 %v1714, %v1714
  %v1721 = vmul.f32 %v1715, %v1715
  %v1722 = vsub.f32 %v1716, %v1719
  %v1723 = vsub.f32 %v1717, %v1720
  %v1724 = vsub.f32 %v1718, %v1721
  %v1725 = vmax.f32 %v1722, 0.0
  %v1726 = vmax.f32 %v1723, 0.0
  %v1727 = vmax.f32 %v1724, 0.0
  %v1728 = vld [vmem:[#allocation5 + $0x78] sm:$0xff]
  %v1729 = vld [vmem:[#allocation5 + $0x80] sm:$0xff]
  %v1730 = vld [vmem:[#allocation5 + $0x88] sm:$0xff]
  %v1731 = vadd.f32 %v1725, 1e-05
  %v1732 = vadd.f32 %v1726, 1e-05
  %v1733 = vadd.f32 %v1727, 1e-05
  %v1734 = vrsqrt.pop %v1731
  %v1735 = vmul.f32 %v1734, %v1731
  %v1736 = vmul.f32 %v1735, %v1734
  %v1737 = vmul.f32 0.5, %v1736
  %v1738 = vsub.f32 1.5, %v1737
  %v1739 = vmul.f32 %v1734, %v1738
  %vm1740 = vweird.f32 %v1731
  %vm1741 = vweird.f32 %v1734
  %vm1742 = vmor %vm1740, %vm1741
  %v1743 = vsel %vm1742, %v1734, %v1739
  %v1744 = vrsqrt.pop %v1732
  %v1745 = vmul.f32 %v1744, %v1732
  %v1746 = vmul.f32 %v1745, %v1744
  %v1747 = vmul.f32 0.5, %v1746
  %v1748 = vsub.f32 1.5, %v1747
  %v1749 = vmul.f32 %v1744, %v1748
  %vm1750 = vweird.f32 %v1732
  %vm1751 = vweird.f32 %v1744
  %vm1752 = vmor %vm1750, %vm1751
  %v1753 = vsel %vm1752, %v1744, %v1749
  %v1754 = vrsqrt.pop %v1733
  %v1755 = vmul.f32 %v1754, %v1733
  %v1756 = vmul.f32 %v1755, %v1754
  %v1757 = vmul.f32 0.5, %v1756
  %v1758 = vsub.f32 1.5, %v1757
  %v1759 = vmul.f32 %v1754, %v1758
  %vm1760 = vweird.f32 %v1733
  %vm1761 = vweird.f32 %v1754
  %vm1762 = vmor %vm1760, %vm1761
  %v1763 = vsel %vm1762, %v1754, %v1759
  %v1764 = vmul.f32 %v1728, %v1743
  %v1765 = vmul.f32 %v1729, %v1753
  %v1766 = vmul.f32 %v1730, %v1763
  %v1767 = vmul.f32 %v1713, %v1764
  %v1768 = vmul.f32 %v1714, %v1765
  %v1769 = vmul.f32 %v1715, %v1766
  %1773 = vrot.lane.b32.xlu0 %v1767, 1
  %v1774 = vpop.permute.xlu0 %1773
  %1775 = vrot.lane.b32.xlu0 %v1768, 1
  %v1776 = vpop.permute.xlu0 %1775
  %1777 = vrot.lane.b32.xlu0 %v1769, 1
  %v1778 = vpop.permute.xlu0 %1777
  %v1782 = vsub.f32 %v1728, %v1774
  %v1783 = vsub.f32 %v1729, %v1776
  %v1784 = vsub.f32 %v1730, %v1778
  %1786 = vset.pattern.permute.xlu0 0
  %1787 = vperm.xlu0 %1786, %v1764
  %v1788 = vpop.permute.xlu0 %1787
  %1791 = vset.pattern.permute.xlu0 0
  %1792 = vperm.xlu0 %1791, %v1765
  %v1793 = vpop.permute.xlu0 %1792
  %1796 = vset.pattern.permute.xlu0 0
  %1797 = vperm.xlu0 %1796, %v1766
  %v1798 = vpop.permute.xlu0 %1797
  %v1800 = vmul.f32 %v1617, %v1788
  %v1801 = vmul.f32 %v1618, %v1788
  %v1802 = vmul.f32 %v1619, %v1788
  %v1803 = vmul.f32 %v1620, %v1788
  %v1804 = vmul.f32 %v1621, %v1788
  %v1805 = vmul.f32 %v1622, %v1788
  %v1806 = vmul.f32 %v1623, %v1788
  %v1807 = vmul.f32 %v1624, %v1793
  %v1808 = vmul.f32 %v1625, %v1793
  %v1809 = vmul.f32 %v1626, %v1793
  %v1810 = vmul.f32 %v1627, %v1793
  %v1811 = vmul.f32 %v1628, %v1793
  %v1812 = vmul.f32 %v1629, %v1793
  %v1813 = vmul.f32 %v1630, %v1793
  %v1814 = vmul.f32 %v1631, %v1798
  %v1815 = vmul.f32 %v1632, %v1798
  %v1816 = vmul.f32 %v1633, %v1798
  %v1817 = vmul.f32 %v1634, %v1798
  %v1818 = vmul.f32 %v1635, %v1798
  %v1819 = vmul.f32 %v1636, %v1798
  %v1820 = vmul.f32 %v1637, %v1798
  %1822 = vset.pattern.permute.xlu0 1
  %1823 = vperm.xlu0 %1822, %v1782
  %v1824 = vpop.permute.xlu0 %1823
  %1827 = vset.pattern.permute.xlu0 1
  %1828 = vperm.xlu0 %1827, %v1783
  %v1829 = vpop.permute.xlu0 %1828
  %1832 = vset.pattern.permute.xlu0 1
  %1833 = vperm.xlu0 %1832, %v1784
  %v1834 = vpop.permute.xlu0 %1833
  %v1836 = vadd.f32 %v1800, %v1824
  %v1837 = vadd.f32 %v1801, %v1824
  %v1838 = vadd.f32 %v1802, %v1824
  %v1839 = vadd.f32 %v1803, %v1824
  %v1840 = vadd.f32 %v1804, %v1824
  %v1841 = vadd.f32 %v1805, %v1824
  %v1842 = vadd.f32 %v1806, %v1824
  %v1843 = vadd.f32 %v1807, %v1829
  %v1844 = vadd.f32 %v1808, %v1829
  %v1845 = vadd.f32 %v1809, %v1829
  %v1846 = vadd.f32 %v1810, %v1829
  %v1847 = vadd.f32 %v1811, %v1829
  %v1848 = vadd.f32 %v1812, %v1829
  %v1849 = vadd.f32 %v1813, %v1829
  %v1850 = vadd.f32 %v1814, %v1834
  %v1851 = vadd.f32 %v1815, %v1834
  %v1852 = vadd.f32 %v1816, %v1834
  %v1853 = vadd.f32 %v1817, %v1834
  %v1854 = vadd.f32 %v1818, %v1834
  %v1855 = vadd.f32 %v1819, %v1834
  %v1856 = vadd.f32 %v1820, %v1834
  %v1857 = vmax.f32 %v1836, 0.0
  %v1858 = vmax.f32 %v1837, 0.0
  %v1859 = vmax.f32 %v1838, 0.0
  %v1860 = vmax.f32 %v1839, 0.0
  %v1861 = vmax.f32 %v1840, 0.0
  %v1862 = vmax.f32 %v1841, 0.0
  %v1863 = vmax.f32 %v1842, 0.0
  %v1864 = vmax.f32 %v1843, 0.0
  %v1865 = vmax.f32 %v1844, 0.0
  %v1866 = vmax.f32 %v1845, 0.0
  %v1867 = vmax.f32 %v1846, 0.0
  %v1868 = vmax.f32 %v1847, 0.0
  %v1869 = vmax.f32 %v1848, 0.0
  %v1870 = vmax.f32 %v1849, 0.0
  %v1871 = vmax.f32 %v1850, 0.0
  %v1872 = vmax.f32 %v1851, 0.0
  %v1873 = vmax.f32 %v1852, 0.0
  %v1874 = vmax.f32 %v1853, 0.0
  %v1875 = vmax.f32 %v1854, 0.0
  %v1876 = vmax.f32 %v1855, 0.0
  %v1877 = vmax.f32 %v1856, 0.0
  %1878 = vst [vmem:[#allocation2 + $0x348] sm:$0xff] %v1857
  %1879 = vst [vmem:[#allocation2 + $0x350] sm:$0xff] %v1858
  %1880 = vst [vmem:[#allocation2 + $0x358] sm:$0xff] %v1859
  %1881 = vst [vmem:[#allocation2 + $0x360] sm:$0xff] %v1860
  %1882 = vst [vmem:[#allocation2 + $0x368] sm:$0xff] %v1861
  %1883 = vst [vmem:[#allocation2 + $0x370] sm:$0xff] %v1862
  %1884 = vst.msk [vmem:[#allocation2 + $0x378] sm:$0xff] %vm222, %v1863
  %1885 = vst [vmem:[#allocation2 + $0x380] sm:$0xff] %v1864
  %1886 = vst [vmem:[#allocation2 + $0x388] sm:$0xff] %v1865
  %1887 = vst [vmem:[#allocation2 + $0x390] sm:$0xff] %v1866
  %1888 = vst [vmem:[#allocation2 + $0x398] sm:$0xff] %v1867
  %1889 = vst [vmem:[#allocation2 + $0x3a0] sm:$0xff] %v1868
  %1890 = vst [vmem:[#allocation2 + $0x3a8] sm:$0xff] %v1869
  %1891 = vst.msk [vmem:[#allocation2 + $0x3b0] sm:$0xff] %vm222, %v1870
  %1892 = vst [vmem:[#allocation2 + $0x3b8] sm:$0xff] %v1871
  %1893 = vst [vmem:[#allocation2 + $0x3c0] sm:$0xff] %v1872
  %1894 = vst [vmem:[#allocation2 + $0x3c8] sm:$0xff] %v1873
  %1895 = vst [vmem:[#allocation2 + $0x3d0] sm:$0xff] %v1874
  %1896 = vst [vmem:[#allocation2 + $0x3d8] sm:$0xff] %v1875
  %1897 = vst [vmem:[#allocation2 + $0x3e0] sm:$0xff] %v1876
  %1898 = vst.msk [vmem:[#allocation2 + $0x3e8] sm:$0xff] %vm222, %v1877
  %s1899 = sshll.u32 %s193, 4
  %1900 = dma.done %s161, %s1899
  %v1901 = vld [vmem:[#allocation2 + $0x3f0] sm:$0xff]
  %v1902 = vld [vmem:[#allocation2 + $0x3f8] sm:$0xff]
  %v1903 = vld [vmem:[#allocation2 + $0x400] sm:$0xff]
  %v1904 = vld [vmem:[#allocation2 + $0x408] sm:$0xff]
  %v1905 = vld [vmem:[#allocation2 + $0x410] sm:$0xff]
  %v1906 = vld [vmem:[#allocation2 + $0x418] sm:$0xff]
  %v1907 = vld [vmem:[#allocation2 + $0x420] sm:$0xff]
  %v1908 = vld [vmem:[#allocation2 + $0x428] sm:$0xff]
  %v1909 = vld [vmem:[#allocation2 + $0x430] sm:$0xff]
  %v1910 = vld [vmem:[#allocation2 + $0x438] sm:$0xff]
  %v1911 = vld [vmem:[#allocation2 + $0x440] sm:$0xff]
  %v1912 = vld [vmem:[#allocation2 + $0x448] sm:$0xff]
  %v1913 = vld [vmem:[#allocation2 + $0x450] sm:$0xff]
  %v1914 = vld [vmem:[#allocation2 + $0x458] sm:$0xff]
  %v1915 = vld [vmem:[#allocation2 + $0x460] sm:$0xff]
  %v1916 = vld [vmem:[#allocation2 + $0x468] sm:$0xff]
  %v1917 = vld [vmem:[#allocation2 + $0x470] sm:$0xff]
  %v1918 = vld [vmem:[#allocation2 + $0x478] sm:$0xff]
  %v1919 = vld [vmem:[#allocation2 + $0x480] sm:$0xff]
  %v1920 = vld [vmem:[#allocation2 + $0x488] sm:$0xff]
  %v1921 = vld [vmem:[#allocation2 + $0x490] sm:$0xff]
  %v1922 = vadd.f32 %v1901, %v1902
  %v1923 = vadd.f32 %v1922, %v1903
  %v1924 = vadd.f32 %v1923, %v1904
  %v1925 = vadd.f32 %v1924, %v1905
  %v1926 = vadd.f32 %v1925, %v1906
  %v1927 = vsel %vm222, %v1907, 0.0
  %v1928 = vadd.f32 %v1926, %v1927
  %1929 = vadd.xlane.f32.xlu0 %v1928
  %v1930 = vpop.xlane.xlu0 %1929
  %v1931 = vadd.f32 %v1908, %v1909
  %v1932 = vadd.f32 %v1931, %v1910
  %v1933 = vadd.f32 %v1932, %v1911
  %v1934 = vadd.f32 %v1933, %v1912
  %v1935 = vadd.f32 %v1934, %v1913
  %v1936 = vsel %vm222, %v1914, 0.0
  %v1937 = vadd.f32 %v1935, %v1936
  %1938 = vadd.xlane.f32.xlu0 %v1937
  %v1939 = vpop.xlane.xlu0 %1938
  %v1940 = vadd.f32 %v1915, %v1916
  %v1941 = vadd.f32 %v1940, %v1917
  %v1942 = vadd.f32 %v1941, %v1918
  %v1943 = vadd.f32 %v1942, %v1919
  %v1944 = vadd.f32 %v1943, %v1920
  %v1945 = vsel %vm222, %v1921, 0.0
  %v1946 = vadd.f32 %v1944, %v1945
  %1947 = vadd.xlane.f32.xlu0 %v1946
  %v1948 = vpop.xlane.xlu0 %1947
  %v1949 = vmul.f32 %v1901, %v1901
  %v1950 = vmul.f32 %v1902, %v1902
  %v1951 = vmul.f32 %v1903, %v1903
  %v1952 = vmul.f32 %v1904, %v1904
  %v1953 = vmul.f32 %v1905, %v1905
  %v1954 = vmul.f32 %v1906, %v1906
  %v1955 = vmul.f32 %v1907, %v1907
  %v1956 = vmul.f32 %v1908, %v1908
  %v1957 = vmul.f32 %v1909, %v1909
  %v1958 = vmul.f32 %v1910, %v1910
  %v1959 = vmul.f32 %v1911, %v1911
  %v1960 = vmul.f32 %v1912, %v1912
  %v1961 = vmul.f32 %v1913, %v1913
  %v1962 = vmul.f32 %v1914, %v1914
  %v1963 = vmul.f32 %v1915, %v1915
  %v1964 = vmul.f32 %v1916, %v1916
  %v1965 = vmul.f32 %v1917, %v1917
  %v1966 = vmul.f32 %v1918, %v1918
  %v1967 = vmul.f32 %v1919, %v1919
  %v1968 = vmul.f32 %v1920, %v1920
  %v1969 = vmul.f32 %v1921, %v1921
  %v1970 = vadd.f32 %v1949, %v1950
  %v1971 = vadd.f32 %v1970, %v1951
  %v1972 = vadd.f32 %v1971, %v1952
  %v1973 = vadd.f32 %v1972, %v1953
  %v1974 = vadd.f32 %v1973, %v1954
  %v1975 = vsel %vm222, %v1955, 0.0
  %v1976 = vadd.f32 %v1974, %v1975
  %1977 = vadd.xlane.f32.xlu0 %v1976
  %v1978 = vpop.xlane.xlu0 %1977
  %v1979 = vadd.f32 %v1956, %v1957
  %v1980 = vadd.f32 %v1979, %v1958
  %v1981 = vadd.f32 %v1980, %v1959
  %v1982 = vadd.f32 %v1981, %v1960
  %v1983 = vadd.f32 %v1982, %v1961
  %v1984 = vsel %vm222, %v1962, 0.0
  %v1985 = vadd.f32 %v1983, %v1984
  %1986 = vadd.xlane.f32.xlu0 %v1985
  %v1987 = vpop.xlane.xlu0 %1986
  %v1988 = vadd.f32 %v1963, %v1964
  %v1989 = vadd.f32 %v1988, %v1965
  %v1990 = vadd.f32 %v1989, %v1966
  %v1991 = vadd.f32 %v1990, %v1967
  %v1992 = vadd.f32 %v1991, %v1968
  %v1993 = vsel %vm222, %v1969, 0.0
  %v1994 = vadd.f32 %v1992, %v1993
  %1995 = vadd.xlane.f32.xlu0 %v1994
  %v1996 = vpop.xlane.xlu0 %1995
  %v1997 = vmul.f32 %v1930, 0.0012755102
  %v1998 = vmul.f32 %v1939, 0.0012755102
  %v1999 = vmul.f32 %v1948, 0.0012755102
  %v2000 = vmul.f32 %v1978, 0.0012755102
  %v2001 = vmul.f32 %v1987, 0.0012755102
  %v2002 = vmul.f32 %v1996, 0.0012755102
  %v2003 = vmul.f32 %v1997, %v1997
  %v2004 = vmul.f32 %v1998, %v1998
  %v2005 = vmul.f32 %v1999, %v1999
  %v2006 = vsub.f32 %v2000, %v2003
  %v2007 = vsub.f32 %v2001, %v2004
  %v2008 = vsub.f32 %v2002, %v2005
  %v2009 = vmax.f32 %v2006, 0.0
  %v2010 = vmax.f32 %v2007, 0.0
  %v2011 = vmax.f32 %v2008, 0.0
  %v2012 = vld [vmem:[#allocation5 + $0x90] sm:$0xff]
  %v2013 = vld [vmem:[#allocation5 + $0x98] sm:$0xff]
  %v2014 = vld [vmem:[#allocation5 + $0xa0] sm:$0xff]
  %v2015 = vadd.f32 %v2009, 1e-05
  %v2016 = vadd.f32 %v2010, 1e-05
  %v2017 = vadd.f32 %v2011, 1e-05
  %v2018 = vrsqrt.pop %v2015
  %v2019 = vmul.f32 %v2018, %v2015
  %v2020 = vmul.f32 %v2019, %v2018
  %v2021 = vmul.f32 0.5, %v2020
  %v2022 = vsub.f32 1.5, %v2021
  %v2023 = vmul.f32 %v2018, %v2022
  %vm2024 = vweird.f32 %v2015
  %vm2025 = vweird.f32 %v2018
  %vm2026 = vmor %vm2024, %vm2025
  %v2027 = vsel %vm2026, %v2018, %v2023
  %v2028 = vrsqrt.pop %v2016
  %v2029 = vmul.f32 %v2028, %v2016
  %v2030 = vmul.f32 %v2029, %v2028
  %v2031 = vmul.f32 0.5, %v2030
  %v2032 = vsub.f32 1.5, %v2031
  %v2033 = vmul.f32 %v2028, %v2032
  %vm2034 = vweird.f32 %v2016
  %vm2035 = vweird.f32 %v2028
  %vm2036 = vmor %vm2034, %vm2035
  %v2037 = vsel %vm2036, %v2028, %v2033
  %v2038 = vrsqrt.pop %v2017
  %v2039 = vmul.f32 %v2038, %v2017
  %v2040 = vmul.f32 %v2039, %v2038
  %v2041 = vmul.f32 0.5, %v2040
  %v2042 = vsub.f32 1.5, %v2041
  %v2043 = vmul.f32 %v2038, %v2042
  %vm2044 = vweird.f32 %v2017
  %vm2045 = vweird.f32 %v2038
  %vm2046 = vmor %vm2044, %vm2045
  %v2047 = vsel %vm2046, %v2038, %v2043
  %v2048 = vmul.f32 %v2012, %v2027
  %v2049 = vmul.f32 %v2013, %v2037
  %v2050 = vmul.f32 %v2014, %v2047
  %v2051 = vmul.f32 %v1997, %v2048
  %v2052 = vmul.f32 %v1998, %v2049
  %v2053 = vmul.f32 %v1999, %v2050
  %2057 = vrot.lane.b32.xlu0 %v2051, 1
  %v2058 = vpop.permute.xlu0 %2057
  %2059 = vrot.lane.b32.xlu0 %v2052, 1
  %v2060 = vpop.permute.xlu0 %2059
  %2061 = vrot.lane.b32.xlu0 %v2053, 1
  %v2062 = vpop.permute.xlu0 %2061
  %v2066 = vsub.f32 %v2012, %v2058
  %v2067 = vsub.f32 %v2013, %v2060
  %v2068 = vsub.f32 %v2014, %v2062
  %2070 = vset.pattern.permute.xlu0 0
  %2071 = vperm.xlu0 %2070, %v2048
  %v2072 = vpop.permute.xlu0 %2071
  %2075 = vset.pattern.permute.xlu0 0
  %2076 = vperm.xlu0 %2075, %v2049
  %v2077 = vpop.permute.xlu0 %2076
  %2080 = vset.pattern.permute.xlu0 0
  %2081 = vperm.xlu0 %2080, %v2050
  %v2082 = vpop.permute.xlu0 %2081
  %v2084 = vmul.f32 %v1901, %v2072
  %v2085 = vmul.f32 %v1902, %v2072
  %v2086 = vmul.f32 %v1903, %v2072
  %v2087 = vmul.f32 %v1904, %v2072
  %v2088 = vmul.f32 %v1905, %v2072
  %v2089 = vmul.f32 %v1906, %v2072
  %v2090 = vmul.f32 %v1907, %v2072
  %v2091 = vmul.f32 %v1908, %v2077
  %v2092 = vmul.f32 %v1909, %v2077
  %v2093 = vmul.f32 %v1910, %v2077
  %v2094 = vmul.f32 %v1911, %v2077
  %v2095 = vmul.f32 %v1912, %v2077
  %v2096 = vmul.f32 %v1913, %v2077
  %v2097 = vmul.f32 %v1914, %v2077
  %v2098 = vmul.f32 %v1915, %v2082
  %v2099 = vmul.f32 %v1916, %v2082
  %v2100 = vmul.f32 %v1917, %v2082
  %v2101 = vmul.f32 %v1918, %v2082
  %v2102 = vmul.f32 %v1919, %v2082
  %v2103 = vmul.f32 %v1920, %v2082
  %v2104 = vmul.f32 %v1921, %v2082
  %2106 = vset.pattern.permute.xlu0 1
  %2107 = vperm.xlu0 %2106, %v2066
  %v2108 = vpop.permute.xlu0 %2107
  %2111 = vset.pattern.permute.xlu0 1
  %2112 = vperm.xlu0 %2111, %v2067
  %v2113 = vpop.permute.xlu0 %2112
  %2116 = vset.pattern.permute.xlu0 1
  %2117 = vperm.xlu0 %2116, %v2068
  %v2118 = vpop.permute.xlu0 %2117
  %v2120 = vadd.f32 %v2084, %v2108
  %v2121 = vadd.f32 %v2085, %v2108
  %v2122 = vadd.f32 %v2086, %v2108
  %v2123 = vadd.f32 %v2087, %v2108
  %v2124 = vadd.f32 %v2088, %v2108
  %v2125 = vadd.f32 %v2089, %v2108
  %v2126 = vadd.f32 %v2090, %v2108
  %v2127 = vadd.f32 %v2091, %v2113
  %v2128 = vadd.f32 %v2092, %v2113
  %v2129 = vadd.f32 %v2093, %v2113
  %v2130 = vadd.f32 %v2094, %v2113
  %v2131 = vadd.f32 %v2095, %v2113
  %v2132 = vadd.f32 %v2096, %v2113
  %v2133 = vadd.f32 %v2097, %v2113
  %v2134 = vadd.f32 %v2098, %v2118
  %v2135 = vadd.f32 %v2099, %v2118
  %v2136 = vadd.f32 %v2100, %v2118
  %v2137 = vadd.f32 %v2101, %v2118
  %v2138 = vadd.f32 %v2102, %v2118
  %v2139 = vadd.f32 %v2103, %v2118
  %v2140 = vadd.f32 %v2104, %v2118
  %v2141 = vmax.f32 %v2120, 0.0
  %v2142 = vmax.f32 %v2121, 0.0
  %v2143 = vmax.f32 %v2122, 0.0
  %v2144 = vmax.f32 %v2123, 0.0
  %v2145 = vmax.f32 %v2124, 0.0
  %v2146 = vmax.f32 %v2125, 0.0
  %v2147 = vmax.f32 %v2126, 0.0
  %v2148 = vmax.f32 %v2127, 0.0
  %v2149 = vmax.f32 %v2128, 0.0
  %v2150 = vmax.f32 %v2129, 0.0
  %v2151 = vmax.f32 %v2130, 0.0
  %v2152 = vmax.f32 %v2131, 0.0
  %v2153 = vmax.f32 %v2132, 0.0
  %v2154 = vmax.f32 %v2133, 0.0
  %v2155 = vmax.f32 %v2134, 0.0
  %v2156 = vmax.f32 %v2135, 0.0
  %v2157 = vmax.f32 %v2136, 0.0
  %v2158 = vmax.f32 %v2137, 0.0
  %v2159 = vmax.f32 %v2138, 0.0
  %v2160 = vmax.f32 %v2139, 0.0
  %v2161 = vmax.f32 %v2140, 0.0
  %2162 = vst [vmem:[#allocation2 + $0x3f0] sm:$0xff] %v2141
  %2163 = vst [vmem:[#allocation2 + $0x3f8] sm:$0xff] %v2142
  %2164 = vst [vmem:[#allocation2 + $0x400] sm:$0xff] %v2143
  %2165 = vst [vmem:[#allocation2 + $0x408] sm:$0xff] %v2144
  %2166 = vst [vmem:[#allocation2 + $0x410] sm:$0xff] %v2145
  %2167 = vst [vmem:[#allocation2 + $0x418] sm:$0xff] %v2146
  %2168 = vst.msk [vmem:[#allocation2 + $0x420] sm:$0xff] %vm222, %v2147
  %2169 = vst [vmem:[#allocation2 + $0x428] sm:$0xff] %v2148
  %2170 = vst [vmem:[#allocation2 + $0x430] sm:$0xff] %v2149
  %2171 = vst [vmem:[#allocation2 + $0x438] sm:$0xff] %v2150
  %2172 = vst [vmem:[#allocation2 + $0x440] sm:$0xff] %v2151
  %2173 = vst [vmem:[#allocation2 + $0x448] sm:$0xff] %v2152
  %2174 = vst [vmem:[#allocation2 + $0x450] sm:$0xff] %v2153
  %2175 = vst.msk [vmem:[#allocation2 + $0x458] sm:$0xff] %vm222, %v2154
  %2176 = vst [vmem:[#allocation2 + $0x460] sm:$0xff] %v2155
  %2177 = vst [vmem:[#allocation2 + $0x468] sm:$0xff] %v2156
  %2178 = vst [vmem:[#allocation2 + $0x470] sm:$0xff] %v2157
  %2179 = vst [vmem:[#allocation2 + $0x478] sm:$0xff] %v2158
  %2180 = vst [vmem:[#allocation2 + $0x480] sm:$0xff] %v2159
  %2181 = vst [vmem:[#allocation2 + $0x488] sm:$0xff] %v2160
  %2182 = vst.msk [vmem:[#allocation2 + $0x490] sm:$0xff] %vm222, %v2161
  %s2183 = smul.u32 8, 21
  %s2184 = smul.u32 %s2183, 2
  %s2185 = sshll.u32 %s2184, 4
  %2186 = dma.done %s175, %s2185
  %v2187 = vld [vmem:[#allocation4] sm:$0xff]
  %v2188 = vld [vmem:[#allocation4 + $0x8] sm:$0xff]
  %v2189 = vld [vmem:[#allocation4 + $0x10] sm:$0xff]
  %v2190 = vld [vmem:[#allocation4 + $0x18] sm:$0xff]
  %v2191 = vld [vmem:[#allocation4 + $0x20] sm:$0xff]
  %v2192 = vld [vmem:[#allocation4 + $0x28] sm:$0xff]
  %v2193 = vld [vmem:[#allocation4 + $0x30] sm:$0xff]
  %v2194 = vld [vmem:[#allocation4 + $0x38] sm:$0xff]
  %v2195 = vld [vmem:[#allocation4 + $0x40] sm:$0xff]
  %v2196 = vld [vmem:[#allocation4 + $0x48] sm:$0xff]
  %v2197 = vld [vmem:[#allocation4 + $0x50] sm:$0xff]
  %v2198 = vld [vmem:[#allocation4 + $0x58] sm:$0xff]
  %v2199 = vld [vmem:[#allocation4 + $0x60] sm:$0xff]
  %v2200 = vld [vmem:[#allocation4 + $0x68] sm:$0xff]
  %v2201 = vld [vmem:[#allocation4 + $0x70] sm:$0xff]
  %v2202 = vld [vmem:[#allocation4 + $0x78] sm:$0xff]
  %v2203 = vld [vmem:[#allocation4 + $0x80] sm:$0xff]
  %v2204 = vld [vmem:[#allocation4 + $0x88] sm:$0xff]
  %v2205 = vld [vmem:[#allocation4 + $0x90] sm:$0xff]
  %v2206 = vld [vmem:[#allocation4 + $0x98] sm:$0xff]
  %v2207 = vld [vmem:[#allocation4 + $0xa0] sm:$0xff]
  %v2208 = vld [vmem:[#allocation4 + $0xa8] sm:$0xff]
  %v2209 = vld [vmem:[#allocation4 + $0xb0] sm:$0xff]
  %v2210 = vld [vmem:[#allocation4 + $0xb8] sm:$0xff]
  %v2211 = vld [vmem:[#allocation4 + $0xc0] sm:$0xff]
  %v2212 = vld [vmem:[#allocation4 + $0xc8] sm:$0xff]
  %v2213 = vld [vmem:[#allocation4 + $0xd0] sm:$0xff]
  %v2214 = vld [vmem:[#allocation4 + $0xd8] sm:$0xff]
  %v2215 = vld [vmem:[#allocation4 + $0xe0] sm:$0xff]
  %v2216 = vld [vmem:[#allocation4 + $0xe8] sm:$0xff]
  %v2217 = vld [vmem:[#allocation4 + $0xf0] sm:$0xff]
  %v2218 = vld [vmem:[#allocation4 + $0xf8] sm:$0xff]
  %v2219 = vld [vmem:[#allocation4 + $0x100] sm:$0xff]
  %v2220 = vld [vmem:[#allocation4 + $0x108] sm:$0xff]
  %v2221 = vld [vmem:[#allocation4 + $0x110] sm:$0xff]
  %v2222 = vld [vmem:[#allocation4 + $0x118] sm:$0xff]
  %v2223 = vld [vmem:[#allocation4 + $0x120] sm:$0xff]
  %v2224 = vld [vmem:[#allocation4 + $0x128] sm:$0xff]
  %v2225 = vld [vmem:[#allocation4 + $0x130] sm:$0xff]
  %v2226 = vld [vmem:[#allocation4 + $0x138] sm:$0xff]
  %v2227 = vld [vmem:[#allocation4 + $0x140] sm:$0xff]
  %v2228 = vld [vmem:[#allocation4 + $0x148] sm:$0xff]
  %v2229 = vld [vmem:[#allocation2] sm:$0xff]
  %v2230 = vld [vmem:[#allocation2 + $0x8] sm:$0xff]
  %v2231 = vld [vmem:[#allocation2 + $0x10] sm:$0xff]
  %v2232 = vld [vmem:[#allocation2 + $0x18] sm:$0xff]
  %v2233 = vld [vmem:[#allocation2 + $0x20] sm:$0xff]
  %v2234 = vld [vmem:[#allocation2 + $0x28] sm:$0xff]
  %v2235 = vld [vmem:[#allocation2 + $0x30] sm:$0xff]
  %v2236 = vld [vmem:[#allocation2 + $0x38] sm:$0xff]
  %v2237 = vld [vmem:[#allocation2 + $0x40] sm:$0xff]
  %v2238 = vld [vmem:[#allocation2 + $0x48] sm:$0xff]
  %v2239 = vld [vmem:[#allocation2 + $0x50] sm:$0xff]
  %v2240 = vld [vmem:[#allocation2 + $0x58] sm:$0xff]
  %v2241 = vld [vmem:[#allocation2 + $0x60] sm:$0xff]
  %v2242 = vld [vmem:[#allocation2 + $0x68] sm:$0xff]
  %v2243 = vld [vmem:[#allocation2 + $0x70] sm:$0xff]
  %v2244 = vld [vmem:[#allocation2 + $0x78] sm:$0xff]
  %v2245 = vld [vmem:[#allocation2 + $0x80] sm:$0xff]
  %v2246 = vld [vmem:[#allocation2 + $0x88] sm:$0xff]
  %v2247 = vld [vmem:[#allocation2 + $0x90] sm:$0xff]
  %v2248 = vld [vmem:[#allocation2 + $0x98] sm:$0xff]
  %v2249 = vld [vmem:[#allocation2 + $0xa0] sm:$0xff]
  %v2250 = vld [vmem:[#allocation2 + $0xa8] sm:$0xff]
  %v2251 = vld [vmem:[#allocation2 + $0xb0] sm:$0xff]
  %v2252 = vld [vmem:[#allocation2 + $0xb8] sm:$0xff]
  %v2253 = vld [vmem:[#allocation2 + $0xc0] sm:$0xff]
  %v2254 = vld [vmem:[#allocation2 + $0xc8] sm:$0xff]
  %v2255 = vld [vmem:[#allocation2 + $0xd0] sm:$0xff]
  %v2256 = vld [vmem:[#allocation2 + $0xd8] sm:$0xff]
  %v2257 = vld [vmem:[#allocation2 + $0xe0] sm:$0xff]
  %v2258 = vld [vmem:[#allocation2 + $0xe8] sm:$0xff]
  %v2259 = vld [vmem:[#allocation2 + $0xf0] sm:$0xff]
  %v2260 = vld [vmem:[#allocation2 + $0xf8] sm:$0xff]
  %v2261 = vld [vmem:[#allocation2 + $0x100] sm:$0xff]
  %v2262 = vld [vmem:[#allocation2 + $0x108] sm:$0xff]
  %v2263 = vld [vmem:[#allocation2 + $0x110] sm:$0xff]
  %v2264 = vld [vmem:[#allocation2 + $0x118] sm:$0xff]
  %v2265 = vld [vmem:[#allocation2 + $0x120] sm:$0xff]
  %v2266 = vld [vmem:[#allocation2 + $0x128] sm:$0xff]
  %v2267 = vld [vmem:[#allocation2 + $0x130] sm:$0xff]
  %v2268 = vld [vmem:[#allocation2 + $0x138] sm:$0xff]
  %v2269 = vld [vmem:[#allocation2 + $0x140] sm:$0xff]
  %v2270 = vld [vmem:[#allocation2 + $0x148] sm:$0xff]
  %v2271 = vld [vmem:[#allocation2 + $0x150] sm:$0xff]
  %v2272 = vld [vmem:[#allocation2 + $0x158] sm:$0xff]
  %v2273 = vld [vmem:[#allocation2 + $0x160] sm:$0xff]
  %v2274 = vld [vmem:[#allocation2 + $0x168] sm:$0xff]
  %v2275 = vld [vmem:[#allocation2 + $0x170] sm:$0xff]
  %v2276 = vld [vmem:[#allocation2 + $0x178] sm:$0xff]
  %v2277 = vld [vmem:[#allocation2 + $0x180] sm:$0xff]
  %v2278 = vld [vmem:[#allocation2 + $0x188] sm:$0xff]
  %v2279 = vld [vmem:[#allocation2 + $0x190] sm:$0xff]
  %v2280 = vld [vmem:[#allocation2 + $0x198] sm:$0xff]
  %v2281 = vld [vmem:[#allocation2 + $0x1a0] sm:$0xff]
  %v2282 = vld [vmem:[#allocation2 + $0x1a8] sm:$0xff]
  %v2283 = vld [vmem:[#allocation2 + $0x1b0] sm:$0xff]
  %v2284 = vld [vmem:[#allocation2 + $0x1b8] sm:$0xff]
  %v2285 = vld [vmem:[#allocation2 + $0x1c0] sm:$0xff]
  %v2286 = vld [vmem:[#allocation2 + $0x1c8] sm:$0xff]
  %v2287 = vld [vmem:[#allocation2 + $0x1d0] sm:$0xff]
  %v2288 = vld [vmem:[#allocation2 + $0x1d8] sm:$0xff]
  %v2289 = vld [vmem:[#allocation2 + $0x1e0] sm:$0xff]
  %v2290 = vld [vmem:[#allocation2 + $0x1e8] sm:$0xff]
  %v2291 = vld [vmem:[#allocation2 + $0x1f0] sm:$0xff]
  %v2292 = vld [vmem:[#allocation2 + $0x1f8] sm:$0xff]
  %v2293 = vld [vmem:[#allocation2 + $0x200] sm:$0xff]
  %v2294 = vld [vmem:[#allocation2 + $0x208] sm:$0xff]
  %v2295 = vld [vmem:[#allocation2 + $0x210] sm:$0xff]
  %v2296 = vld [vmem:[#allocation2 + $0x218] sm:$0xff]
  %v2297 = vld [vmem:[#allocation2 + $0x220] sm:$0xff]
  %v2298 = vld [vmem:[#allocation2 + $0x228] sm:$0xff]
  %v2299 = vld [vmem:[#allocation2 + $0x230] sm:$0xff]
  %v2300 = vld [vmem:[#allocation2 + $0x238] sm:$0xff]
  %v2301 = vld [vmem:[#allocation2 + $0x240] sm:$0xff]
  %v2302 = vld [vmem:[#allocation2 + $0x248] sm:$0xff]
  %v2303 = vld [vmem:[#allocation2 + $0x250] sm:$0xff]
  %v2304 = vld [vmem:[#allocation2 + $0x258] sm:$0xff]
  %v2305 = vld [vmem:[#allocation2 + $0x260] sm:$0xff]
  %v2306 = vld [vmem:[#allocation2 + $0x268] sm:$0xff]
  %v2307 = vld [vmem:[#allocation2 + $0x270] sm:$0xff]
  %v2308 = vld [vmem:[#allocation2 + $0x278] sm:$0xff]
  %v2309 = vld [vmem:[#allocation2 + $0x280] sm:$0xff]
  %v2310 = vld [vmem:[#allocation2 + $0x288] sm:$0xff]
  %v2311 = vld [vmem:[#allocation2 + $0x290] sm:$0xff]
  %v2312 = vld [vmem:[#allocation2 + $0x298] sm:$0xff]
  %v2313 = vld [vmem:[#allocation2 + $0x2a0] sm:$0xff]
  %v2314 = vld [vmem:[#allocation2 + $0x2a8] sm:$0xff]
  %v2315 = vld [vmem:[#allocation2 + $0x2b0] sm:$0xff]
  %v2316 = vld [vmem:[#allocation2 + $0x2b8] sm:$0xff]
  %v2317 = vld [vmem:[#allocation2 + $0x2c0] sm:$0xff]
  %v2318 = vld [vmem:[#allocation2 + $0x2c8] sm:$0xff]
  %v2319 = vld [vmem:[#allocation2 + $0x2d0] sm:$0xff]
  %v2320 = vld [vmem:[#allocation2 + $0x2d8] sm:$0xff]
  %v2321 = vld [vmem:[#allocation2 + $0x2e0] sm:$0xff]
  %v2322 = vld [vmem:[#allocation2 + $0x2e8] sm:$0xff]
  %v2323 = vld [vmem:[#allocation2 + $0x2f0] sm:$0xff]
  %v2324 = vld [vmem:[#allocation2 + $0x2f8] sm:$0xff]
  %v2325 = vld [vmem:[#allocation2 + $0x300] sm:$0xff]
  %v2326 = vld [vmem:[#allocation2 + $0x308] sm:$0xff]
  %v2327 = vld [vmem:[#allocation2 + $0x310] sm:$0xff]
  %v2328 = vld [vmem:[#allocation2 + $0x318] sm:$0xff]
  %v2329 = vld [vmem:[#allocation2 + $0x320] sm:$0xff]
  %v2330 = vld [vmem:[#allocation2 + $0x328] sm:$0xff]
  %v2331 = vld [vmem:[#allocation2 + $0x330] sm:$0xff]
  %v2332 = vld [vmem:[#allocation2 + $0x338] sm:$0xff]
  %v2333 = vld [vmem:[#allocation2 + $0x340] sm:$0xff]
  %v2334 = vld [vmem:[#allocation2 + $0x348] sm:$0xff]
  %v2335 = vld [vmem:[#allocation2 + $0x350] sm:$0xff]
  %v2336 = vld [vmem:[#allocation2 + $0x358] sm:$0xff]
  %v2337 = vld [vmem:[#allocation2 + $0x360] sm:$0xff]
  %v2338 = vld [vmem:[#allocation2 + $0x368] sm:$0xff]
  %v2339 = vld [vmem:[#allocation2 + $0x370] sm:$0xff]
  %v2340 = vld [vmem:[#allocation2 + $0x378] sm:$0xff]
  %v2341 = vld [vmem:[#allocation2 + $0x380] sm:$0xff]
  %v2342 = vld [vmem:[#allocation2 + $0x388] sm:$0xff]
  %v2343 = vld [vmem:[#allocation2 + $0x390] sm:$0xff]
  %v2344 = vld [vmem:[#allocation2 + $0x398] sm:$0xff]
  %v2345 = vld [vmem:[#allocation2 + $0x3a0] sm:$0xff]
  %v2346 = vld [vmem:[#allocation2 + $0x3a8] sm:$0xff]
  %v2347 = vld [vmem:[#allocation2 + $0x3b0] sm:$0xff]
  %v2348 = vld [vmem:[#allocation2 + $0x3b8] sm:$0xff]
  %v2349 = vld [vmem:[#allocation2 + $0x3c0] sm:$0xff]
  %v2350 = vld [vmem:[#allocation2 + $0x3c8] sm:$0xff]
  %v2351 = vld [vmem:[#allocation2 + $0x3d0] sm:$0xff]
  %v2352 = vld [vmem:[#allocation2 + $0x3d8] sm:$0xff]
  %v2353 = vld [vmem:[#allocation2 + $0x3e0] sm:$0xff]
  %v2354 = vld [vmem:[#allocation2 + $0x3e8] sm:$0xff]
  %v2355 = vld [vmem:[#allocation2 + $0x3f0] sm:$0xff]
  %v2356 = vld [vmem:[#allocation2 + $0x3f8] sm:$0xff]
  %v2357 = vld [vmem:[#allocation2 + $0x400] sm:$0xff]
  %v2358 = vld [vmem:[#allocation2 + $0x408] sm:$0xff]
  %v2359 = vld [vmem:[#allocation2 + $0x410] sm:$0xff]
  %v2360 = vld [vmem:[#allocation2 + $0x418] sm:$0xff]
  %v2361 = vld [vmem:[#allocation2 + $0x420] sm:$0xff]
  %v2362 = vld [vmem:[#allocation2 + $0x428] sm:$0xff]
  %v2363 = vld [vmem:[#allocation2 + $0x430] sm:$0xff]
  %v2364 = vld [vmem:[#allocation2 + $0x438] sm:$0xff]
  %v2365 = vld [vmem:[#allocation2 + $0x440] sm:$0xff]
  %v2366 = vld [vmem:[#allocation2 + $0x448] sm:$0xff]
  %v2367 = vld [vmem:[#allocation2 + $0x450] sm:$0xff]
  %v2368 = vld [vmem:[#allocation2 + $0x458] sm:$0xff]
  %v2369 = vld [vmem:[#allocation2 + $0x460] sm:$0xff]
  %v2370 = vld [vmem:[#allocation2 + $0x468] sm:$0xff]
  %v2371 = vld [vmem:[#allocation2 + $0x470] sm:$0xff]
  %v2372 = vld [vmem:[#allocation2 + $0x478] sm:$0xff]
  %v2373 = vld [vmem:[#allocation2 + $0x480] sm:$0xff]
  %v2374 = vld [vmem:[#allocation2 + $0x488] sm:$0xff]
  %v2375 = vld [vmem:[#allocation2 + $0x490] sm:$0xff]
  %vm2376 = vcmask 326656
  %v2378 = vsel %vm2376, %v2188, 0
  %v2381 = vsel %vm2376, %v2190, 0
  %v2384 = vsel %vm2376, %v2192, 0
  %v2387 = vsel %vm2376, %v2194, 0
  %v2390 = vsel %vm2376, %v2196, 0
  %v2393 = vsel %vm2376, %v2198, 0
  %v2396 = vsel %vm2376, %v2200, 0
  %v2399 = vsel %vm2376, %v2202, 0
  %v2402 = vsel %vm2376, %v2204, 0
  %v2405 = vsel %vm2376, %v2206, 0
  %v2408 = vsel %vm2376, %v2208, 0
  %v2411 = vsel %vm2376, %v2210, 0
  %v2414 = vsel %vm2376, %v2212, 0
  %v2417 = vsel %vm2376, %v2214, 0
  %v2420 = vsel %vm2376, %v2216, 0
  %v2423 = vsel %vm2376, %v2218, 0
  %v2426 = vsel %vm2376, %v2220, 0
  %v2429 = vsel %vm2376, %v2222, 0
  %v2432 = vsel %vm2376, %v2224, 0
  %v2435 = vsel %vm2376, %v2226, 0
  %v2438 = vsel %vm2376, %v2228, 0
  %2440 = vmatpush.msra.mxu0 %v2334
  %2441 = vmatpush.msra.mxu0 %v2327
  %2442 = vmatpush.msra.mxu0 %v2320
  %2443 = vmatpush.msra.mxu0 %v2313
  %2444 = vmatpush.msra.mxu0 %v2306
  %2445 = vmatpush.msra.mxu0 %v2299
  %2446 = vmatpush.msra.mxu0 %v2292
  %2447 = vmatpush.msra.mxu0 %v2285
  %2448 = vmatpush.msra.mxu0 %v2278
  %2449 = vmatpush.msra.mxu0 %v2271
  %2450 = vmatpush.msra.mxu0 %v2264
  %2451 = vmatpush.msra.mxu0 %v2257
  %2452 = vmatpush.msra.mxu0 %v2250
  %2453 = vmatpush.msra.mxu0 %v2243
  %2454 = vmatpush.msra.mxu0 %v2236
  %2455 = vmatpush.msra.mxu0 %v2229
  %2456 = vmatmul.f32.gmra.mxu0 %v2187
  %v2457 = vpop.f32.mrf.mxu0
  %v2458 = vadd.f32 0.0, %v2457
  %2459 = vmatmul.f32.gmra.mxu0 %v2189
  %v2460 = vpop.f32.mrf.mxu0
  %v2461 = vadd.f32 0.0, %v2460
  %2462 = vmatmul.f32.gmra.mxu0 %v2191
  %v2463 = vpop.f32.mrf.mxu0
  %v2464 = vadd.f32 0.0, %v2463
  %2465 = vmatmul.f32.gmra.mxu0 %v2193
  %v2466 = vpop.f32.mrf.mxu0
  %v2467 = vadd.f32 0.0, %v2466
  %2468 = vmatmul.f32.gmra.mxu0 %v2195
  %v2469 = vpop.f32.mrf.mxu0
  %v2470 = vadd.f32 0.0, %v2469
  %2471 = vmatmul.f32.gmra.mxu0 %v2197
  %v2472 = vpop.f32.mrf.mxu0
  %v2473 = vadd.f32 0.0, %v2472
  %2474 = vmatmul.f32.gmra.mxu0 %v2199
  %v2475 = vpop.f32.mrf.mxu0
  %v2476 = vadd.f32 0.0, %v2475
  %2477 = vmatmul.f32.gmra.mxu0 %v2201
  %v2478 = vpop.f32.mrf.mxu0
  %v2479 = vadd.f32 0.0, %v2478
  %2480 = vmatmul.f32.gmra.mxu0 %v2203
  %v2481 = vpop.f32.mrf.mxu0
  %v2482 = vadd.f32 0.0, %v2481
  %2483 = vmatmul.f32.gmra.mxu0 %v2205
  %v2484 = vpop.f32.mrf.mxu0
  %v2485 = vadd.f32 0.0, %v2484
  %2486 = vmatmul.f32.gmra.mxu0 %v2207
  %v2487 = vpop.f32.mrf.mxu0
  %v2488 = vadd.f32 0.0, %v2487
  %2489 = vmatmul.f32.gmra.mxu0 %v2209
  %v2490 = vpop.f32.mrf.mxu0
  %v2491 = vadd.f32 0.0, %v2490
  %2492 = vmatmul.f32.gmra.mxu0 %v2211
  %v2493 = vpop.f32.mrf.mxu0
  %v2494 = vadd.f32 0.0, %v2493
  %2495 = vmatmul.f32.gmra.mxu0 %v2213
  %v2496 = vpop.f32.mrf.mxu0
  %v2497 = vadd.f32 0.0, %v2496
  %2498 = vmatmul.f32.gmra.mxu0 %v2215
  %v2499 = vpop.f32.mrf.mxu0
  %v2500 = vadd.f32 0.0, %v2499
  %2501 = vmatmul.f32.gmra.mxu0 %v2217
  %v2502 = vpop.f32.mrf.mxu0
  %v2503 = vadd.f32 0.0, %v2502
  %2504 = vmatmul.f32.gmra.mxu0 %v2219
  %v2505 = vpop.f32.mrf.mxu0
  %v2506 = vadd.f32 0.0, %v2505
  %2507 = vmatmul.f32.gmra.mxu0 %v2221
  %v2508 = vpop.f32.mrf.mxu0
  %v2509 = vadd.f32 0.0, %v2508
  %2510 = vmatmul.f32.gmra.mxu0 %v2223
  %v2511 = vpop.f32.mrf.mxu0
  %v2512 = vadd.f32 0.0, %v2511
  %2513 = vmatmul.f32.gmra.mxu0 %v2225
  %v2514 = vpop.f32.mrf.mxu0
  %v2515 = vadd.f32 0.0, %v2514
  %2516 = vmatmul.f32.gmra.mxu0 %v2227
  %v2517 = vpop.f32.mrf.mxu0
  %v2518 = vadd.f32 0.0, %v2517
  %2519 = vdwg.mxu0
  %2520 = vmatpush.msra.mxu0 0.0
  %2521 = vmatpush.msra.mxu0 0.0
  %2522 = vmatpush.msra.mxu0 0.0
  %2523 = vmatpush.msra.mxu0 0.0
  %2524 = vmatpush.msra.mxu0 0.0
  %2525 = vmatpush.msra.mxu0 0.0
  %2526 = vmatpush.msra.mxu0 0.0
  %2527 = vmatpush.msra.mxu0 0.0
  %2528 = vmatpush.msra.mxu0 0.0
  %2529 = vmatpush.msra.mxu0 0.0
  %2530 = vmatpush.msra.mxu0 0.0
  %2531 = vmatpush.msra.mxu0 %v2369
  %2532 = vmatpush.msra.mxu0 %v2362
  %2533 = vmatpush.msra.mxu0 %v2355
  %2534 = vmatpush.msra.mxu0 %v2348
  %2535 = vmatpush.msra.mxu0 %v2341
  %2536 = vmatmul.f32.gmra.mxu0 %v2378
  %v2537 = vpop.f32.mrf.mxu0
  %v2538 = vadd.f32 %v2458, %v2537
  %2539 = vmatmul.f32.gmra.mxu0 %v2381
  %v2540 = vpop.f32.mrf.mxu0
  %v2541 = vadd.f32 %v2461, %v2540
  %2542 = vmatmul.f32.gmra.mxu0 %v2384
  %v2543 = vpop.f32.mrf.mxu0
  %v2544 = vadd.f32 %v2464, %v2543
  %2545 = vmatmul.f32.gmra.mxu0 %v2387
  %v2546 = vpop.f32.mrf.mxu0
  %v2547 = vadd.f32 %v2467, %v2546
  %2548 = vmatmul.f32.gmra.mxu0 %v2390
  %v2549 = vpop.f32.mrf.mxu0
  %v2550 = vadd.f32 %v2470, %v2549
  %2551 = vmatmul.f32.gmra.mxu0 %v2393
  %v2552 = vpop.f32.mrf.mxu0
  %v2553 = vadd.f32 %v2473, %v2552
  %2554 = vmatmul.f32.gmra.mxu0 %v2396
  %v2555 = vpop.f32.mrf.mxu0
  %v2556 = vadd.f32 %v2476, %v2555
  %2557 = vmatmul.f32.gmra.mxu0 %v2399
  %v2558 = vpop.f32.mrf.mxu0
  %v2559 = vadd.f32 %v2479, %v2558
  %2560 = vmatmul.f32.gmra.mxu0 %v2402
  %v2561 = vpop.f32.mrf.mxu0
  %v2562 = vadd.f32 %v2482, %v2561
  %2563 = vmatmul.f32.gmra.mxu0 %v2405
  %v2564 = vpop.f32.mrf.mxu0
  %v2565 = vadd.f32 %v2485, %v2564
  %2566 = vmatmul.f32.gmra.mxu0 %v2408
  %v2567 = vpop.f32.mrf.mxu0
  %v2568 = vadd.f32 %v2488, %v2567
  %2569 = vmatmul.f32.gmra.mxu0 %v2411
  %v2570 = vpop.f32.mrf.mxu0
  %v2571 = vadd.f32 %v2491, %v2570
  %2572 = vmatmul.f32.gmra.mxu0 %v2414
  %v2573 = vpop.f32.mrf.mxu0
  %v2574 = vadd.f32 %v2494, %v2573
  %2575 = vmatmul.f32.gmra.mxu0 %v2417
  %v2576 = vpop.f32.mrf.mxu0
  %v2577 = vadd.f32 %v2497, %v2576
  %2578 = vmatmul.f32.gmra.mxu0 %v2420
  %v2579 = vpop.f32.mrf.mxu0
  %v2580 = vadd.f32 %v2500, %v2579
  %2581 = vmatmul.f32.gmra.mxu0 %v2423
  %v2582 = vpop.f32.mrf.mxu0
  %v2583 = vadd.f32 %v2503, %v2582
  %2584 = vmatmul.f32.gmra.mxu0 %v2426
  %v2585 = vpop.f32.mrf.mxu0
  %v2586 = vadd.f32 %v2506, %v2585
  %2587 = vmatmul.f32.gmra.mxu0 %v2429
  %v2588 = vpop.f32.mrf.mxu0
  %v2589 = vadd.f32 %v2509, %v2588
  %2590 = vmatmul.f32.gmra.mxu0 %v2432
  %v2591 = vpop.f32.mrf.mxu0
  %v2592 = vadd.f32 %v2512, %v2591
  %2593 = vmatmul.f32.gmra.mxu0 %v2435
  %v2594 = vpop.f32.mrf.mxu0
  %v2595 = vadd.f32 %v2515, %v2594
  %2596 = vmatmul.f32.gmra.mxu0 %v2438
  %v2597 = vpop.f32.mrf.mxu0
  %v2598 = vadd.f32 %v2518, %v2597
  %2599 = vdwg.mxu0
  %2600 = vmatpush.msra.mxu0 %v2335
  %2601 = vmatpush.msra.mxu0 %v2328
  %2602 = vmatpush.msra.mxu0 %v2321
  %2603 = vmatpush.msra.mxu0 %v2314
  %2604 = vmatpush.msra.mxu0 %v2307
  %2605 = vmatpush.msra.mxu0 %v2300
  %2606 = vmatpush.msra.mxu0 %v2293
  %2607 = vmatpush.msra.mxu0 %v2286
  %2608 = vmatpush.msra.mxu0 %v2279
  %2609 = vmatpush.msra.mxu0 %v2272
  %2610 = vmatpush.msra.mxu0 %v2265
  %2611 = vmatpush.msra.mxu0 %v2258
  %2612 = vmatpush.msra.mxu0 %v2251
  %2613 = vmatpush.msra.mxu0 %v2244
  %2614 = vmatpush.msra.mxu0 %v2237
  %2615 = vmatpush.msra.mxu0 %v2230
  %2616 = vmatmul.f32.gmra.mxu0 %v2187
  %v2617 = vpop.f32.mrf.mxu0
  %v2618 = vadd.f32 0.0, %v2617
  %2619 = vmatmul.f32.gmra.mxu0 %v2189
  %v2620 = vpop.f32.mrf.mxu0
  %v2621 = vadd.f32 0.0, %v2620
  %2622 = vmatmul.f32.gmra.mxu0 %v2191
  %v2623 = vpop.f32.mrf.mxu0
  %v2624 = vadd.f32 0.0, %v2623
  %2625 = vmatmul.f32.gmra.mxu0 %v2193
  %v2626 = vpop.f32.mrf.mxu0
  %v2627 = vadd.f32 0.0, %v2626
  %2628 = vmatmul.f32.gmra.mxu0 %v2195
  %v2629 = vpop.f32.mrf.mxu0
  %v2630 = vadd.f32 0.0, %v2629
  %2631 = vmatmul.f32.gmra.mxu0 %v2197
  %v2632 = vpop.f32.mrf.mxu0
  %v2633 = vadd.f32 0.0, %v2632
  %2634 = vmatmul.f32.gmra.mxu0 %v2199
  %v2635 = vpop.f32.mrf.mxu0
  %v2636 = vadd.f32 0.0, %v2635
  %2637 = vmatmul.f32.gmra.mxu0 %v2201
  %v2638 = vpop.f32.mrf.mxu0
  %v2639 = vadd.f32 0.0, %v2638
  %2640 = vmatmul.f32.gmra.mxu0 %v2203
  %v2641 = vpop.f32.mrf.mxu0
  %v2642 = vadd.f32 0.0, %v2641
  %2643 = vmatmul.f32.gmra.mxu0 %v2205
  %v2644 = vpop.f32.mrf.mxu0
  %v2645 = vadd.f32 0.0, %v2644
  %2646 = vmatmul.f32.gmra.mxu0 %v2207
  %v2647 = vpop.f32.mrf.mxu0
  %v2648 = vadd.f32 0.0, %v2647
  %2649 = vmatmul.f32.gmra.mxu0 %v2209
  %v2650 = vpop.f32.mrf.mxu0
  %v2651 = vadd.f32 0.0, %v2650
  %2652 = vmatmul.f32.gmra.mxu0 %v2211
  %v2653 = vpop.f32.mrf.mxu0
  %v2654 = vadd.f32 0.0, %v2653
  %2655 = vmatmul.f32.gmra.mxu0 %v2213
  %v2656 = vpop.f32.mrf.mxu0
  %v2657 = vadd.f32 0.0, %v2656
  %2658 = vmatmul.f32.gmra.mxu0 %v2215
  %v2659 = vpop.f32.mrf.mxu0
  %v2660 = vadd.f32 0.0, %v2659
  %2661 = vmatmul.f32.gmra.mxu0 %v2217
  %v2662 = vpop.f32.mrf.mxu0
  %v2663 = vadd.f32 0.0, %v2662
  %2664 = vmatmul.f32.gmra.mxu0 %v2219
  %v2665 = vpop.f32.mrf.mxu0
  %v2666 = vadd.f32 0.0, %v2665
  %2667 = vmatmul.f32.gmra.mxu0 %v2221
  %v2668 = vpop.f32.mrf.mxu0
  %v2669 = vadd.f32 0.0, %v2668
  %2670 = vmatmul.f32.gmra.mxu0 %v2223
  %v2671 = vpop.f32.mrf.mxu0
  %v2672 = vadd.f32 0.0, %v2671
  %2673 = vmatmul.f32.gmra.mxu0 %v2225
  %v2674 = vpop.f32.mrf.mxu0
  %v2675 = vadd.f32 0.0, %v2674
  %2676 = vmatmul.f32.gmra.mxu0 %v2227
  %v2677 = vpop.f32.mrf.mxu0
  %v2678 = vadd.f32 0.0, %v2677
  %2679 = vdwg.mxu0
  %2680 = vmatpush.msra.mxu0 0.0
  %2681 = vmatpush.msra.mxu0 0.0
  %2682 = vmatpush.msra.mxu0 0.0
  %2683 = vmatpush.msra.mxu0 0.0
  %2684 = vmatpush.msra.mxu0 0.0
  %2685 = vmatpush.msra.mxu0 0.0
  %2686 = vmatpush.msra.mxu0 0.0
  %2687 = vmatpush.msra.mxu0 0.0
  %2688 = vmatpush.msra.mxu0 0.0
  %2689 = vmatpush.msra.mxu0 0.0
  %2690 = vmatpush.msra.mxu0 0.0
  %2691 = vmatpush.msra.mxu0 %v2370
  %2692 = vmatpush.msra.mxu0 %v2363
  %2693 = vmatpush.msra.mxu0 %v2356
  %2694 = vmatpush.msra.mxu0 %v2349
  %2695 = vmatpush.msra.mxu0 %v2342
  %2696 = vmatmul.f32.gmra.mxu0 %v2378
  %v2697 = vpop.f32.mrf.mxu0
  %v2698 = vadd.f32 %v2618, %v2697
  %2699 = vmatmul.f32.gmra.mxu0 %v2381
  %v2700 = vpop.f32.mrf.mxu0
  %v2701 = vadd.f32 %v2621, %v2700
  %2702 = vmatmul.f32.gmra.mxu0 %v2384
  %v2703 = vpop.f32.mrf.mxu0
  %v2704 = vadd.f32 %v2624, %v2703
  %2705 = vmatmul.f32.gmra.mxu0 %v2387
  %v2706 = vpop.f32.mrf.mxu0
  %v2707 = vadd.f32 %v2627, %v2706
  %2708 = vmatmul.f32.gmra.mxu0 %v2390
  %v2709 = vpop.f32.mrf.mxu0
  %v2710 = vadd.f32 %v2630, %v2709
  %2711 = vmatmul.f32.gmra.mxu0 %v2393
  %v2712 = vpop.f32.mrf.mxu0
  %v2713 = vadd.f32 %v2633, %v2712
  %2714 = vmatmul.f32.gmra.mxu0 %v2396
  %v2715 = vpop.f32.mrf.mxu0
  %v2716 = vadd.f32 %v2636, %v2715
  %2717 = vmatmul.f32.gmra.mxu0 %v2399
  %v2718 = vpop.f32.mrf.mxu0
  %v2719 = vadd.f32 %v2639, %v2718
  %2720 = vmatmul.f32.gmra.mxu0 %v2402
  %v2721 = vpop.f32.mrf.mxu0
  %v2722 = vadd.f32 %v2642, %v2721
  %2723 = vmatmul.f32.gmra.mxu0 %v2405
  %v2724 = vpop.f32.mrf.mxu0
  %v2725 = vadd.f32 %v2645, %v2724
  %2726 = vmatmul.f32.gmra.mxu0 %v2408
  %v2727 = vpop.f32.mrf.mxu0
  %v2728 = vadd.f32 %v2648, %v2727
  %2729 = vmatmul.f32.gmra.mxu0 %v2411
  %v2730 = vpop.f32.mrf.mxu0
  %v2731 = vadd.f32 %v2651, %v2730
  %2732 = vmatmul.f32.gmra.mxu0 %v2414
  %v2733 = vpop.f32.mrf.mxu0
  %v2734 = vadd.f32 %v2654, %v2733
  %2735 = vmatmul.f32.gmra.mxu0 %v2417
  %v2736 = vpop.f32.mrf.mxu0
  %v2737 = vadd.f32 %v2657, %v2736
  %2738 = vmatmul.f32.gmra.mxu0 %v2420
  %v2739 = vpop.f32.mrf.mxu0
  %v2740 = vadd.f32 %v2660, %v2739
  %2741 = vmatmul.f32.gmra.mxu0 %v2423
  %v2742 = vpop.f32.mrf.mxu0
  %v2743 = vadd.f32 %v2663, %v2742
  %2744 = vmatmul.f32.gmra.mxu0 %v2426
  %v2745 = vpop.f32.mrf.mxu0
  %v2746 = vadd.f32 %v2666, %v2745
  %2747 = vmatmul.f32.gmra.mxu0 %v2429
  %v2748 = vpop.f32.mrf.mxu0
  %v2749 = vadd.f32 %v2669, %v2748
  %2750 = vmatmul.f32.gmra.mxu0 %v2432
  %v2751 = vpop.f32.mrf.mxu0
  %v2752 = vadd.f32 %v2672, %v2751
  %2753 = vmatmul.f32.gmra.mxu0 %v2435
  %v2754 = vpop.f32.mrf.mxu0
  %v2755 = vadd.f32 %v2675, %v2754
  %2756 = vmatmul.f32.gmra.mxu0 %v2438
  %v2757 = vpop.f32.mrf.mxu0
  %v2758 = vadd.f32 %v2678, %v2757
  %2759 = vdwg.mxu0
  %2760 = vmatpush.msra.mxu0 %v2336
  %2761 = vmatpush.msra.mxu0 %v2329
  %2762 = vmatpush.msra.mxu0 %v2322
  %2763 = vmatpush.msra.mxu0 %v2315
  %2764 = vmatpush.msra.mxu0 %v2308
  %2765 = vmatpush.msra.mxu0 %v2301
  %2766 = vmatpush.msra.mxu0 %v2294
  %2767 = vmatpush.msra.mxu0 %v2287
  %2768 = vmatpush.msra.mxu0 %v2280
  %2769 = vmatpush.msra.mxu0 %v2273
  %2770 = vmatpush.msra.mxu0 %v2266
  %2771 = vmatpush.msra.mxu0 %v2259
  %2772 = vmatpush.msra.mxu0 %v2252
  %2773 = vmatpush.msra.mxu0 %v2245
  %2774 = vmatpush.msra.mxu0 %v2238
  %2775 = vmatpush.msra.mxu0 %v2231
  %2776 = vmatmul.f32.gmra.mxu0 %v2187
  %v2777 = vpop.f32.mrf.mxu0
  %v2778 = vadd.f32 0.0, %v2777
  %2779 = vmatmul.f32.gmra.mxu0 %v2189
  %v2780 = vpop.f32.mrf.mxu0
  %v2781 = vadd.f32 0.0, %v2780
  %2782 = vmatmul.f32.gmra.mxu0 %v2191
  %v2783 = vpop.f32.mrf.mxu0
  %v2784 = vadd.f32 0.0, %v2783
  %2785 = vmatmul.f32.gmra.mxu0 %v2193
  %v2786 = vpop.f32.mrf.mxu0
  %v2787 = vadd.f32 0.0, %v2786
  %2788 = vmatmul.f32.gmra.mxu0 %v2195
  %v2789 = vpop.f32.mrf.mxu0
  %v2790 = vadd.f32 0.0, %v2789
  %2791 = vmatmul.f32.gmra.mxu0 %v2197
  %v2792 = vpop.f32.mrf.mxu0
  %v2793 = vadd.f32 0.0, %v2792
  %2794 = vmatmul.f32.gmra.mxu0 %v2199
  %v2795 = vpop.f32.mrf.mxu0
  %v2796 = vadd.f32 0.0, %v2795
  %2797 = vmatmul.f32.gmra.mxu0 %v2201
  %v2798 = vpop.f32.mrf.mxu0
  %v2799 = vadd.f32 0.0, %v2798
  %2800 = vmatmul.f32.gmra.mxu0 %v2203
  %v2801 = vpop.f32.mrf.mxu0
  %v2802 = vadd.f32 0.0, %v2801
  %2803 = vmatmul.f32.gmra.mxu0 %v2205
  %v2804 = vpop.f32.mrf.mxu0
  %v2805 = vadd.f32 0.0, %v2804
  %2806 = vmatmul.f32.gmra.mxu0 %v2207
  %v2807 = vpop.f32.mrf.mxu0
  %v2808 = vadd.f32 0.0, %v2807
  %2809 = vmatmul.f32.gmra.mxu0 %v2209
  %v2810 = vpop.f32.mrf.mxu0
  %v2811 = vadd.f32 0.0, %v2810
  %2812 = vmatmul.f32.gmra.mxu0 %v2211
  %v2813 = vpop.f32.mrf.mxu0
  %v2814 = vadd.f32 0.0, %v2813
  %2815 = vmatmul.f32.gmra.mxu0 %v2213
  %v2816 = vpop.f32.mrf.mxu0
  %v2817 = vadd.f32 0.0, %v2816
  %2818 = vmatmul.f32.gmra.mxu0 %v2215
  %v2819 = vpop.f32.mrf.mxu0
  %v2820 = vadd.f32 0.0, %v2819
  %2821 = vmatmul.f32.gmra.mxu0 %v2217
  %v2822 = vpop.f32.mrf.mxu0
  %v2823 = vadd.f32 0.0, %v2822
  %2824 = vmatmul.f32.gmra.mxu0 %v2219
  %v2825 = vpop.f32.mrf.mxu0
  %v2826 = vadd.f32 0.0, %v2825
  %2827 = vmatmul.f32.gmra.mxu0 %v2221
  %v2828 = vpop.f32.mrf.mxu0
  %v2829 = vadd.f32 0.0, %v2828
  %2830 = vmatmul.f32.gmra.mxu0 %v2223
  %v2831 = vpop.f32.mrf.mxu0
  %v2832 = vadd.f32 0.0, %v2831
  %2833 = vmatmul.f32.gmra.mxu0 %v2225
  %v2834 = vpop.f32.mrf.mxu0
  %v2835 = vadd.f32 0.0, %v2834
  %2836 = vmatmul.f32.gmra.mxu0 %v2227
  %v2837 = vpop.f32.mrf.mxu0
  %v2838 = vadd.f32 0.0, %v2837
  %2839 = vdwg.mxu0
  %2840 = vmatpush.msra.mxu0 0.0
  %2841 = vmatpush.msra.mxu0 0.0
  %2842 = vmatpush.msra.mxu0 0.0
  %2843 = vmatpush.msra.mxu0 0.0
  %2844 = vmatpush.msra.mxu0 0.0
  %2845 = vmatpush.msra.mxu0 0.0
  %2846 = vmatpush.msra.mxu0 0.0
  %2847 = vmatpush.msra.mxu0 0.0
  %2848 = vmatpush.msra.mxu0 0.0
  %2849 = vmatpush.msra.mxu0 0.0
  %2850 = vmatpush.msra.mxu0 0.0
  %2851 = vmatpush.msra.mxu0 %v2371
  %2852 = vmatpush.msra.mxu0 %v2364
  %2853 = vmatpush.msra.mxu0 %v2357
  %2854 = vmatpush.msra.mxu0 %v2350
  %2855 = vmatpush.msra.mxu0 %v2343
  %2856 = vmatmul.f32.gmra.mxu0 %v2378
  %v2857 = vpop.f32.mrf.mxu0
  %v2858 = vadd.f32 %v2778, %v2857
  %2859 = vmatmul.f32.gmra.mxu0 %v2381
  %v2860 = vpop.f32.mrf.mxu0
  %v2861 = vadd.f32 %v2781, %v2860
  %2862 = vmatmul.f32.gmra.mxu0 %v2384
  %v2863 = vpop.f32.mrf.mxu0
  %v2864 = vadd.f32 %v2784, %v2863
  %2865 = vmatmul.f32.gmra.mxu0 %v2387
  %v2866 = vpop.f32.mrf.mxu0
  %v2867 = vadd.f32 %v2787, %v2866
  %2868 = vmatmul.f32.gmra.mxu0 %v2390
  %v2869 = vpop.f32.mrf.mxu0
  %v2870 = vadd.f32 %v2790, %v2869
  %2871 = vmatmul.f32.gmra.mxu0 %v2393
  %v2872 = vpop.f32.mrf.mxu0
  %v2873 = vadd.f32 %v2793, %v2872
  %2874 = vmatmul.f32.gmra.mxu0 %v2396
  %v2875 = vpop.f32.mrf.mxu0
  %v2876 = vadd.f32 %v2796, %v2875
  %2877 = vmatmul.f32.gmra.mxu0 %v2399
  %v2878 = vpop.f32.mrf.mxu0
  %v2879 = vadd.f32 %v2799, %v2878
  %2880 = vmatmul.f32.gmra.mxu0 %v2402
  %v2881 = vpop.f32.mrf.mxu0
  %v2882 = vadd.f32 %v2802, %v2881
  %2883 = vmatmul.f32.gmra.mxu0 %v2405
  %v2884 = vpop.f32.mrf.mxu0
  %v2885 = vadd.f32 %v2805, %v2884
  %2886 = vmatmul.f32.gmra.mxu0 %v2408
  %v2887 = vpop.f32.mrf.mxu0
  %v2888 = vadd.f32 %v2808, %v2887
  %2889 = vmatmul.f32.gmra.mxu0 %v2411
  %v2890 = vpop.f32.mrf.mxu0
  %v2891 = vadd.f32 %v2811, %v2890
  %2892 = vmatmul.f32.gmra.mxu0 %v2414
  %v2893 = vpop.f32.mrf.mxu0
  %v2894 = vadd.f32 %v2814, %v2893
  %2895 = vmatmul.f32.gmra.mxu0 %v2417
  %v2896 = vpop.f32.mrf.mxu0
  %v2897 = vadd.f32 %v2817, %v2896
  %2898 = vmatmul.f32.gmra.mxu0 %v2420
  %v2899 = vpop.f32.mrf.mxu0
  %v2900 = vadd.f32 %v2820, %v2899
  %2901 = vmatmul.f32.gmra.mxu0 %v2423
  %v2902 = vpop.f32.mrf.mxu0
  %v2903 = vadd.f32 %v2823, %v2902
  %2904 = vmatmul.f32.gmra.mxu0 %v2426
  %v2905 = vpop.f32.mrf.mxu0
  %v2906 = vadd.f32 %v2826, %v2905
  %2907 = vmatmul.f32.gmra.mxu0 %v2429
  %v2908 = vpop.f32.mrf.mxu0
  %v2909 = vadd.f32 %v2829, %v2908
  %2910 = vmatmul.f32.gmra.mxu0 %v2432
  %v2911 = vpop.f32.mrf.mxu0
  %v2912 = vadd.f32 %v2832, %v2911
  %2913 = vmatmul.f32.gmra.mxu0 %v2435
  %v2914 = vpop.f32.mrf.mxu0
  %v2915 = vadd.f32 %v2835, %v2914
  %2916 = vmatmul.f32.gmra.mxu0 %v2438
  %v2917 = vpop.f32.mrf.mxu0
  %v2918 = vadd.f32 %v2838, %v2917
  %2919 = vdwg.mxu0
  %2920 = vmatpush.msra.mxu0 %v2337
  %2921 = vmatpush.msra.mxu0 %v2330
  %2922 = vmatpush.msra.mxu0 %v2323
  %2923 = vmatpush.msra.mxu0 %v2316
  %2924 = vmatpush.msra.mxu0 %v2309
  %2925 = vmatpush.msra.mxu0 %v2302
  %2926 = vmatpush.msra.mxu0 %v2295
  %2927 = vmatpush.msra.mxu0 %v2288
  %2928 = vmatpush.msra.mxu0 %v2281
  %2929 = vmatpush.msra.mxu0 %v2274
  %2930 = vmatpush.msra.mxu0 %v2267
  %2931 = vmatpush.msra.mxu0 %v2260
  %2932 = vmatpush.msra.mxu0 %v2253
  %2933 = vmatpush.msra.mxu0 %v2246
  %2934 = vmatpush.msra.mxu0 %v2239
  %2935 = vmatpush.msra.mxu0 %v2232
  %2936 = vmatmul.f32.gmra.mxu0 %v2187
  %v2937 = vpop.f32.mrf.mxu0
  %v2938 = vadd.f32 0.0, %v2937
  %2939 = vmatmul.f32.gmra.mxu0 %v2189
  %v2940 = vpop.f32.mrf.mxu0
  %v2941 = vadd.f32 0.0, %v2940
  %2942 = vmatmul.f32.gmra.mxu0 %v2191
  %v2943 = vpop.f32.mrf.mxu0
  %v2944 = vadd.f32 0.0, %v2943
  %2945 = vmatmul.f32.gmra.mxu0 %v2193
  %v2946 = vpop.f32.mrf.mxu0
  %v2947 = vadd.f32 0.0, %v2946
  %2948 = vmatmul.f32.gmra.mxu0 %v2195
  %v2949 = vpop.f32.mrf.mxu0
  %v2950 = vadd.f32 0.0, %v2949
  %2951 = vmatmul.f32.gmra.mxu0 %v2197
  %v2952 = vpop.f32.mrf.mxu0
  %v2953 = vadd.f32 0.0, %v2952
  %2954 = vmatmul.f32.gmra.mxu0 %v2199
  %v2955 = vpop.f32.mrf.mxu0
  %v2956 = vadd.f32 0.0, %v2955
  %2957 = vmatmul.f32.gmra.mxu0 %v2201
  %v2958 = vpop.f32.mrf.mxu0
  %v2959 = vadd.f32 0.0, %v2958
  %2960 = vmatmul.f32.gmra.mxu0 %v2203
  %v2961 = vpop.f32.mrf.mxu0
  %v2962 = vadd.f32 0.0, %v2961
  %2963 = vmatmul.f32.gmra.mxu0 %v2205
  %v2964 = vpop.f32.mrf.mxu0
  %v2965 = vadd.f32 0.0, %v2964
  %2966 = vmatmul.f32.gmra.mxu0 %v2207
  %v2967 = vpop.f32.mrf.mxu0
  %v2968 = vadd.f32 0.0, %v2967
  %2969 = vmatmul.f32.gmra.mxu0 %v2209
  %v2970 = vpop.f32.mrf.mxu0
  %v2971 = vadd.f32 0.0, %v2970
  %2972 = vmatmul.f32.gmra.mxu0 %v2211
  %v2973 = vpop.f32.mrf.mxu0
  %v2974 = vadd.f32 0.0, %v2973
  %2975 = vmatmul.f32.gmra.mxu0 %v2213
  %v2976 = vpop.f32.mrf.mxu0
  %v2977 = vadd.f32 0.0, %v2976
  %2978 = vmatmul.f32.gmra.mxu0 %v2215
  %v2979 = vpop.f32.mrf.mxu0
  %v2980 = vadd.f32 0.0, %v2979
  %2981 = vmatmul.f32.gmra.mxu0 %v2217
  %v2982 = vpop.f32.mrf.mxu0
  %v2983 = vadd.f32 0.0, %v2982
  %2984 = vmatmul.f32.gmra.mxu0 %v2219
  %v2985 = vpop.f32.mrf.mxu0
  %v2986 = vadd.f32 0.0, %v2985
  %2987 = vmatmul.f32.gmra.mxu0 %v2221
  %v2988 = vpop.f32.mrf.mxu0
  %v2989 = vadd.f32 0.0, %v2988
  %2990 = vmatmul.f32.gmra.mxu0 %v2223
  %v2991 = vpop.f32.mrf.mxu0
  %v2992 = vadd.f32 0.0, %v2991
  %2993 = vmatmul.f32.gmra.mxu0 %v2225
  %v2994 = vpop.f32.mrf.mxu0
  %v2995 = vadd.f32 0.0, %v2994
  %2996 = vmatmul.f32.gmra.mxu0 %v2227
  %v2997 = vpop.f32.mrf.mxu0
  %v2998 = vadd.f32 0.0, %v2997
  %2999 = vdwg.mxu0
  %3000 = vmatpush.msra.mxu0 0.0
  %3001 = vmatpush.msra.mxu0 0.0
  %3002 = vmatpush.msra.mxu0 0.0
  %3003 = vmatpush.msra.mxu0 0.0
  %3004 = vmatpush.msra.mxu0 0.0
  %3005 = vmatpush.msra.mxu0 0.0
  %3006 = vmatpush.msra.mxu0 0.0
  %3007 = vmatpush.msra.mxu0 0.0
  %3008 = vmatpush.msra.mxu0 0.0
  %3009 = vmatpush.msra.mxu0 0.0
  %3010 = vmatpush.msra.mxu0 0.0
  %3011 = vmatpush.msra.mxu0 %v2372
  %3012 = vmatpush.msra.mxu0 %v2365
  %3013 = vmatpush.msra.mxu0 %v2358
  %3014 = vmatpush.msra.mxu0 %v2351
  %3015 = vmatpush.msra.mxu0 %v2344
  %3016 = vmatmul.f32.gmra.mxu0 %v2378
  %v3017 = vpop.f32.mrf.mxu0
  %v3018 = vadd.f32 %v2938, %v3017
  %3019 = vmatmul.f32.gmra.mxu0 %v2381
  %v3020 = vpop.f32.mrf.mxu0
  %v3021 = vadd.f32 %v2941, %v3020
  %3022 = vmatmul.f32.gmra.mxu0 %v2384
  %v3023 = vpop.f32.mrf.mxu0
  %v3024 = vadd.f32 %v2944, %v3023
  %3025 = vmatmul.f32.gmra.mxu0 %v2387
  %v3026 = vpop.f32.mrf.mxu0
  %v3027 = vadd.f32 %v2947, %v3026
  %3028 = vmatmul.f32.gmra.mxu0 %v2390
  %v3029 = vpop.f32.mrf.mxu0
  %v3030 = vadd.f32 %v2950, %v3029
  %3031 = vmatmul.f32.gmra.mxu0 %v2393
  %v3032 = vpop.f32.mrf.mxu0
  %v3033 = vadd.f32 %v2953, %v3032
  %3034 = vmatmul.f32.gmra.mxu0 %v2396
  %v3035 = vpop.f32.mrf.mxu0
  %v3036 = vadd.f32 %v2956, %v3035
  %3037 = vmatmul.f32.gmra.mxu0 %v2399
  %v3038 = vpop.f32.mrf.mxu0
  %v3039 = vadd.f32 %v2959, %v3038
  %3040 = vmatmul.f32.gmra.mxu0 %v2402
  %v3041 = vpop.f32.mrf.mxu0
  %v3042 = vadd.f32 %v2962, %v3041
  %3043 = vmatmul.f32.gmra.mxu0 %v2405
  %v3044 = vpop.f32.mrf.mxu0
  %v3045 = vadd.f32 %v2965, %v3044
  %3046 = vmatmul.f32.gmra.mxu0 %v2408
  %v3047 = vpop.f32.mrf.mxu0
  %v3048 = vadd.f32 %v2968, %v3047
  %3049 = vmatmul.f32.gmra.mxu0 %v2411
  %v3050 = vpop.f32.mrf.mxu0
  %v3051 = vadd.f32 %v2971, %v3050
  %3052 = vmatmul.f32.gmra.mxu0 %v2414
  %v3053 = vpop.f32.mrf.mxu0
  %v3054 = vadd.f32 %v2974, %v3053
  %3055 = vmatmul.f32.gmra.mxu0 %v2417
  %v3056 = vpop.f32.mrf.mxu0
  %v3057 = vadd.f32 %v2977, %v3056
  %3058 = vmatmul.f32.gmra.mxu0 %v2420
  %v3059 = vpop.f32.mrf.mxu0
  %v3060 = vadd.f32 %v2980, %v3059
  %3061 = vmatmul.f32.gmra.mxu0 %v2423
  %v3062 = vpop.f32.mrf.mxu0
  %v3063 = vadd.f32 %v2983, %v3062
  %3064 = vmatmul.f32.gmra.mxu0 %v2426
  %v3065 = vpop.f32.mrf.mxu0
  %v3066 = vadd.f32 %v2986, %v3065
  %3067 = vmatmul.f32.gmra.mxu0 %v2429
  %v3068 = vpop.f32.mrf.mxu0
  %v3069 = vadd.f32 %v2989, %v3068
  %3070 = vmatmul.f32.gmra.mxu0 %v2432
  %v3071 = vpop.f32.mrf.mxu0
  %v3072 = vadd.f32 %v2992, %v3071
  %3073 = vmatmul.f32.gmra.mxu0 %v2435
  %v3074 = vpop.f32.mrf.mxu0
  %v3075 = vadd.f32 %v2995, %v3074
  %3076 = vmatmul.f32.gmra.mxu0 %v2438
  %v3077 = vpop.f32.mrf.mxu0
  %v3078 = vadd.f32 %v2998, %v3077
  %3079 = vdwg.mxu0
  %3080 = vmatpush.msra.mxu0 %v2338
  %3081 = vmatpush.msra.mxu0 %v2331
  %3082 = vmatpush.msra.mxu0 %v2324
  %3083 = vmatpush.msra.mxu0 %v2317
  %3084 = vmatpush.msra.mxu0 %v2310
  %3085 = vmatpush.msra.mxu0 %v2303
  %3086 = vmatpush.msra.mxu0 %v2296
  %3087 = vmatpush.msra.mxu0 %v2289
  %3088 = vmatpush.msra.mxu0 %v2282
  %3089 = vmatpush.msra.mxu0 %v2275
  %3090 = vmatpush.msra.mxu0 %v2268
  %3091 = vmatpush.msra.mxu0 %v2261
  %3092 = vmatpush.msra.mxu0 %v2254
  %3093 = vmatpush.msra.mxu0 %v2247
  %3094 = vmatpush.msra.mxu0 %v2240
  %3095 = vmatpush.msra.mxu0 %v2233
  %3096 = vmatmul.f32.gmra.mxu0 %v2187
  %v3097 = vpop.f32.mrf.mxu0
  %v3098 = vadd.f32 0.0, %v3097
  %3099 = vmatmul.f32.gmra.mxu0 %v2189
  %v3100 = vpop.f32.mrf.mxu0
  %v3101 = vadd.f32 0.0, %v3100
  %3102 = vmatmul.f32.gmra.mxu0 %v2191
  %v3103 = vpop.f32.mrf.mxu0
  %v3104 = vadd.f32 0.0, %v3103
  %3105 = vmatmul.f32.gmra.mxu0 %v2193
  %v3106 = vpop.f32.mrf.mxu0
  %v3107 = vadd.f32 0.0, %v3106
  %3108 = vmatmul.f32.gmra.mxu0 %v2195
  %v3109 = vpop.f32.mrf.mxu0
  %v3110 = vadd.f32 0.0, %v3109
  %3111 = vmatmul.f32.gmra.mxu0 %v2197
  %v3112 = vpop.f32.mrf.mxu0
  %v3113 = vadd.f32 0.0, %v3112
  %3114 = vmatmul.f32.gmra.mxu0 %v2199
  %v3115 = vpop.f32.mrf.mxu0
  %v3116 = vadd.f32 0.0, %v3115
  %3117 = vmatmul.f32.gmra.mxu0 %v2201
  %v3118 = vpop.f32.mrf.mxu0
  %v3119 = vadd.f32 0.0, %v3118
  %3120 = vmatmul.f32.gmra.mxu0 %v2203
  %v3121 = vpop.f32.mrf.mxu0
  %v3122 = vadd.f32 0.0, %v3121
  %3123 = vmatmul.f32.gmra.mxu0 %v2205
  %v3124 = vpop.f32.mrf.mxu0
  %v3125 = vadd.f32 0.0, %v3124
  %3126 = vmatmul.f32.gmra.mxu0 %v2207
  %v3127 = vpop.f32.mrf.mxu0
  %v3128 = vadd.f32 0.0, %v3127
  %3129 = vmatmul.f32.gmra.mxu0 %v2209
  %v3130 = vpop.f32.mrf.mxu0
  %v3131 = vadd.f32 0.0, %v3130
  %3132 = vmatmul.f32.gmra.mxu0 %v2211
  %v3133 = vpop.f32.mrf.mxu0
  %v3134 = vadd.f32 0.0, %v3133
  %3135 = vmatmul.f32.gmra.mxu0 %v2213
  %v3136 = vpop.f32.mrf.mxu0
  %v3137 = vadd.f32 0.0, %v3136
  %3138 = vmatmul.f32.gmra.mxu0 %v2215
  %v3139 = vpop.f32.mrf.mxu0
  %v3140 = vadd.f32 0.0, %v3139
  %3141 = vmatmul.f32.gmra.mxu0 %v2217
  %v3142 = vpop.f32.mrf.mxu0
  %v3143 = vadd.f32 0.0, %v3142
  %3144 = vmatmul.f32.gmra.mxu0 %v2219
  %v3145 = vpop.f32.mrf.mxu0
  %v3146 = vadd.f32 0.0, %v3145
  %3147 = vmatmul.f32.gmra.mxu0 %v2221
  %v3148 = vpop.f32.mrf.mxu0
  %v3149 = vadd.f32 0.0, %v3148
  %3150 = vmatmul.f32.gmra.mxu0 %v2223
  %v3151 = vpop.f32.mrf.mxu0
  %v3152 = vadd.f32 0.0, %v3151
  %3153 = vmatmul.f32.gmra.mxu0 %v2225
  %v3154 = vpop.f32.mrf.mxu0
  %v3155 = vadd.f32 0.0, %v3154
  %3156 = vmatmul.f32.gmra.mxu0 %v2227
  %v3157 = vpop.f32.mrf.mxu0
  %v3158 = vadd.f32 0.0, %v3157
  %3159 = vdwg.mxu0
  %3160 = vmatpush.msra.mxu0 0.0
  %3161 = vmatpush.msra.mxu0 0.0
  %3162 = vmatpush.msra.mxu0 0.0
  %3163 = vmatpush.msra.mxu0 0.0
  %3164 = vmatpush.msra.mxu0 0.0
  %3165 = vmatpush.msra.mxu0 0.0
  %3166 = vmatpush.msra.mxu0 0.0
  %3167 = vmatpush.msra.mxu0 0.0
  %3168 = vmatpush.msra.mxu0 0.0
  %3169 = vmatpush.msra.mxu0 0.0
  %3170 = vmatpush.msra.mxu0 0.0
  %3171 = vmatpush.msra.mxu0 %v2373
  %3172 = vmatpush.msra.mxu0 %v2366
  %3173 = vmatpush.msra.mxu0 %v2359
  %3174 = vmatpush.msra.mxu0 %v2352
  %3175 = vmatpush.msra.mxu0 %v2345
  %3176 = vmatmul.f32.gmra.mxu0 %v2378
  %v3177 = vpop.f32.mrf.mxu0
  %v3178 = vadd.f32 %v3098, %v3177
  %3179 = vmatmul.f32.gmra.mxu0 %v2381
  %v3180 = vpop.f32.mrf.mxu0
  %v3181 = vadd.f32 %v3101, %v3180
  %3182 = vmatmul.f32.gmra.mxu0 %v2384
  %v3183 = vpop.f32.mrf.mxu0
  %v3184 = vadd.f32 %v3104, %v3183
  %3185 = vmatmul.f32.gmra.mxu0 %v2387
  %v3186 = vpop.f32.mrf.mxu0
  %v3187 = vadd.f32 %v3107, %v3186
  %3188 = vmatmul.f32.gmra.mxu0 %v2390
  %v3189 = vpop.f32.mrf.mxu0
  %v3190 = vadd.f32 %v3110, %v3189
  %3191 = vmatmul.f32.gmra.mxu0 %v2393
  %v3192 = vpop.f32.mrf.mxu0
  %v3193 = vadd.f32 %v3113, %v3192
  %3194 = vmatmul.f32.gmra.mxu0 %v2396
  %v3195 = vpop.f32.mrf.mxu0
  %v3196 = vadd.f32 %v3116, %v3195
  %3197 = vmatmul.f32.gmra.mxu0 %v2399
  %v3198 = vpop.f32.mrf.mxu0
  %v3199 = vadd.f32 %v3119, %v3198
  %3200 = vmatmul.f32.gmra.mxu0 %v2402
  %v3201 = vpop.f32.mrf.mxu0
  %v3202 = vadd.f32 %v3122, %v3201
  %3203 = vmatmul.f32.gmra.mxu0 %v2405
  %v3204 = vpop.f32.mrf.mxu0
  %v3205 = vadd.f32 %v3125, %v3204
  %3206 = vmatmul.f32.gmra.mxu0 %v2408
  %v3207 = vpop.f32.mrf.mxu0
  %v3208 = vadd.f32 %v3128, %v3207
  %3209 = vmatmul.f32.gmra.mxu0 %v2411
  %v3210 = vpop.f32.mrf.mxu0
  %v3211 = vadd.f32 %v3131, %v3210
  %3212 = vmatmul.f32.gmra.mxu0 %v2414
  %v3213 = vpop.f32.mrf.mxu0
  %v3214 = vadd.f32 %v3134, %v3213
  %3215 = vmatmul.f32.gmra.mxu0 %v2417
  %v3216 = vpop.f32.mrf.mxu0
  %v3217 = vadd.f32 %v3137, %v3216
  %3218 = vmatmul.f32.gmra.mxu0 %v2420
  %v3219 = vpop.f32.mrf.mxu0
  %v3220 = vadd.f32 %v3140, %v3219
  %3221 = vmatmul.f32.gmra.mxu0 %v2423
  %v3222 = vpop.f32.mrf.mxu0
  %v3223 = vadd.f32 %v3143, %v3222
  %3224 = vmatmul.f32.gmra.mxu0 %v2426
  %v3225 = vpop.f32.mrf.mxu0
  %v3226 = vadd.f32 %v3146, %v3225
  %3227 = vmatmul.f32.gmra.mxu0 %v2429
  %v3228 = vpop.f32.mrf.mxu0
  %v3229 = vadd.f32 %v3149, %v3228
  %3230 = vmatmul.f32.gmra.mxu0 %v2432
  %v3231 = vpop.f32.mrf.mxu0
  %v3232 = vadd.f32 %v3152, %v3231
  %3233 = vmatmul.f32.gmra.mxu0 %v2435
  %v3234 = vpop.f32.mrf.mxu0
  %v3235 = vadd.f32 %v3155, %v3234
  %3236 = vmatmul.f32.gmra.mxu0 %v2438
  %v3237 = vpop.f32.mrf.mxu0
  %v3238 = vadd.f32 %v3158, %v3237
  %3239 = vdwg.mxu0
  %3240 = vmatpush.msra.mxu0 %v2339
  %3241 = vmatpush.msra.mxu0 %v2332
  %3242 = vmatpush.msra.mxu0 %v2325
  %3243 = vmatpush.msra.mxu0 %v2318
  %3244 = vmatpush.msra.mxu0 %v2311
  %3245 = vmatpush.msra.mxu0 %v2304
  %3246 = vmatpush.msra.mxu0 %v2297
  %3247 = vmatpush.msra.mxu0 %v2290
  %3248 = vmatpush.msra.mxu0 %v2283
  %3249 = vmatpush.msra.mxu0 %v2276
  %3250 = vmatpush.msra.mxu0 %v2269
  %3251 = vmatpush.msra.mxu0 %v2262
  %3252 = vmatpush.msra.mxu0 %v2255
  %3253 = vmatpush.msra.mxu0 %v2248
  %3254 = vmatpush.msra.mxu0 %v2241
  %3255 = vmatpush.msra.mxu0 %v2234
  %3256 = vmatmul.f32.gmra.mxu0 %v2187
  %v3257 = vpop.f32.mrf.mxu0
  %v3258 = vadd.f32 0.0, %v3257
  %3259 = vmatmul.f32.gmra.mxu0 %v2189
  %v3260 = vpop.f32.mrf.mxu0
  %v3261 = vadd.f32 0.0, %v3260
  %3262 = vmatmul.f32.gmra.mxu0 %v2191
  %v3263 = vpop.f32.mrf.mxu0
  %v3264 = vadd.f32 0.0, %v3263
  %3265 = vmatmul.f32.gmra.mxu0 %v2193
  %v3266 = vpop.f32.mrf.mxu0
  %v3267 = vadd.f32 0.0, %v3266
  %3268 = vmatmul.f32.gmra.mxu0 %v2195
  %v3269 = vpop.f32.mrf.mxu0
  %v3270 = vadd.f32 0.0, %v3269
  %3271 = vmatmul.f32.gmra.mxu0 %v2197
  %v3272 = vpop.f32.mrf.mxu0
  %v3273 = vadd.f32 0.0, %v3272
  %3274 = vmatmul.f32.gmra.mxu0 %v2199
  %v3275 = vpop.f32.mrf.mxu0
  %v3276 = vadd.f32 0.0, %v3275
  %3277 = vmatmul.f32.gmra.mxu0 %v2201
  %v3278 = vpop.f32.mrf.mxu0
  %v3279 = vadd.f32 0.0, %v3278
  %3280 = vmatmul.f32.gmra.mxu0 %v2203
  %v3281 = vpop.f32.mrf.mxu0
  %v3282 = vadd.f32 0.0, %v3281
  %3283 = vmatmul.f32.gmra.mxu0 %v2205
  %v3284 = vpop.f32.mrf.mxu0
  %v3285 = vadd.f32 0.0, %v3284
  %3286 = vmatmul.f32.gmra.mxu0 %v2207
  %v3287 = vpop.f32.mrf.mxu0
  %v3288 = vadd.f32 0.0, %v3287
  %3289 = vmatmul.f32.gmra.mxu0 %v2209
  %v3290 = vpop.f32.mrf.mxu0
  %v3291 = vadd.f32 0.0, %v3290
  %3292 = vmatmul.f32.gmra.mxu0 %v2211
  %v3293 = vpop.f32.mrf.mxu0
  %v3294 = vadd.f32 0.0, %v3293
  %3295 = vmatmul.f32.gmra.mxu0 %v2213
  %v3296 = vpop.f32.mrf.mxu0
  %v3297 = vadd.f32 0.0, %v3296
  %3298 = vmatmul.f32.gmra.mxu0 %v2215
  %v3299 = vpop.f32.mrf.mxu0
  %v3300 = vadd.f32 0.0, %v3299
  %3301 = vmatmul.f32.gmra.mxu0 %v2217
  %v3302 = vpop.f32.mrf.mxu0
  %v3303 = vadd.f32 0.0, %v3302
  %3304 = vmatmul.f32.gmra.mxu0 %v2219
  %v3305 = vpop.f32.mrf.mxu0
  %v3306 = vadd.f32 0.0, %v3305
  %3307 = vmatmul.f32.gmra.mxu0 %v2221
  %v3308 = vpop.f32.mrf.mxu0
  %v3309 = vadd.f32 0.0, %v3308
  %3310 = vmatmul.f32.gmra.mxu0 %v2223
  %v3311 = vpop.f32.mrf.mxu0
  %v3312 = vadd.f32 0.0, %v3311
  %3313 = vmatmul.f32.gmra.mxu0 %v2225
  %v3314 = vpop.f32.mrf.mxu0
  %v3315 = vadd.f32 0.0, %v3314
  %3316 = vmatmul.f32.gmra.mxu0 %v2227
  %v3317 = vpop.f32.mrf.mxu0
  %v3318 = vadd.f32 0.0, %v3317
  %3319 = vdwg.mxu0
  %3320 = vmatpush.msra.mxu0 0.0
  %3321 = vmatpush.msra.mxu0 0.0
  %3322 = vmatpush.msra.mxu0 0.0
  %3323 = vmatpush.msra.mxu0 0.0
  %3324 = vmatpush.msra.mxu0 0.0
  %3325 = vmatpush.msra.mxu0 0.0
  %3326 = vmatpush.msra.mxu0 0.0
  %3327 = vmatpush.msra.mxu0 0.0
  %3328 = vmatpush.msra.mxu0 0.0
  %3329 = vmatpush.msra.mxu0 0.0
  %3330 = vmatpush.msra.mxu0 0.0
  %3331 = vmatpush.msra.mxu0 %v2374
  %3332 = vmatpush.msra.mxu0 %v2367
  %3333 = vmatpush.msra.mxu0 %v2360
  %3334 = vmatpush.msra.mxu0 %v2353
  %3335 = vmatpush.msra.mxu0 %v2346
  %3336 = vmatmul.f32.gmra.mxu0 %v2378
  %v3337 = vpop.f32.mrf.mxu0
  %v3338 = vadd.f32 %v3258, %v3337
  %3339 = vmatmul.f32.gmra.mxu0 %v2381
  %v3340 = vpop.f32.mrf.mxu0
  %v3341 = vadd.f32 %v3261, %v3340
  %3342 = vmatmul.f32.gmra.mxu0 %v2384
  %v3343 = vpop.f32.mrf.mxu0
  %v3344 = vadd.f32 %v3264, %v3343
  %3345 = vmatmul.f32.gmra.mxu0 %v2387
  %v3346 = vpop.f32.mrf.mxu0
  %v3347 = vadd.f32 %v3267, %v3346
  %3348 = vmatmul.f32.gmra.mxu0 %v2390
  %v3349 = vpop.f32.mrf.mxu0
  %v3350 = vadd.f32 %v3270, %v3349
  %3351 = vmatmul.f32.gmra.mxu0 %v2393
  %v3352 = vpop.f32.mrf.mxu0
  %v3353 = vadd.f32 %v3273, %v3352
  %3354 = vmatmul.f32.gmra.mxu0 %v2396
  %v3355 = vpop.f32.mrf.mxu0
  %v3356 = vadd.f32 %v3276, %v3355
  %3357 = vmatmul.f32.gmra.mxu0 %v2399
  %v3358 = vpop.f32.mrf.mxu0
  %v3359 = vadd.f32 %v3279, %v3358
  %3360 = vmatmul.f32.gmra.mxu0 %v2402
  %v3361 = vpop.f32.mrf.mxu0
  %v3362 = vadd.f32 %v3282, %v3361
  %3363 = vmatmul.f32.gmra.mxu0 %v2405
  %v3364 = vpop.f32.mrf.mxu0
  %v3365 = vadd.f32 %v3285, %v3364
  %3366 = vmatmul.f32.gmra.mxu0 %v2408
  %v3367 = vpop.f32.mrf.mxu0
  %v3368 = vadd.f32 %v3288, %v3367
  %3369 = vmatmul.f32.gmra.mxu0 %v2411
  %v3370 = vpop.f32.mrf.mxu0
  %v3371 = vadd.f32 %v3291, %v3370
  %3372 = vmatmul.f32.gmra.mxu0 %v2414
  %v3373 = vpop.f32.mrf.mxu0
  %v3374 = vadd.f32 %v3294, %v3373
  %3375 = vmatmul.f32.gmra.mxu0 %v2417
  %v3376 = vpop.f32.mrf.mxu0
  %v3377 = vadd.f32 %v3297, %v3376
  %3378 = vmatmul.f32.gmra.mxu0 %v2420
  %v3379 = vpop.f32.mrf.mxu0
  %v3380 = vadd.f32 %v3300, %v3379
  %3381 = vmatmul.f32.gmra.mxu0 %v2423
  %v3382 = vpop.f32.mrf.mxu0
  %v3383 = vadd.f32 %v3303, %v3382
  %3384 = vmatmul.f32.gmra.mxu0 %v2426
  %v3385 = vpop.f32.mrf.mxu0
  %v3386 = vadd.f32 %v3306, %v3385
  %3387 = vmatmul.f32.gmra.mxu0 %v2429
  %v3388 = vpop.f32.mrf.mxu0
  %v3389 = vadd.f32 %v3309, %v3388
  %3390 = vmatmul.f32.gmra.mxu0 %v2432
  %v3391 = vpop.f32.mrf.mxu0
  %v3392 = vadd.f32 %v3312, %v3391
  %3393 = vmatmul.f32.gmra.mxu0 %v2435
  %v3394 = vpop.f32.mrf.mxu0
  %v3395 = vadd.f32 %v3315, %v3394
  %3396 = vmatmul.f32.gmra.mxu0 %v2438
  %v3397 = vpop.f32.mrf.mxu0
  %v3398 = vadd.f32 %v3318, %v3397
  %3399 = vdwg.mxu0
  %3400 = vmatpush.msra.mxu0 %v2340
  %3401 = vmatpush.msra.mxu0 %v2333
  %3402 = vmatpush.msra.mxu0 %v2326
  %3403 = vmatpush.msra.mxu0 %v2319
  %3404 = vmatpush.msra.mxu0 %v2312
  %3405 = vmatpush.msra.mxu0 %v2305
  %3406 = vmatpush.msra.mxu0 %v2298
  %3407 = vmatpush.msra.mxu0 %v2291
  %3408 = vmatpush.msra.mxu0 %v2284
  %3409 = vmatpush.msra.mxu0 %v2277
  %3410 = vmatpush.msra.mxu0 %v2270
  %3411 = vmatpush.msra.mxu0 %v2263
  %3412 = vmatpush.msra.mxu0 %v2256
  %3413 = vmatpush.msra.mxu0 %v2249
  %3414 = vmatpush.msra.mxu0 %v2242
  %3415 = vmatpush.msra.mxu0 %v2235
  %3416 = vmatmul.f32.gmra.mxu0 %v2187
  %v3417 = vpop.f32.mrf.mxu0
  %v3418 = vadd.f32 0.0, %v3417
  %3419 = vmatmul.f32.gmra.mxu0 %v2189
  %v3420 = vpop.f32.mrf.mxu0
  %v3421 = vadd.f32 0.0, %v3420
  %3422 = vmatmul.f32.gmra.mxu0 %v2191
  %v3423 = vpop.f32.mrf.mxu0
  %v3424 = vadd.f32 0.0, %v3423
  %3425 = vmatmul.f32.gmra.mxu0 %v2193
  %v3426 = vpop.f32.mrf.mxu0
  %v3427 = vadd.f32 0.0, %v3426
  %3428 = vmatmul.f32.gmra.mxu0 %v2195
  %v3429 = vpop.f32.mrf.mxu0
  %v3430 = vadd.f32 0.0, %v3429
  %3431 = vmatmul.f32.gmra.mxu0 %v2197
  %v3432 = vpop.f32.mrf.mxu0
  %v3433 = vadd.f32 0.0, %v3432
  %3434 = vmatmul.f32.gmra.mxu0 %v2199
  %v3435 = vpop.f32.mrf.mxu0
  %v3436 = vadd.f32 0.0, %v3435
  %3437 = vmatmul.f32.gmra.mxu0 %v2201
  %v3438 = vpop.f32.mrf.mxu0
  %v3439 = vadd.f32 0.0, %v3438
  %3440 = vmatmul.f32.gmra.mxu0 %v2203
  %v3441 = vpop.f32.mrf.mxu0
  %v3442 = vadd.f32 0.0, %v3441
  %3443 = vmatmul.f32.gmra.mxu0 %v2205
  %v3444 = vpop.f32.mrf.mxu0
  %v3445 = vadd.f32 0.0, %v3444
  %3446 = vmatmul.f32.gmra.mxu0 %v2207
  %v3447 = vpop.f32.mrf.mxu0
  %v3448 = vadd.f32 0.0, %v3447
  %3449 = vmatmul.f32.gmra.mxu0 %v2209
  %v3450 = vpop.f32.mrf.mxu0
  %v3451 = vadd.f32 0.0, %v3450
  %3452 = vmatmul.f32.gmra.mxu0 %v2211
  %v3453 = vpop.f32.mrf.mxu0
  %v3454 = vadd.f32 0.0, %v3453
  %3455 = vmatmul.f32.gmra.mxu0 %v2213
  %v3456 = vpop.f32.mrf.mxu0
  %v3457 = vadd.f32 0.0, %v3456
  %3458 = vmatmul.f32.gmra.mxu0 %v2215
  %v3459 = vpop.f32.mrf.mxu0
  %v3460 = vadd.f32 0.0, %v3459
  %3461 = vmatmul.f32.gmra.mxu0 %v2217
  %v3462 = vpop.f32.mrf.mxu0
  %v3463 = vadd.f32 0.0, %v3462
  %3464 = vmatmul.f32.gmra.mxu0 %v2219
  %v3465 = vpop.f32.mrf.mxu0
  %v3466 = vadd.f32 0.0, %v3465
  %3467 = vmatmul.f32.gmra.mxu0 %v2221
  %v3468 = vpop.f32.mrf.mxu0
  %v3469 = vadd.f32 0.0, %v3468
  %3470 = vmatmul.f32.gmra.mxu0 %v2223
  %v3471 = vpop.f32.mrf.mxu0
  %v3472 = vadd.f32 0.0, %v3471
  %3473 = vmatmul.f32.gmra.mxu0 %v2225
  %v3474 = vpop.f32.mrf.mxu0
  %v3475 = vadd.f32 0.0, %v3474
  %3476 = vmatmul.f32.gmra.mxu0 %v2227
  %v3477 = vpop.f32.mrf.mxu0
  %v3478 = vadd.f32 0.0, %v3477
  %3479 = vdwg.mxu0
  %3480 = vmatpush.msra.mxu0 0.0
  %3481 = vmatpush.msra.mxu0 0.0
  %3482 = vmatpush.msra.mxu0 0.0
  %3483 = vmatpush.msra.mxu0 0.0
  %3484 = vmatpush.msra.mxu0 0.0
  %3485 = vmatpush.msra.mxu0 0.0
  %3486 = vmatpush.msra.mxu0 0.0
  %3487 = vmatpush.msra.mxu0 0.0
  %3488 = vmatpush.msra.mxu0 0.0
  %3489 = vmatpush.msra.mxu0 0.0
  %3490 = vmatpush.msra.mxu0 0.0
  %3491 = vmatpush.msra.mxu0 %v2375
  %3492 = vmatpush.msra.mxu0 %v2368
  %3493 = vmatpush.msra.mxu0 %v2361
  %3494 = vmatpush.msra.mxu0 %v2354
  %3495 = vmatpush.msra.mxu0 %v2347
  %3496 = vmatmul.f32.gmra.mxu0 %v2378
  %v3497 = vpop.f32.mrf.mxu0
  %v3498 = vadd.f32 %v3418, %v3497
  %3499 = vmatmul.f32.gmra.mxu0 %v2381
  %v3500 = vpop.f32.mrf.mxu0
  %v3501 = vadd.f32 %v3421, %v3500
  %3502 = vmatmul.f32.gmra.mxu0 %v2384
  %v3503 = vpop.f32.mrf.mxu0
  %v3504 = vadd.f32 %v3424, %v3503
  %3505 = vmatmul.f32.gmra.mxu0 %v2387
  %v3506 = vpop.f32.mrf.mxu0
  %v3507 = vadd.f32 %v3427, %v3506
  %3508 = vmatmul.f32.gmra.mxu0 %v2390
  %v3509 = vpop.f32.mrf.mxu0
  %v3510 = vadd.f32 %v3430, %v3509
  %3511 = vmatmul.f32.gmra.mxu0 %v2393
  %v3512 = vpop.f32.mrf.mxu0
  %v3513 = vadd.f32 %v3433, %v3512
  %3514 = vmatmul.f32.gmra.mxu0 %v2396
  %v3515 = vpop.f32.mrf.mxu0
  %v3516 = vadd.f32 %v3436, %v3515
  %3517 = vmatmul.f32.gmra.mxu0 %v2399
  %v3518 = vpop.f32.mrf.mxu0
  %v3519 = vadd.f32 %v3439, %v3518
  %3520 = vmatmul.f32.gmra.mxu0 %v2402
  %v3521 = vpop.f32.mrf.mxu0
  %v3522 = vadd.f32 %v3442, %v3521
  %3523 = vmatmul.f32.gmra.mxu0 %v2405
  %v3524 = vpop.f32.mrf.mxu0
  %v3525 = vadd.f32 %v3445, %v3524
  %3526 = vmatmul.f32.gmra.mxu0 %v2408
  %v3527 = vpop.f32.mrf.mxu0
  %v3528 = vadd.f32 %v3448, %v3527
  %3529 = vmatmul.f32.gmra.mxu0 %v2411
  %v3530 = vpop.f32.mrf.mxu0
  %v3531 = vadd.f32 %v3451, %v3530
  %3532 = vmatmul.f32.gmra.mxu0 %v2414
  %v3533 = vpop.f32.mrf.mxu0
  %v3534 = vadd.f32 %v3454, %v3533
  %3535 = vmatmul.f32.gmra.mxu0 %v2417
  %v3536 = vpop.f32.mrf.mxu0
  %v3537 = vadd.f32 %v3457, %v3536
  %3538 = vmatmul.f32.gmra.mxu0 %v2420
  %v3539 = vpop.f32.mrf.mxu0
  %v3540 = vadd.f32 %v3460, %v3539
  %3541 = vmatmul.f32.gmra.mxu0 %v2423
  %v3542 = vpop.f32.mrf.mxu0
  %v3543 = vadd.f32 %v3463, %v3542
  %3544 = vmatmul.f32.gmra.mxu0 %v2426
  %v3545 = vpop.f32.mrf.mxu0
  %v3546 = vadd.f32 %v3466, %v3545
  %3547 = vmatmul.f32.gmra.mxu0 %v2429
  %v3548 = vpop.f32.mrf.mxu0
  %v3549 = vadd.f32 %v3469, %v3548
  %3550 = vmatmul.f32.gmra.mxu0 %v2432
  %v3551 = vpop.f32.mrf.mxu0
  %v3552 = vadd.f32 %v3472, %v3551
  %3553 = vmatmul.f32.gmra.mxu0 %v2435
  %v3554 = vpop.f32.mrf.mxu0
  %v3555 = vadd.f32 %v3475, %v3554
  %3556 = vmatmul.f32.gmra.mxu0 %v2438
  %v3557 = vpop.f32.mrf.mxu0
  %v3558 = vadd.f32 %v3478, %v3557
  %3559 = vdwg.mxu0
  %3560 = vst [vmem:[#allocation3] sm:$0xff] %v2538
  %3561 = vst [vmem:[#allocation3 + $0x8] sm:$0xff] %v2698
  %3562 = vst [vmem:[#allocation3 + $0x10] sm:$0xff] %v2858
  %3563 = vst [vmem:[#allocation3 + $0x18] sm:$0xff] %v3018
  %3564 = vst [vmem:[#allocation3 + $0x20] sm:$0xff] %v3178
  %3565 = vst [vmem:[#allocation3 + $0x28] sm:$0xff] %v3338
  %3566 = vst.msk [vmem:[#allocation3 + $0x30] sm:$0xff] %vm222, %v3498
  %3567 = vst [vmem:[#allocation3 + $0x38] sm:$0xff] %v2541
  %3568 = vst [vmem:[#allocation3 + $0x40] sm:$0xff] %v2701
  %3569 = vst [vmem:[#allocation3 + $0x48] sm:$0xff] %v2861
  %3570 = vst [vmem:[#allocation3 + $0x50] sm:$0xff] %v3021
  %3571 = vst [vmem:[#allocation3 + $0x58] sm:$0xff] %v3181
  %3572 = vst [vmem:[#allocation3 + $0x60] sm:$0xff] %v3341
  %3573 = vst.msk [vmem:[#allocation3 + $0x68] sm:$0xff] %vm222, %v3501
  %3574 = vst [vmem:[#allocation3 + $0x70] sm:$0xff] %v2544
  %3575 = vst [vmem:[#allocation3 + $0x78] sm:$0xff] %v2704
  %3576 = vst [vmem:[#allocation3 + $0x80] sm:$0xff] %v2864
  %3577 = vst [vmem:[#allocation3 + $0x88] sm:$0xff] %v3024
  %3578 = vst [vmem:[#allocation3 + $0x90] sm:$0xff] %v3184
  %3579 = vst [vmem:[#allocation3 + $0x98] sm:$0xff] %v3344
  %3580 = vst.msk [vmem:[#allocation3 + $0xa0] sm:$0xff] %vm222, %v3504
  %3581 = vst [vmem:[#allocation3 + $0xa8] sm:$0xff] %v2547
  %3582 = vst [vmem:[#allocation3 + $0xb0] sm:$0xff] %v2707
  %3583 = vst [vmem:[#allocation3 + $0xb8] sm:$0xff] %v2867
  %3584 = vst [vmem:[#allocation3 + $0xc0] sm:$0xff] %v3027
  %3585 = vst [vmem:[#allocation3 + $0xc8] sm:$0xff] %v3187
  %3586 = vst [vmem:[#allocation3 + $0xd0] sm:$0xff] %v3347
  %3587 = vst.msk [vmem:[#allocation3 + $0xd8] sm:$0xff] %vm222, %v3507
  %3588 = vst [vmem:[#allocation3 + $0xe0] sm:$0xff] %v2550
  %3589 = vst [vmem:[#allocation3 + $0xe8] sm:$0xff] %v2710
  %3590 = vst [vmem:[#allocation3 + $0xf0] sm:$0xff] %v2870
  %3591 = vst [vmem:[#allocation3 + $0xf8] sm:$0xff] %v3030
  %3592 = vst [vmem:[#allocation3 + $0x100] sm:$0xff] %v3190
  %3593 = vst [vmem:[#allocation3 + $0x108] sm:$0xff] %v3350
  %3594 = vst.msk [vmem:[#allocation3 + $0x110] sm:$0xff] %vm222, %v3510
  %3595 = vst [vmem:[#allocation3 + $0x118] sm:$0xff] %v2553
  %3596 = vst [vmem:[#allocation3 + $0x120] sm:$0xff] %v2713
  %3597 = vst [vmem:[#allocation3 + $0x128] sm:$0xff] %v2873
  %3598 = vst [vmem:[#allocation3 + $0x130] sm:$0xff] %v3033
  %3599 = vst [vmem:[#allocation3 + $0x138] sm:$0xff] %v3193
  %3600 = vst [vmem:[#allocation3 + $0x140] sm:$0xff] %v3353
  %3601 = vst.msk [vmem:[#allocation3 + $0x148] sm:$0xff] %vm222, %v3513
  %3602 = vst [vmem:[#allocation3 + $0x150] sm:$0xff] %v2556
  %3603 = vst [vmem:[#allocation3 + $0x158] sm:$0xff] %v2716
  %3604 = vst [vmem:[#allocation3 + $0x160] sm:$0xff] %v2876
  %3605 = vst [vmem:[#allocation3 + $0x168] sm:$0xff] %v3036
  %3606 = vst [vmem:[#allocation3 + $0x170] sm:$0xff] %v3196
  %3607 = vst [vmem:[#allocation3 + $0x178] sm:$0xff] %v3356
  %3608 = vst.msk [vmem:[#allocation3 + $0x180] sm:$0xff] %vm222, %v3516
  %3609 = vst [vmem:[#allocation3 + $0x188] sm:$0xff] %v2559
  %3610 = vst [vmem:[#allocation3 + $0x190] sm:$0xff] %v2719
  %3611 = vst [vmem:[#allocation3 + $0x198] sm:$0xff] %v2879
  %3612 = vst [vmem:[#allocation3 + $0x1a0] sm:$0xff] %v3039
  %3613 = vst [vmem:[#allocation3 + $0x1a8] sm:$0xff] %v3199
  %3614 = vst [vmem:[#allocation3 + $0x1b0] sm:$0xff] %v3359
  %3615 = vst.msk [vmem:[#allocation3 + $0x1b8] sm:$0xff] %vm222, %v3519
  %3616 = vst [vmem:[#allocation3 + $0x1c0] sm:$0xff] %v2562
  %3617 = vst [vmem:[#allocation3 + $0x1c8] sm:$0xff] %v2722
  %3618 = vst [vmem:[#allocation3 + $0x1d0] sm:$0xff] %v2882
  %3619 = vst [vmem:[#allocation3 + $0x1d8] sm:$0xff] %v3042
  %3620 = vst [vmem:[#allocation3 + $0x1e0] sm:$0xff] %v3202
  %3621 = vst [vmem:[#allocation3 + $0x1e8] sm:$0xff] %v3362
  %3622 = vst.msk [vmem:[#allocation3 + $0x1f0] sm:$0xff] %vm222, %v3522
  %3623 = vst [vmem:[#allocation3 + $0x1f8] sm:$0xff] %v2565
  %3624 = vst [vmem:[#allocation3 + $0x200] sm:$0xff] %v2725
  %3625 = vst [vmem:[#allocation3 + $0x208] sm:$0xff] %v2885
  %3626 = vst [vmem:[#allocation3 + $0x210] sm:$0xff] %v3045
  %3627 = vst [vmem:[#allocation3 + $0x218] sm:$0xff] %v3205
  %3628 = vst [vmem:[#allocation3 + $0x220] sm:$0xff] %v3365
  %3629 = vst.msk [vmem:[#allocation3 + $0x228] sm:$0xff] %vm222, %v3525
  %3630 = vst [vmem:[#allocation3 + $0x230] sm:$0xff] %v2568
  %3631 = vst [vmem:[#allocation3 + $0x238] sm:$0xff] %v2728
  %3632 = vst [vmem:[#allocation3 + $0x240] sm:$0xff] %v2888
  %3633 = vst [vmem:[#allocation3 + $0x248] sm:$0xff] %v3048
  %3634 = vst [vmem:[#allocation3 + $0x250] sm:$0xff] %v3208
  %3635 = vst [vmem:[#allocation3 + $0x258] sm:$0xff] %v3368
  %3636 = vst.msk [vmem:[#allocation3 + $0x260] sm:$0xff] %vm222, %v3528
  %3637 = vst [vmem:[#allocation3 + $0x268] sm:$0xff] %v2571
  %3638 = vst [vmem:[#allocation3 + $0x270] sm:$0xff] %v2731
  %3639 = vst [vmem:[#allocation3 + $0x278] sm:$0xff] %v2891
  %3640 = vst [vmem:[#allocation3 + $0x280] sm:$0xff] %v3051
  %3641 = vst [vmem:[#allocation3 + $0x288] sm:$0xff] %v3211
  %3642 = vst [vmem:[#allocation3 + $0x290] sm:$0xff] %v3371
  %3643 = vst.msk [vmem:[#allocation3 + $0x298] sm:$0xff] %vm222, %v3531
  %3644 = vst [vmem:[#allocation3 + $0x2a0] sm:$0xff] %v2574
  %3645 = vst [vmem:[#allocation3 + $0x2a8] sm:$0xff] %v2734
  %3646 = vst [vmem:[#allocation3 + $0x2b0] sm:$0xff] %v2894
  %3647 = vst [vmem:[#allocation3 + $0x2b8] sm:$0xff] %v3054
  %3648 = vst [vmem:[#allocation3 + $0x2c0] sm:$0xff] %v3214
  %3649 = vst [vmem:[#allocation3 + $0x2c8] sm:$0xff] %v3374
  %3650 = vst.msk [vmem:[#allocation3 + $0x2d0] sm:$0xff] %vm222, %v3534
  %3651 = vst [vmem:[#allocation3 + $0x2d8] sm:$0xff] %v2577
  %3652 = vst [vmem:[#allocation3 + $0x2e0] sm:$0xff] %v2737
  %3653 = vst [vmem:[#allocation3 + $0x2e8] sm:$0xff] %v2897
  %3654 = vst [vmem:[#allocation3 + $0x2f0] sm:$0xff] %v3057
  %3655 = vst [vmem:[#allocation3 + $0x2f8] sm:$0xff] %v3217
  %3656 = vst [vmem:[#allocation3 + $0x300] sm:$0xff] %v3377
  %3657 = vst.msk [vmem:[#allocation3 + $0x308] sm:$0xff] %vm222, %v3537
  %3658 = vst [vmem:[#allocation3 + $0x310] sm:$0xff] %v2580
  %3659 = vst [vmem:[#allocation3 + $0x318] sm:$0xff] %v2740
  %3660 = vst [vmem:[#allocation3 + $0x320] sm:$0xff] %v2900
  %3661 = vst [vmem:[#allocation3 + $0x328] sm:$0xff] %v3060
  %3662 = vst [vmem:[#allocation3 + $0x330] sm:$0xff] %v3220
  %3663 = vst [vmem:[#allocation3 + $0x338] sm:$0xff] %v3380
  %3664 = vst.msk [vmem:[#allocation3 + $0x340] sm:$0xff] %vm222, %v3540
  %3665 = vst [vmem:[#allocation3 + $0x348] sm:$0xff] %v2583
  %3666 = vst [vmem:[#allocation3 + $0x350] sm:$0xff] %v2743
  %3667 = vst [vmem:[#allocation3 + $0x358] sm:$0xff] %v2903
  %3668 = vst [vmem:[#allocation3 + $0x360] sm:$0xff] %v3063
  %3669 = vst [vmem:[#allocation3 + $0x368] sm:$0xff] %v3223
  %3670 = vst [vmem:[#allocation3 + $0x370] sm:$0xff] %v3383
  %3671 = vst.msk [vmem:[#allocation3 + $0x378] sm:$0xff] %vm222, %v3543
  %3672 = vst [vmem:[#allocation3 + $0x380] sm:$0xff] %v2586
  %3673 = vst [vmem:[#allocation3 + $0x388] sm:$0xff] %v2746
  %3674 = vst [vmem:[#allocation3 + $0x390] sm:$0xff] %v2906
  %3675 = vst [vmem:[#allocation3 + $0x398] sm:$0xff] %v3066
  %3676 = vst [vmem:[#allocation3 + $0x3a0] sm:$0xff] %v3226
  %3677 = vst [vmem:[#allocation3 + $0x3a8] sm:$0xff] %v3386
  %3678 = vst.msk [vmem:[#allocation3 + $0x3b0] sm:$0xff] %vm222, %v3546
  %3679 = vst [vmem:[#allocation3 + $0x3b8] sm:$0xff] %v2589
  %3680 = vst [vmem:[#allocation3 + $0x3c0] sm:$0xff] %v2749
  %3681 = vst [vmem:[#allocation3 + $0x3c8] sm:$0xff] %v2909
  %3682 = vst [vmem:[#allocation3 + $0x3d0] sm:$0xff] %v3069
  %3683 = vst [vmem:[#allocation3 + $0x3d8] sm:$0xff] %v3229
  %3684 = vst [vmem:[#allocation3 + $0x3e0] sm:$0xff] %v3389
  %3685 = vst.msk [vmem:[#allocation3 + $0x3e8] sm:$0xff] %vm222, %v3549
  %3686 = vst [vmem:[#allocation3 + $0x3f0] sm:$0xff] %v2592
  %3687 = vst [vmem:[#allocation3 + $0x3f8] sm:$0xff] %v2752
  %3688 = vst [vmem:[#allocation3 + $0x400] sm:$0xff] %v2912
  %3689 = vst [vmem:[#allocation3 + $0x408] sm:$0xff] %v3072
  %3690 = vst [vmem:[#allocation3 + $0x410] sm:$0xff] %v3232
  %3691 = vst [vmem:[#allocation3 + $0x418] sm:$0xff] %v3392
  %3692 = vst.msk [vmem:[#allocation3 + $0x420] sm:$0xff] %vm222, %v3552
  %3693 = vst [vmem:[#allocation3 + $0x428] sm:$0xff] %v2595
  %3694 = vst [vmem:[#allocation3 + $0x430] sm:$0xff] %v2755
  %3695 = vst [vmem:[#allocation3 + $0x438] sm:$0xff] %v2915
  %3696 = vst [vmem:[#allocation3 + $0x440] sm:$0xff] %v3075
  %3697 = vst [vmem:[#allocation3 + $0x448] sm:$0xff] %v3235
  %3698 = vst [vmem:[#allocation3 + $0x450] sm:$0xff] %v3395
  %3699 = vst.msk [vmem:[#allocation3 + $0x458] sm:$0xff] %vm222, %v3555
  %3700 = vst [vmem:[#allocation3 + $0x460] sm:$0xff] %v2598
  %3701 = vst [vmem:[#allocation3 + $0x468] sm:$0xff] %v2758
  %3702 = vst [vmem:[#allocation3 + $0x470] sm:$0xff] %v2918
  %3703 = vst [vmem:[#allocation3 + $0x478] sm:$0xff] %v3078
  %3704 = vst [vmem:[#allocation3 + $0x480] sm:$0xff] %v3238
  %3705 = vst [vmem:[#allocation3 + $0x488] sm:$0xff] %v3398
  %3706 = vst.msk [vmem:[#allocation3 + $0x490] sm:$0xff] %vm222, %v3558
  %v3707 = vld [vmem:[#allocation3] sm:$0xff]
  %v3708 = vld [vmem:[#allocation3 + $0x8] sm:$0xff]
  %v3709 = vld [vmem:[#allocation3 + $0x10] sm:$0xff]
  %v3710 = vld [vmem:[#allocation3 + $0x18] sm:$0xff]
  %v3711 = vld [vmem:[#allocation3 + $0x20] sm:$0xff]
  %v3712 = vld [vmem:[#allocation3 + $0x28] sm:$0xff]
  %v3713 = vld [vmem:[#allocation3 + $0x30] sm:$0xff]
  %v3714 = vld [vmem:[#allocation3 + $0x38] sm:$0xff]
  %v3715 = vld [vmem:[#allocation3 + $0x40] sm:$0xff]
  %v3716 = vld [vmem:[#allocation3 + $0x48] sm:$0xff]
  %v3717 = vld [vmem:[#allocation3 + $0x50] sm:$0xff]
  %v3718 = vld [vmem:[#allocation3 + $0x58] sm:$0xff]
  %v3719 = vld [vmem:[#allocation3 + $0x60] sm:$0xff]
  %v3720 = vld [vmem:[#allocation3 + $0x68] sm:$0xff]
  %v3721 = vld [vmem:[#allocation3 + $0x70] sm:$0xff]
  %v3722 = vld [vmem:[#allocation3 + $0x78] sm:$0xff]
  %v3723 = vld [vmem:[#allocation3 + $0x80] sm:$0xff]
  %v3724 = vld [vmem:[#allocation3 + $0x88] sm:$0xff]
  %v3725 = vld [vmem:[#allocation3 + $0x90] sm:$0xff]
  %v3726 = vld [vmem:[#allocation3 + $0x98] sm:$0xff]
  %v3727 = vld [vmem:[#allocation3 + $0xa0] sm:$0xff]
  %v3728 = vadd.f32 %v3707, %v3708
  %v3729 = vadd.f32 %v3728, %v3709
  %v3730 = vadd.f32 %v3729, %v3710
  %v3731 = vadd.f32 %v3730, %v3711
  %v3732 = vadd.f32 %v3731, %v3712
  %v3733 = vsel %vm222, %v3713, 0.0
  %v3734 = vadd.f32 %v3732, %v3733
  %3735 = vadd.xlane.f32.xlu0 %v3734
  %v3736 = vpop.xlane.xlu0 %3735
  %v3737 = vadd.f32 %v3714, %v3715
  %v3738 = vadd.f32 %v3737, %v3716
  %v3739 = vadd.f32 %v3738, %v3717
  %v3740 = vadd.f32 %v3739, %v3718
  %v3741 = vadd.f32 %v3740, %v3719
  %v3742 = vsel %vm222, %v3720, 0.0
  %v3743 = vadd.f32 %v3741, %v3742
  %3744 = vadd.xlane.f32.xlu0 %v3743
  %v3745 = vpop.xlane.xlu0 %3744
  %v3746 = vadd.f32 %v3721, %v3722
  %v3747 = vadd.f32 %v3746, %v3723
  %v3748 = vadd.f32 %v3747, %v3724
  %v3749 = vadd.f32 %v3748, %v3725
  %v3750 = vadd.f32 %v3749, %v3726
  %v3751 = vsel %vm222, %v3727, 0.0
  %v3752 = vadd.f32 %v3750, %v3751
  %3753 = vadd.xlane.f32.xlu0 %v3752
  %v3754 = vpop.xlane.xlu0 %3753
  %v3755 = vmul.f32 %v3707, %v3707
  %v3756 = vmul.f32 %v3708, %v3708
  %v3757 = vmul.f32 %v3709, %v3709
  %v3758 = vmul.f32 %v3710, %v3710
  %v3759 = vmul.f32 %v3711, %v3711
  %v3760 = vmul.f32 %v3712, %v3712
  %v3761 = vmul.f32 %v3713, %v3713
  %v3762 = vmul.f32 %v3714, %v3714
  %v3763 = vmul.f32 %v3715, %v3715
  %v3764 = vmul.f32 %v3716, %v3716
  %v3765 = vmul.f32 %v3717, %v3717
  %v3766 = vmul.f32 %v3718, %v3718
  %v3767 = vmul.f32 %v3719, %v3719
  %v3768 = vmul.f32 %v3720, %v3720
  %v3769 = vmul.f32 %v3721, %v3721
  %v3770 = vmul.f32 %v3722, %v3722
  %v3771 = vmul.f32 %v3723, %v3723
  %v3772 = vmul.f32 %v3724, %v3724
  %v3773 = vmul.f32 %v3725, %v3725
  %v3774 = vmul.f32 %v3726, %v3726
  %v3775 = vmul.f32 %v3727, %v3727
  %v3776 = vadd.f32 %v3755, %v3756
  %v3777 = vadd.f32 %v3776, %v3757
  %v3778 = vadd.f32 %v3777, %v3758
  %v3779 = vadd.f32 %v3778, %v3759
  %v3780 = vadd.f32 %v3779, %v3760
  %v3781 = vsel %vm222, %v3761, 0.0
  %v3782 = vadd.f32 %v3780, %v3781
  %3783 = vadd.xlane.f32.xlu0 %v3782
  %v3784 = vpop.xlane.xlu0 %3783
  %v3785 = vadd.f32 %v3762, %v3763
  %v3786 = vadd.f32 %v3785, %v3764
  %v3787 = vadd.f32 %v3786, %v3765
  %v3788 = vadd.f32 %v3787, %v3766
  %v3789 = vadd.f32 %v3788, %v3767
  %v3790 = vsel %vm222, %v3768, 0.0
  %v3791 = vadd.f32 %v3789, %v3790
  %3792 = vadd.xlane.f32.xlu0 %v3791
  %v3793 = vpop.xlane.xlu0 %3792
  %v3794 = vadd.f32 %v3769, %v3770
  %v3795 = vadd.f32 %v3794, %v3771
  %v3796 = vadd.f32 %v3795, %v3772
  %v3797 = vadd.f32 %v3796, %v3773
  %v3798 = vadd.f32 %v3797, %v3774
  %v3799 = vsel %vm222, %v3775, 0.0
  %v3800 = vadd.f32 %v3798, %v3799
  %3801 = vadd.xlane.f32.xlu0 %v3800
  %v3802 = vpop.xlane.xlu0 %3801
  %v3803 = vmul.f32 %v3736, 0.0012755102
  %v3804 = vmul.f32 %v3745, 0.0012755102
  %v3805 = vmul.f32 %v3754, 0.0012755102
  %v3806 = vmul.f32 %v3784, 0.0012755102
  %v3807 = vmul.f32 %v3793, 0.0012755102
  %v3808 = vmul.f32 %v3802, 0.0012755102
  %v3809 = vmul.f32 %v3803, %v3803
  %v3810 = vmul.f32 %v3804, %v3804
  %v3811 = vmul.f32 %v3805, %v3805
  %v3812 = vsub.f32 %v3806, %v3809
  %v3813 = vsub.f32 %v3807, %v3810
  %v3814 = vsub.f32 %v3808, %v3811
  %v3815 = vmax.f32 %v3812, 0.0
  %v3816 = vmax.f32 %v3813, 0.0
  %v3817 = vmax.f32 %v3814, 0.0
  %v3818 = vld [vmem:[#allocation5] sm:$0xff]
  %v3819 = vld [vmem:[#allocation5 + $0x8] sm:$0xff]
  %v3820 = vld [vmem:[#allocation5 + $0x10] sm:$0xff]
  %v3821 = vadd.f32 %v3815, 1e-05
  %v3822 = vadd.f32 %v3816, 1e-05
  %v3823 = vadd.f32 %v3817, 1e-05
  %v3824 = vrsqrt.pop %v3821
  %v3825 = vmul.f32 %v3824, %v3821
  %v3826 = vmul.f32 %v3825, %v3824
  %v3827 = vmul.f32 0.5, %v3826
  %v3828 = vsub.f32 1.5, %v3827
  %v3829 = vmul.f32 %v3824, %v3828
  %vm3830 = vweird.f32 %v3821
  %vm3831 = vweird.f32 %v3824
  %vm3832 = vmor %vm3830, %vm3831
  %v3833 = vsel %vm3832, %v3824, %v3829
  %v3834 = vrsqrt.pop %v3822
  %v3835 = vmul.f32 %v3834, %v3822
  %v3836 = vmul.f32 %v3835, %v3834
  %v3837 = vmul.f32 0.5, %v3836
  %v3838 = vsub.f32 1.5, %v3837
  %v3839 = vmul.f32 %v3834, %v3838
  %vm3840 = vweird.f32 %v3822
  %vm3841 = vweird.f32 %v3834
  %vm3842 = vmor %vm3840, %vm3841
  %v3843 = vsel %vm3842, %v3834, %v3839
  %v3844 = vrsqrt.pop %v3823
  %v3845 = vmul.f32 %v3844, %v3823
  %v3846 = vmul.f32 %v3845, %v3844
  %v3847 = vmul.f32 0.5, %v3846
  %v3848 = vsub.f32 1.5, %v3847
  %v3849 = vmul.f32 %v3844, %v3848
  %vm3850 = vweird.f32 %v3823
  %vm3851 = vweird.f32 %v3844
  %vm3852 = vmor %vm3850, %vm3851
  %v3853 = vsel %vm3852, %v3844, %v3849
  %v3854 = vmul.f32 %v3818, %v3833
  %v3855 = vmul.f32 %v3819, %v3843
  %v3856 = vmul.f32 %v3820, %v3853
  %v3857 = vmul.f32 %v3803, %v3854
  %v3858 = vmul.f32 %v3804, %v3855
  %v3859 = vmul.f32 %v3805, %v3856
  %3863 = vrot.lane.b32.xlu0 %v3857, 1
  %v3864 = vpop.permute.xlu0 %3863
  %3865 = vrot.lane.b32.xlu0 %v3858, 1
  %v3866 = vpop.permute.xlu0 %3865
  %3867 = vrot.lane.b32.xlu0 %v3859, 1
  %v3868 = vpop.permute.xlu0 %3867
  %v3872 = vsub.f32 %v3818, %v3864
  %v3873 = vsub.f32 %v3819, %v3866
  %v3874 = vsub.f32 %v3820, %v3868
  %3876 = vset.pattern.permute.xlu0 2
  %3877 = vperm.xlu0 %3876, %v3854
  %v3878 = vpop.permute.xlu0 %3877
  %3881 = vset.pattern.permute.xlu0 2
  %3882 = vperm.xlu0 %3881, %v3855
  %v3883 = vpop.permute.xlu0 %3882
  %3886 = vset.pattern.permute.xlu0 2
  %3887 = vperm.xlu0 %3886, %v3856
  %v3888 = vpop.permute.xlu0 %3887
  %v3890 = vmul.f32 %v3707, %v3878
  %v3891 = vmul.f32 %v3708, %v3878
  %v3892 = vmul.f32 %v3709, %v3878
  %v3893 = vmul.f32 %v3710, %v3878
  %v3894 = vmul.f32 %v3711, %v3878
  %v3895 = vmul.f32 %v3712, %v3878
  %v3896 = vmul.f32 %v3713, %v3878
  %v3897 = vmul.f32 %v3714, %v3883
  %v3898 = vmul.f32 %v3715, %v3883
  %v3899 = vmul.f32 %v3716, %v3883
  %v3900 = vmul.f32 %v3717, %v3883
  %v3901 = vmul.f32 %v3718, %v3883
  %v3902 = vmul.f32 %v3719, %v3883
  %v3903 = vmul.f32 %v3720, %v3883
  %v3904 = vmul.f32 %v3721, %v3888
  %v3905 = vmul.f32 %v3722, %v3888
  %v3906 = vmul.f32 %v3723, %v3888
  %v3907 = vmul.f32 %v3724, %v3888
  %v3908 = vmul.f32 %v3725, %v3888
  %v3909 = vmul.f32 %v3726, %v3888
  %v3910 = vmul.f32 %v3727, %v3888
  %3912 = vset.pattern.permute.xlu0 3
  %3913 = vperm.xlu0 %3912, %v3872
  %v3914 = vpop.permute.xlu0 %3913
  %3917 = vset.pattern.permute.xlu0 3
  %3918 = vperm.xlu0 %3917, %v3873
  %v3919 = vpop.permute.xlu0 %3918
  %3922 = vset.pattern.permute.xlu0 3
  %3923 = vperm.xlu0 %3922, %v3874
  %v3924 = vpop.permute.xlu0 %3923
  %v3926 = vadd.f32 %v3890, %v3914
  %v3927 = vadd.f32 %v3891, %v3914
  %v3928 = vadd.f32 %v3892, %v3914
  %v3929 = vadd.f32 %v3893, %v3914
  %v3930 = vadd.f32 %v3894, %v3914
  %v3931 = vadd.f32 %v3895, %v3914
  %v3932 = vadd.f32 %v3896, %v3914
  %v3933 = vadd.f32 %v3897, %v3919
  %v3934 = vadd.f32 %v3898, %v3919
  %v3935 = vadd.f32 %v3899, %v3919
  %v3936 = vadd.f32 %v3900, %v3919
  %v3937 = vadd.f32 %v3901, %v3919
  %v3938 = vadd.f32 %v3902, %v3919
  %v3939 = vadd.f32 %v3903, %v3919
  %v3940 = vadd.f32 %v3904, %v3924
  %v3941 = vadd.f32 %v3905, %v3924
  %v3942 = vadd.f32 %v3906, %v3924
  %v3943 = vadd.f32 %v3907, %v3924
  %v3944 = vadd.f32 %v3908, %v3924
  %v3945 = vadd.f32 %v3909, %v3924
  %v3946 = vadd.f32 %v3910, %v3924
  %3947 = vst [vmem:[#allocation3] sm:$0xff] %v3926
  %3948 = vst [vmem:[#allocation3 + $0x8] sm:$0xff] %v3927
  %3949 = vst [vmem:[#allocation3 + $0x10] sm:$0xff] %v3928
  %3950 = vst [vmem:[#allocation3 + $0x18] sm:$0xff] %v3929
  %3951 = vst [vmem:[#allocation3 + $0x20] sm:$0xff] %v3930
  %3952 = vst [vmem:[#allocation3 + $0x28] sm:$0xff] %v3931
  %3953 = vst.msk [vmem:[#allocation3 + $0x30] sm:$0xff] %vm222, %v3932
  %3954 = vst [vmem:[#allocation3 + $0x38] sm:$0xff] %v3933
  %3955 = vst [vmem:[#allocation3 + $0x40] sm:$0xff] %v3934
  %3956 = vst [vmem:[#allocation3 + $0x48] sm:$0xff] %v3935
  %3957 = vst [vmem:[#allocation3 + $0x50] sm:$0xff] %v3936
  %3958 = vst [vmem:[#allocation3 + $0x58] sm:$0xff] %v3937
  %3959 = vst [vmem:[#allocation3 + $0x60] sm:$0xff] %v3938
  %3960 = vst.msk [vmem:[#allocation3 + $0x68] sm:$0xff] %vm222, %v3939
  %3961 = vst [vmem:[#allocation3 + $0x70] sm:$0xff] %v3940
  %3962 = vst [vmem:[#allocation3 + $0x78] sm:$0xff] %v3941
  %3963 = vst [vmem:[#allocation3 + $0x80] sm:$0xff] %v3942
  %3964 = vst [vmem:[#allocation3 + $0x88] sm:$0xff] %v3943
  %3965 = vst [vmem:[#allocation3 + $0x90] sm:$0xff] %v3944
  %3966 = vst [vmem:[#allocation3 + $0x98] sm:$0xff] %v3945
  %3967 = vst.msk [vmem:[#allocation3 + $0xa0] sm:$0xff] %vm222, %v3946
  // Predicated region
  $region53: #{tpu_custom_call.1} parent=0 // pred_check
    _
  $region54: #{tpu_custom_call.1} parent=0 // pred_check_branch
    %3969 = sbr.rel target = $region56
  $region55: #{tpu_custom_call.1} parent=0 // pred_region
    %3970 = sst [smem:[#allocation12]] [#allocation29]
    %3971 = sst [smem:[#allocation13]] [#allocation28]
  $region56: #{tpu_custom_call.1} parent=0 // pred_fallthru
    _
  %3973 = shalt.err (0)
  %s3975 = sshll.u32 [#allocation3], 4
  %s3976 = int_to_ptr.vmem [resolvable:$true] %s3975
  %s3977 = sshll.u32 %s3, 4
  %s3978 = int_to_ptr.hbm [resolvable:$true] %s3977
  %3980 = dma.vmem_to_hbm [thread:$0]  %s3976, 2688, %s3978, [#allocation7]
  %v3981 = vld [vmem:[#allocation3 + $0xa8] sm:$0xff]
  %v3982 = vld [vmem:[#allocation3 + $0xb0] sm:$0xff]
  %v3983 = vld [vmem:[#allocation3 + $0xb8] sm:$0xff]
  %v3984 = vld [vmem:[#allocation3 + $0xc0] sm:$0xff]
  %v3985 = vld [vmem:[#allocation3 + $0xc8] sm:$0xff]
  %v3986 = vld [vmem:[#allocation3 + $0xd0] sm:$0xff]
  %v3987 = vld [vmem:[#allocation3 + $0xd8] sm:$0xff]
  %v3988 = vld [vmem:[#allocation3 + $0xe0] sm:$0xff]
  %v3989 = vld [vmem:[#allocation3 + $0xe8] sm:$0xff]
  %v3990 = vld [vmem:[#allocation3 + $0xf0] sm:$0xff]
  %v3991 = vld [vmem:[#allocation3 + $0xf8] sm:$0xff]
  %v3992 = vld [vmem:[#allocation3 + $0x100] sm:$0xff]
  %v3993 = vld [vmem:[#allocation3 + $0x108] sm:$0xff]
  %v3994 = vld [vmem:[#allocation3 + $0x110] sm:$0xff]
  %v3995 = vld [vmem:[#allocation3 + $0x118] sm:$0xff]
  %v3996 = vld [vmem:[#allocation3 + $0x120] sm:$0xff]
  %v3997 = vld [vmem:[#allocation3 + $0x128] sm:$0xff]
  %v3998 = vld [vmem:[#allocation3 + $0x130] sm:$0xff]
  %v3999 = vld [vmem:[#allocation3 + $0x138] sm:$0xff]
  %v4000 = vld [vmem:[#allocation3 + $0x140] sm:$0xff]
  %v4001 = vld [vmem:[#allocation3 + $0x148] sm:$0xff]
  %v4002 = vadd.f32 %v3981, %v3982
  %v4003 = vadd.f32 %v4002, %v3983
  %v4004 = vadd.f32 %v4003, %v3984
  %v4005 = vadd.f32 %v4004, %v3985
  %v4006 = vadd.f32 %v4005, %v3986
  %v4007 = vsel %vm222, %v3987, 0.0
  %v4008 = vadd.f32 %v4006, %v4007
  %4009 = vadd.xlane.f32.xlu0 %v4008
  %v4010 = vpop.xlane.xlu0 %4009
  %v4011 = vadd.f32 %v3988, %v3989
  %v4012 = vadd.f32 %v4011, %v3990
  %v4013 = vadd.f32 %v4012, %v3991
  %v4014 = vadd.f32 %v4013, %v3992
  %v4015 = vadd.f32 %v4014, %v3993
  %v4016 = vsel %vm222, %v3994, 0.0
  %v4017 = vadd.f32 %v4015, %v4016
  %4018 = vadd.xlane.f32.xlu0 %v4017
  %v4019 = vpop.xlane.xlu0 %4018
  %v4020 = vadd.f32 %v3995, %v3996
  %v4021 = vadd.f32 %v4020, %v3997
  %v4022 = vadd.f32 %v4021, %v3998
  %v4023 = vadd.f32 %v4022, %v3999
  %v4024 = vadd.f32 %v4023, %v4000
  %v4025 = vsel %vm222, %v4001, 0.0
  %v4026 = vadd.f32 %v4024, %v4025
  %4027 = vadd.xlane.f32.xlu0 %v4026
  %v4028 = vpop.xlane.xlu0 %4027
  %v4029 = vmul.f32 %v3981, %v3981
  %v4030 = vmul.f32 %v3982, %v3982
  %v4031 = vmul.f32 %v3983, %v3983
  %v4032 = vmul.f32 %v3984, %v3984
  %v4033 = vmul.f32 %v3985, %v3985
  %v4034 = vmul.f32 %v3986, %v3986
  %v4035 = vmul.f32 %v3987, %v3987
  %v4036 = vmul.f32 %v3988, %v3988
  %v4037 = vmul.f32 %v3989, %v3989
  %v4038 = vmul.f32 %v3990, %v3990
  %v4039 = vmul.f32 %v3991, %v3991
  %v4040 = vmul.f32 %v3992, %v3992
  %v4041 = vmul.f32 %v3993, %v3993
  %v4042 = vmul.f32 %v3994, %v3994
  %v4043 = vmul.f32 %v3995, %v3995
  %v4044 = vmul.f32 %v3996, %v3996
  %v4045 = vmul.f32 %v3997, %v3997
  %v4046 = vmul.f32 %v3998, %v3998
  %v4047 = vmul.f32 %v3999, %v3999
  %v4048 = vmul.f32 %v4000, %v4000
  %v4049 = vmul.f32 %v4001, %v4001
  %v4050 = vadd.f32 %v4029, %v4030
  %v4051 = vadd.f32 %v4050, %v4031
  %v4052 = vadd.f32 %v4051, %v4032
  %v4053 = vadd.f32 %v4052, %v4033
  %v4054 = vadd.f32 %v4053, %v4034
  %v4055 = vsel %vm222, %v4035, 0.0
  %v4056 = vadd.f32 %v4054, %v4055
  %4057 = vadd.xlane.f32.xlu0 %v4056
  %v4058 = vpop.xlane.xlu0 %4057
  %v4059 = vadd.f32 %v4036, %v4037
  %v4060 = vadd.f32 %v4059, %v4038
  %v4061 = vadd.f32 %v4060, %v4039
  %v4062 = vadd.f32 %v4061, %v4040
  %v4063 = vadd.f32 %v4062, %v4041
  %v4064 = vsel %vm222, %v4042, 0.0
  %v4065 = vadd.f32 %v4063, %v4064
  %4066 = vadd.xlane.f32.xlu0 %v4065
  %v4067 = vpop.xlane.xlu0 %4066
  %v4068 = vadd.f32 %v4043, %v4044
  %v4069 = vadd.f32 %v4068, %v4045
  %v4070 = vadd.f32 %v4069, %v4046
  %v4071 = vadd.f32 %v4070, %v4047
  %v4072 = vadd.f32 %v4071, %v4048
  %v4073 = vsel %vm222, %v4049, 0.0
  %v4074 = vadd.f32 %v4072, %v4073
  %4075 = vadd.xlane.f32.xlu0 %v4074
  %v4076 = vpop.xlane.xlu0 %4075
  %v4077 = vmul.f32 %v4010, 0.0012755102
  %v4078 = vmul.f32 %v4019, 0.0012755102
  %v4079 = vmul.f32 %v4028, 0.0012755102
  %v4080 = vmul.f32 %v4058, 0.0012755102
  %v4081 = vmul.f32 %v4067, 0.0012755102
  %v4082 = vmul.f32 %v4076, 0.0012755102
  %v4083 = vmul.f32 %v4077, %v4077
  %v4084 = vmul.f32 %v4078, %v4078
  %v4085 = vmul.f32 %v4079, %v4079
  %v4086 = vsub.f32 %v4080, %v4083
  %v4087 = vsub.f32 %v4081, %v4084
  %v4088 = vsub.f32 %v4082, %v4085
  %v4089 = vmax.f32 %v4086, 0.0
  %v4090 = vmax.f32 %v4087, 0.0
  %v4091 = vmax.f32 %v4088, 0.0
  %v4092 = vld [vmem:[#allocation5 + $0x18] sm:$0xff]
  %v4093 = vld [vmem:[#allocation5 + $0x20] sm:$0xff]
  %v4094 = vld [vmem:[#allocation5 + $0x28] sm:$0xff]
  %v4095 = vadd.f32 %v4089, 1e-05
  %v4096 = vadd.f32 %v4090, 1e-05
  %v4097 = vadd.f32 %v4091, 1e-05
  %v4098 = vrsqrt.pop %v4095
  %v4099 = vmul.f32 %v4098, %v4095
  %v4100 = vmul.f32 %v4099, %v4098
  %v4101 = vmul.f32 0.5, %v4100
  %v4102 = vsub.f32 1.5, %v4101
  %v4103 = vmul.f32 %v4098, %v4102
  %vm4104 = vweird.f32 %v4095
  %vm4105 = vweird.f32 %v4098
  %vm4106 = vmor %vm4104, %vm4105
  %v4107 = vsel %vm4106, %v4098, %v4103
  %v4108 = vrsqrt.pop %v4096
  %v4109 = vmul.f32 %v4108, %v4096
  %v4110 = vmul.f32 %v4109, %v4108
  %v4111 = vmul.f32 0.5, %v4110
  %v4112 = vsub.f32 1.5, %v4111
  %v4113 = vmul.f32 %v4108, %v4112
  %vm4114 = vweird.f32 %v4096
  %vm4115 = vweird.f32 %v4108
  %vm4116 = vmor %vm4114, %vm4115
  %v4117 = vsel %vm4116, %v4108, %v4113
  %v4118 = vrsqrt.pop %v4097
  %v4119 = vmul.f32 %v4118, %v4097
  %v4120 = vmul.f32 %v4119, %v4118
  %v4121 = vmul.f32 0.5, %v4120
  %v4122 = vsub.f32 1.5, %v4121
  %v4123 = vmul.f32 %v4118, %v4122
  %vm4124 = vweird.f32 %v4097
  %vm4125 = vweird.f32 %v4118
  %vm4126 = vmor %vm4124, %vm4125
  %v4127 = vsel %vm4126, %v4118, %v4123
  %v4128 = vmul.f32 %v4092, %v4107
  %v4129 = vmul.f32 %v4093, %v4117
  %v4130 = vmul.f32 %v4094, %v4127
  %v4131 = vmul.f32 %v4077, %v4128
  %v4132 = vmul.f32 %v4078, %v4129
  %v4133 = vmul.f32 %v4079, %v4130
  %4137 = vrot.lane.b32.xlu0 %v4131, 1
  %v4138 = vpop.permute.xlu0 %4137
  %4139 = vrot.lane.b32.xlu0 %v4132, 1
  %v4140 = vpop.permute.xlu0 %4139
  %4141 = vrot.lane.b32.xlu0 %v4133, 1
  %v4142 = vpop.permute.xlu0 %4141
  %v4146 = vsub.f32 %v4092, %v4138
  %v4147 = vsub.f32 %v4093, %v4140
  %v4148 = vsub.f32 %v4094, %v4142
  %4150 = vset.pattern.permute.xlu0 2
  %4151 = vperm.xlu0 %4150, %v4128
  %v4152 = vpop.permute.xlu0 %4151
  %4155 = vset.pattern.permute.xlu0 2
  %4156 = vperm.xlu0 %4155, %v4129
  %v4157 = vpop.permute.xlu0 %4156
  %4160 = vset.pattern.permute.xlu0 2
  %4161 = vperm.xlu0 %4160, %v4130
  %v4162 = vpop.permute.xlu0 %4161
  %v4164 = vmul.f32 %v3981, %v4152
  %v4165 = vmul.f32 %v3982, %v4152
  %v4166 = vmul.f32 %v3983, %v4152
  %v4167 = vmul.f32 %v3984, %v4152
  %v4168 = vmul.f32 %v3985, %v4152
  %v4169 = vmul.f32 %v3986, %v4152
  %v4170 = vmul.f32 %v3987, %v4152
  %v4171 = vmul.f32 %v3988, %v4157
  %v4172 = vmul.f32 %v3989, %v4157
  %v4173 = vmul.f32 %v3990, %v4157
  %v4174 = vmul.f32 %v3991, %v4157
  %v4175 = vmul.f32 %v3992, %v4157
  %v4176 = vmul.f32 %v3993, %v4157
  %v4177 = vmul.f32 %v3994, %v4157
  %v4178 = vmul.f32 %v3995, %v4162
  %v4179 = vmul.f32 %v3996, %v4162
  %v4180 = vmul.f32 %v3997, %v4162
  %v4181 = vmul.f32 %v3998, %v4162
  %v4182 = vmul.f32 %v3999, %v4162
  %v4183 = vmul.f32 %v4000, %v4162
  %v4184 = vmul.f32 %v4001, %v4162
  %4186 = vset.pattern.permute.xlu0 3
  %4187 = vperm.xlu0 %4186, %v4146
  %v4188 = vpop.permute.xlu0 %4187
  %4191 = vset.pattern.permute.xlu0 3
  %4192 = vperm.xlu0 %4191, %v4147
  %v4193 = vpop.permute.xlu0 %4192
  %4196 = vset.pattern.permute.xlu0 3
  %4197 = vperm.xlu0 %4196, %v4148
  %v4198 = vpop.permute.xlu0 %4197
  %v4200 = vadd.f32 %v4164, %v4188
  %v4201 = vadd.f32 %v4165, %v4188
  %v4202 = vadd.f32 %v4166, %v4188
  %v4203 = vadd.f32 %v4167, %v4188
  %v4204 = vadd.f32 %v4168, %v4188
  %v4205 = vadd.f32 %v4169, %v4188
  %v4206 = vadd.f32 %v4170, %v4188
  %v4207 = vadd.f32 %v4171, %v4193
  %v4208 = vadd.f32 %v4172, %v4193
  %v4209 = vadd.f32 %v4173, %v4193
  %v4210 = vadd.f32 %v4174, %v4193
  %v4211 = vadd.f32 %v4175, %v4193
  %v4212 = vadd.f32 %v4176, %v4193
  %v4213 = vadd.f32 %v4177, %v4193
  %v4214 = vadd.f32 %v4178, %v4198
  %v4215 = vadd.f32 %v4179, %v4198
  %v4216 = vadd.f32 %v4180, %v4198
  %v4217 = vadd.f32 %v4181, %v4198
  %v4218 = vadd.f32 %v4182, %v4198
  %v4219 = vadd.f32 %v4183, %v4198
  %v4220 = vadd.f32 %v4184, %v4198
  %4221 = vst [vmem:[#allocation3 + $0xa8] sm:$0xff] %v4200
  %4222 = vst [vmem:[#allocation3 + $0xb0] sm:$0xff] %v4201
  %4223 = vst [vmem:[#allocation3 + $0xb8] sm:$0xff] %v4202
  %4224 = vst [vmem:[#allocation3 + $0xc0] sm:$0xff] %v4203
  %4225 = vst [vmem:[#allocation3 + $0xc8] sm:$0xff] %v4204
  %4226 = vst [vmem:[#allocation3 + $0xd0] sm:$0xff] %v4205
  %4227 = vst.msk [vmem:[#allocation3 + $0xd8] sm:$0xff] %vm222, %v4206
  %4228 = vst [vmem:[#allocation3 + $0xe0] sm:$0xff] %v4207
  %4229 = vst [vmem:[#allocation3 + $0xe8] sm:$0xff] %v4208
  %4230 = vst [vmem:[#allocation3 + $0xf0] sm:$0xff] %v4209
  %4231 = vst [vmem:[#allocation3 + $0xf8] sm:$0xff] %v4210
  %4232 = vst [vmem:[#allocation3 + $0x100] sm:$0xff] %v4211
  %4233 = vst [vmem:[#allocation3 + $0x108] sm:$0xff] %v4212
  %4234 = vst.msk [vmem:[#allocation3 + $0x110] sm:$0xff] %vm222, %v4213
  %4235 = vst [vmem:[#allocation3 + $0x118] sm:$0xff] %v4214
  %4236 = vst [vmem:[#allocation3 + $0x120] sm:$0xff] %v4215
  %4237 = vst [vmem:[#allocation3 + $0x128] sm:$0xff] %v4216
  %4238 = vst [vmem:[#allocation3 + $0x130] sm:$0xff] %v4217
  %4239 = vst [vmem:[#allocation3 + $0x138] sm:$0xff] %v4218
  %4240 = vst [vmem:[#allocation3 + $0x140] sm:$0xff] %v4219
  %4241 = vst.msk [vmem:[#allocation3 + $0x148] sm:$0xff] %vm222, %v4220
  %s4242 = scalar_lea.vmem [#allocation3], 168
  %s4243 = scalar_lea.hbm %s3, 168
  %s4244 = scalar_lea.sflag [#allocation7], 1
  // Predicated region
  $region57: #{tpu_custom_call.1} parent=0 // pred_check
    _
  $region58: #{tpu_custom_call.1} parent=0 // pred_check_branch
    %4246 = sbr.rel target = $region60
  $region59: #{tpu_custom_call.1} parent=0 // pred_region
    %4247 = sst [smem:[#allocation12]] [#allocation31]
    %4248 = sst [smem:[#allocation13]] [#allocation30]
  $region60: #{tpu_custom_call.1} parent=0 // pred_fallthru
    _
  %4250 = shalt.err (0)
  %s4252 = sshll.u32 %s4242, 4
  %s4253 = int_to_ptr.vmem [resolvable:$true] %s4252
  %s4254 = sshll.u32 %s4243, 4
  %s4255 = int_to_ptr.hbm [resolvable:$true] %s4254
  %4257 = dma.vmem_to_hbm [thread:$0]  %s4253, 2688, %s4255, %s4244
  %v4258 = vld [vmem:[#allocation3 + $0x150] sm:$0xff]
  %v4259 = vld [vmem:[#allocation3 + $0x158] sm:$0xff]
  %v4260 = vld [vmem:[#allocation3 + $0x160] sm:$0xff]
  %v4261 = vld [vmem:[#allocation3 + $0x168] sm:$0xff]
  %v4262 = vld [vmem:[#allocation3 + $0x170] sm:$0xff]
  %v4263 = vld [vmem:[#allocation3 + $0x178] sm:$0xff]
  %v4264 = vld [vmem:[#allocation3 + $0x180] sm:$0xff]
  %v4265 = vld [vmem:[#allocation3 + $0x188] sm:$0xff]
  %v4266 = vld [vmem:[#allocation3 + $0x190] sm:$0xff]
  %v4267 = vld [vmem:[#allocation3 + $0x198] sm:$0xff]
  %v4268 = vld [vmem:[#allocation3 + $0x1a0] sm:$0xff]
  %v4269 = vld [vmem:[#allocation3 + $0x1a8] sm:$0xff]
  %v4270 = vld [vmem:[#allocation3 + $0x1b0] sm:$0xff]
  %v4271 = vld [vmem:[#allocation3 + $0x1b8] sm:$0xff]
  %v4272 = vld [vmem:[#allocation3 + $0x1c0] sm:$0xff]
  %v4273 = vld [vmem:[#allocation3 + $0x1c8] sm:$0xff]
  %v4274 = vld [vmem:[#allocation3 + $0x1d0] sm:$0xff]
  %v4275 = vld [vmem:[#allocation3 + $0x1d8] sm:$0xff]
  %v4276 = vld [vmem:[#allocation3 + $0x1e0] sm:$0xff]
  %v4277 = vld [vmem:[#allocation3 + $0x1e8] sm:$0xff]
  %v4278 = vld [vmem:[#allocation3 + $0x1f0] sm:$0xff]
  %v4279 = vadd.f32 %v4258, %v4259
  %v4280 = vadd.f32 %v4279, %v4260
  %v4281 = vadd.f32 %v4280, %v4261
  %v4282 = vadd.f32 %v4281, %v4262
  %v4283 = vadd.f32 %v4282, %v4263
  %v4284 = vsel %vm222, %v4264, 0.0
  %v4285 = vadd.f32 %v4283, %v4284
  %4286 = vadd.xlane.f32.xlu0 %v4285
  %v4287 = vpop.xlane.xlu0 %4286
  %v4288 = vadd.f32 %v4265, %v4266
  %v4289 = vadd.f32 %v4288, %v4267
  %v4290 = vadd.f32 %v4289, %v4268
  %v4291 = vadd.f32 %v4290, %v4269
  %v4292 = vadd.f32 %v4291, %v4270
  %v4293 = vsel %vm222, %v4271, 0.0
  %v4294 = vadd.f32 %v4292, %v4293
  %4295 = vadd.xlane.f32.xlu0 %v4294
  %v4296 = vpop.xlane.xlu0 %4295
  %v4297 = vadd.f32 %v4272, %v4273
  %v4298 = vadd.f32 %v4297, %v4274
  %v4299 = vadd.f32 %v4298, %v4275
  %v4300 = vadd.f32 %v4299, %v4276
  %v4301 = vadd.f32 %v4300, %v4277
  %v4302 = vsel %vm222, %v4278, 0.0
  %v4303 = vadd.f32 %v4301, %v4302
  %4304 = vadd.xlane.f32.xlu0 %v4303
  %v4305 = vpop.xlane.xlu0 %4304
  %v4306 = vmul.f32 %v4258, %v4258
  %v4307 = vmul.f32 %v4259, %v4259
  %v4308 = vmul.f32 %v4260, %v4260
  %v4309 = vmul.f32 %v4261, %v4261
  %v4310 = vmul.f32 %v4262, %v4262
  %v4311 = vmul.f32 %v4263, %v4263
  %v4312 = vmul.f32 %v4264, %v4264
  %v4313 = vmul.f32 %v4265, %v4265
  %v4314 = vmul.f32 %v4266, %v4266
  %v4315 = vmul.f32 %v4267, %v4267
  %v4316 = vmul.f32 %v4268, %v4268
  %v4317 = vmul.f32 %v4269, %v4269
  %v4318 = vmul.f32 %v4270, %v4270
  %v4319 = vmul.f32 %v4271, %v4271
  %v4320 = vmul.f32 %v4272, %v4272
  %v4321 = vmul.f32 %v4273, %v4273
  %v4322 = vmul.f32 %v4274, %v4274
  %v4323 = vmul.f32 %v4275, %v4275
  %v4324 = vmul.f32 %v4276, %v4276
  %v4325 = vmul.f32 %v4277, %v4277
  %v4326 = vmul.f32 %v4278, %v4278
  %v4327 = vadd.f32 %v4306, %v4307
  %v4328 = vadd.f32 %v4327, %v4308
  %v4329 = vadd.f32 %v4328, %v4309
  %v4330 = vadd.f32 %v4329, %v4310
  %v4331 = vadd.f32 %v4330, %v4311
  %v4332 = vsel %vm222, %v4312, 0.0
  %v4333 = vadd.f32 %v4331, %v4332
  %4334 = vadd.xlane.f32.xlu0 %v4333
  %v4335 = vpop.xlane.xlu0 %4334
  %v4336 = vadd.f32 %v4313, %v4314
  %v4337 = vadd.f32 %v4336, %v4315
  %v4338 = vadd.f32 %v4337, %v4316
  %v4339 = vadd.f32 %v4338, %v4317
  %v4340 = vadd.f32 %v4339, %v4318
  %v4341 = vsel %vm222, %v4319, 0.0
  %v4342 = vadd.f32 %v4340, %v4341
  %4343 = vadd.xlane.f32.xlu0 %v4342
  %v4344 = vpop.xlane.xlu0 %4343
  %v4345 = vadd.f32 %v4320, %v4321
  %v4346 = vadd.f32 %v4345, %v4322
  %v4347 = vadd.f32 %v4346, %v4323
  %v4348 = vadd.f32 %v4347, %v4324
  %v4349 = vadd.f32 %v4348, %v4325
  %v4350 = vsel %vm222, %v4326, 0.0
  %v4351 = vadd.f32 %v4349, %v4350
  %4352 = vadd.xlane.f32.xlu0 %v4351
  %v4353 = vpop.xlane.xlu0 %4352
  %v4354 = vmul.f32 %v4287, 0.0012755102
  %v4355 = vmul.f32 %v4296, 0.0012755102
  %v4356 = vmul.f32 %v4305, 0.0012755102
  %v4357 = vmul.f32 %v4335, 0.0012755102
  %v4358 = vmul.f32 %v4344, 0.0012755102
  %v4359 = vmul.f32 %v4353, 0.0012755102
  %v4360 = vmul.f32 %v4354, %v4354
  %v4361 = vmul.f32 %v4355, %v4355
  %v4362 = vmul.f32 %v4356, %v4356
  %v4363 = vsub.f32 %v4357, %v4360
  %v4364 = vsub.f32 %v4358, %v4361
  %v4365 = vsub.f32 %v4359, %v4362
  %v4366 = vmax.f32 %v4363, 0.0
  %v4367 = vmax.f32 %v4364, 0.0
  %v4368 = vmax.f32 %v4365, 0.0
  %v4369 = vld [vmem:[#allocation5 + $0x30] sm:$0xff]
  %v4370 = vld [vmem:[#allocation5 + $0x38] sm:$0xff]
  %v4371 = vld [vmem:[#allocation5 + $0x40] sm:$0xff]
  %v4372 = vadd.f32 %v4366, 1e-05
  %v4373 = vadd.f32 %v4367, 1e-05
  %v4374 = vadd.f32 %v4368, 1e-05
  %v4375 = vrsqrt.pop %v4372
  %v4376 = vmul.f32 %v4375, %v4372
  %v4377 = vmul.f32 %v4376, %v4375
  %v4378 = vmul.f32 0.5, %v4377
  %v4379 = vsub.f32 1.5, %v4378
  %v4380 = vmul.f32 %v4375, %v4379
  %vm4381 = vweird.f32 %v4372
  %vm4382 = vweird.f32 %v4375
  %vm4383 = vmor %vm4381, %vm4382
  %v4384 = vsel %vm4383, %v4375, %v4380
  %v4385 = vrsqrt.pop %v4373
  %v4386 = vmul.f32 %v4385, %v4373
  %v4387 = vmul.f32 %v4386, %v4385
  %v4388 = vmul.f32 0.5, %v4387
  %v4389 = vsub.f32 1.5, %v4388
  %v4390 = vmul.f32 %v4385, %v4389
  %vm4391 = vweird.f32 %v4373
  %vm4392 = vweird.f32 %v4385
  %vm4393 = vmor %vm4391, %vm4392
  %v4394 = vsel %vm4393, %v4385, %v4390
  %v4395 = vrsqrt.pop %v4374
  %v4396 = vmul.f32 %v4395, %v4374
  %v4397 = vmul.f32 %v4396, %v4395
  %v4398 = vmul.f32 0.5, %v4397
  %v4399 = vsub.f32 1.5, %v4398
  %v4400 = vmul.f32 %v4395, %v4399
  %vm4401 = vweird.f32 %v4374
  %vm4402 = vweird.f32 %v4395
  %vm4403 = vmor %vm4401, %vm4402
  %v4404 = vsel %vm4403, %v4395, %v4400
  %v4405 = vmul.f32 %v4369, %v4384
  %v4406 = vmul.f32 %v4370, %v4394
  %v4407 = vmul.f32 %v4371, %v4404
  %v4408 = vmul.f32 %v4354, %v4405
  %v4409 = vmul.f32 %v4355, %v4406
  %v4410 = vmul.f32 %v4356, %v4407
  %4414 = vrot.lane.b32.xlu0 %v4408, 1
  %v4415 = vpop.permute.xlu0 %4414
  %4416 = vrot.lane.b32.xlu0 %v4409, 1
  %v4417 = vpop.permute.xlu0 %4416
  %4418 = vrot.lane.b32.xlu0 %v4410, 1
  %v4419 = vpop.permute.xlu0 %4418
  %v4423 = vsub.f32 %v4369, %v4415
  %v4424 = vsub.f32 %v4370, %v4417
  %v4425 = vsub.f32 %v4371, %v4419
  %4427 = vset.pattern.permute.xlu0 2
  %4428 = vperm.xlu0 %4427, %v4405
  %v4429 = vpop.permute.xlu0 %4428
  %4432 = vset.pattern.permute.xlu0 2
  %4433 = vperm.xlu0 %4432, %v4406
  %v4434 = vpop.permute.xlu0 %4433
  %4437 = vset.pattern.permute.xlu0 2
  %4438 = vperm.xlu0 %4437, %v4407
  %v4439 = vpop.permute.xlu0 %4438
  %v4441 = vmul.f32 %v4258, %v4429
  %v4442 = vmul.f32 %v4259, %v4429
  %v4443 = vmul.f32 %v4260, %v4429
  %v4444 = vmul.f32 %v4261, %v4429
  %v4445 = vmul.f32 %v4262, %v4429
  %v4446 = vmul.f32 %v4263, %v4429
  %v4447 = vmul.f32 %v4264, %v4429
  %v4448 = vmul.f32 %v4265, %v4434
  %v4449 = vmul.f32 %v4266, %v4434
  %v4450 = vmul.f32 %v4267, %v4434
  %v4451 = vmul.f32 %v4268, %v4434
  %v4452 = vmul.f32 %v4269, %v4434
  %v4453 = vmul.f32 %v4270, %v4434
  %v4454 = vmul.f32 %v4271, %v4434
  %v4455 = vmul.f32 %v4272, %v4439
  %v4456 = vmul.f32 %v4273, %v4439
  %v4457 = vmul.f32 %v4274, %v4439
  %v4458 = vmul.f32 %v4275, %v4439
  %v4459 = vmul.f32 %v4276, %v4439
  %v4460 = vmul.f32 %v4277, %v4439
  %v4461 = vmul.f32 %v4278, %v4439
  %4463 = vset.pattern.permute.xlu0 3
  %4464 = vperm.xlu0 %4463, %v4423
  %v4465 = vpop.permute.xlu0 %4464
  %4468 = vset.pattern.permute.xlu0 3
  %4469 = vperm.xlu0 %4468, %v4424
  %v4470 = vpop.permute.xlu0 %4469
  %4473 = vset.pattern.permute.xlu0 3
  %4474 = vperm.xlu0 %4473, %v4425
  %v4475 = vpop.permute.xlu0 %4474
  %v4477 = vadd.f32 %v4441, %v4465
  %v4478 = vadd.f32 %v4442, %v4465
  %v4479 = vadd.f32 %v4443, %v4465
  %v4480 = vadd.f32 %v4444, %v4465
  %v4481 = vadd.f32 %v4445, %v4465
  %v4482 = vadd.f32 %v4446, %v4465
  %v4483 = vadd.f32 %v4447, %v4465
  %v4484 = vadd.f32 %v4448, %v4470
  %v4485 = vadd.f32 %v4449, %v4470
  %v4486 = vadd.f32 %v4450, %v4470
  %v4487 = vadd.f32 %v4451, %v4470
  %v4488 = vadd.f32 %v4452, %v4470
  %v4489 = vadd.f32 %v4453, %v4470
  %v4490 = vadd.f32 %v4454, %v4470
  %v4491 = vadd.f32 %v4455, %v4475
  %v4492 = vadd.f32 %v4456, %v4475
  %v4493 = vadd.f32 %v4457, %v4475
  %v4494 = vadd.f32 %v4458, %v4475
  %v4495 = vadd.f32 %v4459, %v4475
  %v4496 = vadd.f32 %v4460, %v4475
  %v4497 = vadd.f32 %v4461, %v4475
  %4498 = vst [vmem:[#allocation3 + $0x150] sm:$0xff] %v4477
  %4499 = vst [vmem:[#allocation3 + $0x158] sm:$0xff] %v4478
  %4500 = vst [vmem:[#allocation3 + $0x160] sm:$0xff] %v4479
  %4501 = vst [vmem:[#allocation3 + $0x168] sm:$0xff] %v4480
  %4502 = vst [vmem:[#allocation3 + $0x170] sm:$0xff] %v4481
  %4503 = vst [vmem:[#allocation3 + $0x178] sm:$0xff] %v4482
  %4504 = vst.msk [vmem:[#allocation3 + $0x180] sm:$0xff] %vm222, %v4483
  %4505 = vst [vmem:[#allocation3 + $0x188] sm:$0xff] %v4484
  %4506 = vst [vmem:[#allocation3 + $0x190] sm:$0xff] %v4485
  %4507 = vst [vmem:[#allocation3 + $0x198] sm:$0xff] %v4486
  %4508 = vst [vmem:[#allocation3 + $0x1a0] sm:$0xff] %v4487
  %4509 = vst [vmem:[#allocation3 + $0x1a8] sm:$0xff] %v4488
  %4510 = vst [vmem:[#allocation3 + $0x1b0] sm:$0xff] %v4489
  %4511 = vst.msk [vmem:[#allocation3 + $0x1b8] sm:$0xff] %vm222, %v4490
  %4512 = vst [vmem:[#allocation3 + $0x1c0] sm:$0xff] %v4491
  %4513 = vst [vmem:[#allocation3 + $0x1c8] sm:$0xff] %v4492
  %4514 = vst [vmem:[#allocation3 + $0x1d0] sm:$0xff] %v4493
  %4515 = vst [vmem:[#allocation3 + $0x1d8] sm:$0xff] %v4494
  %4516 = vst [vmem:[#allocation3 + $0x1e0] sm:$0xff] %v4495
  %4517 = vst [vmem:[#allocation3 + $0x1e8] sm:$0xff] %v4496
  %4518 = vst.msk [vmem:[#allocation3 + $0x1f0] sm:$0xff] %vm222, %v4497
  %s4519 = scalar_lea.vmem [#allocation3], 336
  %s4520 = scalar_lea.hbm %s3, 336
  %s4521 = scalar_lea.sflag [#allocation7], 2
  // Predicated region
  $region61: #{tpu_custom_call.1} parent=0 // pred_check
    _
  $region62: #{tpu_custom_call.1} parent=0 // pred_check_branch
    %4523 = sbr.rel target = $region64
  $region63: #{tpu_custom_call.1} parent=0 // pred_region
    %4524 = sst [smem:[#allocation12]] [#allocation33]
    %4525 = sst [smem:[#allocation13]] [#allocation32]
  $region64: #{tpu_custom_call.1} parent=0 // pred_fallthru
    _
  %4527 = shalt.err (0)
  %s4529 = sshll.u32 %s4519, 4
  %s4530 = int_to_ptr.vmem [resolvable:$true] %s4529
  %s4531 = sshll.u32 %s4520, 4
  %s4532 = int_to_ptr.hbm [resolvable:$true] %s4531
  %4534 = dma.vmem_to_hbm [thread:$0]  %s4530, 2688, %s4532, %s4521
  %v4535 = vld [vmem:[#allocation3 + $0x1f8] sm:$0xff]
  %v4536 = vld [vmem:[#allocation3 + $0x200] sm:$0xff]
  %v4537 = vld [vmem:[#allocation3 + $0x208] sm:$0xff]
  %v4538 = vld [vmem:[#allocation3 + $0x210] sm:$0xff]
  %v4539 = vld [vmem:[#allocation3 + $0x218] sm:$0xff]
  %v4540 = vld [vmem:[#allocation3 + $0x220] sm:$0xff]
  %v4541 = vld [vmem:[#allocation3 + $0x228] sm:$0xff]
  %v4542 = vld [vmem:[#allocation3 + $0x230] sm:$0xff]
  %v4543 = vld [vmem:[#allocation3 + $0x238] sm:$0xff]
  %v4544 = vld [vmem:[#allocation3 + $0x240] sm:$0xff]
  %v4545 = vld [vmem:[#allocation3 + $0x248] sm:$0xff]
  %v4546 = vld [vmem:[#allocation3 + $0x250] sm:$0xff]
  %v4547 = vld [vmem:[#allocation3 + $0x258] sm:$0xff]
  %v4548 = vld [vmem:[#allocation3 + $0x260] sm:$0xff]
  %v4549 = vld [vmem:[#allocation3 + $0x268] sm:$0xff]
  %v4550 = vld [vmem:[#allocation3 + $0x270] sm:$0xff]
  %v4551 = vld [vmem:[#allocation3 + $0x278] sm:$0xff]
  %v4552 = vld [vmem:[#allocation3 + $0x280] sm:$0xff]
  %v4553 = vld [vmem:[#allocation3 + $0x288] sm:$0xff]
  %v4554 = vld [vmem:[#allocation3 + $0x290] sm:$0xff]
  %v4555 = vld [vmem:[#allocation3 + $0x298] sm:$0xff]
  %v4556 = vadd.f32 %v4535, %v4536
  %v4557 = vadd.f32 %v4556, %v4537
  %v4558 = vadd.f32 %v4557, %v4538
  %v4559 = vadd.f32 %v4558, %v4539
  %v4560 = vadd.f32 %v4559, %v4540
  %v4561 = vsel %vm222, %v4541, 0.0
  %v4562 = vadd.f32 %v4560, %v4561
  %4563 = vadd.xlane.f32.xlu0 %v4562
  %v4564 = vpop.xlane.xlu0 %4563
  %v4565 = vadd.f32 %v4542, %v4543
  %v4566 = vadd.f32 %v4565, %v4544
  %v4567 = vadd.f32 %v4566, %v4545
  %v4568 = vadd.f32 %v4567, %v4546
  %v4569 = vadd.f32 %v4568, %v4547
  %v4570 = vsel %vm222, %v4548, 0.0
  %v4571 = vadd.f32 %v4569, %v4570
  %4572 = vadd.xlane.f32.xlu0 %v4571
  %v4573 = vpop.xlane.xlu0 %4572
  %v4574 = vadd.f32 %v4549, %v4550
  %v4575 = vadd.f32 %v4574, %v4551
  %v4576 = vadd.f32 %v4575, %v4552
  %v4577 = vadd.f32 %v4576, %v4553
  %v4578 = vadd.f32 %v4577, %v4554
  %v4579 = vsel %vm222, %v4555, 0.0
  %v4580 = vadd.f32 %v4578, %v4579
  %4581 = vadd.xlane.f32.xlu0 %v4580
  %v4582 = vpop.xlane.xlu0 %4581
  %v4583 = vmul.f32 %v4535, %v4535
  %v4584 = vmul.f32 %v4536, %v4536
  %v4585 = vmul.f32 %v4537, %v4537
  %v4586 = vmul.f32 %v4538, %v4538
  %v4587 = vmul.f32 %v4539, %v4539
  %v4588 = vmul.f32 %v4540, %v4540
  %v4589 = vmul.f32 %v4541, %v4541
  %v4590 = vmul.f32 %v4542, %v4542
  %v4591 = vmul.f32 %v4543, %v4543
  %v4592 = vmul.f32 %v4544, %v4544
  %v4593 = vmul.f32 %v4545, %v4545
  %v4594 = vmul.f32 %v4546, %v4546
  %v4595 = vmul.f32 %v4547, %v4547
  %v4596 = vmul.f32 %v4548, %v4548
  %v4597 = vmul.f32 %v4549, %v4549
  %v4598 = vmul.f32 %v4550, %v4550
  %v4599 = vmul.f32 %v4551, %v4551
  %v4600 = vmul.f32 %v4552, %v4552
  %v4601 = vmul.f32 %v4553, %v4553
  %v4602 = vmul.f32 %v4554, %v4554
  %v4603 = vmul.f32 %v4555, %v4555
  %v4604 = vadd.f32 %v4583, %v4584
  %v4605 = vadd.f32 %v4604, %v4585
  %v4606 = vadd.f32 %v4605, %v4586
  %v4607 = vadd.f32 %v4606, %v4587
  %v4608 = vadd.f32 %v4607, %v4588
  %v4609 = vsel %vm222, %v4589, 0.0
  %v4610 = vadd.f32 %v4608, %v4609
  %4611 = vadd.xlane.f32.xlu0 %v4610
  %v4612 = vpop.xlane.xlu0 %4611
  %v4613 = vadd.f32 %v4590, %v4591
  %v4614 = vadd.f32 %v4613, %v4592
  %v4615 = vadd.f32 %v4614, %v4593
  %v4616 = vadd.f32 %v4615, %v4594
  %v4617 = vadd.f32 %v4616, %v4595
  %v4618 = vsel %vm222, %v4596, 0.0
  %v4619 = vadd.f32 %v4617, %v4618
  %4620 = vadd.xlane.f32.xlu0 %v4619
  %v4621 = vpop.xlane.xlu0 %4620
  %v4622 = vadd.f32 %v4597, %v4598
  %v4623 = vadd.f32 %v4622, %v4599
  %v4624 = vadd.f32 %v4623, %v4600
  %v4625 = vadd.f32 %v4624, %v4601
  %v4626 = vadd.f32 %v4625, %v4602
  %v4627 = vsel %vm222, %v4603, 0.0
  %v4628 = vadd.f32 %v4626, %v4627
  %4629 = vadd.xlane.f32.xlu0 %v4628
  %v4630 = vpop.xlane.xlu0 %4629
  %v4631 = vmul.f32 %v4564, 0.0012755102
  %v4632 = vmul.f32 %v4573, 0.0012755102
  %v4633 = vmul.f32 %v4582, 0.0012755102
  %v4634 = vmul.f32 %v4612, 0.0012755102
  %v4635 = vmul.f32 %v4621, 0.0012755102
  %v4636 = vmul.f32 %v4630, 0.0012755102
  %v4637 = vmul.f32 %v4631, %v4631
  %v4638 = vmul.f32 %v4632, %v4632
  %v4639 = vmul.f32 %v4633, %v4633
  %v4640 = vsub.f32 %v4634, %v4637
  %v4641 = vsub.f32 %v4635, %v4638
  %v4642 = vsub.f32 %v4636, %v4639
  %v4643 = vmax.f32 %v4640, 0.0
  %v4644 = vmax.f32 %v4641, 0.0
  %v4645 = vmax.f32 %v4642, 0.0
  %v4646 = vld [vmem:[#allocation5 + $0x48] sm:$0xff]
  %v4647 = vld [vmem:[#allocation5 + $0x50] sm:$0xff]
  %v4648 = vld [vmem:[#allocation5 + $0x58] sm:$0xff]
  %v4649 = vadd.f32 %v4643, 1e-05
  %v4650 = vadd.f32 %v4644, 1e-05
  %v4651 = vadd.f32 %v4645, 1e-05
  %v4652 = vrsqrt.pop %v4649
  %v4653 = vmul.f32 %v4652, %v4649
  %v4654 = vmul.f32 %v4653, %v4652
  %v4655 = vmul.f32 0.5, %v4654
  %v4656 = vsub.f32 1.5, %v4655
  %v4657 = vmul.f32 %v4652, %v4656
  %vm4658 = vweird.f32 %v4649
  %vm4659 = vweird.f32 %v4652
  %vm4660 = vmor %vm4658, %vm4659
  %v4661 = vsel %vm4660, %v4652, %v4657
  %v4662 = vrsqrt.pop %v4650
  %v4663 = vmul.f32 %v4662, %v4650
  %v4664 = vmul.f32 %v4663, %v4662
  %v4665 = vmul.f32 0.5, %v4664
  %v4666 = vsub.f32 1.5, %v4665
  %v4667 = vmul.f32 %v4662, %v4666
  %vm4668 = vweird.f32 %v4650
  %vm4669 = vweird.f32 %v4662
  %vm4670 = vmor %vm4668, %vm4669
  %v4671 = vsel %vm4670, %v4662, %v4667
  %v4672 = vrsqrt.pop %v4651
  %v4673 = vmul.f32 %v4672, %v4651
  %v4674 = vmul.f32 %v4673, %v4672
  %v4675 = vmul.f32 0.5, %v4674
  %v4676 = vsub.f32 1.5, %v4675
  %v4677 = vmul.f32 %v4672, %v4676
  %vm4678 = vweird.f32 %v4651
  %vm4679 = vweird.f32 %v4672
  %vm4680 = vmor %vm4678, %vm4679
  %v4681 = vsel %vm4680, %v4672, %v4677
  %v4682 = vmul.f32 %v4646, %v4661
  %v4683 = vmul.f32 %v4647, %v4671
  %v4684 = vmul.f32 %v4648, %v4681
  %v4685 = vmul.f32 %v4631, %v4682
  %v4686 = vmul.f32 %v4632, %v4683
  %v4687 = vmul.f32 %v4633, %v4684
  %4691 = vrot.lane.b32.xlu0 %v4685, 1
  %v4692 = vpop.permute.xlu0 %4691
  %4693 = vrot.lane.b32.xlu0 %v4686, 1
  %v4694 = vpop.permute.xlu0 %4693
  %4695 = vrot.lane.b32.xlu0 %v4687, 1
  %v4696 = vpop.permute.xlu0 %4695
  %v4700 = vsub.f32 %v4646, %v4692
  %v4701 = vsub.f32 %v4647, %v4694
  %v4702 = vsub.f32 %v4648, %v4696
  %4704 = vset.pattern.permute.xlu0 2
  %4705 = vperm.xlu0 %4704, %v4682
  %v4706 = vpop.permute.xlu0 %4705
  %4709 = vset.pattern.permute.xlu0 2
  %4710 = vperm.xlu0 %4709, %v4683
  %v4711 = vpop.permute.xlu0 %4710
  %4714 = vset.pattern.permute.xlu0 2
  %4715 = vperm.xlu0 %4714, %v4684
  %v4716 = vpop.permute.xlu0 %4715
  %v4718 = vmul.f32 %v4535, %v4706
  %v4719 = vmul.f32 %v4536, %v4706
  %v4720 = vmul.f32 %v4537, %v4706
  %v4721 = vmul.f32 %v4538, %v4706
  %v4722 = vmul.f32 %v4539, %v4706
  %v4723 = vmul.f32 %v4540, %v4706
  %v4724 = vmul.f32 %v4541, %v4706
  %v4725 = vmul.f32 %v4542, %v4711
  %v4726 = vmul.f32 %v4543, %v4711
  %v4727 = vmul.f32 %v4544, %v4711
  %v4728 = vmul.f32 %v4545, %v4711
  %v4729 = vmul.f32 %v4546, %v4711
  %v4730 = vmul.f32 %v4547, %v4711
  %v4731 = vmul.f32 %v4548, %v4711
  %v4732 = vmul.f32 %v4549, %v4716
  %v4733 = vmul.f32 %v4550, %v4716
  %v4734 = vmul.f32 %v4551, %v4716
  %v4735 = vmul.f32 %v4552, %v4716
  %v4736 = vmul.f32 %v4553, %v4716
  %v4737 = vmul.f32 %v4554, %v4716
  %v4738 = vmul.f32 %v4555, %v4716
  %4740 = vset.pattern.permute.xlu0 3
  %4741 = vperm.xlu0 %4740, %v4700
  %v4742 = vpop.permute.xlu0 %4741
  %4745 = vset.pattern.permute.xlu0 3
  %4746 = vperm.xlu0 %4745, %v4701
  %v4747 = vpop.permute.xlu0 %4746
  %4750 = vset.pattern.permute.xlu0 3
  %4751 = vperm.xlu0 %4750, %v4702
  %v4752 = vpop.permute.xlu0 %4751
  %v4754 = vadd.f32 %v4718, %v4742
  %v4755 = vadd.f32 %v4719, %v4742
  %v4756 = vadd.f32 %v4720, %v4742
  %v4757 = vadd.f32 %v4721, %v4742
  %v4758 = vadd.f32 %v4722, %v4742
  %v4759 = vadd.f32 %v4723, %v4742
  %v4760 = vadd.f32 %v4724, %v4742
  %v4761 = vadd.f32 %v4725, %v4747
  %v4762 = vadd.f32 %v4726, %v4747
  %v4763 = vadd.f32 %v4727, %v4747
  %v4764 = vadd.f32 %v4728, %v4747
  %v4765 = vadd.f32 %v4729, %v4747
  %v4766 = vadd.f32 %v4730, %v4747
  %v4767 = vadd.f32 %v4731, %v4747
  %v4768 = vadd.f32 %v4732, %v4752
  %v4769 = vadd.f32 %v4733, %v4752
  %v4770 = vadd.f32 %v4734, %v4752
  %v4771 = vadd.f32 %v4735, %v4752
  %v4772 = vadd.f32 %v4736, %v4752
  %v4773 = vadd.f32 %v4737, %v4752
  %v4774 = vadd.f32 %v4738, %v4752
  %4775 = vst [vmem:[#allocation3 + $0x1f8] sm:$0xff] %v4754
  %4776 = vst [vmem:[#allocation3 + $0x200] sm:$0xff] %v4755
  %4777 = vst [vmem:[#allocation3 + $0x208] sm:$0xff] %v4756
  %4778 = vst [vmem:[#allocation3 + $0x210] sm:$0xff] %v4757
  %4779 = vst [vmem:[#allocation3 + $0x218] sm:$0xff] %v4758
  %4780 = vst [vmem:[#allocation3 + $0x220] sm:$0xff] %v4759
  %4781 = vst.msk [vmem:[#allocation3 + $0x228] sm:$0xff] %vm222, %v4760
  %4782 = vst [vmem:[#allocation3 + $0x230] sm:$0xff] %v4761
  %4783 = vst [vmem:[#allocation3 + $0x238] sm:$0xff] %v4762
  %4784 = vst [vmem:[#allocation3 + $0x240] sm:$0xff] %v4763
  %4785 = vst [vmem:[#allocation3 + $0x248] sm:$0xff] %v4764
  %4786 = vst [vmem:[#allocation3 + $0x250] sm:$0xff] %v4765
  %4787 = vst [vmem:[#allocation3 + $0x258] sm:$0xff] %v4766
  %4788 = vst.msk [vmem:[#allocation3 + $0x260] sm:$0xff] %vm222, %v4767
  %4789 = vst [vmem:[#allocation3 + $0x268] sm:$0xff] %v4768
  %4790 = vst [vmem:[#allocation3 + $0x270] sm:$0xff] %v4769
  %4791 = vst [vmem:[#allocation3 + $0x278] sm:$0xff] %v4770
  %4792 = vst [vmem:[#allocation3 + $0x280] sm:$0xff] %v4771
  %4793 = vst [vmem:[#allocation3 + $0x288] sm:$0xff] %v4772
  %4794 = vst [vmem:[#allocation3 + $0x290] sm:$0xff] %v4773
  %4795 = vst.msk [vmem:[#allocation3 + $0x298] sm:$0xff] %vm222, %v4774
  %s4796 = scalar_lea.vmem [#allocation3], 504
  %s4797 = scalar_lea.hbm %s3, 504
  %s4798 = scalar_lea.sflag [#allocation7], 3
  // Predicated region
  $region65: #{tpu_custom_call.1} parent=0 // pred_check
    _
  $region66: #{tpu_custom_call.1} parent=0 // pred_check_branch
    %4800 = sbr.rel target = $region68
  $region67: #{tpu_custom_call.1} parent=0 // pred_region
    %4801 = sst [smem:[#allocation12]] [#allocation35]
    %4802 = sst [smem:[#allocation13]] [#allocation34]
  $region68: #{tpu_custom_call.1} parent=0 // pred_fallthru
    _
  %4804 = shalt.err (0)
  %s4806 = sshll.u32 %s4796, 4
  %s4807 = int_to_ptr.vmem [resolvable:$true] %s4806
  %s4808 = sshll.u32 %s4797, 4
  %s4809 = int_to_ptr.hbm [resolvable:$true] %s4808
  %4811 = dma.vmem_to_hbm [thread:$0]  %s4807, 2688, %s4809, %s4798
  %v4812 = vld [vmem:[#allocation3 + $0x2a0] sm:$0xff]
  %v4813 = vld [vmem:[#allocation3 + $0x2a8] sm:$0xff]
  %v4814 = vld [vmem:[#allocation3 + $0x2b0] sm:$0xff]
  %v4815 = vld [vmem:[#allocation3 + $0x2b8] sm:$0xff]
  %v4816 = vld [vmem:[#allocation3 + $0x2c0] sm:$0xff]
  %v4817 = vld [vmem:[#allocation3 + $0x2c8] sm:$0xff]
  %v4818 = vld [vmem:[#allocation3 + $0x2d0] sm:$0xff]
  %v4819 = vld [vmem:[#allocation3 + $0x2d8] sm:$0xff]
  %v4820 = vld [vmem:[#allocation3 + $0x2e0] sm:$0xff]
  %v4821 = vld [vmem:[#allocation3 + $0x2e8] sm:$0xff]
  %v4822 = vld [vmem:[#allocation3 + $0x2f0] sm:$0xff]
  %v4823 = vld [vmem:[#allocation3 + $0x2f8] sm:$0xff]
  %v4824 = vld [vmem:[#allocation3 + $0x300] sm:$0xff]
  %v4825 = vld [vmem:[#allocation3 + $0x308] sm:$0xff]
  %v4826 = vld [vmem:[#allocation3 + $0x310] sm:$0xff]
  %v4827 = vld [vmem:[#allocation3 + $0x318] sm:$0xff]
  %v4828 = vld [vmem:[#allocation3 + $0x320] sm:$0xff]
  %v4829 = vld [vmem:[#allocation3 + $0x328] sm:$0xff]
  %v4830 = vld [vmem:[#allocation3 + $0x330] sm:$0xff]
  %v4831 = vld [vmem:[#allocation3 + $0x338] sm:$0xff]
  %v4832 = vld [vmem:[#allocation3 + $0x340] sm:$0xff]
  %v4833 = vadd.f32 %v4812, %v4813
  %v4834 = vadd.f32 %v4833, %v4814
  %v4835 = vadd.f32 %v4834, %v4815
  %v4836 = vadd.f32 %v4835, %v4816
  %v4837 = vadd.f32 %v4836, %v4817
  %v4838 = vsel %vm222, %v4818, 0.0
  %v4839 = vadd.f32 %v4837, %v4838
  %4840 = vadd.xlane.f32.xlu0 %v4839
  %v4841 = vpop.xlane.xlu0 %4840
  %v4842 = vadd.f32 %v4819, %v4820
  %v4843 = vadd.f32 %v4842, %v4821
  %v4844 = vadd.f32 %v4843, %v4822
  %v4845 = vadd.f32 %v4844, %v4823
  %v4846 = vadd.f32 %v4845, %v4824
  %v4847 = vsel %vm222, %v4825, 0.0
  %v4848 = vadd.f32 %v4846, %v4847
  %4849 = vadd.xlane.f32.xlu0 %v4848
  %v4850 = vpop.xlane.xlu0 %4849
  %v4851 = vadd.f32 %v4826, %v4827
  %v4852 = vadd.f32 %v4851, %v4828
  %v4853 = vadd.f32 %v4852, %v4829
  %v4854 = vadd.f32 %v4853, %v4830
  %v4855 = vadd.f32 %v4854, %v4831
  %v4856 = vsel %vm222, %v4832, 0.0
  %v4857 = vadd.f32 %v4855, %v4856
  %4858 = vadd.xlane.f32.xlu0 %v4857
  %v4859 = vpop.xlane.xlu0 %4858
  %v4860 = vmul.f32 %v4812, %v4812
  %v4861 = vmul.f32 %v4813, %v4813
  %v4862 = vmul.f32 %v4814, %v4814
  %v4863 = vmul.f32 %v4815, %v4815
  %v4864 = vmul.f32 %v4816, %v4816
  %v4865 = vmul.f32 %v4817, %v4817
  %v4866 = vmul.f32 %v4818, %v4818
  %v4867 = vmul.f32 %v4819, %v4819
  %v4868 = vmul.f32 %v4820, %v4820
  %v4869 = vmul.f32 %v4821, %v4821
  %v4870 = vmul.f32 %v4822, %v4822
  %v4871 = vmul.f32 %v4823, %v4823
  %v4872 = vmul.f32 %v4824, %v4824
  %v4873 = vmul.f32 %v4825, %v4825
  %v4874 = vmul.f32 %v4826, %v4826
  %v4875 = vmul.f32 %v4827, %v4827
  %v4876 = vmul.f32 %v4828, %v4828
  %v4877 = vmul.f32 %v4829, %v4829
  %v4878 = vmul.f32 %v4830, %v4830
  %v4879 = vmul.f32 %v4831, %v4831
  %v4880 = vmul.f32 %v4832, %v4832
  %v4881 = vadd.f32 %v4860, %v4861
  %v4882 = vadd.f32 %v4881, %v4862
  %v4883 = vadd.f32 %v4882, %v4863
  %v4884 = vadd.f32 %v4883, %v4864
  %v4885 = vadd.f32 %v4884, %v4865
  %v4886 = vsel %vm222, %v4866, 0.0
  %v4887 = vadd.f32 %v4885, %v4886
  %4888 = vadd.xlane.f32.xlu0 %v4887
  %v4889 = vpop.xlane.xlu0 %4888
  %v4890 = vadd.f32 %v4867, %v4868
  %v4891 = vadd.f32 %v4890, %v4869
  %v4892 = vadd.f32 %v4891, %v4870
  %v4893 = vadd.f32 %v4892, %v4871
  %v4894 = vadd.f32 %v4893, %v4872
  %v4895 = vsel %vm222, %v4873, 0.0
  %v4896 = vadd.f32 %v4894, %v4895
  %4897 = vadd.xlane.f32.xlu0 %v4896
  %v4898 = vpop.xlane.xlu0 %4897
  %v4899 = vadd.f32 %v4874, %v4875
  %v4900 = vadd.f32 %v4899, %v4876
  %v4901 = vadd.f32 %v4900, %v4877
  %v4902 = vadd.f32 %v4901, %v4878
  %v4903 = vadd.f32 %v4902, %v4879
  %v4904 = vsel %vm222, %v4880, 0.0
  %v4905 = vadd.f32 %v4903, %v4904
  %4906 = vadd.xlane.f32.xlu0 %v4905
  %v4907 = vpop.xlane.xlu0 %4906
  %v4908 = vmul.f32 %v4841, 0.0012755102
  %v4909 = vmul.f32 %v4850, 0.0012755102
  %v4910 = vmul.f32 %v4859, 0.0012755102
  %v4911 = vmul.f32 %v4889, 0.0012755102
  %v4912 = vmul.f32 %v4898, 0.0012755102
  %v4913 = vmul.f32 %v4907, 0.0012755102
  %v4914 = vmul.f32 %v4908, %v4908
  %v4915 = vmul.f32 %v4909, %v4909
  %v4916 = vmul.f32 %v4910, %v4910
  %v4917 = vsub.f32 %v4911, %v4914
  %v4918 = vsub.f32 %v4912, %v4915
  %v4919 = vsub.f32 %v4913, %v4916
  %v4920 = vmax.f32 %v4917, 0.0
  %v4921 = vmax.f32 %v4918, 0.0
  %v4922 = vmax.f32 %v4919, 0.0
  %v4923 = vld [vmem:[#allocation5 + $0x60] sm:$0xff]
  %v4924 = vld [vmem:[#allocation5 + $0x68] sm:$0xff]
  %v4925 = vld [vmem:[#allocation5 + $0x70] sm:$0xff]
  %v4926 = vadd.f32 %v4920, 1e-05
  %v4927 = vadd.f32 %v4921, 1e-05
  %v4928 = vadd.f32 %v4922, 1e-05
  %v4929 = vrsqrt.pop %v4926
  %v4930 = vmul.f32 %v4929, %v4926
  %v4931 = vmul.f32 %v4930, %v4929
  %v4932 = vmul.f32 0.5, %v4931
  %v4933 = vsub.f32 1.5, %v4932
  %v4934 = vmul.f32 %v4929, %v4933
  %vm4935 = vweird.f32 %v4926
  %vm4936 = vweird.f32 %v4929
  %vm4937 = vmor %vm4935, %vm4936
  %v4938 = vsel %vm4937, %v4929, %v4934
  %v4939 = vrsqrt.pop %v4927
  %v4940 = vmul.f32 %v4939, %v4927
  %v4941 = vmul.f32 %v4940, %v4939
  %v4942 = vmul.f32 0.5, %v4941
  %v4943 = vsub.f32 1.5, %v4942
  %v4944 = vmul.f32 %v4939, %v4943
  %vm4945 = vweird.f32 %v4927
  %vm4946 = vweird.f32 %v4939
  %vm4947 = vmor %vm4945, %vm4946
  %v4948 = vsel %vm4947, %v4939, %v4944
  %v4949 = vrsqrt.pop %v4928
  %v4950 = vmul.f32 %v4949, %v4928
  %v4951 = vmul.f32 %v4950, %v4949
  %v4952 = vmul.f32 0.5, %v4951
  %v4953 = vsub.f32 1.5, %v4952
  %v4954 = vmul.f32 %v4949, %v4953
  %vm4955 = vweird.f32 %v4928
  %vm4956 = vweird.f32 %v4949
  %vm4957 = vmor %vm4955, %vm4956
  %v4958 = vsel %vm4957, %v4949, %v4954
  %v4959 = vmul.f32 %v4923, %v4938
  %v4960 = vmul.f32 %v4924, %v4948
  %v4961 = vmul.f32 %v4925, %v4958
  %v4962 = vmul.f32 %v4908, %v4959
  %v4963 = vmul.f32 %v4909, %v4960
  %v4964 = vmul.f32 %v4910, %v4961
  %4968 = vrot.lane.b32.xlu0 %v4962, 1
  %v4969 = vpop.permute.xlu0 %4968
  %4970 = vrot.lane.b32.xlu0 %v4963, 1
  %v4971 = vpop.permute.xlu0 %4970
  %4972 = vrot.lane.b32.xlu0 %v4964, 1
  %v4973 = vpop.permute.xlu0 %4972
  %v4977 = vsub.f32 %v4923, %v4969
  %v4978 = vsub.f32 %v4924, %v4971
  %v4979 = vsub.f32 %v4925, %v4973
  %4981 = vset.pattern.permute.xlu0 2
  %4982 = vperm.xlu0 %4981, %v4959
  %v4983 = vpop.permute.xlu0 %4982
  %4986 = vset.pattern.permute.xlu0 2
  %4987 = vperm.xlu0 %4986, %v4960
  %v4988 = vpop.permute.xlu0 %4987
  %4991 = vset.pattern.permute.xlu0 2
  %4992 = vperm.xlu0 %4991, %v4961
  %v4993 = vpop.permute.xlu0 %4992
  %v4995 = vmul.f32 %v4812, %v4983
  %v4996 = vmul.f32 %v4813, %v4983
  %v4997 = vmul.f32 %v4814, %v4983
  %v4998 = vmul.f32 %v4815, %v4983
  %v4999 = vmul.f32 %v4816, %v4983
  %v5000 = vmul.f32 %v4817, %v4983
  %v5001 = vmul.f32 %v4818, %v4983
  %v5002 = vmul.f32 %v4819, %v4988
  %v5003 = vmul.f32 %v4820, %v4988
  %v5004 = vmul.f32 %v4821, %v4988
  %v5005 = vmul.f32 %v4822, %v4988
  %v5006 = vmul.f32 %v4823, %v4988
  %v5007 = vmul.f32 %v4824, %v4988
  %v5008 = vmul.f32 %v4825, %v4988
  %v5009 = vmul.f32 %v4826, %v4993
  %v5010 = vmul.f32 %v4827, %v4993
  %v5011 = vmul.f32 %v4828, %v4993
  %v5012 = vmul.f32 %v4829, %v4993
  %v5013 = vmul.f32 %v4830, %v4993
  %v5014 = vmul.f32 %v4831, %v4993
  %v5015 = vmul.f32 %v4832, %v4993
  %5017 = vset.pattern.permute.xlu0 3
  %5018 = vperm.xlu0 %5017, %v4977
  %v5019 = vpop.permute.xlu0 %5018
  %5022 = vset.pattern.permute.xlu0 3
  %5023 = vperm.xlu0 %5022, %v4978
  %v5024 = vpop.permute.xlu0 %5023
  %5027 = vset.pattern.permute.xlu0 3
  %5028 = vperm.xlu0 %5027, %v4979
  %v5029 = vpop.permute.xlu0 %5028
  %v5031 = vadd.f32 %v4995, %v5019
  %v5032 = vadd.f32 %v4996, %v5019
  %v5033 = vadd.f32 %v4997, %v5019
  %v5034 = vadd.f32 %v4998, %v5019
  %v5035 = vadd.f32 %v4999, %v5019
  %v5036 = vadd.f32 %v5000, %v5019
  %v5037 = vadd.f32 %v5001, %v5019
  %v5038 = vadd.f32 %v5002, %v5024
  %v5039 = vadd.f32 %v5003, %v5024
  %v5040 = vadd.f32 %v5004, %v5024
  %v5041 = vadd.f32 %v5005, %v5024
  %v5042 = vadd.f32 %v5006, %v5024
  %v5043 = vadd.f32 %v5007, %v5024
  %v5044 = vadd.f32 %v5008, %v5024
  %v5045 = vadd.f32 %v5009, %v5029
  %v5046 = vadd.f32 %v5010, %v5029
  %v5047 = vadd.f32 %v5011, %v5029
  %v5048 = vadd.f32 %v5012, %v5029
  %v5049 = vadd.f32 %v5013, %v5029
  %v5050 = vadd.f32 %v5014, %v5029
  %v5051 = vadd.f32 %v5015, %v5029
  %5052 = vst [vmem:[#allocation3 + $0x2a0] sm:$0xff] %v5031
  %5053 = vst [vmem:[#allocation3 + $0x2a8] sm:$0xff] %v5032
  %5054 = vst [vmem:[#allocation3 + $0x2b0] sm:$0xff] %v5033
  %5055 = vst [vmem:[#allocation3 + $0x2b8] sm:$0xff] %v5034
  %5056 = vst [vmem:[#allocation3 + $0x2c0] sm:$0xff] %v5035
  %5057 = vst [vmem:[#allocation3 + $0x2c8] sm:$0xff] %v5036
  %5058 = vst.msk [vmem:[#allocation3 + $0x2d0] sm:$0xff] %vm222, %v5037
  %5059 = vst [vmem:[#allocation3 + $0x2d8] sm:$0xff] %v5038
  %5060 = vst [vmem:[#allocation3 + $0x2e0] sm:$0xff] %v5039
  %5061 = vst [vmem:[#allocation3 + $0x2e8] sm:$0xff] %v5040
  %5062 = vst [vmem:[#allocation3 + $0x2f0] sm:$0xff] %v5041
  %5063 = vst [vmem:[#allocation3 + $0x2f8] sm:$0xff] %v5042
  %5064 = vst [vmem:[#allocation3 + $0x300] sm:$0xff] %v5043
  %5065 = vst.msk [vmem:[#allocation3 + $0x308] sm:$0xff] %vm222, %v5044
  %5066 = vst [vmem:[#allocation3 + $0x310] sm:$0xff] %v5045
  %5067 = vst [vmem:[#allocation3 + $0x318] sm:$0xff] %v5046
  %5068 = vst [vmem:[#allocation3 + $0x320] sm:$0xff] %v5047
  %5069 = vst [vmem:[#allocation3 + $0x328] sm:$0xff] %v5048
  %5070 = vst [vmem:[#allocation3 + $0x330] sm:$0xff] %v5049
  %5071 = vst [vmem:[#allocation3 + $0x338] sm:$0xff] %v5050
  %5072 = vst.msk [vmem:[#allocation3 + $0x340] sm:$0xff] %vm222, %v5051
  %s5073 = scalar_lea.vmem [#allocation3], 672
  %s5074 = scalar_lea.hbm %s3, 672
  %s5075 = scalar_lea.sflag [#allocation7], 4
  // Predicated region
  $region69: #{tpu_custom_call.1} parent=0 // pred_check
    _
  $region70: #{tpu_custom_call.1} parent=0 // pred_check_branch
    %5077 = sbr.rel target = $region72
  $region71: #{tpu_custom_call.1} parent=0 // pred_region
    %5078 = sst [smem:[#allocation12]] [#allocation37]
    %5079 = sst [smem:[#allocation13]] [#allocation36]
  $region72: #{tpu_custom_call.1} parent=0 // pred_fallthru
    _
  %5081 = shalt.err (0)
  %s5083 = sshll.u32 %s5073, 4
  %s5084 = int_to_ptr.vmem [resolvable:$true] %s5083
  %s5085 = sshll.u32 %s5074, 4
  %s5086 = int_to_ptr.hbm [resolvable:$true] %s5085
  %5088 = dma.vmem_to_hbm [thread:$0]  %s5084, 2688, %s5086, %s5075
  %v5089 = vld [vmem:[#allocation3 + $0x348] sm:$0xff]
  %v5090 = vld [vmem:[#allocation3 + $0x350] sm:$0xff]
  %v5091 = vld [vmem:[#allocation3 + $0x358] sm:$0xff]
  %v5092 = vld [vmem:[#allocation3 + $0x360] sm:$0xff]
  %v5093 = vld [vmem:[#allocation3 + $0x368] sm:$0xff]
  %v5094 = vld [vmem:[#allocation3 + $0x370] sm:$0xff]
  %v5095 = vld [vmem:[#allocation3 + $0x378] sm:$0xff]
  %v5096 = vld [vmem:[#allocation3 + $0x380] sm:$0xff]
  %v5097 = vld [vmem:[#allocation3 + $0x388] sm:$0xff]
  %v5098 = vld [vmem:[#allocation3 + $0x390] sm:$0xff]
  %v5099 = vld [vmem:[#allocation3 + $0x398] sm:$0xff]
  %v5100 = vld [vmem:[#allocation3 + $0x3a0] sm:$0xff]
  %v5101 = vld [vmem:[#allocation3 + $0x3a8] sm:$0xff]
  %v5102 = vld [vmem:[#allocation3 + $0x3b0] sm:$0xff]
  %v5103 = vld [vmem:[#allocation3 + $0x3b8] sm:$0xff]
  %v5104 = vld [vmem:[#allocation3 + $0x3c0] sm:$0xff]
  %v5105 = vld [vmem:[#allocation3 + $0x3c8] sm:$0xff]
  %v5106 = vld [vmem:[#allocation3 + $0x3d0] sm:$0xff]
  %v5107 = vld [vmem:[#allocation3 + $0x3d8] sm:$0xff]
  %v5108 = vld [vmem:[#allocation3 + $0x3e0] sm:$0xff]
  %v5109 = vld [vmem:[#allocation3 + $0x3e8] sm:$0xff]
  %v5110 = vadd.f32 %v5089, %v5090
  %v5111 = vadd.f32 %v5110, %v5091
  %v5112 = vadd.f32 %v5111, %v5092
  %v5113 = vadd.f32 %v5112, %v5093
  %v5114 = vadd.f32 %v5113, %v5094
  %v5115 = vsel %vm222, %v5095, 0.0
  %v5116 = vadd.f32 %v5114, %v5115
  %5117 = vadd.xlane.f32.xlu0 %v5116
  %v5118 = vpop.xlane.xlu0 %5117
  %v5119 = vadd.f32 %v5096, %v5097
  %v5120 = vadd.f32 %v5119, %v5098
  %v5121 = vadd.f32 %v5120, %v5099
  %v5122 = vadd.f32 %v5121, %v5100
  %v5123 = vadd.f32 %v5122, %v5101
  %v5124 = vsel %vm222, %v5102, 0.0
  %v5125 = vadd.f32 %v5123, %v5124
  %5126 = vadd.xlane.f32.xlu0 %v5125
  %v5127 = vpop.xlane.xlu0 %5126
  %v5128 = vadd.f32 %v5103, %v5104
  %v5129 = vadd.f32 %v5128, %v5105
  %v5130 = vadd.f32 %v5129, %v5106
  %v5131 = vadd.f32 %v5130, %v5107
  %v5132 = vadd.f32 %v5131, %v5108
  %v5133 = vsel %vm222, %v5109, 0.0
  %v5134 = vadd.f32 %v5132, %v5133
  %5135 = vadd.xlane.f32.xlu0 %v5134
  %v5136 = vpop.xlane.xlu0 %5135
  %v5137 = vmul.f32 %v5089, %v5089
  %v5138 = vmul.f32 %v5090, %v5090
  %v5139 = vmul.f32 %v5091, %v5091
  %v5140 = vmul.f32 %v5092, %v5092
  %v5141 = vmul.f32 %v5093, %v5093
  %v5142 = vmul.f32 %v5094, %v5094
  %v5143 = vmul.f32 %v5095, %v5095
  %v5144 = vmul.f32 %v5096, %v5096
  %v5145 = vmul.f32 %v5097, %v5097
  %v5146 = vmul.f32 %v5098, %v5098
  %v5147 = vmul.f32 %v5099, %v5099
  %v5148 = vmul.f32 %v5100, %v5100
  %v5149 = vmul.f32 %v5101, %v5101
  %v5150 = vmul.f32 %v5102, %v5102
  %v5151 = vmul.f32 %v5103, %v5103
  %v5152 = vmul.f32 %v5104, %v5104
  %v5153 = vmul.f32 %v5105, %v5105
  %v5154 = vmul.f32 %v5106, %v5106
  %v5155 = vmul.f32 %v5107, %v5107
  %v5156 = vmul.f32 %v5108, %v5108
  %v5157 = vmul.f32 %v5109, %v5109
  %v5158 = vadd.f32 %v5137, %v5138
  %v5159 = vadd.f32 %v5158, %v5139
  %v5160 = vadd.f32 %v5159, %v5140
  %v5161 = vadd.f32 %v5160, %v5141
  %v5162 = vadd.f32 %v5161, %v5142
  %v5163 = vsel %vm222, %v5143, 0.0
  %v5164 = vadd.f32 %v5162, %v5163
  %5165 = vadd.xlane.f32.xlu0 %v5164
  %v5166 = vpop.xlane.xlu0 %5165
  %v5167 = vadd.f32 %v5144, %v5145
  %v5168 = vadd.f32 %v5167, %v5146
  %v5169 = vadd.f32 %v5168, %v5147
  %v5170 = vadd.f32 %v5169, %v5148
  %v5171 = vadd.f32 %v5170, %v5149
  %v5172 = vsel %vm222, %v5150, 0.0
  %v5173 = vadd.f32 %v5171, %v5172
  %5174 = vadd.xlane.f32.xlu0 %v5173
  %v5175 = vpop.xlane.xlu0 %5174
  %v5176 = vadd.f32 %v5151, %v5152
  %v5177 = vadd.f32 %v5176, %v5153
  %v5178 = vadd.f32 %v5177, %v5154
  %v5179 = vadd.f32 %v5178, %v5155
  %v5180 = vadd.f32 %v5179, %v5156
  %v5181 = vsel %vm222, %v5157, 0.0
  %v5182 = vadd.f32 %v5180, %v5181
  %5183 = vadd.xlane.f32.xlu0 %v5182
  %v5184 = vpop.xlane.xlu0 %5183
  %v5185 = vmul.f32 %v5118, 0.0012755102
  %v5186 = vmul.f32 %v5127, 0.0012755102
  %v5187 = vmul.f32 %v5136, 0.0012755102
  %v5188 = vmul.f32 %v5166, 0.0012755102
  %v5189 = vmul.f32 %v5175, 0.0012755102
  %v5190 = vmul.f32 %v5184, 0.0012755102
  %v5191 = vmul.f32 %v5185, %v5185
  %v5192 = vmul.f32 %v5186, %v5186
  %v5193 = vmul.f32 %v5187, %v5187
  %v5194 = vsub.f32 %v5188, %v5191
  %v5195 = vsub.f32 %v5189, %v5192
  %v5196 = vsub.f32 %v5190, %v5193
  %v5197 = vmax.f32 %v5194, 0.0
  %v5198 = vmax.f32 %v5195, 0.0
  %v5199 = vmax.f32 %v5196, 0.0
  %v5200 = vld [vmem:[#allocation5 + $0x78] sm:$0xff]
  %v5201 = vld [vmem:[#allocation5 + $0x80] sm:$0xff]
  %v5202 = vld [vmem:[#allocation5 + $0x88] sm:$0xff]
  %v5203 = vadd.f32 %v5197, 1e-05
  %v5204 = vadd.f32 %v5198, 1e-05
  %v5205 = vadd.f32 %v5199, 1e-05
  %v5206 = vrsqrt.pop %v5203
  %v5207 = vmul.f32 %v5206, %v5203
  %v5208 = vmul.f32 %v5207, %v5206
  %v5209 = vmul.f32 0.5, %v5208
  %v5210 = vsub.f32 1.5, %v5209
  %v5211 = vmul.f32 %v5206, %v5210
  %vm5212 = vweird.f32 %v5203
  %vm5213 = vweird.f32 %v5206
  %vm5214 = vmor %vm5212, %vm5213
  %v5215 = vsel %vm5214, %v5206, %v5211
  %v5216 = vrsqrt.pop %v5204
  %v5217 = vmul.f32 %v5216, %v5204
  %v5218 = vmul.f32 %v5217, %v5216
  %v5219 = vmul.f32 0.5, %v5218
  %v5220 = vsub.f32 1.5, %v5219
  %v5221 = vmul.f32 %v5216, %v5220
  %vm5222 = vweird.f32 %v5204
  %vm5223 = vweird.f32 %v5216
  %vm5224 = vmor %vm5222, %vm5223
  %v5225 = vsel %vm5224, %v5216, %v5221
  %v5226 = vrsqrt.pop %v5205
  %v5227 = vmul.f32 %v5226, %v5205
  %v5228 = vmul.f32 %v5227, %v5226
  %v5229 = vmul.f32 0.5, %v5228
  %v5230 = vsub.f32 1.5, %v5229
  %v5231 = vmul.f32 %v5226, %v5230
  %vm5232 = vweird.f32 %v5205
  %vm5233 = vweird.f32 %v5226
  %vm5234 = vmor %vm5232, %vm5233
  %v5235 = vsel %vm5234, %v5226, %v5231
  %v5236 = vmul.f32 %v5200, %v5215
  %v5237 = vmul.f32 %v5201, %v5225
  %v5238 = vmul.f32 %v5202, %v5235
  %v5239 = vmul.f32 %v5185, %v5236
  %v5240 = vmul.f32 %v5186, %v5237
  %v5241 = vmul.f32 %v5187, %v5238
  %5245 = vrot.lane.b32.xlu0 %v5239, 1
  %v5246 = vpop.permute.xlu0 %5245
  %5247 = vrot.lane.b32.xlu0 %v5240, 1
  %v5248 = vpop.permute.xlu0 %5247
  %5249 = vrot.lane.b32.xlu0 %v5241, 1
  %v5250 = vpop.permute.xlu0 %5249
  %v5254 = vsub.f32 %v5200, %v5246
  %v5255 = vsub.f32 %v5201, %v5248
  %v5256 = vsub.f32 %v5202, %v5250
  %5258 = vset.pattern.permute.xlu0 2
  %5259 = vperm.xlu0 %5258, %v5236
  %v5260 = vpop.permute.xlu0 %5259
  %5263 = vset.pattern.permute.xlu0 2
  %5264 = vperm.xlu0 %5263, %v5237
  %v5265 = vpop.permute.xlu0 %5264
  %5268 = vset.pattern.permute.xlu0 2
  %5269 = vperm.xlu0 %5268, %v5238
  %v5270 = vpop.permute.xlu0 %5269
  %v5272 = vmul.f32 %v5089, %v5260
  %v5273 = vmul.f32 %v5090, %v5260
  %v5274 = vmul.f32 %v5091, %v5260
  %v5275 = vmul.f32 %v5092, %v5260
  %v5276 = vmul.f32 %v5093, %v5260
  %v5277 = vmul.f32 %v5094, %v5260
  %v5278 = vmul.f32 %v5095, %v5260
  %v5279 = vmul.f32 %v5096, %v5265
  %v5280 = vmul.f32 %v5097, %v5265
  %v5281 = vmul.f32 %v5098, %v5265
  %v5282 = vmul.f32 %v5099, %v5265
  %v5283 = vmul.f32 %v5100, %v5265
  %v5284 = vmul.f32 %v5101, %v5265
  %v5285 = vmul.f32 %v5102, %v5265
  %v5286 = vmul.f32 %v5103, %v5270
  %v5287 = vmul.f32 %v5104, %v5270
  %v5288 = vmul.f32 %v5105, %v5270
  %v5289 = vmul.f32 %v5106, %v5270
  %v5290 = vmul.f32 %v5107, %v5270
  %v5291 = vmul.f32 %v5108, %v5270
  %v5292 = vmul.f32 %v5109, %v5270
  %5294 = vset.pattern.permute.xlu0 3
  %5295 = vperm.xlu0 %5294, %v5254
  %v5296 = vpop.permute.xlu0 %5295
  %5299 = vset.pattern.permute.xlu0 3
  %5300 = vperm.xlu0 %5299, %v5255
  %v5301 = vpop.permute.xlu0 %5300
  %5304 = vset.pattern.permute.xlu0 3
  %5305 = vperm.xlu0 %5304, %v5256
  %v5306 = vpop.permute.xlu0 %5305
  %v5308 = vadd.f32 %v5272, %v5296
  %v5309 = vadd.f32 %v5273, %v5296
  %v5310 = vadd.f32 %v5274, %v5296
  %v5311 = vadd.f32 %v5275, %v5296
  %v5312 = vadd.f32 %v5276, %v5296
  %v5313 = vadd.f32 %v5277, %v5296
  %v5314 = vadd.f32 %v5278, %v5296
  %v5315 = vadd.f32 %v5279, %v5301
  %v5316 = vadd.f32 %v5280, %v5301
  %v5317 = vadd.f32 %v5281, %v5301
  %v5318 = vadd.f32 %v5282, %v5301
  %v5319 = vadd.f32 %v5283, %v5301
  %v5320 = vadd.f32 %v5284, %v5301
  %v5321 = vadd.f32 %v5285, %v5301
  %v5322 = vadd.f32 %v5286, %v5306
  %v5323 = vadd.f32 %v5287, %v5306
  %v5324 = vadd.f32 %v5288, %v5306
  %v5325 = vadd.f32 %v5289, %v5306
  %v5326 = vadd.f32 %v5290, %v5306
  %v5327 = vadd.f32 %v5291, %v5306
  %v5328 = vadd.f32 %v5292, %v5306
  %5329 = vst [vmem:[#allocation3 + $0x348] sm:$0xff] %v5308
  %5330 = vst [vmem:[#allocation3 + $0x350] sm:$0xff] %v5309
  %5331 = vst [vmem:[#allocation3 + $0x358] sm:$0xff] %v5310
  %5332 = vst [vmem:[#allocation3 + $0x360] sm:$0xff] %v5311
  %5333 = vst [vmem:[#allocation3 + $0x368] sm:$0xff] %v5312
  %5334 = vst [vmem:[#allocation3 + $0x370] sm:$0xff] %v5313
  %5335 = vst.msk [vmem:[#allocation3 + $0x378] sm:$0xff] %vm222, %v5314
  %5336 = vst [vmem:[#allocation3 + $0x380] sm:$0xff] %v5315
  %5337 = vst [vmem:[#allocation3 + $0x388] sm:$0xff] %v5316
  %5338 = vst [vmem:[#allocation3 + $0x390] sm:$0xff] %v5317
  %5339 = vst [vmem:[#allocation3 + $0x398] sm:$0xff] %v5318
  %5340 = vst [vmem:[#allocation3 + $0x3a0] sm:$0xff] %v5319
  %5341 = vst [vmem:[#allocation3 + $0x3a8] sm:$0xff] %v5320
  %5342 = vst.msk [vmem:[#allocation3 + $0x3b0] sm:$0xff] %vm222, %v5321
  %5343 = vst [vmem:[#allocation3 + $0x3b8] sm:$0xff] %v5322
  %5344 = vst [vmem:[#allocation3 + $0x3c0] sm:$0xff] %v5323
  %5345 = vst [vmem:[#allocation3 + $0x3c8] sm:$0xff] %v5324
  %5346 = vst [vmem:[#allocation3 + $0x3d0] sm:$0xff] %v5325
  %5347 = vst [vmem:[#allocation3 + $0x3d8] sm:$0xff] %v5326
  %5348 = vst [vmem:[#allocation3 + $0x3e0] sm:$0xff] %v5327
  %5349 = vst.msk [vmem:[#allocation3 + $0x3e8] sm:$0xff] %vm222, %v5328
  %s5350 = scalar_lea.vmem [#allocation3], 840
  %s5351 = scalar_lea.hbm %s3, 840
  %s5352 = scalar_lea.sflag [#allocation7], 5
  // Predicated region
  $region73: #{tpu_custom_call.1} parent=0 // pred_check
    _
  $region74: #{tpu_custom_call.1} parent=0 // pred_check_branch
    %5354 = sbr.rel target = $region76
  $region75: #{tpu_custom_call.1} parent=0 // pred_region
    %5355 = sst [smem:[#allocation12]] [#allocation39]
    %5356 = sst [smem:[#allocation13]] [#allocation38]
  $region76: #{tpu_custom_call.1} parent=0 // pred_fallthru
    _
  %5358 = shalt.err (0)
  %s5360 = sshll.u32 %s5350, 4
  %s5361 = int_to_ptr.vmem [resolvable:$true] %s5360
  %s5362 = sshll.u32 %s5351, 4
  %s5363 = int_to_ptr.hbm [resolvable:$true] %s5362
  %5365 = dma.vmem_to_hbm [thread:$0]  %s5361, 2688, %s5363, %s5352
  %v5366 = vld [vmem:[#allocation3 + $0x3f0] sm:$0xff]
  %v5367 = vld [vmem:[#allocation3 + $0x3f8] sm:$0xff]
  %v5368 = vld [vmem:[#allocation3 + $0x400] sm:$0xff]
  %v5369 = vld [vmem:[#allocation3 + $0x408] sm:$0xff]
  %v5370 = vld [vmem:[#allocation3 + $0x410] sm:$0xff]
  %v5371 = vld [vmem:[#allocation3 + $0x418] sm:$0xff]
  %v5372 = vld [vmem:[#allocation3 + $0x420] sm:$0xff]
  %v5373 = vld [vmem:[#allocation3 + $0x428] sm:$0xff]
  %v5374 = vld [vmem:[#allocation3 + $0x430] sm:$0xff]
  %v5375 = vld [vmem:[#allocation3 + $0x438] sm:$0xff]
  %v5376 = vld [vmem:[#allocation3 + $0x440] sm:$0xff]
  %v5377 = vld [vmem:[#allocation3 + $0x448] sm:$0xff]
  %v5378 = vld [vmem:[#allocation3 + $0x450] sm:$0xff]
  %v5379 = vld [vmem:[#allocation3 + $0x458] sm:$0xff]
  %v5380 = vld [vmem:[#allocation3 + $0x460] sm:$0xff]
  %v5381 = vld [vmem:[#allocation3 + $0x468] sm:$0xff]
  %v5382 = vld [vmem:[#allocation3 + $0x470] sm:$0xff]
  %v5383 = vld [vmem:[#allocation3 + $0x478] sm:$0xff]
  %v5384 = vld [vmem:[#allocation3 + $0x480] sm:$0xff]
  %v5385 = vld [vmem:[#allocation3 + $0x488] sm:$0xff]
  %v5386 = vld [vmem:[#allocation3 + $0x490] sm:$0xff]
  %v5387 = vadd.f32 %v5366, %v5367
  %v5388 = vadd.f32 %v5387, %v5368
  %v5389 = vadd.f32 %v5388, %v5369
  %v5390 = vadd.f32 %v5389, %v5370
  %v5391 = vadd.f32 %v5390, %v5371
  %v5392 = vsel %vm222, %v5372, 0.0
  %v5393 = vadd.f32 %v5391, %v5392
  %5394 = vadd.xlane.f32.xlu0 %v5393
  %v5395 = vpop.xlane.xlu0 %5394
  %v5396 = vadd.f32 %v5373, %v5374
  %v5397 = vadd.f32 %v5396, %v5375
  %v5398 = vadd.f32 %v5397, %v5376
  %v5399 = vadd.f32 %v5398, %v5377
  %v5400 = vadd.f32 %v5399, %v5378
  %v5401 = vsel %vm222, %v5379, 0.0
  %v5402 = vadd.f32 %v5400, %v5401
  %5403 = vadd.xlane.f32.xlu0 %v5402
  %v5404 = vpop.xlane.xlu0 %5403
  %v5405 = vadd.f32 %v5380, %v5381
  %v5406 = vadd.f32 %v5405, %v5382
  %v5407 = vadd.f32 %v5406, %v5383
  %v5408 = vadd.f32 %v5407, %v5384
  %v5409 = vadd.f32 %v5408, %v5385
  %v5410 = vsel %vm222, %v5386, 0.0
  %v5411 = vadd.f32 %v5409, %v5410
  %5412 = vadd.xlane.f32.xlu0 %v5411
  %v5413 = vpop.xlane.xlu0 %5412
  %v5414 = vmul.f32 %v5366, %v5366
  %v5415 = vmul.f32 %v5367, %v5367
  %v5416 = vmul.f32 %v5368, %v5368
  %v5417 = vmul.f32 %v5369, %v5369
  %v5418 = vmul.f32 %v5370, %v5370
  %v5419 = vmul.f32 %v5371, %v5371
  %v5420 = vmul.f32 %v5372, %v5372
  %v5421 = vmul.f32 %v5373, %v5373
  %v5422 = vmul.f32 %v5374, %v5374
  %v5423 = vmul.f32 %v5375, %v5375
  %v5424 = vmul.f32 %v5376, %v5376
  %v5425 = vmul.f32 %v5377, %v5377
  %v5426 = vmul.f32 %v5378, %v5378
  %v5427 = vmul.f32 %v5379, %v5379
  %v5428 = vmul.f32 %v5380, %v5380
  %v5429 = vmul.f32 %v5381, %v5381
  %v5430 = vmul.f32 %v5382, %v5382
  %v5431 = vmul.f32 %v5383, %v5383
  %v5432 = vmul.f32 %v5384, %v5384
  %v5433 = vmul.f32 %v5385, %v5385
  %v5434 = vmul.f32 %v5386, %v5386
  %v5435 = vadd.f32 %v5414, %v5415
  %v5436 = vadd.f32 %v5435, %v5416
  %v5437 = vadd.f32 %v5436, %v5417
  %v5438 = vadd.f32 %v5437, %v5418
  %v5439 = vadd.f32 %v5438, %v5419
  %v5440 = vsel %vm222, %v5420, 0.0
  %v5441 = vadd.f32 %v5439, %v5440
  %5442 = vadd.xlane.f32.xlu0 %v5441
  %v5443 = vpop.xlane.xlu0 %5442
  %v5444 = vadd.f32 %v5421, %v5422
  %v5445 = vadd.f32 %v5444, %v5423
  %v5446 = vadd.f32 %v5445, %v5424
  %v5447 = vadd.f32 %v5446, %v5425
  %v5448 = vadd.f32 %v5447, %v5426
  %v5449 = vsel %vm222, %v5427, 0.0
  %v5450 = vadd.f32 %v5448, %v5449
  %5451 = vadd.xlane.f32.xlu0 %v5450
  %v5452 = vpop.xlane.xlu0 %5451
  %v5453 = vadd.f32 %v5428, %v5429
  %v5454 = vadd.f32 %v5453, %v5430
  %v5455 = vadd.f32 %v5454, %v5431
  %v5456 = vadd.f32 %v5455, %v5432
  %v5457 = vadd.f32 %v5456, %v5433
  %v5458 = vsel %vm222, %v5434, 0.0
  %v5459 = vadd.f32 %v5457, %v5458
  %5460 = vadd.xlane.f32.xlu0 %v5459
  %v5461 = vpop.xlane.xlu0 %5460
  %v5462 = vmul.f32 %v5395, 0.0012755102
  %v5463 = vmul.f32 %v5404, 0.0012755102
  %v5464 = vmul.f32 %v5413, 0.0012755102
  %v5465 = vmul.f32 %v5443, 0.0012755102
  %v5466 = vmul.f32 %v5452, 0.0012755102
  %v5467 = vmul.f32 %v5461, 0.0012755102
  %v5468 = vmul.f32 %v5462, %v5462
  %v5469 = vmul.f32 %v5463, %v5463
  %v5470 = vmul.f32 %v5464, %v5464
  %v5471 = vsub.f32 %v5465, %v5468
  %v5472 = vsub.f32 %v5466, %v5469
  %v5473 = vsub.f32 %v5467, %v5470
  %v5474 = vmax.f32 %v5471, 0.0
  %v5475 = vmax.f32 %v5472, 0.0
  %v5476 = vmax.f32 %v5473, 0.0
  %v5477 = vld [vmem:[#allocation5 + $0x90] sm:$0xff]
  %v5478 = vld [vmem:[#allocation5 + $0x98] sm:$0xff]
  %v5479 = vld [vmem:[#allocation5 + $0xa0] sm:$0xff]
  %v5480 = vadd.f32 %v5474, 1e-05
  %v5481 = vadd.f32 %v5475, 1e-05
  %v5482 = vadd.f32 %v5476, 1e-05
  %v5483 = vrsqrt.pop %v5480
  %v5484 = vmul.f32 %v5483, %v5480
  %v5485 = vmul.f32 %v5484, %v5483
  %v5486 = vmul.f32 0.5, %v5485
  %v5487 = vsub.f32 1.5, %v5486
  %v5488 = vmul.f32 %v5483, %v5487
  %vm5489 = vweird.f32 %v5480
  %vm5490 = vweird.f32 %v5483
  %vm5491 = vmor %vm5489, %vm5490
  %v5492 = vsel %vm5491, %v5483, %v5488
  %v5493 = vrsqrt.pop %v5481
  %v5494 = vmul.f32 %v5493, %v5481
  %v5495 = vmul.f32 %v5494, %v5493
  %v5496 = vmul.f32 0.5, %v5495
  %v5497 = vsub.f32 1.5, %v5496
  %v5498 = vmul.f32 %v5493, %v5497
  %vm5499 = vweird.f32 %v5481
  %vm5500 = vweird.f32 %v5493
  %vm5501 = vmor %vm5499, %vm5500
  %v5502 = vsel %vm5501, %v5493, %v5498
  %v5503 = vrsqrt.pop %v5482
  %v5504 = vmul.f32 %v5503, %v5482
  %v5505 = vmul.f32 %v5504, %v5503
  %v5506 = vmul.f32 0.5, %v5505
  %v5507 = vsub.f32 1.5, %v5506
  %v5508 = vmul.f32 %v5503, %v5507
  %vm5509 = vweird.f32 %v5482
  %vm5510 = vweird.f32 %v5503
  %vm5511 = vmor %vm5509, %vm5510
  %v5512 = vsel %vm5511, %v5503, %v5508
  %v5513 = vmul.f32 %v5477, %v5492
  %v5514 = vmul.f32 %v5478, %v5502
  %v5515 = vmul.f32 %v5479, %v5512
  %v5516 = vmul.f32 %v5462, %v5513
  %v5517 = vmul.f32 %v5463, %v5514
  %v5518 = vmul.f32 %v5464, %v5515
  %5522 = vrot.lane.b32.xlu0 %v5516, 1
  %v5523 = vpop.permute.xlu0 %5522
  %5524 = vrot.lane.b32.xlu0 %v5517, 1
  %v5525 = vpop.permute.xlu0 %5524
  %5526 = vrot.lane.b32.xlu0 %v5518, 1
  %v5527 = vpop.permute.xlu0 %5526
  %v5531 = vsub.f32 %v5477, %v5523
  %v5532 = vsub.f32 %v5478, %v5525
  %v5533 = vsub.f32 %v5479, %v5527
  %5535 = vset.pattern.permute.xlu0 2
  %5536 = vperm.xlu0 %5535, %v5513
  %v5537 = vpop.permute.xlu0 %5536
  %5540 = vset.pattern.permute.xlu0 2
  %5541 = vperm.xlu0 %5540, %v5514
  %v5542 = vpop.permute.xlu0 %5541
  %5545 = vset.pattern.permute.xlu0 2
  %5546 = vperm.xlu0 %5545, %v5515
  %v5547 = vpop.permute.xlu0 %5546
  %v5549 = vmul.f32 %v5366, %v5537
  %v5550 = vmul.f32 %v5367, %v5537
  %v5551 = vmul.f32 %v5368, %v5537
  %v5552 = vmul.f32 %v5369, %v5537
  %v5553 = vmul.f32 %v5370, %v5537
  %v5554 = vmul.f32 %v5371, %v5537
  %v5555 = vmul.f32 %v5372, %v5537
  %v5556 = vmul.f32 %v5373, %v5542
  %v5557 = vmul.f32 %v5374, %v5542
  %v5558 = vmul.f32 %v5375, %v5542
  %v5559 = vmul.f32 %v5376, %v5542
  %v5560 = vmul.f32 %v5377, %v5542
  %v5561 = vmul.f32 %v5378, %v5542
  %v5562 = vmul.f32 %v5379, %v5542
  %v5563 = vmul.f32 %v5380, %v5547
  %v5564 = vmul.f32 %v5381, %v5547
  %v5565 = vmul.f32 %v5382, %v5547
  %v5566 = vmul.f32 %v5383, %v5547
  %v5567 = vmul.f32 %v5384, %v5547
  %v5568 = vmul.f32 %v5385, %v5547
  %v5569 = vmul.f32 %v5386, %v5547
  %5571 = vset.pattern.permute.xlu0 3
  %5572 = vperm.xlu0 %5571, %v5531
  %v5573 = vpop.permute.xlu0 %5572
  %5576 = vset.pattern.permute.xlu0 3
  %5577 = vperm.xlu0 %5576, %v5532
  %v5578 = vpop.permute.xlu0 %5577
  %5581 = vset.pattern.permute.xlu0 3
  %5582 = vperm.xlu0 %5581, %v5533
  %v5583 = vpop.permute.xlu0 %5582
  %v5585 = vadd.f32 %v5549, %v5573
  %v5586 = vadd.f32 %v5550, %v5573
  %v5587 = vadd.f32 %v5551, %v5573
  %v5588 = vadd.f32 %v5552, %v5573
  %v5589 = vadd.f32 %v5553, %v5573
  %v5590 = vadd.f32 %v5554, %v5573
  %v5591 = vadd.f32 %v5555, %v5573
  %v5592 = vadd.f32 %v5556, %v5578
  %v5593 = vadd.f32 %v5557, %v5578
  %v5594 = vadd.f32 %v5558, %v5578
  %v5595 = vadd.f32 %v5559, %v5578
  %v5596 = vadd.f32 %v5560, %v5578
  %v5597 = vadd.f32 %v5561, %v5578
  %v5598 = vadd.f32 %v5562, %v5578
  %v5599 = vadd.f32 %v5563, %v5583
  %v5600 = vadd.f32 %v5564, %v5583
  %v5601 = vadd.f32 %v5565, %v5583
  %v5602 = vadd.f32 %v5566, %v5583
  %v5603 = vadd.f32 %v5567, %v5583
  %v5604 = vadd.f32 %v5568, %v5583
  %v5605 = vadd.f32 %v5569, %v5583
  %5606 = vst [vmem:[#allocation3 + $0x3f0] sm:$0xff] %v5585
  %5607 = vst [vmem:[#allocation3 + $0x3f8] sm:$0xff] %v5586
  %5608 = vst [vmem:[#allocation3 + $0x400] sm:$0xff] %v5587
  %5609 = vst [vmem:[#allocation3 + $0x408] sm:$0xff] %v5588
  %5610 = vst [vmem:[#allocation3 + $0x410] sm:$0xff] %v5589
  %5611 = vst [vmem:[#allocation3 + $0x418] sm:$0xff] %v5590
  %5612 = vst.msk [vmem:[#allocation3 + $0x420] sm:$0xff] %vm222, %v5591
  %5613 = vst [vmem:[#allocation3 + $0x428] sm:$0xff] %v5592
  %5614 = vst [vmem:[#allocation3 + $0x430] sm:$0xff] %v5593
  %5615 = vst [vmem:[#allocation3 + $0x438] sm:$0xff] %v5594
  %5616 = vst [vmem:[#allocation3 + $0x440] sm:$0xff] %v5595
  %5617 = vst [vmem:[#allocation3 + $0x448] sm:$0xff] %v5596
  %5618 = vst [vmem:[#allocation3 + $0x450] sm:$0xff] %v5597
  %5619 = vst.msk [vmem:[#allocation3 + $0x458] sm:$0xff] %vm222, %v5598
  %5620 = vst [vmem:[#allocation3 + $0x460] sm:$0xff] %v5599
  %5621 = vst [vmem:[#allocation3 + $0x468] sm:$0xff] %v5600
  %5622 = vst [vmem:[#allocation3 + $0x470] sm:$0xff] %v5601
  %5623 = vst [vmem:[#allocation3 + $0x478] sm:$0xff] %v5602
  %5624 = vst [vmem:[#allocation3 + $0x480] sm:$0xff] %v5603
  %5625 = vst [vmem:[#allocation3 + $0x488] sm:$0xff] %v5604
  %5626 = vst.msk [vmem:[#allocation3 + $0x490] sm:$0xff] %vm222, %v5605
  %s5627 = scalar_lea.vmem [#allocation3], 1008
  %s5628 = scalar_lea.hbm %s3, 1008
  %s5629 = scalar_lea.sflag [#allocation7], 6
  // Predicated region
  $region77: #{tpu_custom_call.1} parent=0 // pred_check
    _
  $region78: #{tpu_custom_call.1} parent=0 // pred_check_branch
    %5631 = sbr.rel target = $region80
  $region79: #{tpu_custom_call.1} parent=0 // pred_region
    %5632 = sst [smem:[#allocation12]] [#allocation41]
    %5633 = sst [smem:[#allocation13]] [#allocation40]
  $region80: #{tpu_custom_call.1} parent=0 // pred_fallthru
    _
  %5635 = shalt.err (0)
  %s5637 = sshll.u32 %s5627, 4
  %s5638 = int_to_ptr.vmem [resolvable:$true] %s5637
  %s5639 = sshll.u32 %s5628, 4
  %s5640 = int_to_ptr.hbm [resolvable:$true] %s5639
  %5642 = dma.vmem_to_hbm [thread:$0]  %s5638, 2688, %s5640, %s5629
  %s5643 = sshll.u32 %s193, 4
  %5644 = dma.done [#allocation7], %s5643
  %s5645 = sshll.u32 %s193, 4
  %5646 = dma.done %s4244, %s5645
  %s5647 = sshll.u32 %s193, 4
  %5648 = dma.done %s4521, %s5647
  %s5649 = sshll.u32 %s193, 4
  %5650 = dma.done %s4798, %s5649
  %s5651 = sshll.u32 %s193, 4
  %5652 = dma.done %s5075, %s5651
  %s5653 = sshll.u32 %s193, 4
  %5654 = dma.done %s5352, %s5653
  %s5655 = sshll.u32 %s193, 4
  %5656 = dma.done %s5629, %s5655
  %5657 = vsyncmov [#allocation6]
  %s5658 = vpop.sfrf %5657
  %p5659 = scmp.eq.s32.totalorder %s5658, 0
  %p5660 = pneg %p5659
  %5662 = shalt.err (%p5660)
  %s5663 = scalar_lea.sflag [#allocation6], 1
  %5664 = vsyncmov %s5663
  %s5665 = vpop.sfrf %5664
  %p5666 = scmp.eq.s32.totalorder %s5665, 0
  %p5667 = pneg %p5666
  %5669 = shalt.err (%p5667)
  %s5670 = scalar_lea.sflag [#allocation6], 2
  %5671 = vsyncmov %s5670
  %s5672 = vpop.sfrf %5671
  %p5673 = scmp.eq.s32.totalorder %s5672, 0
  %p5674 = pneg %p5673
  %5676 = shalt.err (%p5674)
  %s5677 = scalar_lea.sflag [#allocation6], 3
  %5678 = vsyncmov %s5677
  %s5679 = vpop.sfrf %5678
  %p5680 = scmp.eq.s32.totalorder %s5679, 0
  %p5681 = pneg %p5680
  %5683 = shalt.err (%p5681)
  %s5684 = scalar_lea.sflag [#allocation6], 4
  %5685 = vsyncmov %s5684
  %s5686 = vpop.sfrf %5685
  %p5687 = scmp.eq.s32.totalorder %s5686, 0
  %p5688 = pneg %p5687
  %5690 = shalt.err (%p5688)
  %s5691 = scalar_lea.sflag [#allocation6], 5
  %5692 = vsyncmov %s5691
  %s5693 = vpop.sfrf %5692
  %p5694 = scmp.eq.s32.totalorder %s5693, 0
  %p5695 = pneg %p5694
  %5697 = shalt.err (%p5695)
  %s5698 = scalar_lea.sflag [#allocation6], 6
  %5699 = vsyncmov %s5698
  %s5700 = vpop.sfrf %5699
  %p5701 = scmp.eq.s32.totalorder %s5700, 0
  %p5702 = pneg %p5701
  %5704 = shalt.err (%p5702)
  %5705 = vsyncmov [#allocation7]
  %s5706 = vpop.sfrf %5705
  %p5707 = scmp.eq.s32.totalorder %s5706, 0
  %p5708 = pneg %p5707
  %5710 = shalt.err (%p5708)
  %s5711 = scalar_lea.sflag [#allocation7], 1
  %5712 = vsyncmov %s5711
  %s5713 = vpop.sfrf %5712
  %p5714 = scmp.eq.s32.totalorder %s5713, 0
  %p5715 = pneg %p5714
  %5717 = shalt.err (%p5715)
  %s5718 = scalar_lea.sflag [#allocation7], 2
  %5719 = vsyncmov %s5718
  %s5720 = vpop.sfrf %5719
  %p5721 = scmp.eq.s32.totalorder %s5720, 0
  %p5722 = pneg %p5721
  %5724 = shalt.err (%p5722)
  %s5725 = scalar_lea.sflag [#allocation7], 3
  %5726 = vsyncmov %s5725
  %s5727 = vpop.sfrf %5726
  %p5728 = scmp.eq.s32.totalorder %s5727, 0
  %p5729 = pneg %p5728
  %5731 = shalt.err (%p5729)
  %s5732 = scalar_lea.sflag [#allocation7], 4
  %5733 = vsyncmov %s5732
  %s5734 = vpop.sfrf %5733
  %p5735 = scmp.eq.s32.totalorder %s5734, 0
  %p5736 = pneg %p5735
  %5738 = shalt.err (%p5736)
  %s5739 = scalar_lea.sflag [#allocation7], 5
  %5740 = vsyncmov %s5739
  %s5741 = vpop.sfrf %5740
  %p5742 = scmp.eq.s32.totalorder %s5741, 0
  %p5743 = pneg %p5742
  %5745 = shalt.err (%p5743)
  %s5746 = scalar_lea.sflag [#allocation7], 6
  %5747 = vsyncmov %s5746
  %s5748 = vpop.sfrf %5747
  %p5749 = scmp.eq.s32.totalorder %s5748, 0
  %p5750 = pneg %p5749
  %5752 = shalt.err (%p5750)
  %5753 = vsyncmov [#allocation8]
  %s5754 = vpop.sfrf %5753
  %p5755 = scmp.eq.s32.totalorder %s5754, 0
  %p5756 = pneg %p5755
  %5758 = shalt.err (%p5756)
  %s5759 = scalar_lea.sflag [#allocation8], 1
  %5760 = vsyncmov %s5759
  %s5761 = vpop.sfrf %5760
  %p5762 = scmp.eq.s32.totalorder %s5761, 0
  %p5763 = pneg %p5762
  %5765 = shalt.err (%p5763)

</llo_original>
